<compile_context>
chip_gen: v6e
topology: v6e:2x2x1
jax: 0.10.0
libtpu: 0.0.40
codegen_flags: <defaults>
</compile_context>

<pallas_src>
import jax
import jax.numpy as jnp
from jax.experimental import pallas as pl
from jax.experimental.pallas import tpu as pltpu


_VMEM_LIMIT_BYTES = 32 * 1024 * 1024   # fits v5e/v6e/v7x scoped-VMEM budgets
_NPAD = 128                            # lane-dense padding for fc3 (50) / fc4 (10)
_CONV_CFG = [(3, 64), (64, 128), (128, 512)]   # (Cin, Cout) per conv block


# ----------------------------------------------------------------------------
# In-kernel fused conv3x3(pad=1) + bias + ReLU + 2x2 maxpool on VMEM values.
# ----------------------------------------------------------------------------
def _conv3x3_relu_pool(x, w_ref, b_ref):
    """x: (H, W, Cin) f32 value; w_ref: (9, Cin, Cout) bf16 tap-major;
    b_ref: (1, Cout) f32.  Returns (H//2, W//2, Cout) f32 pooled activations."""
    H, W, Cin = x.shape
    Cout = w_ref.shape[-1]
    Hp, Wp, HW = H // 2, W // 2, H * W

    # Zero-halo spatial padding built as a VMEM value (no HBM round trip, no
    # wrapper-side pad op).  Concats stay in f32; one cast to bf16 for the MXU.
    zr = jnp.zeros((1, W, Cin), x.dtype)
    xp = jnp.concatenate([zr, x, zr], axis=0)                         # (H+2, W, Cin)
    zc = jnp.zeros((H + 2, 1, Cin), x.dtype)
    xp = jnp.concatenate([zc, xp, zc], axis=1).astype(jnp.bfloat16)   # (H+2, W+2, Cin)

    # 9-tap accumulation with every output pixel folded into the matmul M dim.
    acc = jnp.zeros((HW, Cout), jnp.float32)
    for kh in range(3):
        for kw in range(3):
            tap = xp[kh:kh + H, kw:kw + W, :].reshape(HW, Cin)        # (HW, Cin) bf16
            acc = acc + jnp.dot(tap, w_ref[kh * 3 + kw],
                                preferred_element_type=jnp.float32)

    # Bias + ReLU once for the whole layer (broadcast hoisted out of any loop).
    y = jnp.maximum(acc + b_ref[...], 0.0)                            # (HW, Cout) f32

    # 2x2 max-pool: adjacent rows of the (HW, Cout) slab are W-neighbours, so
    # pool over W first, then over H -- full-width maxima only, one dense result.
    t = y.reshape(HW // 2, 2, Cout)
    t = jnp.maximum(t[:, 0:1, :], t[:, 1:2, :])                       # (H*Wp, 1, Cout)
    t = t.reshape(Hp, 2, Wp, Cout)
    t = jnp.maximum(t[:, 0:1, :, :], t[:, 1:2, :, :])                 # (Hp, 1, Wp, Cout)
    return t.reshape(Hp, Wp, Cout)                                    # f32


# ----------------------------------------------------------------------------
# Whole-network fused kernel (one grid step == one image, end to end).
# ----------------------------------------------------------------------------
def _vgg_fused_kernel(x_ref,
                      w1_ref, b1_ref, w2_ref, b2_ref, w3_ref, b3_ref,
                      wf1_ref, bf1_ref, wf2_ref, bf2_ref,
                      wf3_ref, bf3_ref, wf4_ref, bf4_ref,
                      o_ref):
    f32, bf16 = jnp.float32, jnp.bfloat16

    # ---- features: 3x (conv3x3 + bias + ReLU + 2x2 maxpool), all in VMEM ----
    x = x_ref[...]                                  # (8, 8, 3) f32
    x = _conv3x3_relu_pool(x, w1_ref, b1_ref)       # (4, 4, 64)
    x = _conv3x3_relu_pool(x, w2_ref, b2_ref)       # (2, 2, 128)
    x = _conv3x3_relu_pool(x, w3_ref, b3_ref)       # (1, 1, 512)

    # ---- flatten (spatial is 1x1, so NHWC flatten == PyTorch NCHW flatten) ----
    feat = x.reshape(1, -1).astype(bf16)            # (1, 512)

    # ---- classifier head: fc1+ReLU -> fc2+ReLU -> sigmoid(fc3) -> fc4 ----
    h = jnp.dot(feat, wf1_ref[...], preferred_element_type=f32) + bf1_ref[...]
    h = jnp.maximum(h, 0.0)
    # TODO(synk): Dropout1 (p=0.4) is identity (eval-mode semantics).
    h = jnp.dot(h.astype(bf16), wf2_ref[...], preferred_element_type=f32) + bf2_ref[...]
    h = jnp.maximum(h, 0.0)
    # TODO(synk): Dropout2 (p=0.4) is identity (eval-mode semantics).
    h = jnp.dot(h.astype(bf16), wf3_ref[...], preferred_element_type=f32) + bf3_ref[...]
    h = jax.nn.sigmoid(h)                           # (1, 128); padded lanes -> 0.5
    out = jnp.dot(h.astype(bf16), wf4_ref[...], preferred_element_type=f32) + bf4_ref[...]
    o_ref[...] = out.astype(o_ref.dtype)            # single lane-dense (1, 128) store


# ----------------------------------------------------------------------------
# Parameters (deterministic, mirroring VGG._initialize_weights)
# ----------------------------------------------------------------------------
def init_params(key):
    keys = jax.random.split(key, len(_CONV_CFG) + 4)
    params = {"convs": []}
    # Conv: kaiming normal, mode='fan_out', relu -> std = sqrt(2 / (Cout*3*3))
    for i, (cin, cout) in enumerate(_CONV_CFG):
        std = (2.0 / (cout * 9)) ** 0.5
        w = jax.random.normal(keys[i], (3, 3, cin, cout), jnp.float32) * std
        params["convs"].append((w.reshape(9, cin, cout),          # tap-major (kh,kw)
                                jnp.zeros((cout,), jnp.float32)))

    # Linear: normal(0, 0.01), bias 0.  Stored as (in, out) so y = x @ W + b.
    def lin(k, fin, fout):
        return (jax.random.normal(k, (fin, fout), jnp.float32) * 0.01,
                jnp.zeros((fout,), jnp.float32))

    params["fc1"] = lin(keys[-4], 512, 512)
    params["fc2"] = lin(keys[-3], 512, 512)
    params["fc3"] = lin(keys[-2], 512, 50)
    params["fc4"] = lin(keys[-1], 50, 10)
    return params


def prepare_params(params):
    """One-time conversion to kernel-ready tensors: bf16 MXU weights, f32 biases,
    fc3/fc4 zero-padded to 128 output lanes so every head matmul/store is
    lane-dense.  Padding is exact: padded fc3 lanes become sigmoid(0)=0.5, but
    the matching fc4 *rows* are zero, so the logits are unchanged."""
    (w1, b1), (w2, b2), (w3, b3) = params["convs"]
    fw1, fb1 = params["fc1"]
    fw2, fb2 = params["fc2"]
    fw3, fb3 = params["fc3"]
    fw4, fb4 = params["fc4"]
    n3, n4 = fw3.shape[1], fw4.shape[1]            # 50, 10

    w3p = jnp.zeros((fw3.shape[0], _NPAD), jnp.float32).at[:, :n3].set(fw3)
    b3p = jnp.zeros((_NPAD,), jnp.float32).at[:n3].set(fb3)
    w4p = jnp.zeros((_NPAD, _NPAD), jnp.float32).at[:n3, :n4].set(fw4)
    b4p = jnp.zeros((_NPAD,), jnp.float32).at[:n4].set(fb4)

    bf = lambda a: a.astype(jnp.bfloat16)
    rb = lambda b: b.reshape(1, -1).astype(jnp.float32)
    return {
        "tensors": (
            bf(w1), rb(b1), bf(w2), rb(b2), bf(w3), rb(b3),
            bf(fw1), rb(fb1), bf(fw2), rb(fb2),
            bf(w3p), rb(b3p), bf(w4p), rb(b4p),
        ),
        "num_classes": int(n4),
    }


# ----------------------------------------------------------------------------
# Forward pass: one pallas_call for the whole network.
# ----------------------------------------------------------------------------
def _pinned_index_map(ndim):
    return lambda n: (0,) * ndim   # weight blocks are grid-invariant (stay resident)


def vgg_forward(x_nchw, kernel_params):
    weights = kernel_params["tensors"]
    nclass = kernel_params["num_classes"]

    N, C, H, W = x_nchw.shape
    assert (C, H, W) == (3, 8, 8), "feature stack expects 3x8x8 inputs (flattens to 512)"

    # NCHW (PyTorch convention) -> NHWC so channels ride the 128-wide lane axis.
    x = jnp.transpose(x_nchw.astype(jnp.float32), (0, 2, 3, 1))

    in_specs = [pl.BlockSpec((None, H, W, C), lambda n: (n, 0, 0, 0))]
    in_specs += [pl.BlockSpec(wgt.shape, _pinned_index_map(wgt.ndim)) for wgt in weights]

    out = pl.pallas_call(
        _vgg_fused_kernel,
        out_shape=jax.ShapeDtypeStruct((N, 1, _NPAD), jnp.float32),
        grid=(N,),                                     # v7x: megacore splits batch
        in_specs=in_specs,
        out_specs=pl.BlockSpec((None, 1, _NPAD), lambda n: (n, 0, 0)),
        compiler_params=pltpu.CompilerParams(
            dimension_semantics=("parallel",),
            vmem_limit_bytes=_VMEM_LIMIT_BYTES,
        ),
    )(x, *weights)
    return out.reshape(N, _NPAD)[:, :nclass]           # (N, 10)


# ----------------------------------------------------------------------------
if __name__ == "__main__":
    key = jax.random.PRNGKey(0)
    k_param, k_x = jax.random.split(key)

    params = init_params(k_param)
    kernel_params = prepare_params(params)             # one-time, outside jit

    # Small input: batch=2, channels=3, spatial=8 -> features flatten to 512.
    x = jax.random.normal(k_x, (2, 3, 8, 8), jnp.float32)

    fwd = jax.jit(lambda xx: vgg_forward(xx, kernel_params))
    out = fwd(x)
    jax.block_until_ready(out)

    assert out.shape == (2, 10), out.shape
    assert bool(jnp.all(jnp.isfinite(out)))
    print("KERNEL_OK")
</pallas_src>

<mosaic_0001>
module attributes {stable_mosaic.version = 11 : i64} {
  func.func @_vgg_fused_kernel(%arg0: i32, %arg1: memref<1x8x8x3xf32, #tpu.memory_space<vmem>>, %arg2: memref<9x3x64xbf16, #tpu.memory_space<vmem>>, %arg3: memref<1x64xf32, #tpu.memory_space<vmem>>, %arg4: memref<9x64x128xbf16, #tpu.memory_space<vmem>>, %arg5: memref<1x128xf32, #tpu.memory_space<vmem>>, %arg6: memref<9x128x512xbf16, #tpu.memory_space<vmem>>, %arg7: memref<1x512xf32, #tpu.memory_space<vmem>>, %arg8: memref<512x512xbf16, #tpu.memory_space<vmem>>, %arg9: memref<1x512xf32, #tpu.memory_space<vmem>>, %arg10: memref<512x512xbf16, #tpu.memory_space<vmem>>, %arg11: memref<1x512xf32, #tpu.memory_space<vmem>>, %arg12: memref<512x128xbf16, #tpu.memory_space<vmem>>, %arg13: memref<1x128xf32, #tpu.memory_space<vmem>>, %arg14: memref<128x128xbf16, #tpu.memory_space<vmem>>, %arg15: memref<1x128xf32, #tpu.memory_space<vmem>>, %arg16: memref<1x1x128xf32, #tpu.memory_space<vmem>>) attributes {dimension_semantics = [#tpu.dimension_semantics<parallel>], iteration_bounds = array<i64: 2>, scalar_prefetch = 0 : i64, scratch_operands = 0 : i64, tpu.core_type = #tpu.core_type<tc>, window_params = [{transform_indices = @transform_0, window_bounds = array<i64: 1, 8, 8, 3>}, {pipeline_mode = #tpu.pipeline_mode<synchronous>, transform_indices = @transform_1, window_bounds = array<i64: 9, 3, 64>}, {pipeline_mode = #tpu.pipeline_mode<synchronous>, transform_indices = @transform_2, window_bounds = array<i64: 1, 64>}, {pipeline_mode = #tpu.pipeline_mode<synchronous>, transform_indices = @transform_3, window_bounds = array<i64: 9, 64, 128>}, {pipeline_mode = #tpu.pipeline_mode<synchronous>, transform_indices = @transform_4, window_bounds = array<i64: 1, 128>}, {pipeline_mode = #tpu.pipeline_mode<synchronous>, transform_indices = @transform_5, window_bounds = array<i64: 9, 128, 512>}, {pipeline_mode = #tpu.pipeline_mode<synchronous>, transform_indices = @transform_6, window_bounds = array<i64: 1, 512>}, {pipeline_mode = #tpu.pipeline_mode<synchronous>, transform_indices = @transform_7, window_bounds = array<i64: 512, 512>}, {pipeline_mode = #tpu.pipeline_mode<synchronous>, transform_indices = @transform_8, window_bounds = array<i64: 1, 512>}, {pipeline_mode = #tpu.pipeline_mode<synchronous>, transform_indices = @transform_9, window_bounds = array<i64: 512, 512>}, {pipeline_mode = #tpu.pipeline_mode<synchronous>, transform_indices = @transform_10, window_bounds = array<i64: 1, 512>}, {pipeline_mode = #tpu.pipeline_mode<synchronous>, transform_indices = @transform_11, window_bounds = array<i64: 512, 128>}, {pipeline_mode = #tpu.pipeline_mode<synchronous>, transform_indices = @transform_12, window_bounds = array<i64: 1, 128>}, {pipeline_mode = #tpu.pipeline_mode<synchronous>, transform_indices = @transform_13, window_bounds = array<i64: 128, 128>}, {pipeline_mode = #tpu.pipeline_mode<synchronous>, transform_indices = @transform_14, window_bounds = array<i64: 1, 128>}, {transform_indices = @transform_15, window_bounds = array<i64: 1, 1, 128>}]} {
    %c0 = arith.constant 0 : index
    %c0_0 = arith.constant 0 : index
    %c0_1 = arith.constant 0 : index
    %c0_2 = arith.constant 0 : index
    %0 = vector.load %arg1[%c0, %c0_0, %c0_1, %c0_2] : memref<1x8x8x3xf32, #tpu.memory_space<vmem>>, vector<1x8x8x3xf32>
    %1 = vector.shape_cast %0 : vector<1x8x8x3xf32> to vector<8x8x3xf32>
    %cst = arith.constant 0.000000e+00 : f32
    %2 = vector.broadcast %cst : f32 to vector<1x8x3xf32>
    %3 = tpu.concatenate %2, %1, %2 in 0 : vector<1x8x3xf32>, vector<8x8x3xf32>, vector<1x8x3xf32> -> vector<10x8x3xf32>
    %cst_3 = arith.constant 0.000000e+00 : f32
    %4 = vector.broadcast %cst_3 : f32 to vector<10x1x3xf32>
    %5 = tpu.concatenate %4, %3, %4 in 1 : vector<10x1x3xf32>, vector<10x8x3xf32>, vector<10x1x3xf32> -> vector<10x10x3xf32>
    %6 = arith.truncf %5 : vector<10x10x3xf32> to vector<10x10x3xbf16>
    %cst_4 = arith.constant 0.000000e+00 : f32
    %7 = vector.broadcast %cst_4 : f32 to vector<64x64xf32>
    %8 = vector.extract_strided_slice %6 {offsets = [0, 0, 0], sizes = [8, 8, 3], strides = [1, 1, 1]} : vector<10x10x3xbf16> to vector<8x8x3xbf16>
    %9 = vector.shape_cast %8 : vector<8x8x3xbf16> to vector<64x3xbf16>
    %c0_5 = arith.constant 0 : index
    %c0_6 = arith.constant 0 : index
    %c0_7 = arith.constant 0 : index
    %10 = vector.load %arg2[%c0_5, %c0_6, %c0_7] : memref<9x3x64xbf16, #tpu.memory_space<vmem>>, vector<1x3x64xbf16>
    %11 = vector.shape_cast %10 : vector<1x3x64xbf16> to vector<3x64xbf16>
    %cst_8 = arith.constant dense<0.000000e+00> : vector<64x64xf32>
    %12 = tpu.matmul %9, %11, %cst_8 {dimension_numbers = #tpu.dot_dimension_numbers<[1], [0], [0], [1], [0, 0, 1, 1], [], []>} : vector<64x3xbf16>, vector<3x64xbf16>, vector<64x64xf32> -> vector<64x64xf32>
    %13 = arith.addf %7, %12 : vector<64x64xf32>
    %14 = vector.extract_strided_slice %6 {offsets = [0, 1, 0], sizes = [8, 8, 3], strides = [1, 1, 1]} : vector<10x10x3xbf16> to vector<8x8x3xbf16>
    %15 = vector.shape_cast %14 : vector<8x8x3xbf16> to vector<64x3xbf16>
    %c1 = arith.constant 1 : index
    %c0_9 = arith.constant 0 : index
    %c0_10 = arith.constant 0 : index
    %16 = vector.load %arg2[%c1, %c0_9, %c0_10] : memref<9x3x64xbf16, #tpu.memory_space<vmem>>, vector<1x3x64xbf16>
    %17 = vector.shape_cast %16 : vector<1x3x64xbf16> to vector<3x64xbf16>
    %cst_11 = arith.constant dense<0.000000e+00> : vector<64x64xf32>
    %18 = tpu.matmul %15, %17, %cst_11 {dimension_numbers = #tpu.dot_dimension_numbers<[1], [0], [0], [1], [0, 0, 1, 1], [], []>} : vector<64x3xbf16>, vector<3x64xbf16>, vector<64x64xf32> -> vector<64x64xf32>
    %19 = arith.addf %13, %18 : vector<64x64xf32>
    %20 = vector.extract_strided_slice %6 {offsets = [0, 2, 0], sizes = [8, 8, 3], strides = [1, 1, 1]} : vector<10x10x3xbf16> to vector<8x8x3xbf16>
    %21 = vector.shape_cast %20 : vector<8x8x3xbf16> to vector<64x3xbf16>
    %c2 = arith.constant 2 : index
    %c0_12 = arith.constant 0 : index
    %c0_13 = arith.constant 0 : index
    %22 = vector.load %arg2[%c2, %c0_12, %c0_13] : memref<9x3x64xbf16, #tpu.memory_space<vmem>>, vector<1x3x64xbf16>
    %23 = vector.shape_cast %22 : vector<1x3x64xbf16> to vector<3x64xbf16>
    %cst_14 = arith.constant dense<0.000000e+00> : vector<64x64xf32>
    %24 = tpu.matmul %21, %23, %cst_14 {dimension_numbers = #tpu.dot_dimension_numbers<[1], [0], [0], [1], [0, 0, 1, 1], [], []>} : vector<64x3xbf16>, vector<3x64xbf16>, vector<64x64xf32> -> vector<64x64xf32>
    %25 = arith.addf %19, %24 : vector<64x64xf32>
    %26 = vector.extract_strided_slice %6 {offsets = [1, 0, 0], sizes = [8, 8, 3], strides = [1, 1, 1]} : vector<10x10x3xbf16> to vector<8x8x3xbf16>
    %27 = vector.shape_cast %26 : vector<8x8x3xbf16> to vector<64x3xbf16>
    %c3 = arith.constant 3 : index
    %c0_15 = arith.constant 0 : index
    %c0_16 = arith.constant 0 : index
    %28 = vector.load %arg2[%c3, %c0_15, %c0_16] : memref<9x3x64xbf16, #tpu.memory_space<vmem>>, vector<1x3x64xbf16>
    %29 = vector.shape_cast %28 : vector<1x3x64xbf16> to vector<3x64xbf16>
    %cst_17 = arith.constant dense<0.000000e+00> : vector<64x64xf32>
    %30 = tpu.matmul %27, %29, %cst_17 {dimension_numbers = #tpu.dot_dimension_numbers<[1], [0], [0], [1], [0, 0, 1, 1], [], []>} : vector<64x3xbf16>, vector<3x64xbf16>, vector<64x64xf32> -> vector<64x64xf32>
    %31 = arith.addf %25, %30 : vector<64x64xf32>
    %32 = vector.extract_strided_slice %6 {offsets = [1, 1, 0], sizes = [8, 8, 3], strides = [1, 1, 1]} : vector<10x10x3xbf16> to vector<8x8x3xbf16>
    %33 = vector.shape_cast %32 : vector<8x8x3xbf16> to vector<64x3xbf16>
    %c4 = arith.constant 4 : index
    %c0_18 = arith.constant 0 : index
    %c0_19 = arith.constant 0 : index
    %34 = vector.load %arg2[%c4, %c0_18, %c0_19] : memref<9x3x64xbf16, #tpu.memory_space<vmem>>, vector<1x3x64xbf16>
    %35 = vector.shape_cast %34 : vector<1x3x64xbf16> to vector<3x64xbf16>
    %cst_20 = arith.constant dense<0.000000e+00> : vector<64x64xf32>
    %36 = tpu.matmul %33, %35, %cst_20 {dimension_numbers = #tpu.dot_dimension_numbers<[1], [0], [0], [1], [0, 0, 1, 1], [], []>} : vector<64x3xbf16>, vector<3x64xbf16>, vector<64x64xf32> -> vector<64x64xf32>
    %37 = arith.addf %31, %36 : vector<64x64xf32>
    %38 = vector.extract_strided_slice %6 {offsets = [1, 2, 0], sizes = [8, 8, 3], strides = [1, 1, 1]} : vector<10x10x3xbf16> to vector<8x8x3xbf16>
    %39 = vector.shape_cast %38 : vector<8x8x3xbf16> to vector<64x3xbf16>
    %c5 = arith.constant 5 : index
    %c0_21 = arith.constant 0 : index
    %c0_22 = arith.constant 0 : index
    %40 = vector.load %arg2[%c5, %c0_21, %c0_22] : memref<9x3x64xbf16, #tpu.memory_space<vmem>>, vector<1x3x64xbf16>
    %41 = vector.shape_cast %40 : vector<1x3x64xbf16> to vector<3x64xbf16>
    %cst_23 = arith.constant dense<0.000000e+00> : vector<64x64xf32>
    %42 = tpu.matmul %39, %41, %cst_23 {dimension_numbers = #tpu.dot_dimension_numbers<[1], [0], [0], [1], [0, 0, 1, 1], [], []>} : vector<64x3xbf16>, vector<3x64xbf16>, vector<64x64xf32> -> vector<64x64xf32>
    %43 = arith.addf %37, %42 : vector<64x64xf32>
    %44 = vector.extract_strided_slice %6 {offsets = [2, 0, 0], sizes = [8, 8, 3], strides = [1, 1, 1]} : vector<10x10x3xbf16> to vector<8x8x3xbf16>
    %45 = vector.shape_cast %44 : vector<8x8x3xbf16> to vector<64x3xbf16>
    %c6 = arith.constant 6 : index
    %c0_24 = arith.constant 0 : index
    %c0_25 = arith.constant 0 : index
    %46 = vector.load %arg2[%c6, %c0_24, %c0_25] : memref<9x3x64xbf16, #tpu.memory_space<vmem>>, vector<1x3x64xbf16>
    %47 = vector.shape_cast %46 : vector<1x3x64xbf16> to vector<3x64xbf16>
    %cst_26 = arith.constant dense<0.000000e+00> : vector<64x64xf32>
    %48 = tpu.matmul %45, %47, %cst_26 {dimension_numbers = #tpu.dot_dimension_numbers<[1], [0], [0], [1], [0, 0, 1, 1], [], []>} : vector<64x3xbf16>, vector<3x64xbf16>, vector<64x64xf32> -> vector<64x64xf32>
    %49 = arith.addf %43, %48 : vector<64x64xf32>
    %50 = vector.extract_strided_slice %6 {offsets = [2, 1, 0], sizes = [8, 8, 3], strides = [1, 1, 1]} : vector<10x10x3xbf16> to vector<8x8x3xbf16>
    %51 = vector.shape_cast %50 : vector<8x8x3xbf16> to vector<64x3xbf16>
    %c7 = arith.constant 7 : index
    %c0_27 = arith.constant 0 : index
    %c0_28 = arith.constant 0 : index
    %52 = vector.load %arg2[%c7, %c0_27, %c0_28] : memref<9x3x64xbf16, #tpu.memory_space<vmem>>, vector<1x3x64xbf16>
    %53 = vector.shape_cast %52 : vector<1x3x64xbf16> to vector<3x64xbf16>
    %cst_29 = arith.constant dense<0.000000e+00> : vector<64x64xf32>
    %54 = tpu.matmul %51, %53, %cst_29 {dimension_numbers = #tpu.dot_dimension_numbers<[1], [0], [0], [1], [0, 0, 1, 1], [], []>} : vector<64x3xbf16>, vector<3x64xbf16>, vector<64x64xf32> -> vector<64x64xf32>
    %55 = arith.addf %49, %54 : vector<64x64xf32>
    %56 = vector.extract_strided_slice %6 {offsets = [2, 2, 0], sizes = [8, 8, 3], strides = [1, 1, 1]} : vector<10x10x3xbf16> to vector<8x8x3xbf16>
    %57 = vector.shape_cast %56 : vector<8x8x3xbf16> to vector<64x3xbf16>
    %c8 = arith.constant 8 : index
    %c0_30 = arith.constant 0 : index
    %c0_31 = arith.constant 0 : index
    %58 = vector.load %arg2[%c8, %c0_30, %c0_31] : memref<9x3x64xbf16, #tpu.memory_space<vmem>>, vector<1x3x64xbf16>
    %59 = vector.shape_cast %58 : vector<1x3x64xbf16> to vector<3x64xbf16>
    %cst_32 = arith.constant dense<0.000000e+00> : vector<64x64xf32>
    %60 = tpu.matmul %57, %59, %cst_32 {dimension_numbers = #tpu.dot_dimension_numbers<[1], [0], [0], [1], [0, 0, 1, 1], [], []>} : vector<64x3xbf16>, vector<3x64xbf16>, vector<64x64xf32> -> vector<64x64xf32>
    %61 = arith.addf %55, %60 : vector<64x64xf32>
    %c0_33 = arith.constant 0 : index
    %c0_34 = arith.constant 0 : index
    %62 = vector.load %arg3[%c0_33, %c0_34] : memref<1x64xf32, #tpu.memory_space<vmem>>, vector<1x64xf32>
    %63 = vector.broadcast %62 : vector<1x64xf32> to vector<64x64xf32>
    %64 = arith.addf %61, %63 : vector<64x64xf32>
    %cst_35 = arith.constant 0.000000e+00 : f32
    %65 = vector.broadcast %cst_35 : f32 to vector<64x64xf32>
    %66 = arith.maximumf %64, %65 : vector<64x64xf32>
    %67 = vector.shape_cast %66 : vector<64x64xf32> to vector<32x2x64xf32>
    %68 = vector.extract_strided_slice %67 {offsets = [0, 0, 0], sizes = [32, 1, 64], strides = [1, 1, 1]} : vector<32x2x64xf32> to vector<32x1x64xf32>
    %69 = vector.extract_strided_slice %67 {offsets = [0, 1, 0], sizes = [32, 1, 64], strides = [1, 1, 1]} : vector<32x2x64xf32> to vector<32x1x64xf32>
    %70 = arith.maximumf %68, %69 : vector<32x1x64xf32>
    %71 = vector.shape_cast %70 : vector<32x1x64xf32> to vector<4x2x4x64xf32>
    %72 = vector.extract_strided_slice %71 {offsets = [0, 0, 0, 0], sizes = [4, 1, 4, 64], strides = [1, 1, 1, 1]} : vector<4x2x4x64xf32> to vector<4x1x4x64xf32>
    %73 = vector.extract_strided_slice %71 {offsets = [0, 1, 0, 0], sizes = [4, 1, 4, 64], strides = [1, 1, 1, 1]} : vector<4x2x4x64xf32> to vector<4x1x4x64xf32>
    %74 = arith.maximumf %72, %73 : vector<4x1x4x64xf32>
    %75 = vector.shape_cast %74 : vector<4x1x4x64xf32> to vector<4x4x64xf32>
    %cst_36 = arith.constant 0.000000e+00 : f32
    %76 = vector.broadcast %cst_36 : f32 to vector<1x4x64xf32>
    %77 = tpu.concatenate %76, %75, %76 in 0 : vector<1x4x64xf32>, vector<4x4x64xf32>, vector<1x4x64xf32> -> vector<6x4x64xf32>
    %cst_37 = arith.constant 0.000000e+00 : f32
    %78 = vector.broadcast %cst_37 : f32 to vector<6x1x64xf32>
    %79 = tpu.concatenate %78, %77, %78 in 1 : vector<6x1x64xf32>, vector<6x4x64xf32>, vector<6x1x64xf32> -> vector<6x6x64xf32>
    %80 = arith.truncf %79 : vector<6x6x64xf32> to vector<6x6x64xbf16>
    %cst_38 = arith.constant 0.000000e+00 : f32
    %81 = vector.broadcast %cst_38 : f32 to vector<16x128xf32>
    %82 = vector.extract_strided_slice %80 {offsets = [0, 0, 0], sizes = [4, 4, 64], strides = [1, 1, 1]} : vector<6x6x64xbf16> to vector<4x4x64xbf16>
    %83 = vector.shape_cast %82 : vector<4x4x64xbf16> to vector<16x64xbf16>
    %c0_39 = arith.constant 0 : index
    %c0_40 = arith.constant 0 : index
    %c0_41 = arith.constant 0 : index
    %84 = vector.load %arg4[%c0_39, %c0_40, %c0_41] : memref<9x64x128xbf16, #tpu.memory_space<vmem>>, vector<1x64x128xbf16>
    %85 = vector.shape_cast %84 : vector<1x64x128xbf16> to vector<64x128xbf16>
    %cst_42 = arith.constant dense<0.000000e+00> : vector<16x128xf32>
    %86 = tpu.matmul %83, %85, %cst_42 {dimension_numbers = #tpu.dot_dimension_numbers<[1], [0], [0], [1], [0, 0, 1, 1], [], []>} : vector<16x64xbf16>, vector<64x128xbf16>, vector<16x128xf32> -> vector<16x128xf32>
    %87 = arith.addf %81, %86 : vector<16x128xf32>
    %88 = vector.extract_strided_slice %80 {offsets = [0, 1, 0], sizes = [4, 4, 64], strides = [1, 1, 1]} : vector<6x6x64xbf16> to vector<4x4x64xbf16>
    %89 = vector.shape_cast %88 : vector<4x4x64xbf16> to vector<16x64xbf16>
    %c1_43 = arith.constant 1 : index
    %c0_44 = arith.constant 0 : index
    %c0_45 = arith.constant 0 : index
    %90 = vector.load %arg4[%c1_43, %c0_44, %c0_45] : memref<9x64x128xbf16, #tpu.memory_space<vmem>>, vector<1x64x128xbf16>
    %91 = vector.shape_cast %90 : vector<1x64x128xbf16> to vector<64x128xbf16>
    %cst_46 = arith.constant dense<0.000000e+00> : vector<16x128xf32>
    %92 = tpu.matmul %89, %91, %cst_46 {dimension_numbers = #tpu.dot_dimension_numbers<[1], [0], [0], [1], [0, 0, 1, 1], [], []>} : vector<16x64xbf16>, vector<64x128xbf16>, vector<16x128xf32> -> vector<16x128xf32>
    %93 = arith.addf %87, %92 : vector<16x128xf32>
    %94 = vector.extract_strided_slice %80 {offsets = [0, 2, 0], sizes = [4, 4, 64], strides = [1, 1, 1]} : vector<6x6x64xbf16> to vector<4x4x64xbf16>
    %95 = vector.shape_cast %94 : vector<4x4x64xbf16> to vector<16x64xbf16>
    %c2_47 = arith.constant 2 : index
    %c0_48 = arith.constant 0 : index
    %c0_49 = arith.constant 0 : index
    %96 = vector.load %arg4[%c2_47, %c0_48, %c0_49] : memref<9x64x128xbf16, #tpu.memory_space<vmem>>, vector<1x64x128xbf16>
    %97 = vector.shape_cast %96 : vector<1x64x128xbf16> to vector<64x128xbf16>
    %cst_50 = arith.constant dense<0.000000e+00> : vector<16x128xf32>
    %98 = tpu.matmul %95, %97, %cst_50 {dimension_numbers = #tpu.dot_dimension_numbers<[1], [0], [0], [1], [0, 0, 1, 1], [], []>} : vector<16x64xbf16>, vector<64x128xbf16>, vector<16x128xf32> -> vector<16x128xf32>
    %99 = arith.addf %93, %98 : vector<16x128xf32>
    %100 = vector.extract_strided_slice %80 {offsets = [1, 0, 0], sizes = [4, 4, 64], strides = [1, 1, 1]} : vector<6x6x64xbf16> to vector<4x4x64xbf16>
    %101 = vector.shape_cast %100 : vector<4x4x64xbf16> to vector<16x64xbf16>
    %c3_51 = arith.constant 3 : index
    %c0_52 = arith.constant 0 : index
    %c0_53 = arith.constant 0 : index
    %102 = vector.load %arg4[%c3_51, %c0_52, %c0_53] : memref<9x64x128xbf16, #tpu.memory_space<vmem>>, vector<1x64x128xbf16>
    %103 = vector.shape_cast %102 : vector<1x64x128xbf16> to vector<64x128xbf16>
    %cst_54 = arith.constant dense<0.000000e+00> : vector<16x128xf32>
    %104 = tpu.matmul %101, %103, %cst_54 {dimension_numbers = #tpu.dot_dimension_numbers<[1], [0], [0], [1], [0, 0, 1, 1], [], []>} : vector<16x64xbf16>, vector<64x128xbf16>, vector<16x128xf32> -> vector<16x128xf32>
    %105 = arith.addf %99, %104 : vector<16x128xf32>
    %106 = vector.extract_strided_slice %80 {offsets = [1, 1, 0], sizes = [4, 4, 64], strides = [1, 1, 1]} : vector<6x6x64xbf16> to vector<4x4x64xbf16>
    %107 = vector.shape_cast %106 : vector<4x4x64xbf16> to vector<16x64xbf16>
    %c4_55 = arith.constant 4 : index
    %c0_56 = arith.constant 0 : index
    %c0_57 = arith.constant 0 : index
    %108 = vector.load %arg4[%c4_55, %c0_56, %c0_57] : memref<9x64x128xbf16, #tpu.memory_space<vmem>>, vector<1x64x128xbf16>
    %109 = vector.shape_cast %108 : vector<1x64x128xbf16> to vector<64x128xbf16>
    %cst_58 = arith.constant dense<0.000000e+00> : vector<16x128xf32>
    %110 = tpu.matmul %107, %109, %cst_58 {dimension_numbers = #tpu.dot_dimension_numbers<[1], [0], [0], [1], [0, 0, 1, 1], [], []>} : vector<16x64xbf16>, vector<64x128xbf16>, vector<16x128xf32> -> vector<16x128xf32>
    %111 = arith.addf %105, %110 : vector<16x128xf32>
    %112 = vector.extract_strided_slice %80 {offsets = [1, 2, 0], sizes = [4, 4, 64], strides = [1, 1, 1]} : vector<6x6x64xbf16> to vector<4x4x64xbf16>
    %113 = vector.shape_cast %112 : vector<4x4x64xbf16> to vector<16x64xbf16>
    %c5_59 = arith.constant 5 : index
    %c0_60 = arith.constant 0 : index
    %c0_61 = arith.constant 0 : index
    %114 = vector.load %arg4[%c5_59, %c0_60, %c0_61] : memref<9x64x128xbf16, #tpu.memory_space<vmem>>, vector<1x64x128xbf16>
    %115 = vector.shape_cast %114 : vector<1x64x128xbf16> to vector<64x128xbf16>
    %cst_62 = arith.constant dense<0.000000e+00> : vector<16x128xf32>
    %116 = tpu.matmul %113, %115, %cst_62 {dimension_numbers = #tpu.dot_dimension_numbers<[1], [0], [0], [1], [0, 0, 1, 1], [], []>} : vector<16x64xbf16>, vector<64x128xbf16>, vector<16x128xf32> -> vector<16x128xf32>
    %117 = arith.addf %111, %116 : vector<16x128xf32>
    %118 = vector.extract_strided_slice %80 {offsets = [2, 0, 0], sizes = [4, 4, 64], strides = [1, 1, 1]} : vector<6x6x64xbf16> to vector<4x4x64xbf16>
    %119 = vector.shape_cast %118 : vector<4x4x64xbf16> to vector<16x64xbf16>
    %c6_63 = arith.constant 6 : index
    %c0_64 = arith.constant 0 : index
    %c0_65 = arith.constant 0 : index
    %120 = vector.load %arg4[%c6_63, %c0_64, %c0_65] : memref<9x64x128xbf16, #tpu.memory_space<vmem>>, vector<1x64x128xbf16>
    %121 = vector.shape_cast %120 : vector<1x64x128xbf16> to vector<64x128xbf16>
    %cst_66 = arith.constant dense<0.000000e+00> : vector<16x128xf32>
    %122 = tpu.matmul %119, %121, %cst_66 {dimension_numbers = #tpu.dot_dimension_numbers<[1], [0], [0], [1], [0, 0, 1, 1], [], []>} : vector<16x64xbf16>, vector<64x128xbf16>, vector<16x128xf32> -> vector<16x128xf32>
    %123 = arith.addf %117, %122 : vector<16x128xf32>
    %124 = vector.extract_strided_slice %80 {offsets = [2, 1, 0], sizes = [4, 4, 64], strides = [1, 1, 1]} : vector<6x6x64xbf16> to vector<4x4x64xbf16>
    %125 = vector.shape_cast %124 : vector<4x4x64xbf16> to vector<16x64xbf16>
    %c7_67 = arith.constant 7 : index
    %c0_68 = arith.constant 0 : index
    %c0_69 = arith.constant 0 : index
    %126 = vector.load %arg4[%c7_67, %c0_68, %c0_69] : memref<9x64x128xbf16, #tpu.memory_space<vmem>>, vector<1x64x128xbf16>
    %127 = vector.shape_cast %126 : vector<1x64x128xbf16> to vector<64x128xbf16>
    %cst_70 = arith.constant dense<0.000000e+00> : vector<16x128xf32>
    %128 = tpu.matmul %125, %127, %cst_70 {dimension_numbers = #tpu.dot_dimension_numbers<[1], [0], [0], [1], [0, 0, 1, 1], [], []>} : vector<16x64xbf16>, vector<64x128xbf16>, vector<16x128xf32> -> vector<16x128xf32>
    %129 = arith.addf %123, %128 : vector<16x128xf32>
    %130 = vector.extract_strided_slice %80 {offsets = [2, 2, 0], sizes = [4, 4, 64], strides = [1, 1, 1]} : vector<6x6x64xbf16> to vector<4x4x64xbf16>
    %131 = vector.shape_cast %130 : vector<4x4x64xbf16> to vector<16x64xbf16>
    %c8_71 = arith.constant 8 : index
    %c0_72 = arith.constant 0 : index
    %c0_73 = arith.constant 0 : index
    %132 = vector.load %arg4[%c8_71, %c0_72, %c0_73] : memref<9x64x128xbf16, #tpu.memory_space<vmem>>, vector<1x64x128xbf16>
    %133 = vector.shape_cast %132 : vector<1x64x128xbf16> to vector<64x128xbf16>
    %cst_74 = arith.constant dense<0.000000e+00> : vector<16x128xf32>
    %134 = tpu.matmul %131, %133, %cst_74 {dimension_numbers = #tpu.dot_dimension_numbers<[1], [0], [0], [1], [0, 0, 1, 1], [], []>} : vector<16x64xbf16>, vector<64x128xbf16>, vector<16x128xf32> -> vector<16x128xf32>
    %135 = arith.addf %129, %134 : vector<16x128xf32>
    %c0_75 = arith.constant 0 : index
    %c0_76 = arith.constant 0 : index
    %136 = vector.load %arg5[%c0_75, %c0_76] : memref<1x128xf32, #tpu.memory_space<vmem>>, vector<1x128xf32>
    %137 = vector.broadcast %136 : vector<1x128xf32> to vector<16x128xf32>
    %138 = arith.addf %135, %137 : vector<16x128xf32>
    %cst_77 = arith.constant 0.000000e+00 : f32
    %139 = vector.broadcast %cst_77 : f32 to vector<16x128xf32>
    %140 = arith.maximumf %138, %139 : vector<16x128xf32>
    %141 = vector.shape_cast %140 : vector<16x128xf32> to vector<8x2x128xf32>
    %142 = vector.extract_strided_slice %141 {offsets = [0, 0, 0], sizes = [8, 1, 128], strides = [1, 1, 1]} : vector<8x2x128xf32> to vector<8x1x128xf32>
    %143 = vector.extract_strided_slice %141 {offsets = [0, 1, 0], sizes = [8, 1, 128], strides = [1, 1, 1]} : vector<8x2x128xf32> to vector<8x1x128xf32>
    %144 = arith.maximumf %142, %143 : vector<8x1x128xf32>
    %145 = vector.shape_cast %144 : vector<8x1x128xf32> to vector<2x2x2x128xf32>
    %146 = vector.extract_strided_slice %145 {offsets = [0, 0, 0, 0], sizes = [2, 1, 2, 128], strides = [1, 1, 1, 1]} : vector<2x2x2x128xf32> to vector<2x1x2x128xf32>
    %147 = vector.extract_strided_slice %145 {offsets = [0, 1, 0, 0], sizes = [2, 1, 2, 128], strides = [1, 1, 1, 1]} : vector<2x2x2x128xf32> to vector<2x1x2x128xf32>
    %148 = arith.maximumf %146, %147 : vector<2x1x2x128xf32>
    %149 = vector.shape_cast %148 : vector<2x1x2x128xf32> to vector<2x2x128xf32>
    %cst_78 = arith.constant 0.000000e+00 : f32
    %150 = vector.broadcast %cst_78 : f32 to vector<1x2x128xf32>
    %151 = tpu.concatenate %150, %149, %150 in 0 : vector<1x2x128xf32>, vector<2x2x128xf32>, vector<1x2x128xf32> -> vector<4x2x128xf32>
    %cst_79 = arith.constant 0.000000e+00 : f32
    %152 = vector.broadcast %cst_79 : f32 to vector<4x1x128xf32>
    %153 = tpu.concatenate %152, %151, %152 in 1 : vector<4x1x128xf32>, vector<4x2x128xf32>, vector<4x1x128xf32> -> vector<4x4x128xf32>
    %154 = arith.truncf %153 : vector<4x4x128xf32> to vector<4x4x128xbf16>
    %cst_80 = arith.constant 0.000000e+00 : f32
    %155 = vector.broadcast %cst_80 : f32 to vector<4x512xf32>
    %156 = vector.extract_strided_slice %154 {offsets = [0, 0, 0], sizes = [2, 2, 128], strides = [1, 1, 1]} : vector<4x4x128xbf16> to vector<2x2x128xbf16>
    %157 = vector.shape_cast %156 : vector<2x2x128xbf16> to vector<4x128xbf16>
    %c0_81 = arith.constant 0 : index
    %c0_82 = arith.constant 0 : index
    %c0_83 = arith.constant 0 : index
    %158 = vector.load %arg6[%c0_81, %c0_82, %c0_83] : memref<9x128x512xbf16, #tpu.memory_space<vmem>>, vector<1x128x512xbf16>
    %159 = vector.shape_cast %158 : vector<1x128x512xbf16> to vector<128x512xbf16>
    %cst_84 = arith.constant dense<0.000000e+00> : vector<4x512xf32>
    %160 = tpu.matmul %157, %159, %cst_84 {dimension_numbers = #tpu.dot_dimension_numbers<[1], [0], [0], [1], [0, 0, 1, 1], [], []>} : vector<4x128xbf16>, vector<128x512xbf16>, vector<4x512xf32> -> vector<4x512xf32>
    %161 = arith.addf %155, %160 : vector<4x512xf32>
    %162 = vector.extract_strided_slice %154 {offsets = [0, 1, 0], sizes = [2, 2, 128], strides = [1, 1, 1]} : vector<4x4x128xbf16> to vector<2x2x128xbf16>
    %163 = vector.shape_cast %162 : vector<2x2x128xbf16> to vector<4x128xbf16>
    %c1_85 = arith.constant 1 : index
    %c0_86 = arith.constant 0 : index
    %c0_87 = arith.constant 0 : index
    %164 = vector.load %arg6[%c1_85, %c0_86, %c0_87] : memref<9x128x512xbf16, #tpu.memory_space<vmem>>, vector<1x128x512xbf16>
    %165 = vector.shape_cast %164 : vector<1x128x512xbf16> to vector<128x512xbf16>
    %cst_88 = arith.constant dense<0.000000e+00> : vector<4x512xf32>
    %166 = tpu.matmul %163, %165, %cst_88 {dimension_numbers = #tpu.dot_dimension_numbers<[1], [0], [0], [1], [0, 0, 1, 1], [], []>} : vector<4x128xbf16>, vector<128x512xbf16>, vector<4x512xf32> -> vector<4x512xf32>
    %167 = arith.addf %161, %166 : vector<4x512xf32>
    %168 = vector.extract_strided_slice %154 {offsets = [0, 2, 0], sizes = [2, 2, 128], strides = [1, 1, 1]} : vector<4x4x128xbf16> to vector<2x2x128xbf16>
    %169 = vector.shape_cast %168 : vector<2x2x128xbf16> to vector<4x128xbf16>
    %c2_89 = arith.constant 2 : index
    %c0_90 = arith.constant 0 : index
    %c0_91 = arith.constant 0 : index
    %170 = vector.load %arg6[%c2_89, %c0_90, %c0_91] : memref<9x128x512xbf16, #tpu.memory_space<vmem>>, vector<1x128x512xbf16>
    %171 = vector.shape_cast %170 : vector<1x128x512xbf16> to vector<128x512xbf16>
    %cst_92 = arith.constant dense<0.000000e+00> : vector<4x512xf32>
    %172 = tpu.matmul %169, %171, %cst_92 {dimension_numbers = #tpu.dot_dimension_numbers<[1], [0], [0], [1], [0, 0, 1, 1], [], []>} : vector<4x128xbf16>, vector<128x512xbf16>, vector<4x512xf32> -> vector<4x512xf32>
    %173 = arith.addf %167, %172 : vector<4x512xf32>
    %174 = vector.extract_strided_slice %154 {offsets = [1, 0, 0], sizes = [2, 2, 128], strides = [1, 1, 1]} : vector<4x4x128xbf16> to vector<2x2x128xbf16>
    %175 = vector.shape_cast %174 : vector<2x2x128xbf16> to vector<4x128xbf16>
    %c3_93 = arith.constant 3 : index
    %c0_94 = arith.constant 0 : index
    %c0_95 = arith.constant 0 : index
    %176 = vector.load %arg6[%c3_93, %c0_94, %c0_95] : memref<9x128x512xbf16, #tpu.memory_space<vmem>>, vector<1x128x512xbf16>
    %177 = vector.shape_cast %176 : vector<1x128x512xbf16> to vector<128x512xbf16>
    %cst_96 = arith.constant dense<0.000000e+00> : vector<4x512xf32>
    %178 = tpu.matmul %175, %177, %cst_96 {dimension_numbers = #tpu.dot_dimension_numbers<[1], [0], [0], [1], [0, 0, 1, 1], [], []>} : vector<4x128xbf16>, vector<128x512xbf16>, vector<4x512xf32> -> vector<4x512xf32>
    %179 = arith.addf %173, %178 : vector<4x512xf32>
    %180 = vector.extract_strided_slice %154 {offsets = [1, 1, 0], sizes = [2, 2, 128], strides = [1, 1, 1]} : vector<4x4x128xbf16> to vector<2x2x128xbf16>
    %181 = vector.shape_cast %180 : vector<2x2x128xbf16> to vector<4x128xbf16>
    %c4_97 = arith.constant 4 : index
    %c0_98 = arith.constant 0 : index
    %c0_99 = arith.constant 0 : index
    %182 = vector.load %arg6[%c4_97, %c0_98, %c0_99] : memref<9x128x512xbf16, #tpu.memory_space<vmem>>, vector<1x128x512xbf16>
    %183 = vector.shape_cast %182 : vector<1x128x512xbf16> to vector<128x512xbf16>
    %cst_100 = arith.constant dense<0.000000e+00> : vector<4x512xf32>
    %184 = tpu.matmul %181, %183, %cst_100 {dimension_numbers = #tpu.dot_dimension_numbers<[1], [0], [0], [1], [0, 0, 1, 1], [], []>} : vector<4x128xbf16>, vector<128x512xbf16>, vector<4x512xf32> -> vector<4x512xf32>
    %185 = arith.addf %179, %184 : vector<4x512xf32>
    %186 = vector.extract_strided_slice %154 {offsets = [1, 2, 0], sizes = [2, 2, 128], strides = [1, 1, 1]} : vector<4x4x128xbf16> to vector<2x2x128xbf16>
    %187 = vector.shape_cast %186 : vector<2x2x128xbf16> to vector<4x128xbf16>
    %c5_101 = arith.constant 5 : index
    %c0_102 = arith.constant 0 : index
    %c0_103 = arith.constant 0 : index
    %188 = vector.load %arg6[%c5_101, %c0_102, %c0_103] : memref<9x128x512xbf16, #tpu.memory_space<vmem>>, vector<1x128x512xbf16>
    %189 = vector.shape_cast %188 : vector<1x128x512xbf16> to vector<128x512xbf16>
    %cst_104 = arith.constant dense<0.000000e+00> : vector<4x512xf32>
    %190 = tpu.matmul %187, %189, %cst_104 {dimension_numbers = #tpu.dot_dimension_numbers<[1], [0], [0], [1], [0, 0, 1, 1], [], []>} : vector<4x128xbf16>, vector<128x512xbf16>, vector<4x512xf32> -> vector<4x512xf32>
    %191 = arith.addf %185, %190 : vector<4x512xf32>
    %192 = vector.extract_strided_slice %154 {offsets = [2, 0, 0], sizes = [2, 2, 128], strides = [1, 1, 1]} : vector<4x4x128xbf16> to vector<2x2x128xbf16>
    %193 = vector.shape_cast %192 : vector<2x2x128xbf16> to vector<4x128xbf16>
    %c6_105 = arith.constant 6 : index
    %c0_106 = arith.constant 0 : index
    %c0_107 = arith.constant 0 : index
    %194 = vector.load %arg6[%c6_105, %c0_106, %c0_107] : memref<9x128x512xbf16, #tpu.memory_space<vmem>>, vector<1x128x512xbf16>
    %195 = vector.shape_cast %194 : vector<1x128x512xbf16> to vector<128x512xbf16>
    %cst_108 = arith.constant dense<0.000000e+00> : vector<4x512xf32>
    %196 = tpu.matmul %193, %195, %cst_108 {dimension_numbers = #tpu.dot_dimension_numbers<[1], [0], [0], [1], [0, 0, 1, 1], [], []>} : vector<4x128xbf16>, vector<128x512xbf16>, vector<4x512xf32> -> vector<4x512xf32>
    %197 = arith.addf %191, %196 : vector<4x512xf32>
    %198 = vector.extract_strided_slice %154 {offsets = [2, 1, 0], sizes = [2, 2, 128], strides = [1, 1, 1]} : vector<4x4x128xbf16> to vector<2x2x128xbf16>
    %199 = vector.shape_cast %198 : vector<2x2x128xbf16> to vector<4x128xbf16>
    %c7_109 = arith.constant 7 : index
    %c0_110 = arith.constant 0 : index
    %c0_111 = arith.constant 0 : index
    %200 = vector.load %arg6[%c7_109, %c0_110, %c0_111] : memref<9x128x512xbf16, #tpu.memory_space<vmem>>, vector<1x128x512xbf16>
    %201 = vector.shape_cast %200 : vector<1x128x512xbf16> to vector<128x512xbf16>
    %cst_112 = arith.constant dense<0.000000e+00> : vector<4x512xf32>
    %202 = tpu.matmul %199, %201, %cst_112 {dimension_numbers = #tpu.dot_dimension_numbers<[1], [0], [0], [1], [0, 0, 1, 1], [], []>} : vector<4x128xbf16>, vector<128x512xbf16>, vector<4x512xf32> -> vector<4x512xf32>
    %203 = arith.addf %197, %202 : vector<4x512xf32>
    %204 = vector.extract_strided_slice %154 {offsets = [2, 2, 0], sizes = [2, 2, 128], strides = [1, 1, 1]} : vector<4x4x128xbf16> to vector<2x2x128xbf16>
    %205 = vector.shape_cast %204 : vector<2x2x128xbf16> to vector<4x128xbf16>
    %c8_113 = arith.constant 8 : index
    %c0_114 = arith.constant 0 : index
    %c0_115 = arith.constant 0 : index
    %206 = vector.load %arg6[%c8_113, %c0_114, %c0_115] : memref<9x128x512xbf16, #tpu.memory_space<vmem>>, vector<1x128x512xbf16>
    %207 = vector.shape_cast %206 : vector<1x128x512xbf16> to vector<128x512xbf16>
    %cst_116 = arith.constant dense<0.000000e+00> : vector<4x512xf32>
    %208 = tpu.matmul %205, %207, %cst_116 {dimension_numbers = #tpu.dot_dimension_numbers<[1], [0], [0], [1], [0, 0, 1, 1], [], []>} : vector<4x128xbf16>, vector<128x512xbf16>, vector<4x512xf32> -> vector<4x512xf32>
    %209 = arith.addf %203, %208 : vector<4x512xf32>
    %c0_117 = arith.constant 0 : index
    %c0_118 = arith.constant 0 : index
    %210 = vector.load %arg7[%c0_117, %c0_118] : memref<1x512xf32, #tpu.memory_space<vmem>>, vector<1x512xf32>
    %211 = vector.broadcast %210 : vector<1x512xf32> to vector<4x512xf32>
    %212 = arith.addf %209, %211 : vector<4x512xf32>
    %cst_119 = arith.constant 0.000000e+00 : f32
    %213 = vector.broadcast %cst_119 : f32 to vector<4x512xf32>
    %214 = arith.maximumf %212, %213 : vector<4x512xf32>
    %215 = vector.shape_cast %214 : vector<4x512xf32> to vector<2x2x512xf32>
    %216 = vector.extract_strided_slice %215 {offsets = [0, 0, 0], sizes = [2, 1, 512], strides = [1, 1, 1]} : vector<2x2x512xf32> to vector<2x1x512xf32>
    %217 = vector.extract_strided_slice %215 {offsets = [0, 1, 0], sizes = [2, 1, 512], strides = [1, 1, 1]} : vector<2x2x512xf32> to vector<2x1x512xf32>
    %218 = arith.maximumf %216, %217 : vector<2x1x512xf32>
    %219 = vector.shape_cast %218 : vector<2x1x512xf32> to vector<1x2x1x512xf32>
    %220 = vector.extract_strided_slice %219 {offsets = [0, 0, 0, 0], sizes = [1, 1, 1, 512], strides = [1, 1, 1, 1]} : vector<1x2x1x512xf32> to vector<1x1x1x512xf32>
    %221 = vector.extract_strided_slice %219 {offsets = [0, 1, 0, 0], sizes = [1, 1, 1, 512], strides = [1, 1, 1, 1]} : vector<1x2x1x512xf32> to vector<1x1x1x512xf32>
    %222 = arith.maximumf %220, %221 : vector<1x1x1x512xf32>
    %223 = vector.shape_cast %222 : vector<1x1x1x512xf32> to vector<1x1x512xf32>
    %224 = vector.shape_cast %223 : vector<1x1x512xf32> to vector<1x512xf32>
    %225 = arith.truncf %224 : vector<1x512xf32> to vector<1x512xbf16>
    %c0_120 = arith.constant 0 : index
    %c0_121 = arith.constant 0 : index
    %226 = vector.load %arg8[%c0_120, %c0_121] : memref<512x512xbf16, #tpu.memory_space<vmem>>, vector<512x512xbf16>
    %cst_122 = arith.constant dense<0.000000e+00> : vector<1x512xf32>
    %227 = tpu.matmul %225, %226, %cst_122 {dimension_numbers = #tpu.dot_dimension_numbers<[1], [0], [0], [1], [0, 0, 1, 1], [], []>} : vector<1x512xbf16>, vector<512x512xbf16>, vector<1x512xf32> -> vector<1x512xf32>
    %c0_123 = arith.constant 0 : index
    %c0_124 = arith.constant 0 : index
    %228 = vector.load %arg9[%c0_123, %c0_124] : memref<1x512xf32, #tpu.memory_space<vmem>>, vector<1x512xf32>
    %229 = arith.addf %227, %228 : vector<1x512xf32>
    %cst_125 = arith.constant 0.000000e+00 : f32
    %230 = vector.broadcast %cst_125 : f32 to vector<1x512xf32>
    %231 = arith.maximumf %229, %230 : vector<1x512xf32>
    %232 = arith.truncf %231 : vector<1x512xf32> to vector<1x512xbf16>
    %c0_126 = arith.constant 0 : index
    %c0_127 = arith.constant 0 : index
    %233 = vector.load %arg10[%c0_126, %c0_127] : memref<512x512xbf16, #tpu.memory_space<vmem>>, vector<512x512xbf16>
    %cst_128 = arith.constant dense<0.000000e+00> : vector<1x512xf32>
    %234 = tpu.matmul %232, %233, %cst_128 {dimension_numbers = #tpu.dot_dimension_numbers<[1], [0], [0], [1], [0, 0, 1, 1], [], []>} : vector<1x512xbf16>, vector<512x512xbf16>, vector<1x512xf32> -> vector<1x512xf32>
    %c0_129 = arith.constant 0 : index
    %c0_130 = arith.constant 0 : index
    %235 = vector.load %arg11[%c0_129, %c0_130] : memref<1x512xf32, #tpu.memory_space<vmem>>, vector<1x512xf32>
    %236 = arith.addf %234, %235 : vector<1x512xf32>
    %cst_131 = arith.constant 0.000000e+00 : f32
    %237 = vector.broadcast %cst_131 : f32 to vector<1x512xf32>
    %238 = arith.maximumf %236, %237 : vector<1x512xf32>
    %239 = arith.truncf %238 : vector<1x512xf32> to vector<1x512xbf16>
    %c0_132 = arith.constant 0 : index
    %c0_133 = arith.constant 0 : index
    %240 = vector.load %arg12[%c0_132, %c0_133] : memref<512x128xbf16, #tpu.memory_space<vmem>>, vector<512x128xbf16>
    %cst_134 = arith.constant dense<0.000000e+00> : vector<1x128xf32>
    %241 = tpu.matmul %239, %240, %cst_134 {dimension_numbers = #tpu.dot_dimension_numbers<[1], [0], [0], [1], [0, 0, 1, 1], [], []>} : vector<1x512xbf16>, vector<512x128xbf16>, vector<1x128xf32> -> vector<1x128xf32>
    %c0_135 = arith.constant 0 : index
    %c0_136 = arith.constant 0 : index
    %242 = vector.load %arg13[%c0_135, %c0_136] : memref<1x128xf32, #tpu.memory_space<vmem>>, vector<1x128xf32>
    %243 = arith.addf %241, %242 : vector<1x128xf32>
    %244 = arith.negf %243 : vector<1x128xf32>
    %245 = math.exp %244 : vector<1x128xf32>
    %cst_137 = arith.constant 1.000000e+00 : f32
    %246 = vector.broadcast %cst_137 : f32 to vector<1x128xf32>
    %247 = arith.addf %246, %245 : vector<1x128xf32>
    %248 = arith.divf %246, %247 : vector<1x128xf32>
    %249 = arith.truncf %248 : vector<1x128xf32> to vector<1x128xbf16>
    %c0_138 = arith.constant 0 : index
    %c0_139 = arith.constant 0 : index
    %250 = vector.load %arg14[%c0_138, %c0_139] : memref<128x128xbf16, #tpu.memory_space<vmem>>, vector<128x128xbf16>
    %cst_140 = arith.constant dense<0.000000e+00> : vector<1x128xf32>
    %251 = tpu.matmul %249, %250, %cst_140 {dimension_numbers = #tpu.dot_dimension_numbers<[1], [0], [0], [1], [0, 0, 1, 1], [], []>} : vector<1x128xbf16>, vector<128x128xbf16>, vector<1x128xf32> -> vector<1x128xf32>
    %c0_141 = arith.constant 0 : index
    %c0_142 = arith.constant 0 : index
    %252 = vector.load %arg15[%c0_141, %c0_142] : memref<1x128xf32, #tpu.memory_space<vmem>>, vector<1x128xf32>
    %253 = arith.addf %251, %252 : vector<1x128xf32>
    %c0_143 = arith.constant 0 : index
    %c0_144 = arith.constant 0 : index
    %c0_145 = arith.constant 0 : index
    %254 = vector.load %arg16[%c0_143, %c0_144, %c0_145] : memref<1x1x128xf32, #tpu.memory_space<vmem>>, vector<1x1x128xf32>
    %255 = vector.shape_cast %254 : vector<1x1x128xf32> to vector<1x128xf32>
    %256 = vector.shape_cast %253 : vector<1x128xf32> to vector<1x1x128xf32>
    tpu.vector_store %arg16[%c0_143, %c0_144, %c0_145], %256 {strides = array<i32>} : memref<1x1x128xf32, #tpu.memory_space<vmem>>, vector<1x1x128xf32>,
    return
  }
  func.func @transform_0(%arg0: i32) -> (i32, i32, i32, i32) {
    %c0_i32 = arith.constant 0 : i32
    %c0_i32_0 = arith.constant 0 : i32
    %c0_i32_1 = arith.constant 0 : i32
    %c0_i32_2 = arith.constant 0 : i32
    return %arg0, %c0_i32, %c0_i32_0, %c0_i32_1 : i32, i32, i32, i32
  }
  func.func @transform_1(%arg0: i32) -> (i32, i32, i32) {
    %c0_i32 = arith.constant 0 : i32
    %c0_i32_0 = arith.constant 0 : i32
    %c0_i32_1 = arith.constant 0 : i32
    %c0_i32_2 = arith.constant 0 : i32
    return %c0_i32, %c0_i32_0, %c0_i32_1 : i32, i32, i32
  }
  func.func @transform_2(%arg0: i32) -> (i32, i32) {
    %c0_i32 = arith.constant 0 : i32
    %c0_i32_0 = arith.constant 0 : i32
    %c0_i32_1 = arith.constant 0 : i32
    return %c0_i32, %c0_i32_0 : i32, i32
  }
  func.func @transform_3(%arg0: i32) -> (i32, i32, i32) {
    %c0_i32 = arith.constant 0 : i32
    %c0_i32_0 = arith.constant 0 : i32
    %c0_i32_1 = arith.constant 0 : i32
    %c0_i32_2 = arith.constant 0 : i32
    return %c0_i32, %c0_i32_0, %c0_i32_1 : i32, i32, i32
  }
  func.func @transform_4(%arg0: i32) -> (i32, i32) {
    %c0_i32 = arith.constant 0 : i32
    %c0_i32_0 = arith.constant 0 : i32
    %c0_i32_1 = arith.constant 0 : i32
    return %c0_i32, %c0_i32_0 : i32, i32
  }
  func.func @transform_5(%arg0: i32) -> (i32, i32, i32) {
    %c0_i32 = arith.constant 0 : i32
    %c0_i32_0 = arith.constant 0 : i32
    %c0_i32_1 = arith.constant 0 : i32
    %c0_i32_2 = arith.constant 0 : i32
    return %c0_i32, %c0_i32_0, %c0_i32_1 : i32, i32, i32
  }
  func.func @transform_6(%arg0: i32) -> (i32, i32) {
    %c0_i32 = arith.constant 0 : i32
    %c0_i32_0 = arith.constant 0 : i32
    %c0_i32_1 = arith.constant 0 : i32
    return %c0_i32, %c0_i32_0 : i32, i32
  }
  func.func @transform_7(%arg0: i32) -> (i32, i32) {
    %c0_i32 = arith.constant 0 : i32
    %c0_i32_0 = arith.constant 0 : i32
    %c0_i32_1 = arith.constant 0 : i32
    return %c0_i32, %c0_i32_0 : i32, i32
  }
  func.func @transform_8(%arg0: i32) -> (i32, i32) {
    %c0_i32 = arith.constant 0 : i32
    %c0_i32_0 = arith.constant 0 : i32
    %c0_i32_1 = arith.constant 0 : i32
    return %c0_i32, %c0_i32_0 : i32, i32
  }
  func.func @transform_9(%arg0: i32) -> (i32, i32) {
    %c0_i32 = arith.constant 0 : i32
    %c0_i32_0 = arith.constant 0 : i32
    %c0_i32_1 = arith.constant 0 : i32
    return %c0_i32, %c0_i32_0 : i32, i32
  }
  func.func @transform_10(%arg0: i32) -> (i32, i32) {
    %c0_i32 = arith.constant 0 : i32
    %c0_i32_0 = arith.constant 0 : i32
    %c0_i32_1 = arith.constant 0 : i32
    return %c0_i32, %c0_i32_0 : i32, i32
  }
  func.func @transform_11(%arg0: i32) -> (i32, i32) {
    %c0_i32 = arith.constant 0 : i32
    %c0_i32_0 = arith.constant 0 : i32
    %c0_i32_1 = arith.constant 0 : i32
    return %c0_i32, %c0_i32_0 : i32, i32
  }
  func.func @transform_12(%arg0: i32) -> (i32, i32) {
    %c0_i32 = arith.constant 0 : i32
    %c0_i32_0 = arith.constant 0 : i32
    %c0_i32_1 = arith.constant 0 : i32
    return %c0_i32, %c0_i32_0 : i32, i32
  }
  func.func @transform_13(%arg0: i32) -> (i32, i32) {
    %c0_i32 = arith.constant 0 : i32
    %c0_i32_0 = arith.constant 0 : i32
    %c0_i32_1 = arith.constant 0 : i32
    return %c0_i32, %c0_i32_0 : i32, i32
  }
  func.func @transform_14(%arg0: i32) -> (i32, i32) {
    %c0_i32 = arith.constant 0 : i32
    %c0_i32_0 = arith.constant 0 : i32
    %c0_i32_1 = arith.constant 0 : i32
    return %c0_i32, %c0_i32_0 : i32, i32
  }
  func.func @transform_15(%arg0: i32) -> (i32, i32, i32) {
    %c0_i32 = arith.constant 0 : i32
    %c0_i32_0 = arith.constant 0 : i32
    %c0_i32_1 = arith.constant 0 : i32
    return %arg0, %c0_i32, %c0_i32_0 : i32, i32, i32
  }
}

</mosaic_0001>

<llo_original>
// kernel: _lambda_.1
$region0: #{_lambda_.1}
  #allocation0 [shape = 'u32[]', space=smem, size = 0x4, offset = 0x4, fixed_abs, tag = 'smem constant byte address 0x4 - core index']
  #allocation1 [shape = 'u32[144,128]{1,0:T(1,128)}', space=vmem, size = 0x12000, scoped, tag = 'internal scratch']
  %s0 = inlined_call_operand.vmem [shape: f32[2,8,8,3], index: 0, kind: input, shape index: {}]
  %s1 = inlined_call_operand.hbm [shape: bf16[9,3,64], index: 1, kind: input, shape index: {}]
  %s2 = inlined_call_operand.vmem [shape: f32[1,64], index: 2, kind: input, shape index: {}]
  %s3 = inlined_call_operand.hbm [shape: bf16[9,64,128], index: 3, kind: input, shape index: {}]
  %s4 = inlined_call_operand.vmem [shape: f32[1,128], index: 4, kind: input, shape index: {}, may-alias: {4,12,14}]
  %s5 = inlined_call_operand.hbm [shape: bf16[9,128,512], index: 5, kind: input, shape index: {}]
  %s6 = inlined_call_operand.vmem [shape: f32[1,512], index: 6, kind: input, shape index: {}, may-alias: {6,8,10}]
  %s7 = inlined_call_operand.hbm [shape: bf16[512,512], index: 7, kind: input, shape index: {}]
  %s8 = inlined_call_operand.vmem [shape: f32[1,512], index: 8, kind: input, shape index: {}, may-alias: {6,8,10}]
  %s9 = inlined_call_operand.hbm [shape: bf16[512,512], index: 9, kind: input, shape index: {}]
  %s10 = inlined_call_operand.vmem [shape: f32[1,512], index: 10, kind: input, shape index: {}, may-alias: {6,8,10}]
  %s11 = inlined_call_operand.hbm [shape: bf16[512,128], index: 11, kind: input, shape index: {}]
  %s12 = inlined_call_operand.vmem [shape: f32[1,128], index: 12, kind: input, shape index: {}, may-alias: {4,12,14}]
  %s13 = inlined_call_operand.hbm [shape: bf16[128,128], index: 13, kind: input, shape index: {}]
  %s14 = inlined_call_operand.vmem [shape: f32[1,128], index: 14, kind: input, shape index: {}, may-alias: {4,12,14}]
  %s15 = inlined_call_operand.hbm [shape: f32[2,1,128], index: 15, kind: output, shape index: {}]
  %s16 = sld [smem:[#allocation0]]
  $region121: #{_lambda_.1} parent=0
    _
  %s18 = ssub.s32 1, %s16
  %s19 = scalar_select 0, %s18, %s16
  $region1: #{_lambda_.1} parent=0
    #allocation2 [shape = 'u8[9216]{0}', space=vmem, size = 0x2400, scoped, tag = 'input window, operand 1, single buffered']
    #allocation3 [shape = 's32[2]{0}', space=sflag, size = 0x8, scoped, tag = 'scoped memory for _lambda_.1']
    #allocation4 [shape = 's32[2]{0}', space=sflag, size = 0x8, scoped, tag = 'scoped memory for _lambda_.1']
    #allocation5 [shape = 'u8[147456]{0}', space=vmem, size = 0x24000, scoped, tag = 'input window, operand 3, single buffered']
    #allocation6 [shape = 's32[1]{0}', space=sflag, size = 0x4, scoped, tag = 'scoped memory for _lambda_.1']
    #allocation7 [shape = 'u8[1179648]{0}', space=vmem, size = 0x120000, scoped, tag = 'input window, operand 5, single buffered']
    #allocation8 [shape = 'u8[524288]{0}', space=vmem, size = 0x80000, scoped, tag = 'input window, operand 7, single buffered']
    #allocation9 [shape = 's32[1]{0}', space=sflag, size = 0x4, scoped, tag = 'scoped memory for _lambda_.1']
    #allocation10 [shape = 'u8[524288]{0}', space=vmem, size = 0x80000, scoped, tag = 'input window, operand 9, single buffered']
    #allocation11 [shape = 'u8[131072]{0}', space=vmem, size = 0x20000, scoped, tag = 'input window, operand 11, single buffered']
    #allocation12 [shape = 's32[1]{0}', space=sflag, size = 0x4, scoped, tag = 'scoped memory for _lambda_.1']
    #allocation13 [shape = 'u8[32768]{0}', space=vmem, size = 0x8000, scoped, tag = 'input window, operand 13, single buffered']
    #allocation14 [shape = 'u8[1024]{0}', space=vmem, size = 0x400, scoped, tag = 'output window, operand 0']
    %20 = vsyncpa [#allocation3], 0
    %21 = vsyncpa [#allocation6], 0
    %22 = vsyncpa [#allocation9], 0
    %23 = vsyncpa [#allocation12], 0
    %24 = vsyncpa [#allocation4], 0
    %s25 = scalar_lea.sflag [#allocation4], 1
    %26 = vsyncpa %s25, 0
    loop: start=0, step=1, limit=4
    $region2: #{_lambda_.1} parent=1 // loop_pre_header
      _
    $region3: #{_lambda_.1} parent=1 // loop_header
      %s28 = sphi 0, %s32
      %p29 = scmp.ge.s32.totalorder %s28, 4
      %s38 = sphi 0, %s40
      %s41 = sphi 0, %s38
      %s42 = sphi 0, %s41
      %s58 = sphi 0, %s42
      %s62 = sphi 0, %s62
      %s64 = sphi 0, %s62
      %s65 = sphi 0, %s64
      %s79 = sphi 0, %s65
      %s83 = sphi 0, %s83
      %s85 = sphi 0, %s83
      %s86 = sphi 0, %s85
      %s100 = sphi 0, %s86
      %s104 = sphi 0, %s104
      %s106 = sphi 0, %s104
      %s107 = sphi 0, %s106
      %s121 = sphi 0, %s107
      %s125 = sphi 0, %s125
      %s127 = sphi 0, %s125
      %s128 = sphi 0, %s127
      %s142 = sphi 0, %s128
      %s146 = sphi 0, %s146
      %s148 = sphi 0, %s146
      %s149 = sphi 0, %s148
      %s163 = sphi 0, %s149
      %s167 = sphi 0, %s167
      %s169 = sphi 0, %s167
      %s170 = sphi 0, %s169
      %s184 = sphi 0, %s170
      %s188 = sphi 0, %s188
      %s190 = sphi 0, %s188
      %s191 = sphi 0, %s190
      %s205 = sphi 0, %s191
      %s209 = sphi 0, %s209
      %s211 = sphi 0, %s209
      %s212 = sphi 0, %s211
      %s226 = sphi 0, %s212
      %s230 = sphi 0, %s230
      %s232 = sphi 0, %s230
      %s233 = sphi 0, %s232
      %s247 = sphi 0, %s233
      %s251 = sphi 0, %s251
      %s253 = sphi 0, %s251
      %s254 = sphi 0, %s253
      %s268 = sphi 0, %s254
      %s272 = sphi 0, %s272
      %s274 = sphi 0, %s272
      %s275 = sphi 0, %s274
      %s289 = sphi 0, %s275
      %s293 = sphi 0, %s293
      %s295 = sphi 0, %s293
      %s296 = sphi 0, %s295
      %s310 = sphi 0, %s296
      %s314 = sphi 0, %s314
      %s316 = sphi 0, %s314
      %s317 = sphi 0, %s316
      %s331 = sphi 0, %s317
      %s335 = sphi 0, %s335
      %s337 = sphi 0, %s335
      %s338 = sphi 0, %s337
      %s352 = sphi 0, %s338
      %s358 = sphi 0, %s360
      %s361 = sphi 0, %s358
      %s362 = sphi 0, %s361
      %s378 = sphi 0, %s362
    $region4: #{_lambda_.1} parent=1 // loop_header_branch
      %31 = sbr.rel (%p29) target = $region8
    $region5: #{_lambda_.1} parent=1 // loop_body
      %s33 = ssub.s32 %s28, 1
      %s34 = ssub.s32 %s28, 2
      %s35 = sadd.s32 %s28, 1
      %s36 = ssub.s32 %s28, %s35
      %p37 = scmp.eq.s32.totalorder %s36, 0
      %s39 = sadd.s32 %s38, 1
      %s40 = scalar_select %p37, %s38, %s39
      %p43 = pneg %p37
      %p44 = scmp.eq.s32.totalorder %s28, 1
      %p45 = por %p43, %p44
      %p46 = scmp.ne.s32.totalorder %s38, %s41
      %p47 = scmp.eq.s32.totalorder %s28, 0
      %p48 = por %p46, %p47
      %p49 = scmp.ne.s32.totalorder %s38, %s41
      %p50 = scmp.eq.s32.totalorder %s33, 1
      %p51 = por %p49, %p50
      %p52 = scmp.ne.s32.totalorder %s41, %s42
      %p53 = scmp.eq.s32.totalorder %s33, 0
      %p54 = por %p52, %p53
      %p55 = scmp.ne.s32.totalorder %s41, %s42
      %p56 = scmp.eq.s32.totalorder %s34, 1
      %p57 = por %p55, %p56
      %p59 = scmp.ne.s32.totalorder %s42, %s58
      %p60 = scmp.eq.s32.totalorder %s34, 0
      %p61 = por %p59, %p60
      %s63 = sadd.s32 %s62, 1
      %p66 = scmp.eq.s32.totalorder %s28, 1
      %p67 = scmp.ne.s32.totalorder %s62, %s64
      %p68 = scmp.eq.s32.totalorder %s28, 0
      %p69 = por %p67, %p68
      %p70 = scmp.ne.s32.totalorder %s62, %s64
      %p71 = scmp.eq.s32.totalorder %s33, 1
      %p72 = por %p70, %p71
      %p73 = scmp.ne.s32.totalorder %s64, %s65
      %p74 = scmp.eq.s32.totalorder %s33, 0
      %p75 = por %p73, %p74
      %p76 = scmp.ne.s32.totalorder %s64, %s65
      %p77 = scmp.eq.s32.totalorder %s34, 1
      %p78 = por %p76, %p77
      %p80 = scmp.ne.s32.totalorder %s65, %s79
      %p81 = scmp.eq.s32.totalorder %s34, 0
      %p82 = por %p80, %p81
      %s84 = sadd.s32 %s83, 1
      %p87 = scmp.eq.s32.totalorder %s28, 1
      %p88 = scmp.ne.s32.totalorder %s83, %s85
      %p89 = scmp.eq.s32.totalorder %s28, 0
      %p90 = por %p88, %p89
      %p91 = scmp.ne.s32.totalorder %s83, %s85
      %p92 = scmp.eq.s32.totalorder %s33, 1
      %p93 = por %p91, %p92
      %p94 = scmp.ne.s32.totalorder %s85, %s86
      %p95 = scmp.eq.s32.totalorder %s33, 0
      %p96 = por %p94, %p95
      %p97 = scmp.ne.s32.totalorder %s85, %s86
      %p98 = scmp.eq.s32.totalorder %s34, 1
      %p99 = por %p97, %p98
      %p101 = scmp.ne.s32.totalorder %s86, %s100
      %p102 = scmp.eq.s32.totalorder %s34, 0
      %p103 = por %p101, %p102
      %s105 = sadd.s32 %s104, 1
      %p108 = scmp.eq.s32.totalorder %s28, 1
      %p109 = scmp.ne.s32.totalorder %s104, %s106
      %p110 = scmp.eq.s32.totalorder %s28, 0
      %p111 = por %p109, %p110
      %p112 = scmp.ne.s32.totalorder %s104, %s106
      %p113 = scmp.eq.s32.totalorder %s33, 1
      %p114 = por %p112, %p113
      %p115 = scmp.ne.s32.totalorder %s106, %s107
      %p116 = scmp.eq.s32.totalorder %s33, 0
      %p117 = por %p115, %p116
      %p118 = scmp.ne.s32.totalorder %s106, %s107
      %p119 = scmp.eq.s32.totalorder %s34, 1
      %p120 = por %p118, %p119
      %p122 = scmp.ne.s32.totalorder %s107, %s121
      %p123 = scmp.eq.s32.totalorder %s34, 0
      %p124 = por %p122, %p123
      %s126 = sadd.s32 %s125, 1
      %p129 = scmp.eq.s32.totalorder %s28, 1
      %p130 = scmp.ne.s32.totalorder %s125, %s127
      %p131 = scmp.eq.s32.totalorder %s28, 0
      %p132 = por %p130, %p131
      %p133 = scmp.ne.s32.totalorder %s125, %s127
      %p134 = scmp.eq.s32.totalorder %s33, 1
      %p135 = por %p133, %p134
      %p136 = scmp.ne.s32.totalorder %s127, %s128
      %p137 = scmp.eq.s32.totalorder %s33, 0
      %p138 = por %p136, %p137
      %p139 = scmp.ne.s32.totalorder %s127, %s128
      %p140 = scmp.eq.s32.totalorder %s34, 1
      %p141 = por %p139, %p140
      %p143 = scmp.ne.s32.totalorder %s128, %s142
      %p144 = scmp.eq.s32.totalorder %s34, 0
      %p145 = por %p143, %p144
      %s147 = sadd.s32 %s146, 1
      %p150 = scmp.eq.s32.totalorder %s28, 1
      %p151 = scmp.ne.s32.totalorder %s146, %s148
      %p152 = scmp.eq.s32.totalorder %s28, 0
      %p153 = por %p151, %p152
      %p154 = scmp.ne.s32.totalorder %s146, %s148
      %p155 = scmp.eq.s32.totalorder %s33, 1
      %p156 = por %p154, %p155
      %p157 = scmp.ne.s32.totalorder %s148, %s149
      %p158 = scmp.eq.s32.totalorder %s33, 0
      %p159 = por %p157, %p158
      %p160 = scmp.ne.s32.totalorder %s148, %s149
      %p161 = scmp.eq.s32.totalorder %s34, 1
      %p162 = por %p160, %p161
      %p164 = scmp.ne.s32.totalorder %s149, %s163
      %p165 = scmp.eq.s32.totalorder %s34, 0
      %p166 = por %p164, %p165
      %s168 = sadd.s32 %s167, 1
      %p171 = scmp.eq.s32.totalorder %s28, 1
      %p172 = scmp.ne.s32.totalorder %s167, %s169
      %p173 = scmp.eq.s32.totalorder %s28, 0
      %p174 = por %p172, %p173
      %p175 = scmp.ne.s32.totalorder %s167, %s169
      %p176 = scmp.eq.s32.totalorder %s33, 1
      %p177 = por %p175, %p176
      %p178 = scmp.ne.s32.totalorder %s169, %s170
      %p179 = scmp.eq.s32.totalorder %s33, 0
      %p180 = por %p178, %p179
      %p181 = scmp.ne.s32.totalorder %s169, %s170
      %p182 = scmp.eq.s32.totalorder %s34, 1
      %p183 = por %p181, %p182
      %p185 = scmp.ne.s32.totalorder %s170, %s184
      %p186 = scmp.eq.s32.totalorder %s34, 0
      %p187 = por %p185, %p186
      %s189 = sadd.s32 %s188, 1
      %p192 = scmp.eq.s32.totalorder %s28, 1
      %p193 = scmp.ne.s32.totalorder %s188, %s190
      %p194 = scmp.eq.s32.totalorder %s28, 0
      %p195 = por %p193, %p194
      %p196 = scmp.ne.s32.totalorder %s188, %s190
      %p197 = scmp.eq.s32.totalorder %s33, 1
      %p198 = por %p196, %p197
      %p199 = scmp.ne.s32.totalorder %s190, %s191
      %p200 = scmp.eq.s32.totalorder %s33, 0
      %p201 = por %p199, %p200
      %p202 = scmp.ne.s32.totalorder %s190, %s191
      %p203 = scmp.eq.s32.totalorder %s34, 1
      %p204 = por %p202, %p203
      %p206 = scmp.ne.s32.totalorder %s191, %s205
      %p207 = scmp.eq.s32.totalorder %s34, 0
      %p208 = por %p206, %p207
      %s210 = sadd.s32 %s209, 1
      %p213 = scmp.eq.s32.totalorder %s28, 1
      %p214 = scmp.ne.s32.totalorder %s209, %s211
      %p215 = scmp.eq.s32.totalorder %s28, 0
      %p216 = por %p214, %p215
      %p217 = scmp.ne.s32.totalorder %s209, %s211
      %p218 = scmp.eq.s32.totalorder %s33, 1
      %p219 = por %p217, %p218
      %p220 = scmp.ne.s32.totalorder %s211, %s212
      %p221 = scmp.eq.s32.totalorder %s33, 0
      %p222 = por %p220, %p221
      %p223 = scmp.ne.s32.totalorder %s211, %s212
      %p224 = scmp.eq.s32.totalorder %s34, 1
      %p225 = por %p223, %p224
      %p227 = scmp.ne.s32.totalorder %s212, %s226
      %p228 = scmp.eq.s32.totalorder %s34, 0
      %p229 = por %p227, %p228
      %s231 = sadd.s32 %s230, 1
      %p234 = scmp.eq.s32.totalorder %s28, 1
      %p235 = scmp.ne.s32.totalorder %s230, %s232
      %p236 = scmp.eq.s32.totalorder %s28, 0
      %p237 = por %p235, %p236
      %p238 = scmp.ne.s32.totalorder %s230, %s232
      %p239 = scmp.eq.s32.totalorder %s33, 1
      %p240 = por %p238, %p239
      %p241 = scmp.ne.s32.totalorder %s232, %s233
      %p242 = scmp.eq.s32.totalorder %s33, 0
      %p243 = por %p241, %p242
      %p244 = scmp.ne.s32.totalorder %s232, %s233
      %p245 = scmp.eq.s32.totalorder %s34, 1
      %p246 = por %p244, %p245
      %p248 = scmp.ne.s32.totalorder %s233, %s247
      %p249 = scmp.eq.s32.totalorder %s34, 0
      %p250 = por %p248, %p249
      %s252 = sadd.s32 %s251, 1
      %p255 = scmp.eq.s32.totalorder %s28, 1
      %p256 = scmp.ne.s32.totalorder %s251, %s253
      %p257 = scmp.eq.s32.totalorder %s28, 0
      %p258 = por %p256, %p257
      %p259 = scmp.ne.s32.totalorder %s251, %s253
      %p260 = scmp.eq.s32.totalorder %s33, 1
      %p261 = por %p259, %p260
      %p262 = scmp.ne.s32.totalorder %s253, %s254
      %p263 = scmp.eq.s32.totalorder %s33, 0
      %p264 = por %p262, %p263
      %p265 = scmp.ne.s32.totalorder %s253, %s254
      %p266 = scmp.eq.s32.totalorder %s34, 1
      %p267 = por %p265, %p266
      %p269 = scmp.ne.s32.totalorder %s254, %s268
      %p270 = scmp.eq.s32.totalorder %s34, 0
      %p271 = por %p269, %p270
      %s273 = sadd.s32 %s272, 1
      %p276 = scmp.eq.s32.totalorder %s28, 1
      %p277 = scmp.ne.s32.totalorder %s272, %s274
      %p278 = scmp.eq.s32.totalorder %s28, 0
      %p279 = por %p277, %p278
      %p280 = scmp.ne.s32.totalorder %s272, %s274
      %p281 = scmp.eq.s32.totalorder %s33, 1
      %p282 = por %p280, %p281
      %p283 = scmp.ne.s32.totalorder %s274, %s275
      %p284 = scmp.eq.s32.totalorder %s33, 0
      %p285 = por %p283, %p284
      %p286 = scmp.ne.s32.totalorder %s274, %s275
      %p287 = scmp.eq.s32.totalorder %s34, 1
      %p288 = por %p286, %p287
      %p290 = scmp.ne.s32.totalorder %s275, %s289
      %p291 = scmp.eq.s32.totalorder %s34, 0
      %p292 = por %p290, %p291
      %s294 = sadd.s32 %s293, 1
      %p297 = scmp.eq.s32.totalorder %s28, 1
      %p298 = scmp.ne.s32.totalorder %s293, %s295
      %p299 = scmp.eq.s32.totalorder %s28, 0
      %p300 = por %p298, %p299
      %p301 = scmp.ne.s32.totalorder %s293, %s295
      %p302 = scmp.eq.s32.totalorder %s33, 1
      %p303 = por %p301, %p302
      %p304 = scmp.ne.s32.totalorder %s295, %s296
      %p305 = scmp.eq.s32.totalorder %s33, 0
      %p306 = por %p304, %p305
      %p307 = scmp.ne.s32.totalorder %s295, %s296
      %p308 = scmp.eq.s32.totalorder %s34, 1
      %p309 = por %p307, %p308
      %p311 = scmp.ne.s32.totalorder %s296, %s310
      %p312 = scmp.eq.s32.totalorder %s34, 0
      %p313 = por %p311, %p312
      %s315 = sadd.s32 %s314, 1
      %p318 = scmp.eq.s32.totalorder %s28, 1
      %p319 = scmp.ne.s32.totalorder %s314, %s316
      %p320 = scmp.eq.s32.totalorder %s28, 0
      %p321 = por %p319, %p320
      %p322 = scmp.ne.s32.totalorder %s314, %s316
      %p323 = scmp.eq.s32.totalorder %s33, 1
      %p324 = por %p322, %p323
      %p325 = scmp.ne.s32.totalorder %s316, %s317
      %p326 = scmp.eq.s32.totalorder %s33, 0
      %p327 = por %p325, %p326
      %p328 = scmp.ne.s32.totalorder %s316, %s317
      %p329 = scmp.eq.s32.totalorder %s34, 1
      %p330 = por %p328, %p329
      %p332 = scmp.ne.s32.totalorder %s317, %s331
      %p333 = scmp.eq.s32.totalorder %s34, 0
      %p334 = por %p332, %p333
      %s336 = sadd.s32 %s335, 1
      %p339 = scmp.eq.s32.totalorder %s28, 1
      %p340 = scmp.ne.s32.totalorder %s335, %s337
      %p341 = scmp.eq.s32.totalorder %s28, 0
      %p342 = por %p340, %p341
      %p343 = scmp.ne.s32.totalorder %s335, %s337
      %p344 = scmp.eq.s32.totalorder %s33, 1
      %p345 = por %p343, %p344
      %p346 = scmp.ne.s32.totalorder %s337, %s338
      %p347 = scmp.eq.s32.totalorder %s33, 0
      %p348 = por %p346, %p347
      %p349 = scmp.ne.s32.totalorder %s337, %s338
      %p350 = scmp.eq.s32.totalorder %s34, 1
      %p351 = por %p349, %p350
      %p353 = scmp.ne.s32.totalorder %s338, %s352
      %p354 = scmp.eq.s32.totalorder %s34, 0
      %p355 = por %p353, %p354
      %s356 = ssub.s32 %s28, %s35
      %p357 = scmp.eq.s32.totalorder %s356, 0
      %s359 = sadd.s32 %s358, 1
      %s360 = scalar_select %p357, %s358, %s359
      %p363 = pneg %p357
      %p364 = scmp.eq.s32.totalorder %s28, 1
      %p365 = por %p363, %p364
      %p366 = scmp.ne.s32.totalorder %s358, %s361
      %p367 = scmp.eq.s32.totalorder %s28, 0
      %p368 = por %p366, %p367
      %p369 = scmp.ne.s32.totalorder %s358, %s361
      %p370 = scmp.eq.s32.totalorder %s33, 1
      %p371 = por %p369, %p370
      %p372 = scmp.ne.s32.totalorder %s361, %s362
      %p373 = scmp.eq.s32.totalorder %s33, 0
      %p374 = por %p372, %p373
      %p375 = scmp.ne.s32.totalorder %s361, %s362
      %p376 = scmp.eq.s32.totalorder %s34, 1
      %p377 = por %p375, %p376
      %p379 = scmp.ne.s32.totalorder %s362, %s378
      %p380 = scmp.eq.s32.totalorder %s34, 0
      %p381 = por %p379, %p380
      %p382 = scmp.le.s32.totalorder 1, %s28
      %p383 = scmp.lt.s32.totalorder %s28, 3
      %p384 = pnand %p382, %p383
      %p385 = pneg %p384
      // Predicated region
      $region9: #{_lambda_.1} parent=5 // pred_check
        _
      $region10: #{_lambda_.1} parent=5 // pred_check_branch
        %387 = sbr.rel (%p384) target = $region12
      $region11: #{_lambda_.1} parent=5 // pred_region
        %s388 = ssub.s32 %s28, 1
        // Predicated region
        $region13: #{_lambda_.1} parent=11 // pred_check
          %p389 = pneg %p75
        $region14: #{_lambda_.1} parent=11 // pred_check_branch
          %391 = sbr.rel (%p389) target = $region16
        $region15: #{_lambda_.1} parent=11 // pred_region
          %s393 = ssub.s32 288, 288
          %394 = vsyncadd [#allocation3], %s393
          %s395 = sshll.u32 [#allocation2], 4
          %s396 = int_to_ptr.vmem [resolvable:$true] %s395
          %401 = dma.hbm_to_vmem [thread:$0]  %s1, 288, %s396, [#allocation3], 32, 32, 2
        $region16: #{_lambda_.1} parent=11 // pred_fallthru
          _
        // Predicated region
        $region17: #{_lambda_.1} parent=11 // pred_check
          %p402 = pneg %p96
        $region18: #{_lambda_.1} parent=11 // pred_check_branch
          %404 = sbr.rel (%p402) target = $region20
        $region19: #{_lambda_.1} parent=11 // pred_region
          _
        $region20: #{_lambda_.1} parent=11 // pred_fallthru
          _
        // Predicated region
        $region21: #{_lambda_.1} parent=11 // pred_check
          %p405 = pneg %p117
        $region22: #{_lambda_.1} parent=11 // pred_check_branch
          %407 = sbr.rel (%p405) target = $region24
        $region23: #{_lambda_.1} parent=11 // pred_region
          %s409 = ssub.s32 4608, 4608
          %410 = vsyncadd [#allocation6], %s409
          %s411 = sshll.u32 [#allocation5], 4
          %s412 = int_to_ptr.vmem [resolvable:$true] %s411
          %417 = dma.hbm_to_vmem [thread:$0]  %s3, 4608, %s412, [#allocation6], 64, 64, 4
        $region24: #{_lambda_.1} parent=11 // pred_fallthru
          _
        // Predicated region
        $region25: #{_lambda_.1} parent=11 // pred_check
          %p418 = pneg %p138
        $region26: #{_lambda_.1} parent=11 // pred_check_branch
          %420 = sbr.rel (%p418) target = $region28
        $region27: #{_lambda_.1} parent=11 // pred_region
          _
        $region28: #{_lambda_.1} parent=11 // pred_fallthru
          _
        // Predicated region
        $region29: #{_lambda_.1} parent=11 // pred_check
          %p421 = pneg %p159
        $region30: #{_lambda_.1} parent=11 // pred_check_branch
          %423 = sbr.rel (%p421) target = $region32
        $region31: #{_lambda_.1} parent=11 // pred_region
          %s425 = ssub.s32 36864, 36864
          %426 = vsyncadd [#allocation6], %s425
          %s427 = sshll.u32 [#allocation7], 4
          %s428 = int_to_ptr.vmem [resolvable:$true] %s427
          %433 = dma.hbm_to_vmem [thread:$0]  %s5, 36864, %s428, [#allocation6], 256, 256, 16
        $region32: #{_lambda_.1} parent=11 // pred_fallthru
          _
        // Predicated region
        $region33: #{_lambda_.1} parent=11 // pred_check
          %p434 = pneg %p180
        $region34: #{_lambda_.1} parent=11 // pred_check_branch
          %436 = sbr.rel (%p434) target = $region36
        $region35: #{_lambda_.1} parent=11 // pred_region
          _
        $region36: #{_lambda_.1} parent=11 // pred_fallthru
          _
        // Predicated region
        $region37: #{_lambda_.1} parent=11 // pred_check
          %p437 = pneg %p201
        $region38: #{_lambda_.1} parent=11 // pred_check_branch
          %439 = sbr.rel (%p437) target = $region40
        $region39: #{_lambda_.1} parent=11 // pred_region
          %s441 = ssub.s32 16384, 16384
          %442 = vsyncadd [#allocation9], %s441
          %s443 = sshll.u32 [#allocation8], 4
          %s444 = int_to_ptr.vmem [resolvable:$true] %s443
          %449 = dma.hbm_to_vmem [thread:$0]  %s7, 16384, %s444, [#allocation9], 256, 256, 16
        $region40: #{_lambda_.1} parent=11 // pred_fallthru
          _
        // Predicated region
        $region41: #{_lambda_.1} parent=11 // pred_check
          %p450 = pneg %p222
        $region42: #{_lambda_.1} parent=11 // pred_check_branch
          %452 = sbr.rel (%p450) target = $region44
        $region43: #{_lambda_.1} parent=11 // pred_region
          _
        $region44: #{_lambda_.1} parent=11 // pred_fallthru
          _
        // Predicated region
        $region45: #{_lambda_.1} parent=11 // pred_check
          %p453 = pneg %p243
        $region46: #{_lambda_.1} parent=11 // pred_check_branch
          %455 = sbr.rel (%p453) target = $region48
        $region47: #{_lambda_.1} parent=11 // pred_region
          %s457 = ssub.s32 16384, 16384
          %458 = vsyncadd [#allocation9], %s457
          %s459 = sshll.u32 [#allocation10], 4
          %s460 = int_to_ptr.vmem [resolvable:$true] %s459
          %465 = dma.hbm_to_vmem [thread:$0]  %s9, 16384, %s460, [#allocation9], 256, 256, 16
        $region48: #{_lambda_.1} parent=11 // pred_fallthru
          _
        // Predicated region
        $region49: #{_lambda_.1} parent=11 // pred_check
          %p466 = pneg %p264
        $region50: #{_lambda_.1} parent=11 // pred_check_branch
          %468 = sbr.rel (%p466) target = $region52
        $region51: #{_lambda_.1} parent=11 // pred_region
          _
        $region52: #{_lambda_.1} parent=11 // pred_fallthru
          _
        // Predicated region
        $region53: #{_lambda_.1} parent=11 // pred_check
          %p469 = pneg %p285
        $region54: #{_lambda_.1} parent=11 // pred_check_branch
          %471 = sbr.rel (%p469) target = $region56
        $region55: #{_lambda_.1} parent=11 // pred_region
          %s473 = ssub.s32 4096, 4096
          %474 = vsyncadd [#allocation12], %s473
          %s475 = sshll.u32 [#allocation11], 4
          %s476 = int_to_ptr.vmem [resolvable:$true] %s475
          %481 = dma.hbm_to_vmem [thread:$0]  %s11, 4096, %s476, [#allocation12], 64, 64, 4
        $region56: #{_lambda_.1} parent=11 // pred_fallthru
          _
        // Predicated region
        $region57: #{_lambda_.1} parent=11 // pred_check
          %p482 = pneg %p306
        $region58: #{_lambda_.1} parent=11 // pred_check_branch
          %484 = sbr.rel (%p482) target = $region60
        $region59: #{_lambda_.1} parent=11 // pred_region
          _
        $region60: #{_lambda_.1} parent=11 // pred_fallthru
          _
        // Predicated region
        $region61: #{_lambda_.1} parent=11 // pred_check
          %p485 = pneg %p327
        $region62: #{_lambda_.1} parent=11 // pred_check_branch
          %487 = sbr.rel (%p485) target = $region64
        $region63: #{_lambda_.1} parent=11 // pred_region
          %s489 = ssub.s32 1024, 1024
          %490 = vsyncadd [#allocation12], %s489
          %s491 = sshll.u32 [#allocation13], 4
          %s492 = int_to_ptr.vmem [resolvable:$true] %s491
          %497 = dma.hbm_to_vmem [thread:$0]  %s13, 1024, %s492, [#allocation12], 64, 64, 4
        $region64: #{_lambda_.1} parent=11 // pred_fallthru
          _
        // Predicated region
        $region65: #{_lambda_.1} parent=11 // pred_check
          %p498 = pneg %p348
        $region66: #{_lambda_.1} parent=11 // pred_check_branch
          %500 = sbr.rel (%p498) target = $region68
        $region67: #{_lambda_.1} parent=11 // pred_region
          _
        $region68: #{_lambda_.1} parent=11 // pred_fallthru
          _
      $region12: #{_lambda_.1} parent=5 // pred_fallthru
        _
      %p501 = scmp.lt.s32.totalorder %s28, 2
      // Predicated region
      $region69: #{_lambda_.1} parent=5 // pred_check
        %p502 = pneg %p501
      $region70: #{_lambda_.1} parent=5 // pred_check_branch
        %504 = sbr.rel (%p502) target = $region72
      $region71: #{_lambda_.1} parent=5 // pred_region
        // Predicated region
        $region73: #{_lambda_.1} parent=71 // pred_check
          %p505 = pneg %p48
        $region74: #{_lambda_.1} parent=71 // pred_check_branch
          %507 = sbr.rel (%p505) target = $region76
        $region75: #{_lambda_.1} parent=71 // pred_region
          %p508 = scmp.lt.s32.totalorder %s28, 1
          %s509 = scalar_select %p508, %s28, 1
          %s510 = smul.addr %s509, 8
          %s511 = smul.addr %s510, 8
          %s512 = scalar_lea.vmem %s0, %s511
        $region76: #{_lambda_.1} parent=71 // pred_fallthru
          _
      $region72: #{_lambda_.1} parent=5 // pred_fallthru
        _
      %p513 = scmp.le.s32.totalorder 1, %s28
      %p514 = scmp.lt.s32.totalorder %s28, 3
      %p515 = pnand %p513, %p514
      %p516 = pneg %p515
      // Predicated region
      $region77: #{_lambda_.1} parent=5 // pred_check
        _
      $region78: #{_lambda_.1} parent=5 // pred_check_branch
        %518 = sbr.rel (%p515) target = $region80
      $region79: #{_lambda_.1} parent=5 // pred_region
        %s519 = ssub.s32 %s28, 1
        // Predicated region
        $region81: #{_lambda_.1} parent=79 // pred_check
          %p520 = pneg %p75
        $region82: #{_lambda_.1} parent=79 // pred_check_branch
          %522 = sbr.rel (%p520) target = $region84
        $region83: #{_lambda_.1} parent=79 // pred_region
          %523 = dma.done [#allocation3], 288
        $region84: #{_lambda_.1} parent=79 // pred_fallthru
          _
        // Predicated region
        $region85: #{_lambda_.1} parent=79 // pred_check
          %p524 = pneg %p117
        $region86: #{_lambda_.1} parent=79 // pred_check_branch
          %526 = sbr.rel (%p524) target = $region88
        $region87: #{_lambda_.1} parent=79 // pred_region
          %527 = dma.done [#allocation6], 4608
        $region88: #{_lambda_.1} parent=79 // pred_fallthru
          _
        // Predicated region
        $region89: #{_lambda_.1} parent=79 // pred_check
          %p528 = pneg %p159
        $region90: #{_lambda_.1} parent=79 // pred_check_branch
          %530 = sbr.rel (%p528) target = $region92
        $region91: #{_lambda_.1} parent=79 // pred_region
          %531 = dma.done [#allocation6], 36864
        $region92: #{_lambda_.1} parent=79 // pred_fallthru
          _
        // Predicated region
        $region93: #{_lambda_.1} parent=79 // pred_check
          %p532 = pneg %p201
        $region94: #{_lambda_.1} parent=79 // pred_check_branch
          %534 = sbr.rel (%p532) target = $region96
        $region95: #{_lambda_.1} parent=79 // pred_region
          %535 = dma.done [#allocation9], 16384
        $region96: #{_lambda_.1} parent=79 // pred_fallthru
          _
        // Predicated region
        $region97: #{_lambda_.1} parent=79 // pred_check
          %p536 = pneg %p243
        $region98: #{_lambda_.1} parent=79 // pred_check_branch
          %538 = sbr.rel (%p536) target = $region100
        $region99: #{_lambda_.1} parent=79 // pred_region
          %539 = dma.done [#allocation9], 16384
        $region100: #{_lambda_.1} parent=79 // pred_fallthru
          _
        // Predicated region
        $region101: #{_lambda_.1} parent=79 // pred_check
          %p540 = pneg %p285
        $region102: #{_lambda_.1} parent=79 // pred_check_branch
          %542 = sbr.rel (%p540) target = $region104
        $region103: #{_lambda_.1} parent=79 // pred_region
          %543 = dma.done [#allocation12], 4096
        $region104: #{_lambda_.1} parent=79 // pred_fallthru
          _
        // Predicated region
        $region105: #{_lambda_.1} parent=79 // pred_check
          %p544 = pneg %p327
        $region106: #{_lambda_.1} parent=79 // pred_check_branch
          %546 = sbr.rel (%p544) target = $region108
        $region107: #{_lambda_.1} parent=79 // pred_region
          %547 = dma.done [#allocation12], 1024
        $region108: #{_lambda_.1} parent=79 // pred_fallthru
          _
        %p548 = scmp.lt.s32.totalorder %s33, 1
        %s549 = scalar_select %p548, %s33, 1
        %s550 = smul.addr %s549, 8
        %s551 = smul.addr %s550, 8
        %s552 = scalar_lea.vmem %s0, %s551
        %p553 = pneg %p54
        %p554 = pneg %p51
        %p555 = pneg %p75
        %p556 = pneg %p72
        %p557 = pneg %p96
        %p558 = pneg %p93
        %p559 = pneg %p117
        %p560 = pneg %p114
        %p561 = pneg %p138
        %p562 = pneg %p135
        %p563 = pneg %p159
        %p564 = pneg %p156
        %p565 = pneg %p180
        %p566 = pneg %p177
        %p567 = pneg %p201
        %p568 = pneg %p198
        %p569 = pneg %p222
        %p570 = pneg %p219
        %p571 = pneg %p243
        %p572 = pneg %p240
        %p573 = pneg %p264
        %p574 = pneg %p261
        %p575 = pneg %p285
        %p576 = pneg %p282
        %p577 = pneg %p306
        %p578 = pneg %p303
        %p579 = pneg %p327
        %p580 = pneg %p324
        %p581 = pneg %p348
        %p582 = pneg %p345
        %p583 = pneg %p374
        %p584 = pneg %p371
        %s585 = sand.u32 %s361, 1
        %s586 = scalar_lea.sflag [#allocation4], %s585
        %s587 = sand.u32 %s361, 1
        %s588 = scalar_lea.vmem [#allocation14], %s587
        %p589 = scmp.lt.s32.totalorder %s33, 1
        %s590 = scalar_select %p589, %s33, 1
        %s591 = smul.addr %s590, 8
        %s592 = smul.addr %s591, 8
        %s593 = scalar_lea.vmem %s0, %s592
        %v595 = vld [vmem:[%s593] sm:$0xff]
        %v596 = vld [vmem:[%s593 + $0x8] sm:$0xff]
        %v597 = vld [vmem:[%s593 + $0x10] sm:$0xff]
        %v598 = vld [vmem:[%s593 + $0x18] sm:$0xff]
        %v599 = vld [vmem:[%s593 + $0x20] sm:$0xff]
        %v600 = vld [vmem:[%s593 + $0x28] sm:$0xff]
        %v601 = vld [vmem:[%s593 + $0x30] sm:$0xff]
        %v602 = vld [vmem:[%s593 + $0x38] sm:$0xff]
        %v612 = vrot.slane 0.0, 7
        %v613 = vrot.slane %v595, 7
        %v614 = vrot.slane %v596, 7
        %v615 = vrot.slane %v597, 7
        %v616 = vrot.slane %v598, 7
        %v617 = vrot.slane %v599, 7
        %v618 = vrot.slane %v600, 7
        %v619 = vrot.slane %v601, 7
        %v620 = vrot.slane %v602, 7
        %vm630 = vcmask 1040384
        %v631 = vsel %vm630, 0.0, %v612
        %v632 = vsel %vm630, 0.0, %v613
        %v633 = vsel %vm630, 0.0, %v614
        %v634 = vsel %vm630, 0.0, %v615
        %v635 = vsel %vm630, 0.0, %v616
        %v636 = vsel %vm630, 0.0, %v617
        %v637 = vsel %vm630, 0.0, %v618
        %v638 = vsel %vm630, 0.0, %v619
        %v639 = vsel %vm630, 0.0, %v620
        %v640 = vsel %vm630, %v612, 0.0
        %v641 = vsel %vm630, %v613, 0.0
        %v642 = vsel %vm630, %v614, 0.0
        %v643 = vsel %vm630, %v615, 0.0
        %v644 = vsel %vm630, %v616, 0.0
        %v645 = vsel %vm630, %v617, 0.0
        %v646 = vsel %vm630, %v618, 0.0
        %v647 = vsel %vm630, %v619, 0.0
        %v648 = vsel %vm630, %v620, 0.0
        %v649 = vpack.c.bf16 %v640, %v631
        %v650 = vpack.c.bf16 %v641, %v632
        %v651 = vpack.c.bf16 %v642, %v633
        %v652 = vpack.c.bf16 %v643, %v634
        %v653 = vpack.c.bf16 %v644, %v635
        %v654 = vpack.c.bf16 %v645, %v636
        %v655 = vpack.c.bf16 %v646, %v637
        %v656 = vpack.c.bf16 %v647, %v638
        %v657 = vpack.c.bf16 %v648, %v639
        %v658 = vld [vmem:[#allocation2] sm:$0x3]
        %v667 = vunpack.c.l.b16 %v649
        %v668 = vunpack.c.h.b16 %v649
        %v669 = vunpack.c.l.b16 %v650
        %v670 = vunpack.c.h.b16 %v650
        %v671 = vunpack.c.l.b16 %v651
        %v672 = vunpack.c.h.b16 %v651
        %v673 = vunpack.c.l.b16 %v652
        %v674 = vunpack.c.h.b16 %v652
        %v675 = vunpack.c.l.b16 %v653
        %v676 = vunpack.c.h.b16 %v653
        %v677 = vunpack.c.l.b16 %v654
        %v678 = vunpack.c.h.b16 %v654
        %v679 = vunpack.c.l.b16 %v655
        %v680 = vunpack.c.h.b16 %v655
        %v681 = vunpack.c.l.b16 %v656
        %v682 = vunpack.c.h.b16 %v656
        %v683 = vpack.c.b16 %v667, %v667
        %v684 = vpack.c.b16 %v668, %v668
        %v685 = vpack.c.b16 %v669, %v669
        %v686 = vpack.c.b16 %v670, %v670
        %v687 = vpack.c.b16 %v671, %v671
        %v688 = vpack.c.b16 %v672, %v672
        %v689 = vpack.c.b16 %v673, %v673
        %v690 = vpack.c.b16 %v674, %v674
        %v691 = vpack.c.b16 %v675, %v675
        %v692 = vpack.c.b16 %v676, %v676
        %v693 = vpack.c.b16 %v677, %v677
        %v694 = vpack.c.b16 %v678, %v678
        %v695 = vpack.c.b16 %v679, %v679
        %v696 = vpack.c.b16 %v680, %v680
        %v697 = vpack.c.b16 %v681, %v681
        %v698 = vpack.c.b16 %v682, %v682
        %vm699 = vsmask.f32 3328
        %vm700 = vsmask.f32 7440
        %vm701 = vmor %vm699, %vm700
        %v703 = vshrl.u32 %v683, 16
        %v705 = vrot.slane %v703, 4
        %v706 = vshll.u32 %v683, 16
        %v708 = vrot.slane %v706, 5
        %v709 = vor.u32 %v705, %v708
        %v710 = vrot.slane %v709, 4
        %v712 = vshll.u32 %v684, 16
        %v714 = vrot.slane %v712, 5
        %v715 = vsel %vm701, %v710, %v714
        %v717 = vshrl.u32 %v685, 16
        %v719 = vrot.slane %v717, 4
        %v720 = vshll.u32 %v685, 16
        %v722 = vrot.slane %v720, 5
        %v723 = vor.u32 %v719, %v722
        %v724 = vrot.slane %v723, 4
        %v726 = vshll.u32 %v686, 16
        %v728 = vrot.slane %v726, 5
        %v729 = vsel %vm701, %v724, %v728
        %v731 = vshrl.u32 %v687, 16
        %v733 = vrot.slane %v731, 4
        %v734 = vshll.u32 %v687, 16
        %v736 = vrot.slane %v734, 5
        %v737 = vor.u32 %v733, %v736
        %v738 = vrot.slane %v737, 4
        %v740 = vshll.u32 %v688, 16
        %v742 = vrot.slane %v740, 5
        %v743 = vsel %vm701, %v738, %v742
        %v745 = vshrl.u32 %v689, 16
        %v747 = vrot.slane %v745, 4
        %v748 = vshll.u32 %v689, 16
        %v750 = vrot.slane %v748, 5
        %v751 = vor.u32 %v747, %v750
        %v752 = vrot.slane %v751, 4
        %v754 = vshll.u32 %v690, 16
        %v756 = vrot.slane %v754, 5
        %v757 = vsel %vm701, %v752, %v756
        %v759 = vshrl.u32 %v691, 16
        %v761 = vrot.slane %v759, 4
        %v762 = vshll.u32 %v691, 16
        %v764 = vrot.slane %v762, 5
        %v765 = vor.u32 %v761, %v764
        %v766 = vrot.slane %v765, 4
        %v768 = vshll.u32 %v692, 16
        %v770 = vrot.slane %v768, 5
        %v771 = vsel %vm701, %v766, %v770
        %v773 = vshrl.u32 %v693, 16
        %v775 = vrot.slane %v773, 4
        %v776 = vshll.u32 %v693, 16
        %v778 = vrot.slane %v776, 5
        %v779 = vor.u32 %v775, %v778
        %v780 = vrot.slane %v779, 4
        %v782 = vshll.u32 %v694, 16
        %v784 = vrot.slane %v782, 5
        %v785 = vsel %vm701, %v780, %v784
        %v787 = vshrl.u32 %v695, 16
        %v789 = vrot.slane %v787, 4
        %v790 = vshll.u32 %v695, 16
        %v792 = vrot.slane %v790, 5
        %v793 = vor.u32 %v789, %v792
        %v794 = vrot.slane %v793, 4
        %v796 = vshll.u32 %v696, 16
        %v798 = vrot.slane %v796, 5
        %v799 = vsel %vm701, %v794, %v798
        %v801 = vshrl.u32 %v697, 16
        %v803 = vrot.slane %v801, 4
        %v804 = vshll.u32 %v697, 16
        %v806 = vrot.slane %v804, 5
        %v807 = vor.u32 %v803, %v806
        %v808 = vrot.slane %v807, 4
        %v810 = vshll.u32 %v698, 16
        %v812 = vrot.slane %v810, 5
        %v813 = vsel %vm701, %v808, %v812
        %s814 = scalar_lea.vmem [#allocation2], 2
        %v815 = vld [vmem:[%s814] sm:$0x3]
        %v816 = vunpack.c.l.b16 %v715
        %v817 = vunpack.c.l.b16 %v729
        %v818 = vunpack.c.l.b16 %v743
        %v819 = vunpack.c.l.b16 %v757
        %v820 = vunpack.c.l.b16 %v771
        %v821 = vunpack.c.l.b16 %v785
        %v822 = vunpack.c.l.b16 %v799
        %v823 = vunpack.c.l.b16 %v813
        %v824 = vpack.c.b16 %v817, %v816
        %v825 = vpack.c.b16 %v819, %v818
        %v826 = vpack.c.b16 %v821, %v820
        %v827 = vpack.c.b16 %v823, %v822
        %vm828 = vcmask 23552
        %v830 = vsel %vm828, %v824, 0
        %v833 = vsel %vm828, %v825, 0
        %v836 = vsel %vm828, %v826, 0
        %v839 = vsel %vm828, %v827, 0
        %vm841 = vcmask 1041408
        %v842 = vsel %vm630, 4294967295, 65535
        %v843 = vsel %vm841, %v842, 0
        %v845 = vand.u32 %v815, %v843
        %847 = vmatprep.subr.bf16.mxu0 0
        %848 = vmatpush1.bf16.msra.mxu0 0
        %849 = vmatprep.subr.bf16.mxu0 0
        %850 = vmatpush1.bf16.msra.mxu0 0
        %851 = vmatprep.subr.bf16.mxu0 0
        %852 = vmatpush1.bf16.msra.mxu0 0
        %853 = vmatprep.subr.bf16.mxu0 0
        %854 = vmatpush1.bf16.msra.mxu0 0
        %855 = vmatprep.subr.bf16.mxu0 0
        %856 = vmatpush1.bf16.msra.mxu0 0
        %857 = vmatprep.subr.bf16.mxu0 0
        %858 = vmatpush1.bf16.msra.mxu0 0
        %859 = vmatprep.subr.bf16.mxu0 0
        %860 = vmatpush1.bf16.msra.mxu0 0
        %861 = vmatprep.subr.bf16.mxu0 0
        %862 = vmatpush1.bf16.msra.mxu0 %v845
        %863 = vmatprep.subr.bf16.mxu0 0
        %864 = vmatpush2.bf16.msra.mxu0 0
        %865 = vmatprep.subr.bf16.mxu0 0
        %866 = vmatpush2.bf16.msra.mxu0 0
        %867 = vmatprep.subr.bf16.mxu0 0
        %868 = vmatpush2.bf16.msra.mxu0 0
        %869 = vmatprep.subr.bf16.mxu0 0
        %870 = vmatpush2.bf16.msra.mxu0 0
        %871 = vmatprep.subr.bf16.mxu0 0
        %872 = vmatpush2.bf16.msra.mxu0 0
        %873 = vmatprep.subr.bf16.mxu0 0
        %874 = vmatpush2.bf16.msra.mxu0 0
        %875 = vmatprep.subr.bf16.mxu0 0
        %876 = vmatpush2.bf16.msra.mxu0 0
        %877 = vmatprep.subr.bf16.mxu0 0
        %878 = vmatpush2.bf16.msra.mxu0 0
        %879 = vmatprep.mubr.bf16.mxu0 0
        %880 = vmatmul.mubr.bf16.gmra.mxu0 %v830
        %v881 = vpop.f32.mrf.mxu0
        %v882 = vadd.f32 0.0, %v881
        %v883 = vpop.f32.mrf.mxu0
        %v884 = vpop.f32.mrf.mxu0
        %v885 = vadd.f32 0.0, %v884
        %v886 = vpop.f32.mrf.mxu0
        %887 = vmatprep.mubr.bf16.mxu0 0
        %888 = vmatmul.mubr.bf16.gmra.mxu0 %v833
        %v889 = vpop.f32.mrf.mxu0
        %v890 = vadd.f32 0.0, %v889
        %v891 = vpop.f32.mrf.mxu0
        %v892 = vpop.f32.mrf.mxu0
        %v893 = vadd.f32 0.0, %v892
        %v894 = vpop.f32.mrf.mxu0
        %895 = vmatprep.mubr.bf16.mxu0 0
        %896 = vmatmul.mubr.bf16.gmra.mxu0 %v836
        %v897 = vpop.f32.mrf.mxu0
        %v898 = vadd.f32 0.0, %v897
        %v899 = vpop.f32.mrf.mxu0
        %v900 = vpop.f32.mrf.mxu0
        %v901 = vadd.f32 0.0, %v900
        %v902 = vpop.f32.mrf.mxu0
        %903 = vmatprep.mubr.bf16.mxu0 0
        %904 = vmatmul.mubr.bf16.gmra.mxu0 %v839
        %v905 = vpop.f32.mrf.mxu0
        %v906 = vadd.f32 0.0, %v905
        %v907 = vpop.f32.mrf.mxu0
        %v908 = vpop.f32.mrf.mxu0
        %v909 = vadd.f32 0.0, %v908
        %v910 = vpop.f32.mrf.mxu0
        %911 = vdwg.mxu0
        %v912 = vpack.c.b16 %v669, %v667
        %v913 = vpack.c.b16 %v673, %v671
        %v914 = vpack.c.b16 %v677, %v675
        %v915 = vpack.c.b16 %v681, %v679
        %v917 = vsel %vm828, %v912, 0
        %v920 = vsel %vm828, %v913, 0
        %v923 = vsel %vm828, %v914, 0
        %v926 = vsel %vm828, %v915, 0
        %v929 = vand.u32 %v658, %v843
        %931 = vmatprep.subr.bf16.mxu0 0
        %932 = vmatpush1.bf16.msra.mxu0 0
        %933 = vmatprep.subr.bf16.mxu0 0
        %934 = vmatpush1.bf16.msra.mxu0 0
        %935 = vmatprep.subr.bf16.mxu0 0
        %936 = vmatpush1.bf16.msra.mxu0 0
        %937 = vmatprep.subr.bf16.mxu0 0
        %938 = vmatpush1.bf16.msra.mxu0 0
        %939 = vmatprep.subr.bf16.mxu0 0
        %940 = vmatpush1.bf16.msra.mxu0 0
        %941 = vmatprep.subr.bf16.mxu0 0
        %942 = vmatpush1.bf16.msra.mxu0 0
        %943 = vmatprep.subr.bf16.mxu0 0
        %944 = vmatpush1.bf16.msra.mxu0 0
        %945 = vmatprep.subr.bf16.mxu0 0
        %946 = vmatpush1.bf16.msra.mxu0 %v929
        %947 = vmatprep.subr.bf16.mxu0 0
        %948 = vmatpush2.bf16.msra.mxu0 0
        %949 = vmatprep.subr.bf16.mxu0 0
        %950 = vmatpush2.bf16.msra.mxu0 0
        %951 = vmatprep.subr.bf16.mxu0 0
        %952 = vmatpush2.bf16.msra.mxu0 0
        %953 = vmatprep.subr.bf16.mxu0 0
        %954 = vmatpush2.bf16.msra.mxu0 0
        %955 = vmatprep.subr.bf16.mxu0 0
        %956 = vmatpush2.bf16.msra.mxu0 0
        %957 = vmatprep.subr.bf16.mxu0 0
        %958 = vmatpush2.bf16.msra.mxu0 0
        %959 = vmatprep.subr.bf16.mxu0 0
        %960 = vmatpush2.bf16.msra.mxu0 0
        %961 = vmatprep.subr.bf16.mxu0 0
        %962 = vmatpush2.bf16.msra.mxu0 0
        %963 = vmatprep.mubr.bf16.mxu0 0
        %964 = vmatmul.mubr.bf16.gmra.mxu0 %v917
        %v965 = vpop.f32.mrf.mxu0
        %v966 = vadd.f32 %v882, %v965
        %v967 = vpop.f32.mrf.mxu0
        %v968 = vpop.f32.mrf.mxu0
        %v969 = vadd.f32 %v885, %v968
        %v970 = vpop.f32.mrf.mxu0
        %971 = vmatprep.mubr.bf16.mxu0 0
        %972 = vmatmul.mubr.bf16.gmra.mxu0 %v920
        %v973 = vpop.f32.mrf.mxu0
        %v974 = vadd.f32 %v890, %v973
        %v975 = vpop.f32.mrf.mxu0
        %v976 = vpop.f32.mrf.mxu0
        %v977 = vadd.f32 %v893, %v976
        %v978 = vpop.f32.mrf.mxu0
        %979 = vmatprep.mubr.bf16.mxu0 0
        %980 = vmatmul.mubr.bf16.gmra.mxu0 %v923
        %v981 = vpop.f32.mrf.mxu0
        %v982 = vadd.f32 %v898, %v981
        %v983 = vpop.f32.mrf.mxu0
        %v984 = vpop.f32.mrf.mxu0
        %v985 = vadd.f32 %v901, %v984
        %v986 = vpop.f32.mrf.mxu0
        %987 = vmatprep.mubr.bf16.mxu0 0
        %988 = vmatmul.mubr.bf16.gmra.mxu0 %v926
        %v989 = vpop.f32.mrf.mxu0
        %v990 = vadd.f32 %v906, %v989
        %v991 = vpop.f32.mrf.mxu0
        %v992 = vpop.f32.mrf.mxu0
        %v993 = vadd.f32 %v909, %v992
        %v994 = vpop.f32.mrf.mxu0
        %995 = vdwg.mxu0
        %vm996 = vcmask 1042432
        %vm997 = vcmask 1046532
        %vm998 = vmor %vm996, %vm997
        %v999 = vrot.slane %v683, 5
        %v1000 = vrot.slane %v999, 4
        %v1001 = vrot.slane %v684, 5
        %v1002 = vsel %vm998, %v1000, %v1001
        %v1003 = vrot.slane %v685, 5
        %v1004 = vrot.slane %v1003, 4
        %v1005 = vrot.slane %v686, 5
        %v1006 = vsel %vm998, %v1004, %v1005
        %v1007 = vrot.slane %v687, 5
        %v1008 = vrot.slane %v1007, 4
        %v1009 = vrot.slane %v688, 5
        %v1010 = vsel %vm998, %v1008, %v1009
        %v1011 = vrot.slane %v689, 5
        %v1012 = vrot.slane %v1011, 4
        %v1013 = vrot.slane %v690, 5
        %v1014 = vsel %vm998, %v1012, %v1013
        %v1015 = vrot.slane %v691, 5
        %v1016 = vrot.slane %v1015, 4
        %v1017 = vrot.slane %v692, 5
        %v1018 = vsel %vm998, %v1016, %v1017
        %v1019 = vrot.slane %v693, 5
        %v1020 = vrot.slane %v1019, 4
        %v1021 = vrot.slane %v694, 5
        %v1022 = vsel %vm998, %v1020, %v1021
        %v1023 = vrot.slane %v695, 5
        %v1024 = vrot.slane %v1023, 4
        %v1025 = vrot.slane %v696, 5
        %v1026 = vsel %vm998, %v1024, %v1025
        %v1027 = vrot.slane %v697, 5
        %v1028 = vrot.slane %v1027, 4
        %v1029 = vrot.slane %v698, 5
        %v1030 = vsel %vm998, %v1028, %v1029
        %s1031 = scalar_lea.vmem [#allocation2], 4
        %v1032 = vld [vmem:[%s1031] sm:$0x3]
        %v1033 = vunpack.c.l.b16 %v1002
        %v1034 = vunpack.c.l.b16 %v1006
        %v1035 = vunpack.c.l.b16 %v1010
        %v1036 = vunpack.c.l.b16 %v1014
        %v1037 = vunpack.c.l.b16 %v1018
        %v1038 = vunpack.c.l.b16 %v1022
        %v1039 = vunpack.c.l.b16 %v1026
        %v1040 = vunpack.c.l.b16 %v1030
        %v1041 = vpack.c.b16 %v1034, %v1033
        %v1042 = vpack.c.b16 %v1036, %v1035
        %v1043 = vpack.c.b16 %v1038, %v1037
        %v1044 = vpack.c.b16 %v1040, %v1039
        %v1046 = vsel %vm828, %v1041, 0
        %v1049 = vsel %vm828, %v1042, 0
        %v1052 = vsel %vm828, %v1043, 0
        %v1055 = vsel %vm828, %v1044, 0
        %v1058 = vand.u32 %v1032, %v843
        %1060 = vmatprep.subr.bf16.mxu0 0
        %1061 = vmatpush1.bf16.msra.mxu0 0
        %1062 = vmatprep.subr.bf16.mxu0 0
        %1063 = vmatpush1.bf16.msra.mxu0 0
        %1064 = vmatprep.subr.bf16.mxu0 0
        %1065 = vmatpush1.bf16.msra.mxu0 0
        %1066 = vmatprep.subr.bf16.mxu0 0
        %1067 = vmatpush1.bf16.msra.mxu0 0
        %1068 = vmatprep.subr.bf16.mxu0 0
        %1069 = vmatpush1.bf16.msra.mxu0 0
        %1070 = vmatprep.subr.bf16.mxu0 0
        %1071 = vmatpush1.bf16.msra.mxu0 0
        %1072 = vmatprep.subr.bf16.mxu0 0
        %1073 = vmatpush1.bf16.msra.mxu0 0
        %1074 = vmatprep.subr.bf16.mxu0 0
        %1075 = vmatpush1.bf16.msra.mxu0 %v1058
        %1076 = vmatprep.subr.bf16.mxu0 0
        %1077 = vmatpush2.bf16.msra.mxu0 0
        %1078 = vmatprep.subr.bf16.mxu0 0
        %1079 = vmatpush2.bf16.msra.mxu0 0
        %1080 = vmatprep.subr.bf16.mxu0 0
        %1081 = vmatpush2.bf16.msra.mxu0 0
        %1082 = vmatprep.subr.bf16.mxu0 0
        %1083 = vmatpush2.bf16.msra.mxu0 0
        %1084 = vmatprep.subr.bf16.mxu0 0
        %1085 = vmatpush2.bf16.msra.mxu0 0
        %1086 = vmatprep.subr.bf16.mxu0 0
        %1087 = vmatpush2.bf16.msra.mxu0 0
        %1088 = vmatprep.subr.bf16.mxu0 0
        %1089 = vmatpush2.bf16.msra.mxu0 0
        %1090 = vmatprep.subr.bf16.mxu0 0
        %1091 = vmatpush2.bf16.msra.mxu0 0
        %1092 = vmatprep.mubr.bf16.mxu0 0
        %1093 = vmatmul.mubr.bf16.gmra.mxu0 %v1046
        %v1094 = vpop.f32.mrf.mxu0
        %v1095 = vadd.f32 0.0, %v1094
        %v1096 = vpop.f32.mrf.mxu0
        %v1097 = vpop.f32.mrf.mxu0
        %v1098 = vadd.f32 0.0, %v1097
        %v1099 = vpop.f32.mrf.mxu0
        %1100 = vmatprep.mubr.bf16.mxu0 0
        %1101 = vmatmul.mubr.bf16.gmra.mxu0 %v1049
        %v1102 = vpop.f32.mrf.mxu0
        %v1103 = vadd.f32 0.0, %v1102
        %v1104 = vpop.f32.mrf.mxu0
        %v1105 = vpop.f32.mrf.mxu0
        %v1106 = vadd.f32 0.0, %v1105
        %v1107 = vpop.f32.mrf.mxu0
        %1108 = vmatprep.mubr.bf16.mxu0 0
        %1109 = vmatmul.mubr.bf16.gmra.mxu0 %v1052
        %v1110 = vpop.f32.mrf.mxu0
        %v1111 = vadd.f32 0.0, %v1110
        %v1112 = vpop.f32.mrf.mxu0
        %v1113 = vpop.f32.mrf.mxu0
        %v1114 = vadd.f32 0.0, %v1113
        %v1115 = vpop.f32.mrf.mxu0
        %1116 = vmatprep.mubr.bf16.mxu0 0
        %1117 = vmatmul.mubr.bf16.gmra.mxu0 %v1055
        %v1118 = vpop.f32.mrf.mxu0
        %v1119 = vadd.f32 0.0, %v1118
        %v1120 = vpop.f32.mrf.mxu0
        %v1121 = vpop.f32.mrf.mxu0
        %v1122 = vadd.f32 0.0, %v1121
        %v1123 = vpop.f32.mrf.mxu0
        %1124 = vdwg.mxu0
        %v1125 = vadd.f32 %v966, %v1095
        %v1126 = vadd.f32 %v969, %v1098
        %v1127 = vadd.f32 %v974, %v1103
        %v1128 = vadd.f32 %v977, %v1106
        %v1129 = vadd.f32 %v982, %v1111
        %v1130 = vadd.f32 %v985, %v1114
        %v1131 = vadd.f32 %v990, %v1119
        %v1132 = vadd.f32 %v993, %v1122
        %s1133 = scalar_lea.vmem [#allocation2], 6
        %v1134 = vld [vmem:[%s1133] sm:$0x3]
        %v1136 = vunpack.c.l.b16 %v657
        %v1137 = vpack.c.b16 %v671, %v669
        %v1138 = vpack.c.b16 %v675, %v673
        %v1139 = vpack.c.b16 %v679, %v677
        %v1140 = vpack.c.b16 %v1136, %v681
        %v1142 = vsel %vm828, %v1137, 0
        %v1145 = vsel %vm828, %v1138, 0
        %v1148 = vsel %vm828, %v1139, 0
        %v1151 = vsel %vm828, %v1140, 0
        %v1154 = vand.u32 %v1134, %v843
        %1156 = vmatprep.subr.bf16.mxu0 0
        %1157 = vmatpush1.bf16.msra.mxu0 0
        %1158 = vmatprep.subr.bf16.mxu0 0
        %1159 = vmatpush1.bf16.msra.mxu0 0
        %1160 = vmatprep.subr.bf16.mxu0 0
        %1161 = vmatpush1.bf16.msra.mxu0 0
        %1162 = vmatprep.subr.bf16.mxu0 0
        %1163 = vmatpush1.bf16.msra.mxu0 0
        %1164 = vmatprep.subr.bf16.mxu0 0
        %1165 = vmatpush1.bf16.msra.mxu0 0
        %1166 = vmatprep.subr.bf16.mxu0 0
        %1167 = vmatpush1.bf16.msra.mxu0 0
        %1168 = vmatprep.subr.bf16.mxu0 0
        %1169 = vmatpush1.bf16.msra.mxu0 0
        %1170 = vmatprep.subr.bf16.mxu0 0
        %1171 = vmatpush1.bf16.msra.mxu0 %v1154
        %1172 = vmatprep.subr.bf16.mxu0 0
        %1173 = vmatpush2.bf16.msra.mxu0 0
        %1174 = vmatprep.subr.bf16.mxu0 0
        %1175 = vmatpush2.bf16.msra.mxu0 0
        %1176 = vmatprep.subr.bf16.mxu0 0
        %1177 = vmatpush2.bf16.msra.mxu0 0
        %1178 = vmatprep.subr.bf16.mxu0 0
        %1179 = vmatpush2.bf16.msra.mxu0 0
        %1180 = vmatprep.subr.bf16.mxu0 0
        %1181 = vmatpush2.bf16.msra.mxu0 0
        %1182 = vmatprep.subr.bf16.mxu0 0
        %1183 = vmatpush2.bf16.msra.mxu0 0
        %1184 = vmatprep.subr.bf16.mxu0 0
        %1185 = vmatpush2.bf16.msra.mxu0 0
        %1186 = vmatprep.subr.bf16.mxu0 0
        %1187 = vmatpush2.bf16.msra.mxu0 0
        %1188 = vmatprep.mubr.bf16.mxu0 0
        %1189 = vmatmul.mubr.bf16.gmra.mxu0 %v1142
        %v1190 = vpop.f32.mrf.mxu0
        %v1191 = vadd.f32 0.0, %v1190
        %v1192 = vpop.f32.mrf.mxu0
        %v1193 = vpop.f32.mrf.mxu0
        %v1194 = vadd.f32 0.0, %v1193
        %v1195 = vpop.f32.mrf.mxu0
        %1196 = vmatprep.mubr.bf16.mxu0 0
        %1197 = vmatmul.mubr.bf16.gmra.mxu0 %v1145
        %v1198 = vpop.f32.mrf.mxu0
        %v1199 = vadd.f32 0.0, %v1198
        %v1200 = vpop.f32.mrf.mxu0
        %v1201 = vpop.f32.mrf.mxu0
        %v1202 = vadd.f32 0.0, %v1201
        %v1203 = vpop.f32.mrf.mxu0
        %1204 = vmatprep.mubr.bf16.mxu0 0
        %1205 = vmatmul.mubr.bf16.gmra.mxu0 %v1148
        %v1206 = vpop.f32.mrf.mxu0
        %v1207 = vadd.f32 0.0, %v1206
        %v1208 = vpop.f32.mrf.mxu0
        %v1209 = vpop.f32.mrf.mxu0
        %v1210 = vadd.f32 0.0, %v1209
        %v1211 = vpop.f32.mrf.mxu0
        %1212 = vmatprep.mubr.bf16.mxu0 0
        %1213 = vmatmul.mubr.bf16.gmra.mxu0 %v1151
        %v1214 = vpop.f32.mrf.mxu0
        %v1215 = vadd.f32 0.0, %v1214
        %v1216 = vpop.f32.mrf.mxu0
        %v1217 = vpop.f32.mrf.mxu0
        %v1218 = vadd.f32 0.0, %v1217
        %v1219 = vpop.f32.mrf.mxu0
        %1220 = vdwg.mxu0
        %v1221 = vadd.f32 %v1125, %v1191
        %v1222 = vadd.f32 %v1126, %v1194
        %v1223 = vadd.f32 %v1127, %v1199
        %v1224 = vadd.f32 %v1128, %v1202
        %v1225 = vadd.f32 %v1129, %v1207
        %v1226 = vadd.f32 %v1130, %v1210
        %v1227 = vadd.f32 %v1131, %v1215
        %v1228 = vadd.f32 %v1132, %v1218
        %v1229 = vunpack.c.h.b16 %v657
        %v1230 = vpack.c.b16 %v1136, %v1136
        %v1231 = vpack.c.b16 %v1229, %v1229
        %v1233 = vshrl.u32 %v1230, 16
        %v1235 = vrot.slane %v1233, 4
        %v1236 = vshll.u32 %v1230, 16
        %v1238 = vrot.slane %v1236, 5
        %v1239 = vor.u32 %v1235, %v1238
        %v1240 = vrot.slane %v1239, 4
        %v1242 = vshll.u32 %v1231, 16
        %v1244 = vrot.slane %v1242, 5
        %v1245 = vsel %vm701, %v1240, %v1244
        %s1246 = scalar_lea.vmem [#allocation2], 8
        %v1247 = vld [vmem:[%s1246] sm:$0x3]
        %v1248 = vunpack.c.l.b16 %v1245
        %v1249 = vpack.c.b16 %v818, %v817
        %v1250 = vpack.c.b16 %v820, %v819
        %v1251 = vpack.c.b16 %v822, %v821
        %v1252 = vpack.c.b16 %v1248, %v823
        %v1254 = vsel %vm828, %v1249, 0
        %v1257 = vsel %vm828, %v1250, 0
        %v1260 = vsel %vm828, %v1251, 0
        %v1263 = vsel %vm828, %v1252, 0
        %v1266 = vand.u32 %v1247, %v843
        %1268 = vmatprep.subr.bf16.mxu0 0
        %1269 = vmatpush1.bf16.msra.mxu0 0
        %1270 = vmatprep.subr.bf16.mxu0 0
        %1271 = vmatpush1.bf16.msra.mxu0 0
        %1272 = vmatprep.subr.bf16.mxu0 0
        %1273 = vmatpush1.bf16.msra.mxu0 0
        %1274 = vmatprep.subr.bf16.mxu0 0
        %1275 = vmatpush1.bf16.msra.mxu0 0
        %1276 = vmatprep.subr.bf16.mxu0 0
        %1277 = vmatpush1.bf16.msra.mxu0 0
        %1278 = vmatprep.subr.bf16.mxu0 0
        %1279 = vmatpush1.bf16.msra.mxu0 0
        %1280 = vmatprep.subr.bf16.mxu0 0
        %1281 = vmatpush1.bf16.msra.mxu0 0
        %1282 = vmatprep.subr.bf16.mxu0 0
        %1283 = vmatpush1.bf16.msra.mxu0 %v1266
        %1284 = vmatprep.subr.bf16.mxu0 0
        %1285 = vmatpush2.bf16.msra.mxu0 0
        %1286 = vmatprep.subr.bf16.mxu0 0
        %1287 = vmatpush2.bf16.msra.mxu0 0
        %1288 = vmatprep.subr.bf16.mxu0 0
        %1289 = vmatpush2.bf16.msra.mxu0 0
        %1290 = vmatprep.subr.bf16.mxu0 0
        %1291 = vmatpush2.bf16.msra.mxu0 0
        %1292 = vmatprep.subr.bf16.mxu0 0
        %1293 = vmatpush2.bf16.msra.mxu0 0
        %1294 = vmatprep.subr.bf16.mxu0 0
        %1295 = vmatpush2.bf16.msra.mxu0 0
        %1296 = vmatprep.subr.bf16.mxu0 0
        %1297 = vmatpush2.bf16.msra.mxu0 0
        %1298 = vmatprep.subr.bf16.mxu0 0
        %1299 = vmatpush2.bf16.msra.mxu0 0
        %1300 = vmatprep.mubr.bf16.mxu0 0
        %1301 = vmatmul.mubr.bf16.gmra.mxu0 %v1254
        %v1302 = vpop.f32.mrf.mxu0
        %v1303 = vadd.f32 0.0, %v1302
        %v1304 = vpop.f32.mrf.mxu0
        %v1305 = vpop.f32.mrf.mxu0
        %v1306 = vadd.f32 0.0, %v1305
        %v1307 = vpop.f32.mrf.mxu0
        %1308 = vmatprep.mubr.bf16.mxu0 0
        %1309 = vmatmul.mubr.bf16.gmra.mxu0 %v1257
        %v1310 = vpop.f32.mrf.mxu0
        %v1311 = vadd.f32 0.0, %v1310
        %v1312 = vpop.f32.mrf.mxu0
        %v1313 = vpop.f32.mrf.mxu0
        %v1314 = vadd.f32 0.0, %v1313
        %v1315 = vpop.f32.mrf.mxu0
        %1316 = vmatprep.mubr.bf16.mxu0 0
        %1317 = vmatmul.mubr.bf16.gmra.mxu0 %v1260
        %v1318 = vpop.f32.mrf.mxu0
        %v1319 = vadd.f32 0.0, %v1318
        %v1320 = vpop.f32.mrf.mxu0
        %v1321 = vpop.f32.mrf.mxu0
        %v1322 = vadd.f32 0.0, %v1321
        %v1323 = vpop.f32.mrf.mxu0
        %1324 = vmatprep.mubr.bf16.mxu0 0
        %1325 = vmatmul.mubr.bf16.gmra.mxu0 %v1263
        %v1326 = vpop.f32.mrf.mxu0
        %v1327 = vadd.f32 0.0, %v1326
        %v1328 = vpop.f32.mrf.mxu0
        %v1329 = vpop.f32.mrf.mxu0
        %v1330 = vadd.f32 0.0, %v1329
        %v1331 = vpop.f32.mrf.mxu0
        %1332 = vdwg.mxu0
        %v1333 = vadd.f32 %v1221, %v1303
        %v1334 = vadd.f32 %v1222, %v1306
        %v1335 = vadd.f32 %v1223, %v1311
        %v1336 = vadd.f32 %v1224, %v1314
        %v1337 = vadd.f32 %v1225, %v1319
        %v1338 = vadd.f32 %v1226, %v1322
        %v1339 = vadd.f32 %v1227, %v1327
        %v1340 = vadd.f32 %v1228, %v1330
        %v1341 = vrot.slane %v1230, 5
        %v1342 = vrot.slane %v1341, 4
        %v1343 = vrot.slane %v1231, 5
        %v1344 = vsel %vm998, %v1342, %v1343
        %s1345 = scalar_lea.vmem [#allocation2], 10
        %v1346 = vld [vmem:[%s1345] sm:$0x3]
        %v1347 = vunpack.c.l.b16 %v1344
        %v1348 = vpack.c.b16 %v1035, %v1034
        %v1349 = vpack.c.b16 %v1037, %v1036
        %v1350 = vpack.c.b16 %v1039, %v1038
        %v1351 = vpack.c.b16 %v1347, %v1040
        %v1353 = vsel %vm828, %v1348, 0
        %v1356 = vsel %vm828, %v1349, 0
        %v1359 = vsel %vm828, %v1350, 0
        %v1362 = vsel %vm828, %v1351, 0
        %v1365 = vand.u32 %v1346, %v843
        %1367 = vmatprep.subr.bf16.mxu0 0
        %1368 = vmatpush1.bf16.msra.mxu0 0
        %1369 = vmatprep.subr.bf16.mxu0 0
        %1370 = vmatpush1.bf16.msra.mxu0 0
        %1371 = vmatprep.subr.bf16.mxu0 0
        %1372 = vmatpush1.bf16.msra.mxu0 0
        %1373 = vmatprep.subr.bf16.mxu0 0
        %1374 = vmatpush1.bf16.msra.mxu0 0
        %1375 = vmatprep.subr.bf16.mxu0 0
        %1376 = vmatpush1.bf16.msra.mxu0 0
        %1377 = vmatprep.subr.bf16.mxu0 0
        %1378 = vmatpush1.bf16.msra.mxu0 0
        %1379 = vmatprep.subr.bf16.mxu0 0
        %1380 = vmatpush1.bf16.msra.mxu0 0
        %1381 = vmatprep.subr.bf16.mxu0 0
        %1382 = vmatpush1.bf16.msra.mxu0 %v1365
        %1383 = vmatprep.subr.bf16.mxu0 0
        %1384 = vmatpush2.bf16.msra.mxu0 0
        %1385 = vmatprep.subr.bf16.mxu0 0
        %1386 = vmatpush2.bf16.msra.mxu0 0
        %1387 = vmatprep.subr.bf16.mxu0 0
        %1388 = vmatpush2.bf16.msra.mxu0 0
        %1389 = vmatprep.subr.bf16.mxu0 0
        %1390 = vmatpush2.bf16.msra.mxu0 0
        %1391 = vmatprep.subr.bf16.mxu0 0
        %1392 = vmatpush2.bf16.msra.mxu0 0
        %1393 = vmatprep.subr.bf16.mxu0 0
        %1394 = vmatpush2.bf16.msra.mxu0 0
        %1395 = vmatprep.subr.bf16.mxu0 0
        %1396 = vmatpush2.bf16.msra.mxu0 0
        %1397 = vmatprep.subr.bf16.mxu0 0
        %1398 = vmatpush2.bf16.msra.mxu0 0
        %1399 = vmatprep.mubr.bf16.mxu0 0
        %1400 = vmatmul.mubr.bf16.gmra.mxu0 %v1353
        %v1401 = vpop.f32.mrf.mxu0
        %v1402 = vadd.f32 0.0, %v1401
        %v1403 = vpop.f32.mrf.mxu0
        %v1404 = vpop.f32.mrf.mxu0
        %v1405 = vadd.f32 0.0, %v1404
        %v1406 = vpop.f32.mrf.mxu0
        %1407 = vmatprep.mubr.bf16.mxu0 0
        %1408 = vmatmul.mubr.bf16.gmra.mxu0 %v1356
        %v1409 = vpop.f32.mrf.mxu0
        %v1410 = vadd.f32 0.0, %v1409
        %v1411 = vpop.f32.mrf.mxu0
        %v1412 = vpop.f32.mrf.mxu0
        %v1413 = vadd.f32 0.0, %v1412
        %v1414 = vpop.f32.mrf.mxu0
        %1415 = vmatprep.mubr.bf16.mxu0 0
        %1416 = vmatmul.mubr.bf16.gmra.mxu0 %v1359
        %v1417 = vpop.f32.mrf.mxu0
        %v1418 = vadd.f32 0.0, %v1417
        %v1419 = vpop.f32.mrf.mxu0
        %v1420 = vpop.f32.mrf.mxu0
        %v1421 = vadd.f32 0.0, %v1420
        %v1422 = vpop.f32.mrf.mxu0
        %1423 = vmatprep.mubr.bf16.mxu0 0
        %1424 = vmatmul.mubr.bf16.gmra.mxu0 %v1362
        %v1425 = vpop.f32.mrf.mxu0
        %v1426 = vadd.f32 0.0, %v1425
        %v1427 = vpop.f32.mrf.mxu0
        %v1428 = vpop.f32.mrf.mxu0
        %v1429 = vadd.f32 0.0, %v1428
        %v1430 = vpop.f32.mrf.mxu0
        %1431 = vdwg.mxu0
        %v1432 = vadd.f32 %v1333, %v1402
        %v1433 = vadd.f32 %v1334, %v1405
        %v1434 = vadd.f32 %v1335, %v1410
        %v1435 = vadd.f32 %v1336, %v1413
        %v1436 = vadd.f32 %v1337, %v1418
        %v1437 = vadd.f32 %v1338, %v1421
        %v1438 = vadd.f32 %v1339, %v1426
        %v1439 = vadd.f32 %v1340, %v1429
        %s1440 = scalar_lea.vmem [#allocation2], 12
        %v1441 = vld [vmem:[%s1440] sm:$0x3]
        %v1442 = vpack.c.b16 %v667, %v1136
        %v1444 = vsel %vm828, %v1442, 0
        %v1447 = vand.u32 %v1441, %v843
        %1449 = vmatprep.subr.bf16.mxu0 0
        %1450 = vmatpush1.bf16.msra.mxu0 0
        %1451 = vmatprep.subr.bf16.mxu0 0
        %1452 = vmatpush1.bf16.msra.mxu0 0
        %1453 = vmatprep.subr.bf16.mxu0 0
        %1454 = vmatpush1.bf16.msra.mxu0 0
        %1455 = vmatprep.subr.bf16.mxu0 0
        %1456 = vmatpush1.bf16.msra.mxu0 0
        %1457 = vmatprep.subr.bf16.mxu0 0
        %1458 = vmatpush1.bf16.msra.mxu0 0
        %1459 = vmatprep.subr.bf16.mxu0 0
        %1460 = vmatpush1.bf16.msra.mxu0 0
        %1461 = vmatprep.subr.bf16.mxu0 0
        %1462 = vmatpush1.bf16.msra.mxu0 0
        %1463 = vmatprep.subr.bf16.mxu0 0
        %1464 = vmatpush1.bf16.msra.mxu0 %v1447
        %1465 = vmatprep.subr.bf16.mxu0 0
        %1466 = vmatpush2.bf16.msra.mxu0 0
        %1467 = vmatprep.subr.bf16.mxu0 0
        %1468 = vmatpush2.bf16.msra.mxu0 0
        %1469 = vmatprep.subr.bf16.mxu0 0
        %1470 = vmatpush2.bf16.msra.mxu0 0
        %1471 = vmatprep.subr.bf16.mxu0 0
        %1472 = vmatpush2.bf16.msra.mxu0 0
        %1473 = vmatprep.subr.bf16.mxu0 0
        %1474 = vmatpush2.bf16.msra.mxu0 0
        %1475 = vmatprep.subr.bf16.mxu0 0
        %1476 = vmatpush2.bf16.msra.mxu0 0
        %1477 = vmatprep.subr.bf16.mxu0 0
        %1478 = vmatpush2.bf16.msra.mxu0 0
        %1479 = vmatprep.subr.bf16.mxu0 0
        %1480 = vmatpush2.bf16.msra.mxu0 0
        %1481 = vmatprep.mubr.bf16.mxu0 0
        %1482 = vmatmul.mubr.bf16.gmra.mxu0 %v920
        %v1483 = vpop.f32.mrf.mxu0
        %v1484 = vadd.f32 0.0, %v1483
        %v1485 = vpop.f32.mrf.mxu0
        %v1486 = vpop.f32.mrf.mxu0
        %v1487 = vadd.f32 0.0, %v1486
        %v1488 = vpop.f32.mrf.mxu0
        %1489 = vmatprep.mubr.bf16.mxu0 0
        %1490 = vmatmul.mubr.bf16.gmra.mxu0 %v923
        %v1491 = vpop.f32.mrf.mxu0
        %v1492 = vadd.f32 0.0, %v1491
        %v1493 = vpop.f32.mrf.mxu0
        %v1494 = vpop.f32.mrf.mxu0
        %v1495 = vadd.f32 0.0, %v1494
        %v1496 = vpop.f32.mrf.mxu0
        %1497 = vmatprep.mubr.bf16.mxu0 0
        %1498 = vmatmul.mubr.bf16.gmra.mxu0 %v926
        %v1499 = vpop.f32.mrf.mxu0
        %v1500 = vadd.f32 0.0, %v1499
        %v1501 = vpop.f32.mrf.mxu0
        %v1502 = vpop.f32.mrf.mxu0
        %v1503 = vadd.f32 0.0, %v1502
        %v1504 = vpop.f32.mrf.mxu0
        %1505 = vmatprep.mubr.bf16.mxu0 0
        %1506 = vmatmul.mubr.bf16.gmra.mxu0 %v1444
        %v1507 = vpop.f32.mrf.mxu0
        %v1508 = vadd.f32 0.0, %v1507
        %v1509 = vpop.f32.mrf.mxu0
        %v1510 = vpop.f32.mrf.mxu0
        %v1511 = vadd.f32 0.0, %v1510
        %v1512 = vpop.f32.mrf.mxu0
        %1513 = vdwg.mxu0
        %v1514 = vadd.f32 %v1432, %v1484
        %v1515 = vadd.f32 %v1433, %v1487
        %v1516 = vadd.f32 %v1434, %v1492
        %v1517 = vadd.f32 %v1435, %v1495
        %v1518 = vadd.f32 %v1436, %v1500
        %v1519 = vadd.f32 %v1437, %v1503
        %v1520 = vadd.f32 %v1438, %v1508
        %v1521 = vadd.f32 %v1439, %v1511
        %s1522 = scalar_lea.vmem [#allocation2], 14
        %v1523 = vld [vmem:[%s1522] sm:$0x3]
        %v1524 = vpack.c.b16 %v816, %v1248
        %v1526 = vsel %vm828, %v1524, 0
        %v1529 = vand.u32 %v1523, %v843
        %1531 = vmatprep.subr.bf16.mxu0 0
        %1532 = vmatpush1.bf16.msra.mxu0 0
        %1533 = vmatprep.subr.bf16.mxu0 0
        %1534 = vmatpush1.bf16.msra.mxu0 0
        %1535 = vmatprep.subr.bf16.mxu0 0
        %1536 = vmatpush1.bf16.msra.mxu0 0
        %1537 = vmatprep.subr.bf16.mxu0 0
        %1538 = vmatpush1.bf16.msra.mxu0 0
        %1539 = vmatprep.subr.bf16.mxu0 0
        %1540 = vmatpush1.bf16.msra.mxu0 0
        %1541 = vmatprep.subr.bf16.mxu0 0
        %1542 = vmatpush1.bf16.msra.mxu0 0
        %1543 = vmatprep.subr.bf16.mxu0 0
        %1544 = vmatpush1.bf16.msra.mxu0 0
        %1545 = vmatprep.subr.bf16.mxu0 0
        %1546 = vmatpush1.bf16.msra.mxu0 %v1529
        %1547 = vmatprep.subr.bf16.mxu0 0
        %1548 = vmatpush2.bf16.msra.mxu0 0
        %1549 = vmatprep.subr.bf16.mxu0 0
        %1550 = vmatpush2.bf16.msra.mxu0 0
        %1551 = vmatprep.subr.bf16.mxu0 0
        %1552 = vmatpush2.bf16.msra.mxu0 0
        %1553 = vmatprep.subr.bf16.mxu0 0
        %1554 = vmatpush2.bf16.msra.mxu0 0
        %1555 = vmatprep.subr.bf16.mxu0 0
        %1556 = vmatpush2.bf16.msra.mxu0 0
        %1557 = vmatprep.subr.bf16.mxu0 0
        %1558 = vmatpush2.bf16.msra.mxu0 0
        %1559 = vmatprep.subr.bf16.mxu0 0
        %1560 = vmatpush2.bf16.msra.mxu0 0
        %1561 = vmatprep.subr.bf16.mxu0 0
        %1562 = vmatpush2.bf16.msra.mxu0 0
        %1563 = vmatprep.mubr.bf16.mxu0 0
        %1564 = vmatmul.mubr.bf16.gmra.mxu0 %v833
        %v1565 = vpop.f32.mrf.mxu0
        %v1566 = vadd.f32 0.0, %v1565
        %v1567 = vpop.f32.mrf.mxu0
        %v1568 = vpop.f32.mrf.mxu0
        %v1569 = vadd.f32 0.0, %v1568
        %v1570 = vpop.f32.mrf.mxu0
        %1571 = vmatprep.mubr.bf16.mxu0 0
        %1572 = vmatmul.mubr.bf16.gmra.mxu0 %v836
        %v1573 = vpop.f32.mrf.mxu0
        %v1574 = vadd.f32 0.0, %v1573
        %v1575 = vpop.f32.mrf.mxu0
        %v1576 = vpop.f32.mrf.mxu0
        %v1577 = vadd.f32 0.0, %v1576
        %v1578 = vpop.f32.mrf.mxu0
        %1579 = vmatprep.mubr.bf16.mxu0 0
        %1580 = vmatmul.mubr.bf16.gmra.mxu0 %v839
        %v1581 = vpop.f32.mrf.mxu0
        %v1582 = vadd.f32 0.0, %v1581
        %v1583 = vpop.f32.mrf.mxu0
        %v1584 = vpop.f32.mrf.mxu0
        %v1585 = vadd.f32 0.0, %v1584
        %v1586 = vpop.f32.mrf.mxu0
        %1587 = vmatprep.mubr.bf16.mxu0 0
        %1588 = vmatmul.mubr.bf16.gmra.mxu0 %v1526
        %v1589 = vpop.f32.mrf.mxu0
        %v1590 = vadd.f32 0.0, %v1589
        %v1591 = vpop.f32.mrf.mxu0
        %v1592 = vpop.f32.mrf.mxu0
        %v1593 = vadd.f32 0.0, %v1592
        %v1594 = vpop.f32.mrf.mxu0
        %1595 = vdwg.mxu0
        %v1596 = vadd.f32 %v1514, %v1566
        %v1597 = vadd.f32 %v1515, %v1569
        %v1598 = vadd.f32 %v1516, %v1574
        %v1599 = vadd.f32 %v1517, %v1577
        %v1600 = vadd.f32 %v1518, %v1582
        %v1601 = vadd.f32 %v1519, %v1585
        %v1602 = vadd.f32 %v1520, %v1590
        %v1603 = vadd.f32 %v1521, %v1593
        %s1604 = scalar_lea.vmem [#allocation2], 16
        %v1605 = vld [vmem:[%s1604] sm:$0x3]
        %v1606 = vpack.c.b16 %v1033, %v1347
        %v1608 = vsel %vm828, %v1606, 0
        %v1611 = vand.u32 %v1605, %v843
        %1613 = vmatprep.subr.bf16.mxu0 0
        %1614 = vmatpush1.bf16.msra.mxu0 0
        %1615 = vmatprep.subr.bf16.mxu0 0
        %1616 = vmatpush1.bf16.msra.mxu0 0
        %1617 = vmatprep.subr.bf16.mxu0 0
        %1618 = vmatpush1.bf16.msra.mxu0 0
        %1619 = vmatprep.subr.bf16.mxu0 0
        %1620 = vmatpush1.bf16.msra.mxu0 0
        %1621 = vmatprep.subr.bf16.mxu0 0
        %1622 = vmatpush1.bf16.msra.mxu0 0
        %1623 = vmatprep.subr.bf16.mxu0 0
        %1624 = vmatpush1.bf16.msra.mxu0 0
        %1625 = vmatprep.subr.bf16.mxu0 0
        %1626 = vmatpush1.bf16.msra.mxu0 0
        %1627 = vmatprep.subr.bf16.mxu0 0
        %1628 = vmatpush1.bf16.msra.mxu0 %v1611
        %1629 = vmatprep.subr.bf16.mxu0 0
        %1630 = vmatpush2.bf16.msra.mxu0 0
        %1631 = vmatprep.subr.bf16.mxu0 0
        %1632 = vmatpush2.bf16.msra.mxu0 0
        %1633 = vmatprep.subr.bf16.mxu0 0
        %1634 = vmatpush2.bf16.msra.mxu0 0
        %1635 = vmatprep.subr.bf16.mxu0 0
        %1636 = vmatpush2.bf16.msra.mxu0 0
        %1637 = vmatprep.subr.bf16.mxu0 0
        %1638 = vmatpush2.bf16.msra.mxu0 0
        %1639 = vmatprep.subr.bf16.mxu0 0
        %1640 = vmatpush2.bf16.msra.mxu0 0
        %1641 = vmatprep.subr.bf16.mxu0 0
        %1642 = vmatpush2.bf16.msra.mxu0 0
        %1643 = vmatprep.subr.bf16.mxu0 0
        %1644 = vmatpush2.bf16.msra.mxu0 0
        %1645 = vmatprep.mubr.bf16.mxu0 0
        %1646 = vmatmul.mubr.bf16.gmra.mxu0 %v1049
        %v1647 = vpop.f32.mrf.mxu0
        %v1648 = vadd.f32 0.0, %v1647
        %v1649 = vpop.f32.mrf.mxu0
        %v1650 = vpop.f32.mrf.mxu0
        %v1651 = vadd.f32 0.0, %v1650
        %v1652 = vpop.f32.mrf.mxu0
        %1653 = vmatprep.mubr.bf16.mxu0 0
        %1654 = vmatmul.mubr.bf16.gmra.mxu0 %v1052
        %v1655 = vpop.f32.mrf.mxu0
        %v1656 = vadd.f32 0.0, %v1655
        %v1657 = vpop.f32.mrf.mxu0
        %v1658 = vpop.f32.mrf.mxu0
        %v1659 = vadd.f32 0.0, %v1658
        %v1660 = vpop.f32.mrf.mxu0
        %1661 = vmatprep.mubr.bf16.mxu0 0
        %1662 = vmatmul.mubr.bf16.gmra.mxu0 %v1055
        %v1663 = vpop.f32.mrf.mxu0
        %v1664 = vadd.f32 0.0, %v1663
        %v1665 = vpop.f32.mrf.mxu0
        %v1666 = vpop.f32.mrf.mxu0
        %v1667 = vadd.f32 0.0, %v1666
        %v1668 = vpop.f32.mrf.mxu0
        %1669 = vmatprep.mubr.bf16.mxu0 0
        %1670 = vmatmul.mubr.bf16.gmra.mxu0 %v1608
        %v1671 = vpop.f32.mrf.mxu0
        %v1672 = vadd.f32 0.0, %v1671
        %v1673 = vpop.f32.mrf.mxu0
        %v1674 = vpop.f32.mrf.mxu0
        %v1675 = vadd.f32 0.0, %v1674
        %v1676 = vpop.f32.mrf.mxu0
        %1677 = vdwg.mxu0
        %v1678 = vadd.f32 %v1596, %v1648
        %v1679 = vadd.f32 %v1597, %v1651
        %v1680 = vadd.f32 %v1598, %v1656
        %v1681 = vadd.f32 %v1599, %v1659
        %v1682 = vadd.f32 %v1600, %v1664
        %v1683 = vadd.f32 %v1601, %v1667
        %v1684 = vadd.f32 %v1602, %v1672
        %v1685 = vadd.f32 %v1603, %v1675
        %v1686 = vld [vmem:[%s2] sm:$0x1]
        %v1688 = vlaneseq
        %v1689 = vshrl.u32 %v1688, 7
        %v1690 = vsub.s32 0, %v1689
        %v1691 = vrot.slane %v1686, %v1690
        %v1693 = vadd.f32 %v1678, %v1691
        %v1694 = vadd.f32 %v1679, %v1691
        %v1695 = vadd.f32 %v1680, %v1691
        %v1696 = vadd.f32 %v1681, %v1691
        %v1697 = vadd.f32 %v1682, %v1691
        %v1698 = vadd.f32 %v1683, %v1691
        %v1699 = vadd.f32 %v1684, %v1691
        %v1700 = vadd.f32 %v1685, %v1691
        %v1701 = vmax.f32 %v1693, 0.0
        %v1702 = vmax.f32 %v1694, 0.0
        %v1703 = vmax.f32 %v1695, 0.0
        %v1704 = vmax.f32 %v1696, 0.0
        %v1705 = vmax.f32 %v1697, 0.0
        %v1706 = vmax.f32 %v1698, 0.0
        %v1707 = vmax.f32 %v1699, 0.0
        %v1708 = vmax.f32 %v1700, 0.0
        %v1717 = vcombine.high %v1701, %v1701
        %v1719 = vunpack.c.l.s4 1983009808
        %v1720 = vunpack.c.0.s8 %v1719
        %v1721 = vlaneseq
        %v1722 = vshrl.u32 %v1721, 7
        %v1723 = vsub.s32 %v1720, %v1722
        %v1724 = vrot.slane %v1701, %v1723
        %v1726 = vunpack.c.l.s4 1983009808
        %v1727 = vunpack.c.0.s8 %v1726
        %v1728 = vlaneseq
        %v1729 = vshrl.u32 %v1728, 7
        %v1730 = vsub.s32 %v1727, %v1729
        %v1731 = vrot.slane %v1717, %v1730
        %v1732 = vcombine.high %v1724, %v1724
        %v1733 = vcombine.high %v1731, %v1731
        %v1734 = vcombine.high %v1702, %v1702
        %v1736 = vunpack.c.l.s4 1983009808
        %v1737 = vunpack.c.0.s8 %v1736
        %v1738 = vlaneseq
        %v1739 = vshrl.u32 %v1738, 7
        %v1740 = vsub.s32 %v1737, %v1739
        %v1741 = vrot.slane %v1702, %v1740
        %v1743 = vunpack.c.l.s4 1983009808
        %v1744 = vunpack.c.0.s8 %v1743
        %v1745 = vlaneseq
        %v1746 = vshrl.u32 %v1745, 7
        %v1747 = vsub.s32 %v1744, %v1746
        %v1748 = vrot.slane %v1734, %v1747
        %v1749 = vcombine.high %v1741, %v1741
        %v1750 = vcombine.high %v1748, %v1748
        %v1751 = vcombine.high %v1703, %v1703
        %v1753 = vunpack.c.l.s4 1983009808
        %v1754 = vunpack.c.0.s8 %v1753
        %v1755 = vlaneseq
        %v1756 = vshrl.u32 %v1755, 7
        %v1757 = vsub.s32 %v1754, %v1756
        %v1758 = vrot.slane %v1703, %v1757
        %v1760 = vunpack.c.l.s4 1983009808
        %v1761 = vunpack.c.0.s8 %v1760
        %v1762 = vlaneseq
        %v1763 = vshrl.u32 %v1762, 7
        %v1764 = vsub.s32 %v1761, %v1763
        %v1765 = vrot.slane %v1751, %v1764
        %v1766 = vcombine.high %v1758, %v1758
        %v1767 = vcombine.high %v1765, %v1765
        %v1768 = vcombine.high %v1704, %v1704
        %v1770 = vunpack.c.l.s4 1983009808
        %v1771 = vunpack.c.0.s8 %v1770
        %v1772 = vlaneseq
        %v1773 = vshrl.u32 %v1772, 7
        %v1774 = vsub.s32 %v1771, %v1773
        %v1775 = vrot.slane %v1704, %v1774
        %v1777 = vunpack.c.l.s4 1983009808
        %v1778 = vunpack.c.0.s8 %v1777
        %v1779 = vlaneseq
        %v1780 = vshrl.u32 %v1779, 7
        %v1781 = vsub.s32 %v1778, %v1780
        %v1782 = vrot.slane %v1768, %v1781
        %v1783 = vcombine.high %v1775, %v1775
        %v1784 = vcombine.high %v1782, %v1782
        %v1785 = vcombine.high %v1705, %v1705
        %v1787 = vunpack.c.l.s4 1983009808
        %v1788 = vunpack.c.0.s8 %v1787
        %v1789 = vlaneseq
        %v1790 = vshrl.u32 %v1789, 7
        %v1791 = vsub.s32 %v1788, %v1790
        %v1792 = vrot.slane %v1705, %v1791
        %v1794 = vunpack.c.l.s4 1983009808
        %v1795 = vunpack.c.0.s8 %v1794
        %v1796 = vlaneseq
        %v1797 = vshrl.u32 %v1796, 7
        %v1798 = vsub.s32 %v1795, %v1797
        %v1799 = vrot.slane %v1785, %v1798
        %v1800 = vcombine.high %v1792, %v1792
        %v1801 = vcombine.high %v1799, %v1799
        %v1802 = vcombine.high %v1706, %v1706
        %v1804 = vunpack.c.l.s4 1983009808
        %v1805 = vunpack.c.0.s8 %v1804
        %v1806 = vlaneseq
        %v1807 = vshrl.u32 %v1806, 7
        %v1808 = vsub.s32 %v1805, %v1807
        %v1809 = vrot.slane %v1706, %v1808
        %v1811 = vunpack.c.l.s4 1983009808
        %v1812 = vunpack.c.0.s8 %v1811
        %v1813 = vlaneseq
        %v1814 = vshrl.u32 %v1813, 7
        %v1815 = vsub.s32 %v1812, %v1814
        %v1816 = vrot.slane %v1802, %v1815
        %v1817 = vcombine.high %v1809, %v1809
        %v1818 = vcombine.high %v1816, %v1816
        %v1819 = vcombine.high %v1707, %v1707
        %v1821 = vunpack.c.l.s4 1983009808
        %v1822 = vunpack.c.0.s8 %v1821
        %v1823 = vlaneseq
        %v1824 = vshrl.u32 %v1823, 7
        %v1825 = vsub.s32 %v1822, %v1824
        %v1826 = vrot.slane %v1707, %v1825
        %v1828 = vunpack.c.l.s4 1983009808
        %v1829 = vunpack.c.0.s8 %v1828
        %v1830 = vlaneseq
        %v1831 = vshrl.u32 %v1830, 7
        %v1832 = vsub.s32 %v1829, %v1831
        %v1833 = vrot.slane %v1819, %v1832
        %v1834 = vcombine.high %v1826, %v1826
        %v1835 = vcombine.high %v1833, %v1833
        %v1836 = vcombine.high %v1708, %v1708
        %v1838 = vunpack.c.l.s4 1983009808
        %v1839 = vunpack.c.0.s8 %v1838
        %v1840 = vlaneseq
        %v1841 = vshrl.u32 %v1840, 7
        %v1842 = vsub.s32 %v1839, %v1841
        %v1843 = vrot.slane %v1708, %v1842
        %v1845 = vunpack.c.l.s4 1983009808
        %v1846 = vunpack.c.0.s8 %v1845
        %v1847 = vlaneseq
        %v1848 = vshrl.u32 %v1847, 7
        %v1849 = vsub.s32 %v1846, %v1848
        %v1850 = vrot.slane %v1836, %v1849
        %v1851 = vcombine.high %v1843, %v1843
        %v1852 = vcombine.high %v1850, %v1850
        %v1885 = vrot.slane %v1724, 7
        %v1886 = vrot.slane %v1885, 2
        %v1887 = vrot.slane %v1732, 7
        %v1888 = vrot.slane %v1887, 2
        %v1889 = vrot.slane %v1731, 7
        %v1890 = vrot.slane %v1889, 2
        %v1891 = vrot.slane %v1733, 7
        %v1892 = vrot.slane %v1891, 2
        %v1893 = vrot.slane %v1741, 7
        %v1894 = vrot.slane %v1893, 2
        %v1895 = vrot.slane %v1749, 7
        %v1896 = vrot.slane %v1895, 2
        %v1897 = vrot.slane %v1748, 7
        %v1898 = vrot.slane %v1897, 2
        %v1899 = vrot.slane %v1750, 7
        %v1900 = vrot.slane %v1899, 2
        %v1901 = vrot.slane %v1758, 7
        %v1902 = vrot.slane %v1901, 2
        %v1903 = vrot.slane %v1766, 7
        %v1904 = vrot.slane %v1903, 2
        %v1905 = vrot.slane %v1765, 7
        %v1906 = vrot.slane %v1905, 2
        %v1907 = vrot.slane %v1767, 7
        %v1908 = vrot.slane %v1907, 2
        %v1909 = vrot.slane %v1775, 7
        %v1910 = vrot.slane %v1909, 2
        %v1911 = vrot.slane %v1783, 7
        %v1912 = vrot.slane %v1911, 2
        %v1913 = vrot.slane %v1782, 7
        %v1914 = vrot.slane %v1913, 2
        %v1915 = vrot.slane %v1784, 7
        %v1916 = vrot.slane %v1915, 2
        %v1917 = vrot.slane %v1792, 7
        %v1918 = vrot.slane %v1917, 2
        %v1919 = vrot.slane %v1800, 7
        %v1920 = vrot.slane %v1919, 2
        %v1921 = vrot.slane %v1799, 7
        %v1922 = vrot.slane %v1921, 2
        %v1923 = vrot.slane %v1801, 7
        %v1924 = vrot.slane %v1923, 2
        %v1925 = vrot.slane %v1809, 7
        %v1926 = vrot.slane %v1925, 2
        %v1927 = vrot.slane %v1817, 7
        %v1928 = vrot.slane %v1927, 2
        %v1929 = vrot.slane %v1816, 7
        %v1930 = vrot.slane %v1929, 2
        %v1931 = vrot.slane %v1818, 7
        %v1932 = vrot.slane %v1931, 2
        %v1933 = vrot.slane %v1826, 7
        %v1934 = vrot.slane %v1933, 2
        %v1935 = vrot.slane %v1834, 7
        %v1936 = vrot.slane %v1935, 2
        %v1937 = vrot.slane %v1833, 7
        %v1938 = vrot.slane %v1937, 2
        %v1939 = vrot.slane %v1835, 7
        %v1940 = vrot.slane %v1939, 2
        %v1941 = vrot.slane %v1843, 7
        %v1942 = vrot.slane %v1941, 2
        %v1943 = vrot.slane %v1851, 7
        %v1944 = vrot.slane %v1943, 2
        %v1945 = vrot.slane %v1850, 7
        %v1946 = vrot.slane %v1945, 2
        %v1947 = vrot.slane %v1852, 7
        %v1948 = vrot.slane %v1947, 2
        %v1981 = vmax.f32 %v1724, %v1886
        %v1982 = vmax.f32 %v1732, %v1888
        %v1983 = vmax.f32 %v1731, %v1890
        %v1984 = vmax.f32 %v1733, %v1892
        %v1985 = vmax.f32 %v1741, %v1894
        %v1986 = vmax.f32 %v1749, %v1896
        %v1987 = vmax.f32 %v1748, %v1898
        %v1988 = vmax.f32 %v1750, %v1900
        %v1989 = vmax.f32 %v1758, %v1902
        %v1990 = vmax.f32 %v1766, %v1904
        %v1991 = vmax.f32 %v1765, %v1906
        %v1992 = vmax.f32 %v1767, %v1908
        %v1993 = vmax.f32 %v1775, %v1910
        %v1994 = vmax.f32 %v1783, %v1912
        %v1995 = vmax.f32 %v1782, %v1914
        %v1996 = vmax.f32 %v1784, %v1916
        %v1997 = vmax.f32 %v1792, %v1918
        %v1998 = vmax.f32 %v1800, %v1920
        %v1999 = vmax.f32 %v1799, %v1922
        %v2000 = vmax.f32 %v1801, %v1924
        %v2001 = vmax.f32 %v1809, %v1926
        %v2002 = vmax.f32 %v1817, %v1928
        %v2003 = vmax.f32 %v1816, %v1930
        %v2004 = vmax.f32 %v1818, %v1932
        %v2005 = vmax.f32 %v1826, %v1934
        %v2006 = vmax.f32 %v1834, %v1936
        %v2007 = vmax.f32 %v1833, %v1938
        %v2008 = vmax.f32 %v1835, %v1940
        %v2009 = vmax.f32 %v1843, %v1942
        %v2010 = vmax.f32 %v1851, %v1944
        %v2011 = vmax.f32 %v1850, %v1946
        %v2012 = vmax.f32 %v1852, %v1948
        %v2013 = vmax.f32 %v1981, %v1985
        %v2014 = vmax.f32 %v1982, %v1986
        %v2015 = vmax.f32 %v1983, %v1987
        %v2016 = vmax.f32 %v1984, %v1988
        %v2017 = vmax.f32 %v1989, %v1993
        %v2018 = vmax.f32 %v1990, %v1994
        %v2019 = vmax.f32 %v1991, %v1995
        %v2020 = vmax.f32 %v1992, %v1996
        %v2021 = vmax.f32 %v1997, %v2001
        %v2022 = vmax.f32 %v1998, %v2002
        %v2023 = vmax.f32 %v1999, %v2003
        %v2024 = vmax.f32 %v2000, %v2004
        %v2025 = vmax.f32 %v2005, %v2009
        %v2026 = vmax.f32 %v2006, %v2010
        %v2027 = vmax.f32 %v2007, %v2011
        %v2028 = vmax.f32 %v2008, %v2012
        %v2045 = vlaneseq
        %v2046 = vshrl.u32 %v2045, 7
        %v2047 = vsub.s32 0, %v2046
        %v2048 = vrot.slane %v2013, %v2047
        %v2049 = vlaneseq
        %v2050 = vshrl.u32 %v2049, 7
        %v2051 = vsub.s32 0, %v2050
        %v2052 = vrot.slane %v2014, %v2051
        %v2053 = vlaneseq
        %v2054 = vshrl.u32 %v2053, 7
        %v2055 = vsub.s32 0, %v2054
        %v2056 = vrot.slane %v2015, %v2055
        %v2057 = vlaneseq
        %v2058 = vshrl.u32 %v2057, 7
        %v2059 = vsub.s32 0, %v2058
        %v2060 = vrot.slane %v2016, %v2059
        %v2061 = vlaneseq
        %v2062 = vshrl.u32 %v2061, 7
        %v2063 = vsub.s32 0, %v2062
        %v2064 = vrot.slane %v2017, %v2063
        %v2065 = vlaneseq
        %v2066 = vshrl.u32 %v2065, 7
        %v2067 = vsub.s32 0, %v2066
        %v2068 = vrot.slane %v2018, %v2067
        %v2069 = vlaneseq
        %v2070 = vshrl.u32 %v2069, 7
        %v2071 = vsub.s32 0, %v2070
        %v2072 = vrot.slane %v2019, %v2071
        %v2073 = vlaneseq
        %v2074 = vshrl.u32 %v2073, 7
        %v2075 = vsub.s32 0, %v2074
        %v2076 = vrot.slane %v2020, %v2075
        %v2077 = vlaneseq
        %v2078 = vshrl.u32 %v2077, 7
        %v2079 = vsub.s32 0, %v2078
        %v2080 = vrot.slane %v2021, %v2079
        %v2081 = vlaneseq
        %v2082 = vshrl.u32 %v2081, 7
        %v2083 = vsub.s32 0, %v2082
        %v2084 = vrot.slane %v2022, %v2083
        %v2085 = vlaneseq
        %v2086 = vshrl.u32 %v2085, 7
        %v2087 = vsub.s32 0, %v2086
        %v2088 = vrot.slane %v2023, %v2087
        %v2089 = vlaneseq
        %v2090 = vshrl.u32 %v2089, 7
        %v2091 = vsub.s32 0, %v2090
        %v2092 = vrot.slane %v2024, %v2091
        %v2093 = vlaneseq
        %v2094 = vshrl.u32 %v2093, 7
        %v2095 = vsub.s32 0, %v2094
        %v2096 = vrot.slane %v2025, %v2095
        %v2097 = vlaneseq
        %v2098 = vshrl.u32 %v2097, 7
        %v2099 = vsub.s32 0, %v2098
        %v2100 = vrot.slane %v2026, %v2099
        %v2101 = vlaneseq
        %v2102 = vshrl.u32 %v2101, 7
        %v2103 = vsub.s32 0, %v2102
        %v2104 = vrot.slane %v2027, %v2103
        %v2105 = vlaneseq
        %v2106 = vshrl.u32 %v2105, 7
        %v2107 = vsub.s32 0, %v2106
        %v2108 = vrot.slane %v2028, %v2107
        %vm2109 = vcmask 1041409
        %v2110 = vsel %vm2109, %v2052, %v2048
        %vm2111 = vcmask 1042434
        %v2112 = vsel %vm2111, %v2056, %v2110
        %vm2113 = vcmask 1043459
        %v2114 = vsel %vm2113, %v2060, %v2112
        %v2115 = vsel %vm2109, %v2068, %v2064
        %v2116 = vsel %vm2111, %v2072, %v2115
        %v2117 = vsel %vm2113, %v2076, %v2116
        %v2118 = vsel %vm2109, %v2084, %v2080
        %v2119 = vsel %vm2111, %v2088, %v2118
        %v2120 = vsel %vm2113, %v2092, %v2119
        %v2121 = vsel %vm2109, %v2100, %v2096
        %v2122 = vsel %vm2111, %v2104, %v2121
        %v2123 = vsel %vm2113, %v2108, %v2122
        %v2124 = vrot.slane %v2114, 7
        %v2125 = vrot.slane %v2117, 7
        %v2126 = vrot.slane %v2120, 7
        %v2127 = vrot.slane %v2123, 7
        %v2132 = vsel %vm630, 0.0, %v2124
        %v2133 = vsel %vm630, 0.0, %v2125
        %v2134 = vsel %vm630, 0.0, %v2126
        %v2135 = vsel %vm630, 0.0, %v2127
        %vm2136 = vcmask 1044480
        %v2137 = vsel %vm2136, %v631, 0.0
        %v2138 = vsel %vm2136, %v2132, 0.0
        %v2139 = vsel %vm2136, %v2133, 0.0
        %v2140 = vsel %vm2136, %v2134, 0.0
        %v2141 = vsel %vm2136, %v2135, 0.0
        %v2142 = vpack.c.bf16 %v2137, %v2137
        %v2143 = vpack.c.bf16 %v2138, %v2138
        %v2144 = vpack.c.bf16 %v2139, %v2139
        %v2145 = vpack.c.bf16 %v2140, %v2140
        %v2146 = vpack.c.bf16 %v2141, %v2141
        %v2147 = vld [vmem:[#allocation5] sm:$0xf]
        %v2148 = vld [vmem:[#allocation5 + $0x4] sm:$0xf]
        %v2149 = vld [vmem:[#allocation5 + $0x8] sm:$0xf]
        %v2150 = vld [vmem:[#allocation5 + $0xc] sm:$0xf]
        %v2151 = vld [vmem:[#allocation5 + $0x10] sm:$0xf]
        %v2152 = vld [vmem:[#allocation5 + $0x14] sm:$0xf]
        %v2153 = vld [vmem:[#allocation5 + $0x18] sm:$0xf]
        %v2154 = vld [vmem:[#allocation5 + $0x1c] sm:$0xf]
        %v2160 = vunpack.c.l.s4 1983009808
        %v2161 = vunpack.c.0.s8 %v2160
        %v2162 = vlaneseq
        %v2163 = vshrl.u32 %v2162, 7
        %v2164 = vsub.s32 %v2161, %v2163
        %v2165 = vrot.slane %v2142, %v2164
        %v2166 = vcombine.high %v2165, %v2165
        %v2168 = vunpack.c.l.s4 1983009808
        %v2169 = vunpack.c.0.s8 %v2168
        %v2170 = vlaneseq
        %v2171 = vshrl.u32 %v2170, 7
        %v2172 = vsub.s32 %v2169, %v2171
        %v2173 = vrot.slane %v2143, %v2172
        %v2174 = vcombine.high %v2173, %v2173
        %v2176 = vunpack.c.l.s4 1983009808
        %v2177 = vunpack.c.0.s8 %v2176
        %v2178 = vlaneseq
        %v2179 = vshrl.u32 %v2178, 7
        %v2180 = vsub.s32 %v2177, %v2179
        %v2181 = vrot.slane %v2144, %v2180
        %v2182 = vcombine.high %v2181, %v2181
        %v2184 = vunpack.c.l.s4 1983009808
        %v2185 = vunpack.c.0.s8 %v2184
        %v2186 = vlaneseq
        %v2187 = vshrl.u32 %v2186, 7
        %v2188 = vsub.s32 %v2185, %v2187
        %v2189 = vrot.slane %v2145, %v2188
        %v2190 = vcombine.high %v2189, %v2189
        %vm2191 = vsmask.f32 1280
        %vm2192 = vsmask.f32 3336
        %vm2193 = vmor %vm2191, %vm2192
        %vm2194 = vsmask.f32 5392
        %vm2195 = vmor %vm2193, %vm2194
        %vm2196 = vsmask.f32 7448
        %vm2197 = vmor %vm2195, %vm2196
        %v2199 = vshrl.u32 %v2165, 16
        %v2201 = vrot.slane %v2199, 6
        %v2202 = vshll.u32 %v2165, 16
        %v2204 = vrot.slane %v2202, 7
        %v2205 = vor.u32 %v2201, %v2204
        %v2206 = vrot.slane %v2205, 2
        %v2208 = vshll.u32 %v2166, 16
        %v2210 = vrot.slane %v2208, 7
        %v2211 = vsel %vm2197, %v2206, %v2210
        %v2213 = vshrl.u32 %v2173, 16
        %v2215 = vrot.slane %v2213, 6
        %v2216 = vshll.u32 %v2173, 16
        %v2218 = vrot.slane %v2216, 7
        %v2219 = vor.u32 %v2215, %v2218
        %v2220 = vrot.slane %v2219, 2
        %v2222 = vshll.u32 %v2174, 16
        %v2224 = vrot.slane %v2222, 7
        %v2225 = vsel %vm2197, %v2220, %v2224
        %v2227 = vshrl.u32 %v2181, 16
        %v2229 = vrot.slane %v2227, 6
        %v2230 = vshll.u32 %v2181, 16
        %v2232 = vrot.slane %v2230, 7
        %v2233 = vor.u32 %v2229, %v2232
        %v2234 = vrot.slane %v2233, 2
        %v2236 = vshll.u32 %v2182, 16
        %v2238 = vrot.slane %v2236, 7
        %v2239 = vsel %vm2197, %v2234, %v2238
        %v2241 = vshrl.u32 %v2189, 16
        %v2243 = vrot.slane %v2241, 6
        %v2244 = vshll.u32 %v2189, 16
        %v2246 = vrot.slane %v2244, 7
        %v2247 = vor.u32 %v2243, %v2246
        %v2248 = vrot.slane %v2247, 2
        %v2250 = vshll.u32 %v2190, 16
        %v2252 = vrot.slane %v2250, 7
        %v2253 = vsel %vm2197, %v2248, %v2252
        %s2254 = scalar_lea.vmem [#allocation5], 32
        %v2255 = vld [vmem:[%s2254] sm:$0xf]
        %v2256 = vld [vmem:[%s2254 + $0x4] sm:$0xf]
        %v2257 = vld [vmem:[%s2254 + $0x8] sm:$0xf]
        %v2258 = vld [vmem:[%s2254 + $0xc] sm:$0xf]
        %v2259 = vld [vmem:[%s2254 + $0x10] sm:$0xf]
        %v2260 = vld [vmem:[%s2254 + $0x14] sm:$0xf]
        %v2261 = vld [vmem:[%s2254 + $0x18] sm:$0xf]
        %v2262 = vld [vmem:[%s2254 + $0x1c] sm:$0xf]
        %v2263 = vcombine.low %v2211, %v2225
        %v2264 = vcombine.low %v2239, %v2253
        %v2266 = vunpack.c.l.s4 1983009808
        %v2267 = vunpack.c.0.s8 %v2266
        %v2268 = vlaneseq
        %v2269 = vshrl.u32 %v2268, 7
        %v2270 = vsub.s32 %v2267, %v2269
        %v2271 = vrot.slane %v2263, %v2270
        %v2273 = vunpack.c.l.s4 1983009808
        %v2274 = vunpack.c.0.s8 %v2273
        %v2275 = vlaneseq
        %v2276 = vshrl.u32 %v2275, 7
        %v2277 = vsub.s32 %v2274, %v2276
        %v2278 = vrot.slane %v2264, %v2277
        %v2279 = vcombine.low %v2271, %v2278
        %v2288 = vunpack.c.l.b16 %v2255
        %v2289 = vunpack.c.l.b16 %v2256
        %v2290 = vunpack.c.l.b16 %v2257
        %v2291 = vunpack.c.l.b16 %v2258
        %v2292 = vunpack.c.l.b16 %v2259
        %v2293 = vunpack.c.l.b16 %v2260
        %v2294 = vunpack.c.l.b16 %v2261
        %v2295 = vunpack.c.l.b16 %v2262
        %v2296 = vpack.c.b16 %v2289, %v2288
        %v2297 = vpack.c.b16 %v2291, %v2290
        %v2298 = vpack.c.b16 %v2293, %v2292
        %v2299 = vpack.c.b16 %v2295, %v2294
        %vm2304 = vcmask 523264
        %v2306 = vsel %vm2304, %v2279, 0
        %2308 = vmatprep.subr.bf16.mxu0 0
        %2309 = vmatpush1.bf16.msra.mxu0 0
        %2310 = vmatprep.subr.bf16.mxu0 0
        %2311 = vmatpush1.bf16.msra.mxu0 0
        %2312 = vmatprep.subr.bf16.mxu0 0
        %2313 = vmatpush1.bf16.msra.mxu0 0
        %2314 = vmatprep.subr.bf16.mxu0 0
        %2315 = vmatpush1.bf16.msra.mxu0 0
        %2316 = vmatprep.subr.bf16.mxu0 0
        %2317 = vmatpush1.bf16.msra.mxu0 %v2299
        %2318 = vmatprep.subr.bf16.mxu0 0
        %2319 = vmatpush1.bf16.msra.mxu0 %v2298
        %2320 = vmatprep.subr.bf16.mxu0 0
        %2321 = vmatpush1.bf16.msra.mxu0 %v2297
        %2322 = vmatprep.subr.bf16.mxu0 0
        %2323 = vmatpush1.bf16.msra.mxu0 %v2296
        %2324 = vmatprep.subr.bf16.mxu0 0
        %2325 = vmatpush2.bf16.msra.mxu0 0
        %2326 = vmatprep.subr.bf16.mxu0 0
        %2327 = vmatpush2.bf16.msra.mxu0 0
        %2328 = vmatprep.subr.bf16.mxu0 0
        %2329 = vmatpush2.bf16.msra.mxu0 0
        %2330 = vmatprep.subr.bf16.mxu0 0
        %2331 = vmatpush2.bf16.msra.mxu0 0
        %2332 = vmatprep.subr.bf16.mxu0 0
        %2333 = vmatpush2.bf16.msra.mxu0 0
        %2334 = vmatprep.subr.bf16.mxu0 0
        %2335 = vmatpush2.bf16.msra.mxu0 0
        %2336 = vmatprep.subr.bf16.mxu0 0
        %2337 = vmatpush2.bf16.msra.mxu0 0
        %2338 = vmatprep.subr.bf16.mxu0 0
        %2339 = vmatpush2.bf16.msra.mxu0 0
        %2340 = vmatprep.mubr.bf16.mxu0 0
        %2341 = vmatmul.mubr.bf16.gmra.mxu0 %v2306
        %v2342 = vpop.f32.mrf.mxu0
        %v2343 = vadd.f32 0.0, %v2342
        %v2344 = vpop.f32.mrf.mxu0
        %v2345 = vpop.f32.mrf.mxu0
        %v2346 = vadd.f32 0.0, %v2345
        %v2347 = vpop.f32.mrf.mxu0
        %2348 = vdwg.mxu0
        %v2349 = vcombine.low %v2142, %v2143
        %v2350 = vcombine.low %v2144, %v2145
        %v2352 = vunpack.c.l.s4 1983009808
        %v2353 = vunpack.c.0.s8 %v2352
        %v2354 = vlaneseq
        %v2355 = vshrl.u32 %v2354, 7
        %v2356 = vsub.s32 %v2353, %v2355
        %v2357 = vrot.slane %v2349, %v2356
        %v2359 = vunpack.c.l.s4 1983009808
        %v2360 = vunpack.c.0.s8 %v2359
        %v2361 = vlaneseq
        %v2362 = vshrl.u32 %v2361, 7
        %v2363 = vsub.s32 %v2360, %v2362
        %v2364 = vrot.slane %v2350, %v2363
        %v2365 = vcombine.low %v2357, %v2364
        %v2374 = vunpack.c.l.b16 %v2147
        %v2375 = vunpack.c.l.b16 %v2148
        %v2376 = vunpack.c.l.b16 %v2149
        %v2377 = vunpack.c.l.b16 %v2150
        %v2378 = vunpack.c.l.b16 %v2151
        %v2379 = vunpack.c.l.b16 %v2152
        %v2380 = vunpack.c.l.b16 %v2153
        %v2381 = vunpack.c.l.b16 %v2154
        %v2382 = vpack.c.b16 %v2375, %v2374
        %v2383 = vpack.c.b16 %v2377, %v2376
        %v2384 = vpack.c.b16 %v2379, %v2378
        %v2385 = vpack.c.b16 %v2381, %v2380
        %v2391 = vsel %vm2304, %v2365, 0
        %2393 = vmatprep.subr.bf16.mxu0 0
        %2394 = vmatpush1.bf16.msra.mxu0 0
        %2395 = vmatprep.subr.bf16.mxu0 0
        %2396 = vmatpush1.bf16.msra.mxu0 0
        %2397 = vmatprep.subr.bf16.mxu0 0
        %2398 = vmatpush1.bf16.msra.mxu0 0
        %2399 = vmatprep.subr.bf16.mxu0 0
        %2400 = vmatpush1.bf16.msra.mxu0 0
        %2401 = vmatprep.subr.bf16.mxu0 0
        %2402 = vmatpush1.bf16.msra.mxu0 %v2385
        %2403 = vmatprep.subr.bf16.mxu0 0
        %2404 = vmatpush1.bf16.msra.mxu0 %v2384
        %2405 = vmatprep.subr.bf16.mxu0 0
        %2406 = vmatpush1.bf16.msra.mxu0 %v2383
        %2407 = vmatprep.subr.bf16.mxu0 0
        %2408 = vmatpush1.bf16.msra.mxu0 %v2382
        %2409 = vmatprep.subr.bf16.mxu0 0
        %2410 = vmatpush2.bf16.msra.mxu0 0
        %2411 = vmatprep.subr.bf16.mxu0 0
        %2412 = vmatpush2.bf16.msra.mxu0 0
        %2413 = vmatprep.subr.bf16.mxu0 0
        %2414 = vmatpush2.bf16.msra.mxu0 0
        %2415 = vmatprep.subr.bf16.mxu0 0
        %2416 = vmatpush2.bf16.msra.mxu0 0
        %2417 = vmatprep.subr.bf16.mxu0 0
        %2418 = vmatpush2.bf16.msra.mxu0 0
        %2419 = vmatprep.subr.bf16.mxu0 0
        %2420 = vmatpush2.bf16.msra.mxu0 0
        %2421 = vmatprep.subr.bf16.mxu0 0
        %2422 = vmatpush2.bf16.msra.mxu0 0
        %2423 = vmatprep.subr.bf16.mxu0 0
        %2424 = vmatpush2.bf16.msra.mxu0 0
        %2425 = vmatprep.mubr.bf16.mxu0 0
        %2426 = vmatmul.mubr.bf16.gmra.mxu0 %v2391
        %v2427 = vpop.f32.mrf.mxu0
        %v2428 = vadd.f32 %v2343, %v2427
        %v2429 = vpop.f32.mrf.mxu0
        %v2430 = vpop.f32.mrf.mxu0
        %v2431 = vadd.f32 %v2346, %v2430
        %v2432 = vpop.f32.mrf.mxu0
        %2433 = vdwg.mxu0
        %vm2434 = vcmask 1040384
        %vm2435 = vcmask 1042434
        %vm2436 = vmor %vm2434, %vm2435
        %vm2437 = vcmask 1044484
        %vm2438 = vmor %vm2436, %vm2437
        %vm2439 = vcmask 1046534
        %vm2440 = vmor %vm2438, %vm2439
        %v2441 = vrot.slane %v2165, 7
        %v2442 = vrot.slane %v2441, 2
        %v2443 = vrot.slane %v2166, 7
        %v2444 = vsel %vm2440, %v2442, %v2443
        %v2445 = vrot.slane %v2173, 7
        %v2446 = vrot.slane %v2445, 2
        %v2447 = vrot.slane %v2174, 7
        %v2448 = vsel %vm2440, %v2446, %v2447
        %v2449 = vrot.slane %v2181, 7
        %v2450 = vrot.slane %v2449, 2
        %v2451 = vrot.slane %v2182, 7
        %v2452 = vsel %vm2440, %v2450, %v2451
        %v2453 = vrot.slane %v2189, 7
        %v2454 = vrot.slane %v2453, 2
        %v2455 = vrot.slane %v2190, 7
        %v2456 = vsel %vm2440, %v2454, %v2455
        %s2457 = scalar_lea.vmem [#allocation5], 64
        %v2458 = vld [vmem:[%s2457] sm:$0xf]
        %v2459 = vld [vmem:[%s2457 + $0x4] sm:$0xf]
        %v2460 = vld [vmem:[%s2457 + $0x8] sm:$0xf]
        %v2461 = vld [vmem:[%s2457 + $0xc] sm:$0xf]
        %v2462 = vld [vmem:[%s2457 + $0x10] sm:$0xf]
        %v2463 = vld [vmem:[%s2457 + $0x14] sm:$0xf]
        %v2464 = vld [vmem:[%s2457 + $0x18] sm:$0xf]
        %v2465 = vld [vmem:[%s2457 + $0x1c] sm:$0xf]
        %v2466 = vcombine.low %v2444, %v2448
        %v2467 = vcombine.low %v2452, %v2456
        %v2469 = vunpack.c.l.s4 1983009808
        %v2470 = vunpack.c.0.s8 %v2469
        %v2471 = vlaneseq
        %v2472 = vshrl.u32 %v2471, 7
        %v2473 = vsub.s32 %v2470, %v2472
        %v2474 = vrot.slane %v2466, %v2473
        %v2476 = vunpack.c.l.s4 1983009808
        %v2477 = vunpack.c.0.s8 %v2476
        %v2478 = vlaneseq
        %v2479 = vshrl.u32 %v2478, 7
        %v2480 = vsub.s32 %v2477, %v2479
        %v2481 = vrot.slane %v2467, %v2480
        %v2482 = vcombine.low %v2474, %v2481
        %v2491 = vunpack.c.l.b16 %v2458
        %v2492 = vunpack.c.l.b16 %v2459
        %v2493 = vunpack.c.l.b16 %v2460
        %v2494 = vunpack.c.l.b16 %v2461
        %v2495 = vunpack.c.l.b16 %v2462
        %v2496 = vunpack.c.l.b16 %v2463
        %v2497 = vunpack.c.l.b16 %v2464
        %v2498 = vunpack.c.l.b16 %v2465
        %v2499 = vpack.c.b16 %v2492, %v2491
        %v2500 = vpack.c.b16 %v2494, %v2493
        %v2501 = vpack.c.b16 %v2496, %v2495
        %v2502 = vpack.c.b16 %v2498, %v2497
        %v2508 = vsel %vm2304, %v2482, 0
        %2510 = vmatprep.subr.bf16.mxu0 0
        %2511 = vmatpush1.bf16.msra.mxu0 0
        %2512 = vmatprep.subr.bf16.mxu0 0
        %2513 = vmatpush1.bf16.msra.mxu0 0
        %2514 = vmatprep.subr.bf16.mxu0 0
        %2515 = vmatpush1.bf16.msra.mxu0 0
        %2516 = vmatprep.subr.bf16.mxu0 0
        %2517 = vmatpush1.bf16.msra.mxu0 0
        %2518 = vmatprep.subr.bf16.mxu0 0
        %2519 = vmatpush1.bf16.msra.mxu0 %v2502
        %2520 = vmatprep.subr.bf16.mxu0 0
        %2521 = vmatpush1.bf16.msra.mxu0 %v2501
        %2522 = vmatprep.subr.bf16.mxu0 0
        %2523 = vmatpush1.bf16.msra.mxu0 %v2500
        %2524 = vmatprep.subr.bf16.mxu0 0
        %2525 = vmatpush1.bf16.msra.mxu0 %v2499
        %2526 = vmatprep.subr.bf16.mxu0 0
        %2527 = vmatpush2.bf16.msra.mxu0 0
        %2528 = vmatprep.subr.bf16.mxu0 0
        %2529 = vmatpush2.bf16.msra.mxu0 0
        %2530 = vmatprep.subr.bf16.mxu0 0
        %2531 = vmatpush2.bf16.msra.mxu0 0
        %2532 = vmatprep.subr.bf16.mxu0 0
        %2533 = vmatpush2.bf16.msra.mxu0 0
        %2534 = vmatprep.subr.bf16.mxu0 0
        %2535 = vmatpush2.bf16.msra.mxu0 0
        %2536 = vmatprep.subr.bf16.mxu0 0
        %2537 = vmatpush2.bf16.msra.mxu0 0
        %2538 = vmatprep.subr.bf16.mxu0 0
        %2539 = vmatpush2.bf16.msra.mxu0 0
        %2540 = vmatprep.subr.bf16.mxu0 0
        %2541 = vmatpush2.bf16.msra.mxu0 0
        %2542 = vmatprep.mubr.bf16.mxu0 0
        %2543 = vmatmul.mubr.bf16.gmra.mxu0 %v2508
        %v2544 = vpop.f32.mrf.mxu0
        %v2545 = vadd.f32 0.0, %v2544
        %v2546 = vpop.f32.mrf.mxu0
        %v2547 = vpop.f32.mrf.mxu0
        %v2548 = vadd.f32 0.0, %v2547
        %v2549 = vpop.f32.mrf.mxu0
        %2550 = vdwg.mxu0
        %v2551 = vadd.f32 %v2428, %v2545
        %v2552 = vadd.f32 %v2431, %v2548
        %s2553 = scalar_lea.vmem [#allocation5], 96
        %v2554 = vld [vmem:[%s2553] sm:$0xf]
        %v2555 = vld [vmem:[%s2553 + $0x4] sm:$0xf]
        %v2556 = vld [vmem:[%s2553 + $0x8] sm:$0xf]
        %v2557 = vld [vmem:[%s2553 + $0xc] sm:$0xf]
        %v2558 = vld [vmem:[%s2553 + $0x10] sm:$0xf]
        %v2559 = vld [vmem:[%s2553 + $0x14] sm:$0xf]
        %v2560 = vld [vmem:[%s2553 + $0x18] sm:$0xf]
        %v2561 = vld [vmem:[%s2553 + $0x1c] sm:$0xf]
        %v2563 = vcombine.low %v2143, %v2144
        %v2564 = vcombine.low %v2145, %v2146
        %v2566 = vunpack.c.l.s4 1983009808
        %v2567 = vunpack.c.0.s8 %v2566
        %v2568 = vlaneseq
        %v2569 = vshrl.u32 %v2568, 7
        %v2570 = vsub.s32 %v2567, %v2569
        %v2571 = vrot.slane %v2563, %v2570
        %v2573 = vunpack.c.l.s4 1983009808
        %v2574 = vunpack.c.0.s8 %v2573
        %v2575 = vlaneseq
        %v2576 = vshrl.u32 %v2575, 7
        %v2577 = vsub.s32 %v2574, %v2576
        %v2578 = vrot.slane %v2564, %v2577
        %v2579 = vcombine.low %v2571, %v2578
        %v2588 = vunpack.c.l.b16 %v2554
        %v2589 = vunpack.c.l.b16 %v2555
        %v2590 = vunpack.c.l.b16 %v2556
        %v2591 = vunpack.c.l.b16 %v2557
        %v2592 = vunpack.c.l.b16 %v2558
        %v2593 = vunpack.c.l.b16 %v2559
        %v2594 = vunpack.c.l.b16 %v2560
        %v2595 = vunpack.c.l.b16 %v2561
        %v2596 = vpack.c.b16 %v2589, %v2588
        %v2597 = vpack.c.b16 %v2591, %v2590
        %v2598 = vpack.c.b16 %v2593, %v2592
        %v2599 = vpack.c.b16 %v2595, %v2594
        %v2605 = vsel %vm2304, %v2579, 0
        %2607 = vmatprep.subr.bf16.mxu0 0
        %2608 = vmatpush1.bf16.msra.mxu0 0
        %2609 = vmatprep.subr.bf16.mxu0 0
        %2610 = vmatpush1.bf16.msra.mxu0 0
        %2611 = vmatprep.subr.bf16.mxu0 0
        %2612 = vmatpush1.bf16.msra.mxu0 0
        %2613 = vmatprep.subr.bf16.mxu0 0
        %2614 = vmatpush1.bf16.msra.mxu0 0
        %2615 = vmatprep.subr.bf16.mxu0 0
        %2616 = vmatpush1.bf16.msra.mxu0 %v2599
        %2617 = vmatprep.subr.bf16.mxu0 0
        %2618 = vmatpush1.bf16.msra.mxu0 %v2598
        %2619 = vmatprep.subr.bf16.mxu0 0
        %2620 = vmatpush1.bf16.msra.mxu0 %v2597
        %2621 = vmatprep.subr.bf16.mxu0 0
        %2622 = vmatpush1.bf16.msra.mxu0 %v2596
        %2623 = vmatprep.subr.bf16.mxu0 0
        %2624 = vmatpush2.bf16.msra.mxu0 0
        %2625 = vmatprep.subr.bf16.mxu0 0
        %2626 = vmatpush2.bf16.msra.mxu0 0
        %2627 = vmatprep.subr.bf16.mxu0 0
        %2628 = vmatpush2.bf16.msra.mxu0 0
        %2629 = vmatprep.subr.bf16.mxu0 0
        %2630 = vmatpush2.bf16.msra.mxu0 0
        %2631 = vmatprep.subr.bf16.mxu0 0
        %2632 = vmatpush2.bf16.msra.mxu0 0
        %2633 = vmatprep.subr.bf16.mxu0 0
        %2634 = vmatpush2.bf16.msra.mxu0 0
        %2635 = vmatprep.subr.bf16.mxu0 0
        %2636 = vmatpush2.bf16.msra.mxu0 0
        %2637 = vmatprep.subr.bf16.mxu0 0
        %2638 = vmatpush2.bf16.msra.mxu0 0
        %2639 = vmatprep.mubr.bf16.mxu0 0
        %2640 = vmatmul.mubr.bf16.gmra.mxu0 %v2605
        %v2641 = vpop.f32.mrf.mxu0
        %v2642 = vadd.f32 0.0, %v2641
        %v2643 = vpop.f32.mrf.mxu0
        %v2644 = vpop.f32.mrf.mxu0
        %v2645 = vadd.f32 0.0, %v2644
        %v2646 = vpop.f32.mrf.mxu0
        %2647 = vdwg.mxu0
        %v2648 = vadd.f32 %v2551, %v2642
        %v2649 = vadd.f32 %v2552, %v2645
        %v2651 = vunpack.c.l.s4 1983009808
        %v2652 = vunpack.c.0.s8 %v2651
        %v2653 = vlaneseq
        %v2654 = vshrl.u32 %v2653, 7
        %v2655 = vsub.s32 %v2652, %v2654
        %v2656 = vrot.slane %v2146, %v2655
        %v2657 = vcombine.high %v2656, %v2656
        %v2659 = vshrl.u32 %v2656, 16
        %v2661 = vrot.slane %v2659, 6
        %v2662 = vshll.u32 %v2656, 16
        %v2664 = vrot.slane %v2662, 7
        %v2665 = vor.u32 %v2661, %v2664
        %v2666 = vrot.slane %v2665, 2
        %v2668 = vshll.u32 %v2657, 16
        %v2670 = vrot.slane %v2668, 7
        %v2671 = vsel %vm2197, %v2666, %v2670
        %s2672 = scalar_lea.vmem [#allocation5], 128
        %v2673 = vld [vmem:[%s2672] sm:$0xf]
        %v2674 = vld [vmem:[%s2672 + $0x4] sm:$0xf]
        %v2675 = vld [vmem:[%s2672 + $0x8] sm:$0xf]
        %v2676 = vld [vmem:[%s2672 + $0xc] sm:$0xf]
        %v2677 = vld [vmem:[%s2672 + $0x10] sm:$0xf]
        %v2678 = vld [vmem:[%s2672 + $0x14] sm:$0xf]
        %v2679 = vld [vmem:[%s2672 + $0x18] sm:$0xf]
        %v2680 = vld [vmem:[%s2672 + $0x1c] sm:$0xf]
        %v2681 = vcombine.low %v2225, %v2239
        %v2682 = vcombine.low %v2253, %v2671
        %v2684 = vunpack.c.l.s4 1983009808
        %v2685 = vunpack.c.0.s8 %v2684
        %v2686 = vlaneseq
        %v2687 = vshrl.u32 %v2686, 7
        %v2688 = vsub.s32 %v2685, %v2687
        %v2689 = vrot.slane %v2681, %v2688
        %v2691 = vunpack.c.l.s4 1983009808
        %v2692 = vunpack.c.0.s8 %v2691
        %v2693 = vlaneseq
        %v2694 = vshrl.u32 %v2693, 7
        %v2695 = vsub.s32 %v2692, %v2694
        %v2696 = vrot.slane %v2682, %v2695
        %v2697 = vcombine.low %v2689, %v2696
        %v2706 = vunpack.c.l.b16 %v2673
        %v2707 = vunpack.c.l.b16 %v2674
        %v2708 = vunpack.c.l.b16 %v2675
        %v2709 = vunpack.c.l.b16 %v2676
        %v2710 = vunpack.c.l.b16 %v2677
        %v2711 = vunpack.c.l.b16 %v2678
        %v2712 = vunpack.c.l.b16 %v2679
        %v2713 = vunpack.c.l.b16 %v2680
        %v2714 = vpack.c.b16 %v2707, %v2706
        %v2715 = vpack.c.b16 %v2709, %v2708
        %v2716 = vpack.c.b16 %v2711, %v2710
        %v2717 = vpack.c.b16 %v2713, %v2712
        %v2723 = vsel %vm2304, %v2697, 0
        %2725 = vmatprep.subr.bf16.mxu0 0
        %2726 = vmatpush1.bf16.msra.mxu0 0
        %2727 = vmatprep.subr.bf16.mxu0 0
        %2728 = vmatpush1.bf16.msra.mxu0 0
        %2729 = vmatprep.subr.bf16.mxu0 0
        %2730 = vmatpush1.bf16.msra.mxu0 0
        %2731 = vmatprep.subr.bf16.mxu0 0
        %2732 = vmatpush1.bf16.msra.mxu0 0
        %2733 = vmatprep.subr.bf16.mxu0 0
        %2734 = vmatpush1.bf16.msra.mxu0 %v2717
        %2735 = vmatprep.subr.bf16.mxu0 0
        %2736 = vmatpush1.bf16.msra.mxu0 %v2716
        %2737 = vmatprep.subr.bf16.mxu0 0
        %2738 = vmatpush1.bf16.msra.mxu0 %v2715
        %2739 = vmatprep.subr.bf16.mxu0 0
        %2740 = vmatpush1.bf16.msra.mxu0 %v2714
        %2741 = vmatprep.subr.bf16.mxu0 0
        %2742 = vmatpush2.bf16.msra.mxu0 0
        %2743 = vmatprep.subr.bf16.mxu0 0
        %2744 = vmatpush2.bf16.msra.mxu0 0
        %2745 = vmatprep.subr.bf16.mxu0 0
        %2746 = vmatpush2.bf16.msra.mxu0 0
        %2747 = vmatprep.subr.bf16.mxu0 0
        %2748 = vmatpush2.bf16.msra.mxu0 0
        %2749 = vmatprep.subr.bf16.mxu0 0
        %2750 = vmatpush2.bf16.msra.mxu0 0
        %2751 = vmatprep.subr.bf16.mxu0 0
        %2752 = vmatpush2.bf16.msra.mxu0 0
        %2753 = vmatprep.subr.bf16.mxu0 0
        %2754 = vmatpush2.bf16.msra.mxu0 0
        %2755 = vmatprep.subr.bf16.mxu0 0
        %2756 = vmatpush2.bf16.msra.mxu0 0
        %2757 = vmatprep.mubr.bf16.mxu0 0
        %2758 = vmatmul.mubr.bf16.gmra.mxu0 %v2723
        %v2759 = vpop.f32.mrf.mxu0
        %v2760 = vadd.f32 0.0, %v2759
        %v2761 = vpop.f32.mrf.mxu0
        %v2762 = vpop.f32.mrf.mxu0
        %v2763 = vadd.f32 0.0, %v2762
        %v2764 = vpop.f32.mrf.mxu0
        %2765 = vdwg.mxu0
        %v2766 = vadd.f32 %v2648, %v2760
        %v2767 = vadd.f32 %v2649, %v2763
        %v2768 = vrot.slane %v2656, 7
        %v2769 = vrot.slane %v2768, 2
        %v2770 = vrot.slane %v2657, 7
        %v2771 = vsel %vm2440, %v2769, %v2770
        %s2772 = scalar_lea.vmem [#allocation5], 160
        %v2773 = vld [vmem:[%s2772] sm:$0xf]
        %v2774 = vld [vmem:[%s2772 + $0x4] sm:$0xf]
        %v2775 = vld [vmem:[%s2772 + $0x8] sm:$0xf]
        %v2776 = vld [vmem:[%s2772 + $0xc] sm:$0xf]
        %v2777 = vld [vmem:[%s2772 + $0x10] sm:$0xf]
        %v2778 = vld [vmem:[%s2772 + $0x14] sm:$0xf]
        %v2779 = vld [vmem:[%s2772 + $0x18] sm:$0xf]
        %v2780 = vld [vmem:[%s2772 + $0x1c] sm:$0xf]
        %v2781 = vcombine.low %v2448, %v2452
        %v2782 = vcombine.low %v2456, %v2771
        %v2784 = vunpack.c.l.s4 1983009808
        %v2785 = vunpack.c.0.s8 %v2784
        %v2786 = vlaneseq
        %v2787 = vshrl.u32 %v2786, 7
        %v2788 = vsub.s32 %v2785, %v2787
        %v2789 = vrot.slane %v2781, %v2788
        %v2791 = vunpack.c.l.s4 1983009808
        %v2792 = vunpack.c.0.s8 %v2791
        %v2793 = vlaneseq
        %v2794 = vshrl.u32 %v2793, 7
        %v2795 = vsub.s32 %v2792, %v2794
        %v2796 = vrot.slane %v2782, %v2795
        %v2797 = vcombine.low %v2789, %v2796
        %v2806 = vunpack.c.l.b16 %v2773
        %v2807 = vunpack.c.l.b16 %v2774
        %v2808 = vunpack.c.l.b16 %v2775
        %v2809 = vunpack.c.l.b16 %v2776
        %v2810 = vunpack.c.l.b16 %v2777
        %v2811 = vunpack.c.l.b16 %v2778
        %v2812 = vunpack.c.l.b16 %v2779
        %v2813 = vunpack.c.l.b16 %v2780
        %v2814 = vpack.c.b16 %v2807, %v2806
        %v2815 = vpack.c.b16 %v2809, %v2808
        %v2816 = vpack.c.b16 %v2811, %v2810
        %v2817 = vpack.c.b16 %v2813, %v2812
        %v2823 = vsel %vm2304, %v2797, 0
        %2825 = vmatprep.subr.bf16.mxu0 0
        %2826 = vmatpush1.bf16.msra.mxu0 0
        %2827 = vmatprep.subr.bf16.mxu0 0
        %2828 = vmatpush1.bf16.msra.mxu0 0
        %2829 = vmatprep.subr.bf16.mxu0 0
        %2830 = vmatpush1.bf16.msra.mxu0 0
        %2831 = vmatprep.subr.bf16.mxu0 0
        %2832 = vmatpush1.bf16.msra.mxu0 0
        %2833 = vmatprep.subr.bf16.mxu0 0
        %2834 = vmatpush1.bf16.msra.mxu0 %v2817
        %2835 = vmatprep.subr.bf16.mxu0 0
        %2836 = vmatpush1.bf16.msra.mxu0 %v2816
        %2837 = vmatprep.subr.bf16.mxu0 0
        %2838 = vmatpush1.bf16.msra.mxu0 %v2815
        %2839 = vmatprep.subr.bf16.mxu0 0
        %2840 = vmatpush1.bf16.msra.mxu0 %v2814
        %2841 = vmatprep.subr.bf16.mxu0 0
        %2842 = vmatpush2.bf16.msra.mxu0 0
        %2843 = vmatprep.subr.bf16.mxu0 0
        %2844 = vmatpush2.bf16.msra.mxu0 0
        %2845 = vmatprep.subr.bf16.mxu0 0
        %2846 = vmatpush2.bf16.msra.mxu0 0
        %2847 = vmatprep.subr.bf16.mxu0 0
        %2848 = vmatpush2.bf16.msra.mxu0 0
        %2849 = vmatprep.subr.bf16.mxu0 0
        %2850 = vmatpush2.bf16.msra.mxu0 0
        %2851 = vmatprep.subr.bf16.mxu0 0
        %2852 = vmatpush2.bf16.msra.mxu0 0
        %2853 = vmatprep.subr.bf16.mxu0 0
        %2854 = vmatpush2.bf16.msra.mxu0 0
        %2855 = vmatprep.subr.bf16.mxu0 0
        %2856 = vmatpush2.bf16.msra.mxu0 0
        %2857 = vmatprep.mubr.bf16.mxu0 0
        %2858 = vmatmul.mubr.bf16.gmra.mxu0 %v2823
        %v2859 = vpop.f32.mrf.mxu0
        %v2860 = vadd.f32 0.0, %v2859
        %v2861 = vpop.f32.mrf.mxu0
        %v2862 = vpop.f32.mrf.mxu0
        %v2863 = vadd.f32 0.0, %v2862
        %v2864 = vpop.f32.mrf.mxu0
        %2865 = vdwg.mxu0
        %v2866 = vadd.f32 %v2766, %v2860
        %v2867 = vadd.f32 %v2767, %v2863
        %s2868 = scalar_lea.vmem [#allocation5], 192
        %v2869 = vld [vmem:[%s2868] sm:$0xf]
        %v2870 = vld [vmem:[%s2868 + $0x4] sm:$0xf]
        %v2871 = vld [vmem:[%s2868 + $0x8] sm:$0xf]
        %v2872 = vld [vmem:[%s2868 + $0xc] sm:$0xf]
        %v2873 = vld [vmem:[%s2868 + $0x10] sm:$0xf]
        %v2874 = vld [vmem:[%s2868 + $0x14] sm:$0xf]
        %v2875 = vld [vmem:[%s2868 + $0x18] sm:$0xf]
        %v2876 = vld [vmem:[%s2868 + $0x1c] sm:$0xf]
        %v2877 = vcombine.low %v2146, %v2142
        %v2879 = vunpack.c.l.s4 1983009808
        %v2880 = vunpack.c.0.s8 %v2879
        %v2881 = vlaneseq
        %v2882 = vshrl.u32 %v2881, 7
        %v2883 = vsub.s32 %v2880, %v2882
        %v2884 = vrot.slane %v2877, %v2883
        %v2885 = vcombine.low %v2364, %v2884
        %v2894 = vunpack.c.l.b16 %v2869
        %v2895 = vunpack.c.l.b16 %v2870
        %v2896 = vunpack.c.l.b16 %v2871
        %v2897 = vunpack.c.l.b16 %v2872
        %v2898 = vunpack.c.l.b16 %v2873
        %v2899 = vunpack.c.l.b16 %v2874
        %v2900 = vunpack.c.l.b16 %v2875
        %v2901 = vunpack.c.l.b16 %v2876
        %v2902 = vpack.c.b16 %v2895, %v2894
        %v2903 = vpack.c.b16 %v2897, %v2896
        %v2904 = vpack.c.b16 %v2899, %v2898
        %v2905 = vpack.c.b16 %v2901, %v2900
        %v2911 = vsel %vm2304, %v2885, 0
        %2913 = vmatprep.subr.bf16.mxu0 0
        %2914 = vmatpush1.bf16.msra.mxu0 0
        %2915 = vmatprep.subr.bf16.mxu0 0
        %2916 = vmatpush1.bf16.msra.mxu0 0
        %2917 = vmatprep.subr.bf16.mxu0 0
        %2918 = vmatpush1.bf16.msra.mxu0 0
        %2919 = vmatprep.subr.bf16.mxu0 0
        %2920 = vmatpush1.bf16.msra.mxu0 0
        %2921 = vmatprep.subr.bf16.mxu0 0
        %2922 = vmatpush1.bf16.msra.mxu0 %v2905
        %2923 = vmatprep.subr.bf16.mxu0 0
        %2924 = vmatpush1.bf16.msra.mxu0 %v2904
        %2925 = vmatprep.subr.bf16.mxu0 0
        %2926 = vmatpush1.bf16.msra.mxu0 %v2903
        %2927 = vmatprep.subr.bf16.mxu0 0
        %2928 = vmatpush1.bf16.msra.mxu0 %v2902
        %2929 = vmatprep.subr.bf16.mxu0 0
        %2930 = vmatpush2.bf16.msra.mxu0 0
        %2931 = vmatprep.subr.bf16.mxu0 0
        %2932 = vmatpush2.bf16.msra.mxu0 0
        %2933 = vmatprep.subr.bf16.mxu0 0
        %2934 = vmatpush2.bf16.msra.mxu0 0
        %2935 = vmatprep.subr.bf16.mxu0 0
        %2936 = vmatpush2.bf16.msra.mxu0 0
        %2937 = vmatprep.subr.bf16.mxu0 0
        %2938 = vmatpush2.bf16.msra.mxu0 0
        %2939 = vmatprep.subr.bf16.mxu0 0
        %2940 = vmatpush2.bf16.msra.mxu0 0
        %2941 = vmatprep.subr.bf16.mxu0 0
        %2942 = vmatpush2.bf16.msra.mxu0 0
        %2943 = vmatprep.subr.bf16.mxu0 0
        %2944 = vmatpush2.bf16.msra.mxu0 0
        %2945 = vmatprep.mubr.bf16.mxu0 0
        %2946 = vmatmul.mubr.bf16.gmra.mxu0 %v2911
        %v2947 = vpop.f32.mrf.mxu0
        %v2948 = vadd.f32 0.0, %v2947
        %v2949 = vpop.f32.mrf.mxu0
        %v2950 = vpop.f32.mrf.mxu0
        %v2951 = vadd.f32 0.0, %v2950
        %v2952 = vpop.f32.mrf.mxu0
        %2953 = vdwg.mxu0
        %v2954 = vadd.f32 %v2866, %v2948
        %v2955 = vadd.f32 %v2867, %v2951
        %s2956 = scalar_lea.vmem [#allocation5], 224
        %v2957 = vld [vmem:[%s2956] sm:$0xf]
        %v2958 = vld [vmem:[%s2956 + $0x4] sm:$0xf]
        %v2959 = vld [vmem:[%s2956 + $0x8] sm:$0xf]
        %v2960 = vld [vmem:[%s2956 + $0xc] sm:$0xf]
        %v2961 = vld [vmem:[%s2956 + $0x10] sm:$0xf]
        %v2962 = vld [vmem:[%s2956 + $0x14] sm:$0xf]
        %v2963 = vld [vmem:[%s2956 + $0x18] sm:$0xf]
        %v2964 = vld [vmem:[%s2956 + $0x1c] sm:$0xf]
        %v2965 = vcombine.low %v2671, %v2211
        %v2967 = vunpack.c.l.s4 1983009808
        %v2968 = vunpack.c.0.s8 %v2967
        %v2969 = vlaneseq
        %v2970 = vshrl.u32 %v2969, 7
        %v2971 = vsub.s32 %v2968, %v2970
        %v2972 = vrot.slane %v2965, %v2971
        %v2973 = vcombine.low %v2278, %v2972
        %v2982 = vunpack.c.l.b16 %v2957
        %v2983 = vunpack.c.l.b16 %v2958
        %v2984 = vunpack.c.l.b16 %v2959
        %v2985 = vunpack.c.l.b16 %v2960
        %v2986 = vunpack.c.l.b16 %v2961
        %v2987 = vunpack.c.l.b16 %v2962
        %v2988 = vunpack.c.l.b16 %v2963
        %v2989 = vunpack.c.l.b16 %v2964
        %v2990 = vpack.c.b16 %v2983, %v2982
        %v2991 = vpack.c.b16 %v2985, %v2984
        %v2992 = vpack.c.b16 %v2987, %v2986
        %v2993 = vpack.c.b16 %v2989, %v2988
        %v2999 = vsel %vm2304, %v2973, 0
        %3001 = vmatprep.subr.bf16.mxu0 0
        %3002 = vmatpush1.bf16.msra.mxu0 0
        %3003 = vmatprep.subr.bf16.mxu0 0
        %3004 = vmatpush1.bf16.msra.mxu0 0
        %3005 = vmatprep.subr.bf16.mxu0 0
        %3006 = vmatpush1.bf16.msra.mxu0 0
        %3007 = vmatprep.subr.bf16.mxu0 0
        %3008 = vmatpush1.bf16.msra.mxu0 0
        %3009 = vmatprep.subr.bf16.mxu0 0
        %3010 = vmatpush1.bf16.msra.mxu0 %v2993
        %3011 = vmatprep.subr.bf16.mxu0 0
        %3012 = vmatpush1.bf16.msra.mxu0 %v2992
        %3013 = vmatprep.subr.bf16.mxu0 0
        %3014 = vmatpush1.bf16.msra.mxu0 %v2991
        %3015 = vmatprep.subr.bf16.mxu0 0
        %3016 = vmatpush1.bf16.msra.mxu0 %v2990
        %3017 = vmatprep.subr.bf16.mxu0 0
        %3018 = vmatpush2.bf16.msra.mxu0 0
        %3019 = vmatprep.subr.bf16.mxu0 0
        %3020 = vmatpush2.bf16.msra.mxu0 0
        %3021 = vmatprep.subr.bf16.mxu0 0
        %3022 = vmatpush2.bf16.msra.mxu0 0
        %3023 = vmatprep.subr.bf16.mxu0 0
        %3024 = vmatpush2.bf16.msra.mxu0 0
        %3025 = vmatprep.subr.bf16.mxu0 0
        %3026 = vmatpush2.bf16.msra.mxu0 0
        %3027 = vmatprep.subr.bf16.mxu0 0
        %3028 = vmatpush2.bf16.msra.mxu0 0
        %3029 = vmatprep.subr.bf16.mxu0 0
        %3030 = vmatpush2.bf16.msra.mxu0 0
        %3031 = vmatprep.subr.bf16.mxu0 0
        %3032 = vmatpush2.bf16.msra.mxu0 0
        %3033 = vmatprep.mubr.bf16.mxu0 0
        %3034 = vmatmul.mubr.bf16.gmra.mxu0 %v2999
        %v3035 = vpop.f32.mrf.mxu0
        %v3036 = vadd.f32 0.0, %v3035
        %v3037 = vpop.f32.mrf.mxu0
        %v3038 = vpop.f32.mrf.mxu0
        %v3039 = vadd.f32 0.0, %v3038
        %v3040 = vpop.f32.mrf.mxu0
        %3041 = vdwg.mxu0
        %v3042 = vadd.f32 %v2954, %v3036
        %v3043 = vadd.f32 %v2955, %v3039
        %s3044 = scalar_lea.vmem [#allocation5], 256
        %v3045 = vld [vmem:[%s3044] sm:$0xf]
        %v3046 = vld [vmem:[%s3044 + $0x4] sm:$0xf]
        %v3047 = vld [vmem:[%s3044 + $0x8] sm:$0xf]
        %v3048 = vld [vmem:[%s3044 + $0xc] sm:$0xf]
        %v3049 = vld [vmem:[%s3044 + $0x10] sm:$0xf]
        %v3050 = vld [vmem:[%s3044 + $0x14] sm:$0xf]
        %v3051 = vld [vmem:[%s3044 + $0x18] sm:$0xf]
        %v3052 = vld [vmem:[%s3044 + $0x1c] sm:$0xf]
        %v3053 = vcombine.low %v2771, %v2444
        %v3055 = vunpack.c.l.s4 1983009808
        %v3056 = vunpack.c.0.s8 %v3055
        %v3057 = vlaneseq
        %v3058 = vshrl.u32 %v3057, 7
        %v3059 = vsub.s32 %v3056, %v3058
        %v3060 = vrot.slane %v3053, %v3059
        %v3061 = vcombine.low %v2481, %v3060
        %v3070 = vunpack.c.l.b16 %v3045
        %v3071 = vunpack.c.l.b16 %v3046
        %v3072 = vunpack.c.l.b16 %v3047
        %v3073 = vunpack.c.l.b16 %v3048
        %v3074 = vunpack.c.l.b16 %v3049
        %v3075 = vunpack.c.l.b16 %v3050
        %v3076 = vunpack.c.l.b16 %v3051
        %v3077 = vunpack.c.l.b16 %v3052
        %v3078 = vpack.c.b16 %v3071, %v3070
        %v3079 = vpack.c.b16 %v3073, %v3072
        %v3080 = vpack.c.b16 %v3075, %v3074
        %v3081 = vpack.c.b16 %v3077, %v3076
        %v3087 = vsel %vm2304, %v3061, 0
        %3089 = vmatprep.subr.bf16.mxu0 0
        %3090 = vmatpush1.bf16.msra.mxu0 0
        %3091 = vmatprep.subr.bf16.mxu0 0
        %3092 = vmatpush1.bf16.msra.mxu0 0
        %3093 = vmatprep.subr.bf16.mxu0 0
        %3094 = vmatpush1.bf16.msra.mxu0 0
        %3095 = vmatprep.subr.bf16.mxu0 0
        %3096 = vmatpush1.bf16.msra.mxu0 0
        %3097 = vmatprep.subr.bf16.mxu0 0
        %3098 = vmatpush1.bf16.msra.mxu0 %v3081
        %3099 = vmatprep.subr.bf16.mxu0 0
        %3100 = vmatpush1.bf16.msra.mxu0 %v3080
        %3101 = vmatprep.subr.bf16.mxu0 0
        %3102 = vmatpush1.bf16.msra.mxu0 %v3079
        %3103 = vmatprep.subr.bf16.mxu0 0
        %3104 = vmatpush1.bf16.msra.mxu0 %v3078
        %3105 = vmatprep.subr.bf16.mxu0 0
        %3106 = vmatpush2.bf16.msra.mxu0 0
        %3107 = vmatprep.subr.bf16.mxu0 0
        %3108 = vmatpush2.bf16.msra.mxu0 0
        %3109 = vmatprep.subr.bf16.mxu0 0
        %3110 = vmatpush2.bf16.msra.mxu0 0
        %3111 = vmatprep.subr.bf16.mxu0 0
        %3112 = vmatpush2.bf16.msra.mxu0 0
        %3113 = vmatprep.subr.bf16.mxu0 0
        %3114 = vmatpush2.bf16.msra.mxu0 0
        %3115 = vmatprep.subr.bf16.mxu0 0
        %3116 = vmatpush2.bf16.msra.mxu0 0
        %3117 = vmatprep.subr.bf16.mxu0 0
        %3118 = vmatpush2.bf16.msra.mxu0 0
        %3119 = vmatprep.subr.bf16.mxu0 0
        %3120 = vmatpush2.bf16.msra.mxu0 0
        %3121 = vmatprep.mubr.bf16.mxu0 0
        %3122 = vmatmul.mubr.bf16.gmra.mxu0 %v3087
        %v3123 = vpop.f32.mrf.mxu0
        %v3124 = vadd.f32 0.0, %v3123
        %v3125 = vpop.f32.mrf.mxu0
        %v3126 = vpop.f32.mrf.mxu0
        %v3127 = vadd.f32 0.0, %v3126
        %v3128 = vpop.f32.mrf.mxu0
        %3129 = vdwg.mxu0
        %v3130 = vadd.f32 %v3042, %v3124
        %v3131 = vadd.f32 %v3043, %v3127
        %v3132 = vld [vmem:[%s4] sm:$0x1]
        %v3134 = vlaneseq
        %v3135 = vshrl.u32 %v3134, 7
        %v3136 = vsub.s32 0, %v3135
        %v3137 = vrot.slane %v3132, %v3136
        %v3139 = vadd.f32 %v3130, %v3137
        %v3140 = vadd.f32 %v3131, %v3137
        %v3141 = vmax.f32 %v3139, 0.0
        %v3142 = vmax.f32 %v3140, 0.0
        %v3145 = vcombine.high %v3141, %v3141
        %v3147 = vunpack.c.l.s4 1983009808
        %v3148 = vunpack.c.0.s8 %v3147
        %v3149 = vlaneseq
        %v3150 = vshrl.u32 %v3149, 7
        %v3151 = vsub.s32 %v3148, %v3150
        %v3152 = vrot.slane %v3141, %v3151
        %v3154 = vunpack.c.l.s4 1983009808
        %v3155 = vunpack.c.0.s8 %v3154
        %v3156 = vlaneseq
        %v3157 = vshrl.u32 %v3156, 7
        %v3158 = vsub.s32 %v3155, %v3157
        %v3159 = vrot.slane %v3145, %v3158
        %v3160 = vcombine.high %v3152, %v3152
        %v3161 = vcombine.high %v3159, %v3159
        %v3162 = vcombine.high %v3142, %v3142
        %v3164 = vunpack.c.l.s4 1983009808
        %v3165 = vunpack.c.0.s8 %v3164
        %v3166 = vlaneseq
        %v3167 = vshrl.u32 %v3166, 7
        %v3168 = vsub.s32 %v3165, %v3167
        %v3169 = vrot.slane %v3142, %v3168
        %v3171 = vunpack.c.l.s4 1983009808
        %v3172 = vunpack.c.0.s8 %v3171
        %v3173 = vlaneseq
        %v3174 = vshrl.u32 %v3173, 7
        %v3175 = vsub.s32 %v3172, %v3174
        %v3176 = vrot.slane %v3162, %v3175
        %v3177 = vcombine.high %v3169, %v3169
        %v3178 = vcombine.high %v3176, %v3176
        %v3187 = vrot.slane %v3152, 7
        %v3188 = vrot.slane %v3187, 2
        %v3189 = vrot.slane %v3160, 7
        %v3190 = vrot.slane %v3189, 2
        %v3191 = vrot.slane %v3159, 7
        %v3192 = vrot.slane %v3191, 2
        %v3193 = vrot.slane %v3161, 7
        %v3194 = vrot.slane %v3193, 2
        %v3195 = vrot.slane %v3169, 7
        %v3196 = vrot.slane %v3195, 2
        %v3197 = vrot.slane %v3177, 7
        %v3198 = vrot.slane %v3197, 2
        %v3199 = vrot.slane %v3176, 7
        %v3200 = vrot.slane %v3199, 2
        %v3201 = vrot.slane %v3178, 7
        %v3202 = vrot.slane %v3201, 2
        %v3211 = vmax.f32 %v3152, %v3188
        %v3212 = vmax.f32 %v3160, %v3190
        %v3213 = vmax.f32 %v3159, %v3192
        %v3214 = vmax.f32 %v3161, %v3194
        %v3215 = vmax.f32 %v3169, %v3196
        %v3216 = vmax.f32 %v3177, %v3198
        %v3217 = vmax.f32 %v3176, %v3200
        %v3218 = vmax.f32 %v3178, %v3202
        %v3219 = vmax.f32 %v3211, %v3213
        %v3220 = vmax.f32 %v3212, %v3214
        %v3221 = vmax.f32 %v3215, %v3217
        %v3222 = vmax.f32 %v3216, %v3218
        %v3227 = vlaneseq
        %v3228 = vshrl.u32 %v3227, 7
        %v3229 = vsub.s32 0, %v3228
        %v3230 = vrot.slane %v3219, %v3229
        %v3231 = vlaneseq
        %v3232 = vshrl.u32 %v3231, 7
        %v3233 = vsub.s32 0, %v3232
        %v3234 = vrot.slane %v3220, %v3233
        %v3235 = vlaneseq
        %v3236 = vshrl.u32 %v3235, 7
        %v3237 = vsub.s32 0, %v3236
        %v3238 = vrot.slane %v3221, %v3237
        %v3239 = vlaneseq
        %v3240 = vshrl.u32 %v3239, 7
        %v3241 = vsub.s32 0, %v3240
        %v3242 = vrot.slane %v3222, %v3241
        %v3243 = vsel %vm2109, %v3234, %v3230
        %v3244 = vsel %vm2109, %v3242, %v3238
        %v3245 = vrot.slane %v3243, 7
        %v3246 = vrot.slane %v3244, 7
        %v3249 = vsel %vm630, 0.0, %v3245
        %v3250 = vsel %vm630, 0.0, %v3246
        %vm3251 = vcmask 1042432
        %v3252 = vsel %vm3251, %v631, 0.0
        %v3253 = vsel %vm3251, %v3249, 0.0
        %v3254 = vsel %vm3251, %v3250, 0.0
        %v3255 = vpack.c.bf16 %v3252, %v3252
        %v3256 = vpack.c.bf16 %v3253, %v3253
        %v3257 = vpack.c.bf16 %v3254, %v3254
        %v3258 = vld [vmem:[#allocation7] sm:$0xff]
        %v3259 = vld [vmem:[#allocation7 + $0x8] sm:$0xff]
        %v3260 = vld [vmem:[#allocation7 + $0x10] sm:$0xff]
        %v3261 = vld [vmem:[#allocation7 + $0x18] sm:$0xff]
        %v3262 = vld [vmem:[#allocation7 + $0x20] sm:$0xff]
        %v3263 = vld [vmem:[#allocation7 + $0x28] sm:$0xff]
        %v3264 = vld [vmem:[#allocation7 + $0x30] sm:$0xff]
        %v3265 = vld [vmem:[#allocation7 + $0x38] sm:$0xff]
        %v3266 = vld [vmem:[#allocation7 + $0x40] sm:$0xff]
        %v3267 = vld [vmem:[#allocation7 + $0x48] sm:$0xff]
        %v3268 = vld [vmem:[#allocation7 + $0x50] sm:$0xff]
        %v3269 = vld [vmem:[#allocation7 + $0x58] sm:$0xff]
        %v3270 = vld [vmem:[#allocation7 + $0x60] sm:$0xff]
        %v3271 = vld [vmem:[#allocation7 + $0x68] sm:$0xff]
        %v3272 = vld [vmem:[#allocation7 + $0x70] sm:$0xff]
        %v3273 = vld [vmem:[#allocation7 + $0x78] sm:$0xff]
        %v3274 = vld [vmem:[#allocation7 + $0x80] sm:$0xff]
        %v3275 = vld [vmem:[#allocation7 + $0x88] sm:$0xff]
        %v3276 = vld [vmem:[#allocation7 + $0x90] sm:$0xff]
        %v3277 = vld [vmem:[#allocation7 + $0x98] sm:$0xff]
        %v3278 = vld [vmem:[#allocation7 + $0xa0] sm:$0xff]
        %v3279 = vld [vmem:[#allocation7 + $0xa8] sm:$0xff]
        %v3280 = vld [vmem:[#allocation7 + $0xb0] sm:$0xff]
        %v3281 = vld [vmem:[#allocation7 + $0xb8] sm:$0xff]
        %v3282 = vld [vmem:[#allocation7 + $0xc0] sm:$0xff]
        %v3283 = vld [vmem:[#allocation7 + $0xc8] sm:$0xff]
        %v3284 = vld [vmem:[#allocation7 + $0xd0] sm:$0xff]
        %v3285 = vld [vmem:[#allocation7 + $0xd8] sm:$0xff]
        %v3286 = vld [vmem:[#allocation7 + $0xe0] sm:$0xff]
        %v3287 = vld [vmem:[#allocation7 + $0xe8] sm:$0xff]
        %v3288 = vld [vmem:[#allocation7 + $0xf0] sm:$0xff]
        %v3289 = vld [vmem:[#allocation7 + $0xf8] sm:$0xff]
        %v3293 = vunpack.c.l.s4 1966171168
        %v3294 = vunpack.c.0.s8 %v3293
        %v3295 = vlaneseq
        %v3296 = vshrl.u32 %v3295, 7
        %v3297 = vsub.s32 %v3294, %v3296
        %v3298 = vrot.slane %v3255, %v3297
        %v3299 = vcombine.high %v3298, %v3298
        %v3301 = vunpack.c.l.s4 1966171168
        %v3302 = vunpack.c.0.s8 %v3301
        %v3303 = vlaneseq
        %v3304 = vshrl.u32 %v3303, 7
        %v3305 = vsub.s32 %v3302, %v3304
        %v3306 = vrot.slane %v3298, %v3305
        %v3308 = vunpack.c.l.s4 1966171168
        %v3309 = vunpack.c.0.s8 %v3308
        %v3310 = vlaneseq
        %v3311 = vshrl.u32 %v3310, 7
        %v3312 = vsub.s32 %v3309, %v3311
        %v3313 = vrot.slane %v3299, %v3312
        %v3315 = vunpack.c.l.s4 1966171168
        %v3316 = vunpack.c.0.s8 %v3315
        %v3317 = vlaneseq
        %v3318 = vshrl.u32 %v3317, 7
        %v3319 = vsub.s32 %v3316, %v3318
        %v3320 = vrot.slane %v3256, %v3319
        %v3321 = vcombine.high %v3320, %v3320
        %v3323 = vunpack.c.l.s4 1966171168
        %v3324 = vunpack.c.0.s8 %v3323
        %v3325 = vlaneseq
        %v3326 = vshrl.u32 %v3325, 7
        %v3327 = vsub.s32 %v3324, %v3326
        %v3328 = vrot.slane %v3320, %v3327
        %v3330 = vunpack.c.l.s4 1966171168
        %v3331 = vunpack.c.0.s8 %v3330
        %v3332 = vlaneseq
        %v3333 = vshrl.u32 %v3332, 7
        %v3334 = vsub.s32 %v3331, %v3333
        %v3335 = vrot.slane %v3321, %v3334
        %vm3336 = vsmask.f32 256
        %vm3337 = vsmask.f32 1284
        %vm3338 = vmor %vm3336, %vm3337
        %vm3339 = vsmask.f32 2312
        %vm3340 = vmor %vm3338, %vm3339
        %vm3341 = vsmask.f32 3340
        %vm3342 = vmor %vm3340, %vm3341
        %vm3343 = vsmask.f32 4368
        %vm3344 = vmor %vm3342, %vm3343
        %vm3345 = vsmask.f32 5396
        %vm3346 = vmor %vm3344, %vm3345
        %vm3347 = vsmask.f32 6424
        %vm3348 = vmor %vm3346, %vm3347
        %vm3349 = vsmask.f32 7452
        %vm3350 = vmor %vm3348, %vm3349
        %v3352 = vshrl.u32 %v3306, 16
        %v3354 = vrot.slane %v3352, 7
        %v3355 = vrot.slane %v3354, 1
        %v3357 = vshll.u32 %v3313, 16
        %v3359 = vsel %vm3350, %v3355, %v3357
        %v3361 = vshrl.u32 %v3328, 16
        %v3363 = vrot.slane %v3361, 7
        %v3364 = vrot.slane %v3363, 1
        %v3366 = vshll.u32 %v3335, 16
        %v3368 = vsel %vm3350, %v3364, %v3366
        %s3369 = scalar_lea.vmem [#allocation7], 256
        %v3370 = vld [vmem:[%s3369] sm:$0xff]
        %v3371 = vld [vmem:[%s3369 + $0x8] sm:$0xff]
        %v3372 = vld [vmem:[%s3369 + $0x10] sm:$0xff]
        %v3373 = vld [vmem:[%s3369 + $0x18] sm:$0xff]
        %v3374 = vld [vmem:[%s3369 + $0x20] sm:$0xff]
        %v3375 = vld [vmem:[%s3369 + $0x28] sm:$0xff]
        %v3376 = vld [vmem:[%s3369 + $0x30] sm:$0xff]
        %v3377 = vld [vmem:[%s3369 + $0x38] sm:$0xff]
        %v3378 = vld [vmem:[%s3369 + $0x40] sm:$0xff]
        %v3379 = vld [vmem:[%s3369 + $0x48] sm:$0xff]
        %v3380 = vld [vmem:[%s3369 + $0x50] sm:$0xff]
        %v3381 = vld [vmem:[%s3369 + $0x58] sm:$0xff]
        %v3382 = vld [vmem:[%s3369 + $0x60] sm:$0xff]
        %v3383 = vld [vmem:[%s3369 + $0x68] sm:$0xff]
        %v3384 = vld [vmem:[%s3369 + $0x70] sm:$0xff]
        %v3385 = vld [vmem:[%s3369 + $0x78] sm:$0xff]
        %v3386 = vld [vmem:[%s3369 + $0x80] sm:$0xff]
        %v3387 = vld [vmem:[%s3369 + $0x88] sm:$0xff]
        %v3388 = vld [vmem:[%s3369 + $0x90] sm:$0xff]
        %v3389 = vld [vmem:[%s3369 + $0x98] sm:$0xff]
        %v3390 = vld [vmem:[%s3369 + $0xa0] sm:$0xff]
        %v3391 = vld [vmem:[%s3369 + $0xa8] sm:$0xff]
        %v3392 = vld [vmem:[%s3369 + $0xb0] sm:$0xff]
        %v3393 = vld [vmem:[%s3369 + $0xb8] sm:$0xff]
        %v3394 = vld [vmem:[%s3369 + $0xc0] sm:$0xff]
        %v3395 = vld [vmem:[%s3369 + $0xc8] sm:$0xff]
        %v3396 = vld [vmem:[%s3369 + $0xd0] sm:$0xff]
        %v3397 = vld [vmem:[%s3369 + $0xd8] sm:$0xff]
        %v3398 = vld [vmem:[%s3369 + $0xe0] sm:$0xff]
        %v3399 = vld [vmem:[%s3369 + $0xe8] sm:$0xff]
        %v3400 = vld [vmem:[%s3369 + $0xf0] sm:$0xff]
        %v3401 = vld [vmem:[%s3369 + $0xf8] sm:$0xff]
        %v3402 = vcombine.low %v3359, %v3368
        %v3404 = vunpack.c.l.s4 1966171168
        %v3405 = vunpack.c.0.s8 %v3404
        %v3406 = vlaneseq
        %v3407 = vshrl.u32 %v3406, 7
        %v3408 = vsub.s32 %v3405, %v3407
        %v3409 = vrot.slane %v3402, %v3408
        %v3411 = vunpack.c.l.s4 1966171168
        %v3412 = vunpack.c.0.s8 %v3411
        %v3413 = vlaneseq
        %v3414 = vshrl.u32 %v3413, 7
        %v3415 = vsub.s32 %v3412, %v3414
        %v3416 = vrot.slane %v3409, %v3415
        %v3450 = vunpack.c.l.b16 %v3370
        %v3451 = vunpack.c.h.b16 %v3370
        %v3452 = vunpack.c.l.b16 %v3371
        %v3453 = vunpack.c.h.b16 %v3371
        %v3454 = vunpack.c.l.b16 %v3372
        %v3455 = vunpack.c.h.b16 %v3372
        %v3456 = vunpack.c.l.b16 %v3373
        %v3457 = vunpack.c.h.b16 %v3373
        %v3458 = vunpack.c.l.b16 %v3374
        %v3459 = vunpack.c.h.b16 %v3374
        %v3460 = vunpack.c.l.b16 %v3375
        %v3461 = vunpack.c.h.b16 %v3375
        %v3462 = vunpack.c.l.b16 %v3376
        %v3463 = vunpack.c.h.b16 %v3376
        %v3464 = vunpack.c.l.b16 %v3377
        %v3465 = vunpack.c.h.b16 %v3377
        %v3466 = vunpack.c.l.b16 %v3378
        %v3467 = vunpack.c.h.b16 %v3378
        %v3468 = vunpack.c.l.b16 %v3379
        %v3469 = vunpack.c.h.b16 %v3379
        %v3470 = vunpack.c.l.b16 %v3380
        %v3471 = vunpack.c.h.b16 %v3380
        %v3472 = vunpack.c.l.b16 %v3381
        %v3473 = vunpack.c.h.b16 %v3381
        %v3474 = vunpack.c.l.b16 %v3382
        %v3475 = vunpack.c.h.b16 %v3382
        %v3476 = vunpack.c.l.b16 %v3383
        %v3477 = vunpack.c.h.b16 %v3383
        %v3478 = vunpack.c.l.b16 %v3384
        %v3479 = vunpack.c.h.b16 %v3384
        %v3480 = vunpack.c.l.b16 %v3385
        %v3481 = vunpack.c.h.b16 %v3385
        %v3482 = vunpack.c.l.b16 %v3386
        %v3483 = vunpack.c.h.b16 %v3386
        %v3484 = vunpack.c.l.b16 %v3387
        %v3485 = vunpack.c.h.b16 %v3387
        %v3486 = vunpack.c.l.b16 %v3388
        %v3487 = vunpack.c.h.b16 %v3388
        %v3488 = vunpack.c.l.b16 %v3389
        %v3489 = vunpack.c.h.b16 %v3389
        %v3490 = vunpack.c.l.b16 %v3390
        %v3491 = vunpack.c.h.b16 %v3390
        %v3492 = vunpack.c.l.b16 %v3391
        %v3493 = vunpack.c.h.b16 %v3391
        %v3494 = vunpack.c.l.b16 %v3392
        %v3495 = vunpack.c.h.b16 %v3392
        %v3496 = vunpack.c.l.b16 %v3393
        %v3497 = vunpack.c.h.b16 %v3393
        %v3498 = vunpack.c.l.b16 %v3394
        %v3499 = vunpack.c.h.b16 %v3394
        %v3500 = vunpack.c.l.b16 %v3395
        %v3501 = vunpack.c.h.b16 %v3395
        %v3502 = vunpack.c.l.b16 %v3396
        %v3503 = vunpack.c.h.b16 %v3396
        %v3504 = vunpack.c.l.b16 %v3397
        %v3505 = vunpack.c.h.b16 %v3397
        %v3506 = vunpack.c.l.b16 %v3398
        %v3507 = vunpack.c.h.b16 %v3398
        %v3508 = vunpack.c.l.b16 %v3399
        %v3509 = vunpack.c.h.b16 %v3399
        %v3510 = vunpack.c.l.b16 %v3400
        %v3511 = vunpack.c.h.b16 %v3400
        %v3512 = vunpack.c.l.b16 %v3401
        %v3513 = vunpack.c.h.b16 %v3401
        %v3514 = vpack.c.b16 %v3454, %v3450
        %v3515 = vpack.c.b16 %v3455, %v3451
        %v3516 = vpack.c.b16 %v3456, %v3452
        %v3517 = vpack.c.b16 %v3457, %v3453
        %v3518 = vpack.c.b16 %v3462, %v3458
        %v3519 = vpack.c.b16 %v3463, %v3459
        %v3520 = vpack.c.b16 %v3464, %v3460
        %v3521 = vpack.c.b16 %v3465, %v3461
        %v3522 = vpack.c.b16 %v3470, %v3466
        %v3523 = vpack.c.b16 %v3471, %v3467
        %v3524 = vpack.c.b16 %v3472, %v3468
        %v3525 = vpack.c.b16 %v3473, %v3469
        %v3526 = vpack.c.b16 %v3478, %v3474
        %v3527 = vpack.c.b16 %v3479, %v3475
        %v3528 = vpack.c.b16 %v3480, %v3476
        %v3529 = vpack.c.b16 %v3481, %v3477
        %v3530 = vpack.c.b16 %v3486, %v3482
        %v3531 = vpack.c.b16 %v3487, %v3483
        %v3532 = vpack.c.b16 %v3488, %v3484
        %v3533 = vpack.c.b16 %v3489, %v3485
        %v3534 = vpack.c.b16 %v3494, %v3490
        %v3535 = vpack.c.b16 %v3495, %v3491
        %v3536 = vpack.c.b16 %v3496, %v3492
        %v3537 = vpack.c.b16 %v3497, %v3493
        %v3538 = vpack.c.b16 %v3502, %v3498
        %v3539 = vpack.c.b16 %v3503, %v3499
        %v3540 = vpack.c.b16 %v3504, %v3500
        %v3541 = vpack.c.b16 %v3505, %v3501
        %v3542 = vpack.c.b16 %v3510, %v3506
        %v3543 = vpack.c.b16 %v3511, %v3507
        %v3544 = vpack.c.b16 %v3512, %v3508
        %v3545 = vpack.c.b16 %v3513, %v3509
        %3578 = vmatprep.subr.bf16.mxu0 %v3543
        %3579 = vmatpush1.bf16.msra.mxu0 %v3542
        %3580 = vmatprep.subr.bf16.mxu0 %v3539
        %3581 = vmatpush1.bf16.msra.mxu0 %v3538
        %3582 = vmatprep.subr.bf16.mxu0 %v3535
        %3583 = vmatpush1.bf16.msra.mxu0 %v3534
        %3584 = vmatprep.subr.bf16.mxu0 %v3531
        %3585 = vmatpush1.bf16.msra.mxu0 %v3530
        %3586 = vmatprep.subr.bf16.mxu0 %v3527
        %3587 = vmatpush1.bf16.msra.mxu0 %v3526
        %3588 = vmatprep.subr.bf16.mxu0 %v3523
        %3589 = vmatpush1.bf16.msra.mxu0 %v3522
        %3590 = vmatprep.subr.bf16.mxu0 %v3519
        %3591 = vmatpush1.bf16.msra.mxu0 %v3518
        %3592 = vmatprep.subr.bf16.mxu0 %v3515
        %3593 = vmatpush1.bf16.msra.mxu0 %v3514
        %3594 = vmatprep.subr.bf16.mxu0 0
        %3595 = vmatpush2.bf16.msra.mxu0 0
        %3596 = vmatprep.subr.bf16.mxu0 0
        %3597 = vmatpush2.bf16.msra.mxu0 0
        %3598 = vmatprep.subr.bf16.mxu0 0
        %3599 = vmatpush2.bf16.msra.mxu0 0
        %3600 = vmatprep.subr.bf16.mxu0 0
        %3601 = vmatpush2.bf16.msra.mxu0 0
        %3602 = vmatprep.subr.bf16.mxu0 0
        %3603 = vmatpush2.bf16.msra.mxu0 0
        %3604 = vmatprep.subr.bf16.mxu0 0
        %3605 = vmatpush2.bf16.msra.mxu0 0
        %3606 = vmatprep.subr.bf16.mxu0 0
        %3607 = vmatpush2.bf16.msra.mxu0 0
        %3608 = vmatprep.subr.bf16.mxu0 0
        %3609 = vmatpush2.bf16.msra.mxu0 0
        %3610 = vmatprep.mubr.bf16.mxu0 0
        %3611 = vmatmul.mubr.bf16.gmra.mxu0 %v3416
        %v3612 = vpop.f32.mrf.mxu0
        %v3613 = vadd.f32 0.0, %v3612
        %v3614 = vpop.f32.mrf.mxu0
        %v3615 = vadd.f32 0.0, %v3614
        %v3616 = vpop.f32.mrf.mxu0
        %v3617 = vpop.f32.mrf.mxu0
        %3618 = vdwg.mxu0
        %3619 = vmatprep.subr.bf16.mxu0 %v3545
        %3620 = vmatpush1.bf16.msra.mxu0 %v3544
        %3621 = vmatprep.subr.bf16.mxu0 %v3541
        %3622 = vmatpush1.bf16.msra.mxu0 %v3540
        %3623 = vmatprep.subr.bf16.mxu0 %v3537
        %3624 = vmatpush1.bf16.msra.mxu0 %v3536
        %3625 = vmatprep.subr.bf16.mxu0 %v3533
        %3626 = vmatpush1.bf16.msra.mxu0 %v3532
        %3627 = vmatprep.subr.bf16.mxu0 %v3529
        %3628 = vmatpush1.bf16.msra.mxu0 %v3528
        %3629 = vmatprep.subr.bf16.mxu0 %v3525
        %3630 = vmatpush1.bf16.msra.mxu0 %v3524
        %3631 = vmatprep.subr.bf16.mxu0 %v3521
        %3632 = vmatpush1.bf16.msra.mxu0 %v3520
        %3633 = vmatprep.subr.bf16.mxu0 %v3517
        %3634 = vmatpush1.bf16.msra.mxu0 %v3516
        %3635 = vmatprep.subr.bf16.mxu0 0
        %3636 = vmatpush2.bf16.msra.mxu0 0
        %3637 = vmatprep.subr.bf16.mxu0 0
        %3638 = vmatpush2.bf16.msra.mxu0 0
        %3639 = vmatprep.subr.bf16.mxu0 0
        %3640 = vmatpush2.bf16.msra.mxu0 0
        %3641 = vmatprep.subr.bf16.mxu0 0
        %3642 = vmatpush2.bf16.msra.mxu0 0
        %3643 = vmatprep.subr.bf16.mxu0 0
        %3644 = vmatpush2.bf16.msra.mxu0 0
        %3645 = vmatprep.subr.bf16.mxu0 0
        %3646 = vmatpush2.bf16.msra.mxu0 0
        %3647 = vmatprep.subr.bf16.mxu0 0
        %3648 = vmatpush2.bf16.msra.mxu0 0
        %3649 = vmatprep.subr.bf16.mxu0 0
        %3650 = vmatpush2.bf16.msra.mxu0 0
        %3651 = vmatprep.mubr.bf16.mxu0 0
        %3652 = vmatmul.mubr.bf16.gmra.mxu0 %v3416
        %v3653 = vpop.f32.mrf.mxu0
        %v3654 = vadd.f32 0.0, %v3653
        %v3655 = vpop.f32.mrf.mxu0
        %v3656 = vadd.f32 0.0, %v3655
        %v3657 = vpop.f32.mrf.mxu0
        %v3658 = vpop.f32.mrf.mxu0
        %3659 = vdwg.mxu0
        %v3660 = vcombine.low %v3255, %v3256
        %v3662 = vunpack.c.l.s4 1966171168
        %v3663 = vunpack.c.0.s8 %v3662
        %v3664 = vlaneseq
        %v3665 = vshrl.u32 %v3664, 7
        %v3666 = vsub.s32 %v3663, %v3665
        %v3667 = vrot.slane %v3660, %v3666
        %v3669 = vunpack.c.l.s4 1966171168
        %v3670 = vunpack.c.0.s8 %v3669
        %v3671 = vlaneseq
        %v3672 = vshrl.u32 %v3671, 7
        %v3673 = vsub.s32 %v3670, %v3672
        %v3674 = vrot.slane %v3667, %v3673
        %v3708 = vunpack.c.l.b16 %v3258
        %v3709 = vunpack.c.h.b16 %v3258
        %v3710 = vunpack.c.l.b16 %v3259
        %v3711 = vunpack.c.h.b16 %v3259
        %v3712 = vunpack.c.l.b16 %v3260
        %v3713 = vunpack.c.h.b16 %v3260
        %v3714 = vunpack.c.l.b16 %v3261
        %v3715 = vunpack.c.h.b16 %v3261
        %v3716 = vunpack.c.l.b16 %v3262
        %v3717 = vunpack.c.h.b16 %v3262
        %v3718 = vunpack.c.l.b16 %v3263
        %v3719 = vunpack.c.h.b16 %v3263
        %v3720 = vunpack.c.l.b16 %v3264
        %v3721 = vunpack.c.h.b16 %v3264
        %v3722 = vunpack.c.l.b16 %v3265
        %v3723 = vunpack.c.h.b16 %v3265
        %v3724 = vunpack.c.l.b16 %v3266
        %v3725 = vunpack.c.h.b16 %v3266
        %v3726 = vunpack.c.l.b16 %v3267
        %v3727 = vunpack.c.h.b16 %v3267
        %v3728 = vunpack.c.l.b16 %v3268
        %v3729 = vunpack.c.h.b16 %v3268
        %v3730 = vunpack.c.l.b16 %v3269
        %v3731 = vunpack.c.h.b16 %v3269
        %v3732 = vunpack.c.l.b16 %v3270
        %v3733 = vunpack.c.h.b16 %v3270
        %v3734 = vunpack.c.l.b16 %v3271
        %v3735 = vunpack.c.h.b16 %v3271
        %v3736 = vunpack.c.l.b16 %v3272
        %v3737 = vunpack.c.h.b16 %v3272
        %v3738 = vunpack.c.l.b16 %v3273
        %v3739 = vunpack.c.h.b16 %v3273
        %v3740 = vunpack.c.l.b16 %v3274
        %v3741 = vunpack.c.h.b16 %v3274
        %v3742 = vunpack.c.l.b16 %v3275
        %v3743 = vunpack.c.h.b16 %v3275
        %v3744 = vunpack.c.l.b16 %v3276
        %v3745 = vunpack.c.h.b16 %v3276
        %v3746 = vunpack.c.l.b16 %v3277
        %v3747 = vunpack.c.h.b16 %v3277
        %v3748 = vunpack.c.l.b16 %v3278
        %v3749 = vunpack.c.h.b16 %v3278
        %v3750 = vunpack.c.l.b16 %v3279
        %v3751 = vunpack.c.h.b16 %v3279
        %v3752 = vunpack.c.l.b16 %v3280
        %v3753 = vunpack.c.h.b16 %v3280
        %v3754 = vunpack.c.l.b16 %v3281
        %v3755 = vunpack.c.h.b16 %v3281
        %v3756 = vunpack.c.l.b16 %v3282
        %v3757 = vunpack.c.h.b16 %v3282
        %v3758 = vunpack.c.l.b16 %v3283
        %v3759 = vunpack.c.h.b16 %v3283
        %v3760 = vunpack.c.l.b16 %v3284
        %v3761 = vunpack.c.h.b16 %v3284
        %v3762 = vunpack.c.l.b16 %v3285
        %v3763 = vunpack.c.h.b16 %v3285
        %v3764 = vunpack.c.l.b16 %v3286
        %v3765 = vunpack.c.h.b16 %v3286
        %v3766 = vunpack.c.l.b16 %v3287
        %v3767 = vunpack.c.h.b16 %v3287
        %v3768 = vunpack.c.l.b16 %v3288
        %v3769 = vunpack.c.h.b16 %v3288
        %v3770 = vunpack.c.l.b16 %v3289
        %v3771 = vunpack.c.h.b16 %v3289
        %v3772 = vpack.c.b16 %v3712, %v3708
        %v3773 = vpack.c.b16 %v3713, %v3709
        %v3774 = vpack.c.b16 %v3714, %v3710
        %v3775 = vpack.c.b16 %v3715, %v3711
        %v3776 = vpack.c.b16 %v3720, %v3716
        %v3777 = vpack.c.b16 %v3721, %v3717
        %v3778 = vpack.c.b16 %v3722, %v3718
        %v3779 = vpack.c.b16 %v3723, %v3719
        %v3780 = vpack.c.b16 %v3728, %v3724
        %v3781 = vpack.c.b16 %v3729, %v3725
        %v3782 = vpack.c.b16 %v3730, %v3726
        %v3783 = vpack.c.b16 %v3731, %v3727
        %v3784 = vpack.c.b16 %v3736, %v3732
        %v3785 = vpack.c.b16 %v3737, %v3733
        %v3786 = vpack.c.b16 %v3738, %v3734
        %v3787 = vpack.c.b16 %v3739, %v3735
        %v3788 = vpack.c.b16 %v3744, %v3740
        %v3789 = vpack.c.b16 %v3745, %v3741
        %v3790 = vpack.c.b16 %v3746, %v3742
        %v3791 = vpack.c.b16 %v3747, %v3743
        %v3792 = vpack.c.b16 %v3752, %v3748
        %v3793 = vpack.c.b16 %v3753, %v3749
        %v3794 = vpack.c.b16 %v3754, %v3750
        %v3795 = vpack.c.b16 %v3755, %v3751
        %v3796 = vpack.c.b16 %v3760, %v3756
        %v3797 = vpack.c.b16 %v3761, %v3757
        %v3798 = vpack.c.b16 %v3762, %v3758
        %v3799 = vpack.c.b16 %v3763, %v3759
        %v3800 = vpack.c.b16 %v3768, %v3764
        %v3801 = vpack.c.b16 %v3769, %v3765
        %v3802 = vpack.c.b16 %v3770, %v3766
        %v3803 = vpack.c.b16 %v3771, %v3767
        %3836 = vmatprep.subr.bf16.mxu0 %v3801
        %3837 = vmatpush1.bf16.msra.mxu0 %v3800
        %3838 = vmatprep.subr.bf16.mxu0 %v3797
        %3839 = vmatpush1.bf16.msra.mxu0 %v3796
        %3840 = vmatprep.subr.bf16.mxu0 %v3793
        %3841 = vmatpush1.bf16.msra.mxu0 %v3792
        %3842 = vmatprep.subr.bf16.mxu0 %v3789
        %3843 = vmatpush1.bf16.msra.mxu0 %v3788
        %3844 = vmatprep.subr.bf16.mxu0 %v3785
        %3845 = vmatpush1.bf16.msra.mxu0 %v3784
        %3846 = vmatprep.subr.bf16.mxu0 %v3781
        %3847 = vmatpush1.bf16.msra.mxu0 %v3780
        %3848 = vmatprep.subr.bf16.mxu0 %v3777
        %3849 = vmatpush1.bf16.msra.mxu0 %v3776
        %3850 = vmatprep.subr.bf16.mxu0 %v3773
        %3851 = vmatpush1.bf16.msra.mxu0 %v3772
        %3852 = vmatprep.subr.bf16.mxu0 0
        %3853 = vmatpush2.bf16.msra.mxu0 0
        %3854 = vmatprep.subr.bf16.mxu0 0
        %3855 = vmatpush2.bf16.msra.mxu0 0
        %3856 = vmatprep.subr.bf16.mxu0 0
        %3857 = vmatpush2.bf16.msra.mxu0 0
        %3858 = vmatprep.subr.bf16.mxu0 0
        %3859 = vmatpush2.bf16.msra.mxu0 0
        %3860 = vmatprep.subr.bf16.mxu0 0
        %3861 = vmatpush2.bf16.msra.mxu0 0
        %3862 = vmatprep.subr.bf16.mxu0 0
        %3863 = vmatpush2.bf16.msra.mxu0 0
        %3864 = vmatprep.subr.bf16.mxu0 0
        %3865 = vmatpush2.bf16.msra.mxu0 0
        %3866 = vmatprep.subr.bf16.mxu0 0
        %3867 = vmatpush2.bf16.msra.mxu0 0
        %3868 = vmatprep.mubr.bf16.mxu0 0
        %3869 = vmatmul.mubr.bf16.gmra.mxu0 %v3674
        %v3870 = vpop.f32.mrf.mxu0
        %v3871 = vadd.f32 %v3613, %v3870
        %v3872 = vpop.f32.mrf.mxu0
        %v3873 = vadd.f32 %v3615, %v3872
        %v3874 = vpop.f32.mrf.mxu0
        %v3875 = vpop.f32.mrf.mxu0
        %3876 = vdwg.mxu0
        %3877 = vmatprep.subr.bf16.mxu0 %v3803
        %3878 = vmatpush1.bf16.msra.mxu0 %v3802
        %3879 = vmatprep.subr.bf16.mxu0 %v3799
        %3880 = vmatpush1.bf16.msra.mxu0 %v3798
        %3881 = vmatprep.subr.bf16.mxu0 %v3795
        %3882 = vmatpush1.bf16.msra.mxu0 %v3794
        %3883 = vmatprep.subr.bf16.mxu0 %v3791
        %3884 = vmatpush1.bf16.msra.mxu0 %v3790
        %3885 = vmatprep.subr.bf16.mxu0 %v3787
        %3886 = vmatpush1.bf16.msra.mxu0 %v3786
        %3887 = vmatprep.subr.bf16.mxu0 %v3783
        %3888 = vmatpush1.bf16.msra.mxu0 %v3782
        %3889 = vmatprep.subr.bf16.mxu0 %v3779
        %3890 = vmatpush1.bf16.msra.mxu0 %v3778
        %3891 = vmatprep.subr.bf16.mxu0 %v3775
        %3892 = vmatpush1.bf16.msra.mxu0 %v3774
        %3893 = vmatprep.subr.bf16.mxu0 0
        %3894 = vmatpush2.bf16.msra.mxu0 0
        %3895 = vmatprep.subr.bf16.mxu0 0
        %3896 = vmatpush2.bf16.msra.mxu0 0
        %3897 = vmatprep.subr.bf16.mxu0 0
        %3898 = vmatpush2.bf16.msra.mxu0 0
        %3899 = vmatprep.subr.bf16.mxu0 0
        %3900 = vmatpush2.bf16.msra.mxu0 0
        %3901 = vmatprep.subr.bf16.mxu0 0
        %3902 = vmatpush2.bf16.msra.mxu0 0
        %3903 = vmatprep.subr.bf16.mxu0 0
        %3904 = vmatpush2.bf16.msra.mxu0 0
        %3905 = vmatprep.subr.bf16.mxu0 0
        %3906 = vmatpush2.bf16.msra.mxu0 0
        %3907 = vmatprep.subr.bf16.mxu0 0
        %3908 = vmatpush2.bf16.msra.mxu0 0
        %3909 = vmatprep.mubr.bf16.mxu0 0
        %3910 = vmatmul.mubr.bf16.gmra.mxu0 %v3674
        %v3911 = vpop.f32.mrf.mxu0
        %v3912 = vadd.f32 %v3654, %v3911
        %v3913 = vpop.f32.mrf.mxu0
        %v3914 = vadd.f32 %v3656, %v3913
        %v3915 = vpop.f32.mrf.mxu0
        %v3916 = vpop.f32.mrf.mxu0
        %3917 = vdwg.mxu0
        %s3918 = scalar_lea.vmem [#allocation7], 512
        %v3919 = vld [vmem:[%s3918] sm:$0xff]
        %v3920 = vld [vmem:[%s3918 + $0x8] sm:$0xff]
        %v3921 = vld [vmem:[%s3918 + $0x10] sm:$0xff]
        %v3922 = vld [vmem:[%s3918 + $0x18] sm:$0xff]
        %v3923 = vld [vmem:[%s3918 + $0x20] sm:$0xff]
        %v3924 = vld [vmem:[%s3918 + $0x28] sm:$0xff]
        %v3925 = vld [vmem:[%s3918 + $0x30] sm:$0xff]
        %v3926 = vld [vmem:[%s3918 + $0x38] sm:$0xff]
        %v3927 = vld [vmem:[%s3918 + $0x40] sm:$0xff]
        %v3928 = vld [vmem:[%s3918 + $0x48] sm:$0xff]
        %v3929 = vld [vmem:[%s3918 + $0x50] sm:$0xff]
        %v3930 = vld [vmem:[%s3918 + $0x58] sm:$0xff]
        %v3931 = vld [vmem:[%s3918 + $0x60] sm:$0xff]
        %v3932 = vld [vmem:[%s3918 + $0x68] sm:$0xff]
        %v3933 = vld [vmem:[%s3918 + $0x70] sm:$0xff]
        %v3934 = vld [vmem:[%s3918 + $0x78] sm:$0xff]
        %v3935 = vld [vmem:[%s3918 + $0x80] sm:$0xff]
        %v3936 = vld [vmem:[%s3918 + $0x88] sm:$0xff]
        %v3937 = vld [vmem:[%s3918 + $0x90] sm:$0xff]
        %v3938 = vld [vmem:[%s3918 + $0x98] sm:$0xff]
        %v3939 = vld [vmem:[%s3918 + $0xa0] sm:$0xff]
        %v3940 = vld [vmem:[%s3918 + $0xa8] sm:$0xff]
        %v3941 = vld [vmem:[%s3918 + $0xb0] sm:$0xff]
        %v3942 = vld [vmem:[%s3918 + $0xb8] sm:$0xff]
        %v3943 = vld [vmem:[%s3918 + $0xc0] sm:$0xff]
        %v3944 = vld [vmem:[%s3918 + $0xc8] sm:$0xff]
        %v3945 = vld [vmem:[%s3918 + $0xd0] sm:$0xff]
        %v3946 = vld [vmem:[%s3918 + $0xd8] sm:$0xff]
        %v3947 = vld [vmem:[%s3918 + $0xe0] sm:$0xff]
        %v3948 = vld [vmem:[%s3918 + $0xe8] sm:$0xff]
        %v3949 = vld [vmem:[%s3918 + $0xf0] sm:$0xff]
        %v3950 = vld [vmem:[%s3918 + $0xf8] sm:$0xff]
        %v3951 = vcombine.low %v3313, %v3335
        %v3953 = vunpack.c.l.s4 1966171168
        %v3954 = vunpack.c.0.s8 %v3953
        %v3955 = vlaneseq
        %v3956 = vshrl.u32 %v3955, 7
        %v3957 = vsub.s32 %v3954, %v3956
        %v3958 = vrot.slane %v3951, %v3957
        %v3960 = vunpack.c.l.s4 1966171168
        %v3961 = vunpack.c.0.s8 %v3960
        %v3962 = vlaneseq
        %v3963 = vshrl.u32 %v3962, 7
        %v3964 = vsub.s32 %v3961, %v3963
        %v3965 = vrot.slane %v3958, %v3964
        %v3999 = vunpack.c.l.b16 %v3919
        %v4000 = vunpack.c.h.b16 %v3919
        %v4001 = vunpack.c.l.b16 %v3920
        %v4002 = vunpack.c.h.b16 %v3920
        %v4003 = vunpack.c.l.b16 %v3921
        %v4004 = vunpack.c.h.b16 %v3921
        %v4005 = vunpack.c.l.b16 %v3922
        %v4006 = vunpack.c.h.b16 %v3922
        %v4007 = vunpack.c.l.b16 %v3923
        %v4008 = vunpack.c.h.b16 %v3923
        %v4009 = vunpack.c.l.b16 %v3924
        %v4010 = vunpack.c.h.b16 %v3924
        %v4011 = vunpack.c.l.b16 %v3925
        %v4012 = vunpack.c.h.b16 %v3925
        %v4013 = vunpack.c.l.b16 %v3926
        %v4014 = vunpack.c.h.b16 %v3926
        %v4015 = vunpack.c.l.b16 %v3927
        %v4016 = vunpack.c.h.b16 %v3927
        %v4017 = vunpack.c.l.b16 %v3928
        %v4018 = vunpack.c.h.b16 %v3928
        %v4019 = vunpack.c.l.b16 %v3929
        %v4020 = vunpack.c.h.b16 %v3929
        %v4021 = vunpack.c.l.b16 %v3930
        %v4022 = vunpack.c.h.b16 %v3930
        %v4023 = vunpack.c.l.b16 %v3931
        %v4024 = vunpack.c.h.b16 %v3931
        %v4025 = vunpack.c.l.b16 %v3932
        %v4026 = vunpack.c.h.b16 %v3932
        %v4027 = vunpack.c.l.b16 %v3933
        %v4028 = vunpack.c.h.b16 %v3933
        %v4029 = vunpack.c.l.b16 %v3934
        %v4030 = vunpack.c.h.b16 %v3934
        %v4031 = vunpack.c.l.b16 %v3935
        %v4032 = vunpack.c.h.b16 %v3935
        %v4033 = vunpack.c.l.b16 %v3936
        %v4034 = vunpack.c.h.b16 %v3936
        %v4035 = vunpack.c.l.b16 %v3937
        %v4036 = vunpack.c.h.b16 %v3937
        %v4037 = vunpack.c.l.b16 %v3938
        %v4038 = vunpack.c.h.b16 %v3938
        %v4039 = vunpack.c.l.b16 %v3939
        %v4040 = vunpack.c.h.b16 %v3939
        %v4041 = vunpack.c.l.b16 %v3940
        %v4042 = vunpack.c.h.b16 %v3940
        %v4043 = vunpack.c.l.b16 %v3941
        %v4044 = vunpack.c.h.b16 %v3941
        %v4045 = vunpack.c.l.b16 %v3942
        %v4046 = vunpack.c.h.b16 %v3942
        %v4047 = vunpack.c.l.b16 %v3943
        %v4048 = vunpack.c.h.b16 %v3943
        %v4049 = vunpack.c.l.b16 %v3944
        %v4050 = vunpack.c.h.b16 %v3944
        %v4051 = vunpack.c.l.b16 %v3945
        %v4052 = vunpack.c.h.b16 %v3945
        %v4053 = vunpack.c.l.b16 %v3946
        %v4054 = vunpack.c.h.b16 %v3946
        %v4055 = vunpack.c.l.b16 %v3947
        %v4056 = vunpack.c.h.b16 %v3947
        %v4057 = vunpack.c.l.b16 %v3948
        %v4058 = vunpack.c.h.b16 %v3948
        %v4059 = vunpack.c.l.b16 %v3949
        %v4060 = vunpack.c.h.b16 %v3949
        %v4061 = vunpack.c.l.b16 %v3950
        %v4062 = vunpack.c.h.b16 %v3950
        %v4063 = vpack.c.b16 %v4003, %v3999
        %v4064 = vpack.c.b16 %v4004, %v4000
        %v4065 = vpack.c.b16 %v4005, %v4001
        %v4066 = vpack.c.b16 %v4006, %v4002
        %v4067 = vpack.c.b16 %v4011, %v4007
        %v4068 = vpack.c.b16 %v4012, %v4008
        %v4069 = vpack.c.b16 %v4013, %v4009
        %v4070 = vpack.c.b16 %v4014, %v4010
        %v4071 = vpack.c.b16 %v4019, %v4015
        %v4072 = vpack.c.b16 %v4020, %v4016
        %v4073 = vpack.c.b16 %v4021, %v4017
        %v4074 = vpack.c.b16 %v4022, %v4018
        %v4075 = vpack.c.b16 %v4027, %v4023
        %v4076 = vpack.c.b16 %v4028, %v4024
        %v4077 = vpack.c.b16 %v4029, %v4025
        %v4078 = vpack.c.b16 %v4030, %v4026
        %v4079 = vpack.c.b16 %v4035, %v4031
        %v4080 = vpack.c.b16 %v4036, %v4032
        %v4081 = vpack.c.b16 %v4037, %v4033
        %v4082 = vpack.c.b16 %v4038, %v4034
        %v4083 = vpack.c.b16 %v4043, %v4039
        %v4084 = vpack.c.b16 %v4044, %v4040
        %v4085 = vpack.c.b16 %v4045, %v4041
        %v4086 = vpack.c.b16 %v4046, %v4042
        %v4087 = vpack.c.b16 %v4051, %v4047
        %v4088 = vpack.c.b16 %v4052, %v4048
        %v4089 = vpack.c.b16 %v4053, %v4049
        %v4090 = vpack.c.b16 %v4054, %v4050
        %v4091 = vpack.c.b16 %v4059, %v4055
        %v4092 = vpack.c.b16 %v4060, %v4056
        %v4093 = vpack.c.b16 %v4061, %v4057
        %v4094 = vpack.c.b16 %v4062, %v4058
        %4127 = vmatprep.subr.bf16.mxu0 %v4092
        %4128 = vmatpush1.bf16.msra.mxu0 %v4091
        %4129 = vmatprep.subr.bf16.mxu0 %v4088
        %4130 = vmatpush1.bf16.msra.mxu0 %v4087
        %4131 = vmatprep.subr.bf16.mxu0 %v4084
        %4132 = vmatpush1.bf16.msra.mxu0 %v4083
        %4133 = vmatprep.subr.bf16.mxu0 %v4080
        %4134 = vmatpush1.bf16.msra.mxu0 %v4079
        %4135 = vmatprep.subr.bf16.mxu0 %v4076
        %4136 = vmatpush1.bf16.msra.mxu0 %v4075
        %4137 = vmatprep.subr.bf16.mxu0 %v4072
        %4138 = vmatpush1.bf16.msra.mxu0 %v4071
        %4139 = vmatprep.subr.bf16.mxu0 %v4068
        %4140 = vmatpush1.bf16.msra.mxu0 %v4067
        %4141 = vmatprep.subr.bf16.mxu0 %v4064
        %4142 = vmatpush1.bf16.msra.mxu0 %v4063
        %4143 = vmatprep.subr.bf16.mxu0 0
        %4144 = vmatpush2.bf16.msra.mxu0 0
        %4145 = vmatprep.subr.bf16.mxu0 0
        %4146 = vmatpush2.bf16.msra.mxu0 0
        %4147 = vmatprep.subr.bf16.mxu0 0
        %4148 = vmatpush2.bf16.msra.mxu0 0
        %4149 = vmatprep.subr.bf16.mxu0 0
        %4150 = vmatpush2.bf16.msra.mxu0 0
        %4151 = vmatprep.subr.bf16.mxu0 0
        %4152 = vmatpush2.bf16.msra.mxu0 0
        %4153 = vmatprep.subr.bf16.mxu0 0
        %4154 = vmatpush2.bf16.msra.mxu0 0
        %4155 = vmatprep.subr.bf16.mxu0 0
        %4156 = vmatpush2.bf16.msra.mxu0 0
        %4157 = vmatprep.subr.bf16.mxu0 0
        %4158 = vmatpush2.bf16.msra.mxu0 0
        %4159 = vmatprep.mubr.bf16.mxu0 0
        %4160 = vmatmul.mubr.bf16.gmra.mxu0 %v3965
        %v4161 = vpop.f32.mrf.mxu0
        %v4162 = vadd.f32 0.0, %v4161
        %v4163 = vpop.f32.mrf.mxu0
        %v4164 = vadd.f32 0.0, %v4163
        %v4165 = vpop.f32.mrf.mxu0
        %v4166 = vpop.f32.mrf.mxu0
        %4167 = vdwg.mxu0
        %4168 = vmatprep.subr.bf16.mxu0 %v4094
        %4169 = vmatpush1.bf16.msra.mxu0 %v4093
        %4170 = vmatprep.subr.bf16.mxu0 %v4090
        %4171 = vmatpush1.bf16.msra.mxu0 %v4089
        %4172 = vmatprep.subr.bf16.mxu0 %v4086
        %4173 = vmatpush1.bf16.msra.mxu0 %v4085
        %4174 = vmatprep.subr.bf16.mxu0 %v4082
        %4175 = vmatpush1.bf16.msra.mxu0 %v4081
        %4176 = vmatprep.subr.bf16.mxu0 %v4078
        %4177 = vmatpush1.bf16.msra.mxu0 %v4077
        %4178 = vmatprep.subr.bf16.mxu0 %v4074
        %4179 = vmatpush1.bf16.msra.mxu0 %v4073
        %4180 = vmatprep.subr.bf16.mxu0 %v4070
        %4181 = vmatpush1.bf16.msra.mxu0 %v4069
        %4182 = vmatprep.subr.bf16.mxu0 %v4066
        %4183 = vmatpush1.bf16.msra.mxu0 %v4065
        %4184 = vmatprep.subr.bf16.mxu0 0
        %4185 = vmatpush2.bf16.msra.mxu0 0
        %4186 = vmatprep.subr.bf16.mxu0 0
        %4187 = vmatpush2.bf16.msra.mxu0 0
        %4188 = vmatprep.subr.bf16.mxu0 0
        %4189 = vmatpush2.bf16.msra.mxu0 0
        %4190 = vmatprep.subr.bf16.mxu0 0
        %4191 = vmatpush2.bf16.msra.mxu0 0
        %4192 = vmatprep.subr.bf16.mxu0 0
        %4193 = vmatpush2.bf16.msra.mxu0 0
        %4194 = vmatprep.subr.bf16.mxu0 0
        %4195 = vmatpush2.bf16.msra.mxu0 0
        %4196 = vmatprep.subr.bf16.mxu0 0
        %4197 = vmatpush2.bf16.msra.mxu0 0
        %4198 = vmatprep.subr.bf16.mxu0 0
        %4199 = vmatpush2.bf16.msra.mxu0 0
        %4200 = vmatprep.mubr.bf16.mxu0 0
        %4201 = vmatmul.mubr.bf16.gmra.mxu0 %v3965
        %v4202 = vpop.f32.mrf.mxu0
        %v4203 = vadd.f32 0.0, %v4202
        %v4204 = vpop.f32.mrf.mxu0
        %v4205 = vadd.f32 0.0, %v4204
        %v4206 = vpop.f32.mrf.mxu0
        %v4207 = vpop.f32.mrf.mxu0
        %4208 = vdwg.mxu0
        %v4209 = vadd.f32 %v3871, %v4162
        %v4210 = vadd.f32 %v3873, %v4164
        %v4211 = vadd.f32 %v3912, %v4203
        %v4212 = vadd.f32 %v3914, %v4205
        %s4213 = scalar_lea.vmem [#allocation7], 768
        %v4214 = vld [vmem:[%s4213] sm:$0xff]
        %v4215 = vld [vmem:[%s4213 + $0x8] sm:$0xff]
        %v4216 = vld [vmem:[%s4213 + $0x10] sm:$0xff]
        %v4217 = vld [vmem:[%s4213 + $0x18] sm:$0xff]
        %v4218 = vld [vmem:[%s4213 + $0x20] sm:$0xff]
        %v4219 = vld [vmem:[%s4213 + $0x28] sm:$0xff]
        %v4220 = vld [vmem:[%s4213 + $0x30] sm:$0xff]
        %v4221 = vld [vmem:[%s4213 + $0x38] sm:$0xff]
        %v4222 = vld [vmem:[%s4213 + $0x40] sm:$0xff]
        %v4223 = vld [vmem:[%s4213 + $0x48] sm:$0xff]
        %v4224 = vld [vmem:[%s4213 + $0x50] sm:$0xff]
        %v4225 = vld [vmem:[%s4213 + $0x58] sm:$0xff]
        %v4226 = vld [vmem:[%s4213 + $0x60] sm:$0xff]
        %v4227 = vld [vmem:[%s4213 + $0x68] sm:$0xff]
        %v4228 = vld [vmem:[%s4213 + $0x70] sm:$0xff]
        %v4229 = vld [vmem:[%s4213 + $0x78] sm:$0xff]
        %v4230 = vld [vmem:[%s4213 + $0x80] sm:$0xff]
        %v4231 = vld [vmem:[%s4213 + $0x88] sm:$0xff]
        %v4232 = vld [vmem:[%s4213 + $0x90] sm:$0xff]
        %v4233 = vld [vmem:[%s4213 + $0x98] sm:$0xff]
        %v4234 = vld [vmem:[%s4213 + $0xa0] sm:$0xff]
        %v4235 = vld [vmem:[%s4213 + $0xa8] sm:$0xff]
        %v4236 = vld [vmem:[%s4213 + $0xb0] sm:$0xff]
        %v4237 = vld [vmem:[%s4213 + $0xb8] sm:$0xff]
        %v4238 = vld [vmem:[%s4213 + $0xc0] sm:$0xff]
        %v4239 = vld [vmem:[%s4213 + $0xc8] sm:$0xff]
        %v4240 = vld [vmem:[%s4213 + $0xd0] sm:$0xff]
        %v4241 = vld [vmem:[%s4213 + $0xd8] sm:$0xff]
        %v4242 = vld [vmem:[%s4213 + $0xe0] sm:$0xff]
        %v4243 = vld [vmem:[%s4213 + $0xe8] sm:$0xff]
        %v4244 = vld [vmem:[%s4213 + $0xf0] sm:$0xff]
        %v4245 = vld [vmem:[%s4213 + $0xf8] sm:$0xff]
        %v4247 = vcombine.low %v3256, %v3257
        %v4249 = vunpack.c.l.s4 1966171168
        %v4250 = vunpack.c.0.s8 %v4249
        %v4251 = vlaneseq
        %v4252 = vshrl.u32 %v4251, 7
        %v4253 = vsub.s32 %v4250, %v4252
        %v4254 = vrot.slane %v4247, %v4253
        %v4256 = vunpack.c.l.s4 1966171168
        %v4257 = vunpack.c.0.s8 %v4256
        %v4258 = vlaneseq
        %v4259 = vshrl.u32 %v4258, 7
        %v4260 = vsub.s32 %v4257, %v4259
        %v4261 = vrot.slane %v4254, %v4260
        %v4295 = vunpack.c.l.b16 %v4214
        %v4296 = vunpack.c.h.b16 %v4214
        %v4297 = vunpack.c.l.b16 %v4215
        %v4298 = vunpack.c.h.b16 %v4215
        %v4299 = vunpack.c.l.b16 %v4216
        %v4300 = vunpack.c.h.b16 %v4216
        %v4301 = vunpack.c.l.b16 %v4217
        %v4302 = vunpack.c.h.b16 %v4217
        %v4303 = vunpack.c.l.b16 %v4218
        %v4304 = vunpack.c.h.b16 %v4218
        %v4305 = vunpack.c.l.b16 %v4219
        %v4306 = vunpack.c.h.b16 %v4219
        %v4307 = vunpack.c.l.b16 %v4220
        %v4308 = vunpack.c.h.b16 %v4220
        %v4309 = vunpack.c.l.b16 %v4221
        %v4310 = vunpack.c.h.b16 %v4221
        %v4311 = vunpack.c.l.b16 %v4222
        %v4312 = vunpack.c.h.b16 %v4222
        %v4313 = vunpack.c.l.b16 %v4223
        %v4314 = vunpack.c.h.b16 %v4223
        %v4315 = vunpack.c.l.b16 %v4224
        %v4316 = vunpack.c.h.b16 %v4224
        %v4317 = vunpack.c.l.b16 %v4225
        %v4318 = vunpack.c.h.b16 %v4225
        %v4319 = vunpack.c.l.b16 %v4226
        %v4320 = vunpack.c.h.b16 %v4226
        %v4321 = vunpack.c.l.b16 %v4227
        %v4322 = vunpack.c.h.b16 %v4227
        %v4323 = vunpack.c.l.b16 %v4228
        %v4324 = vunpack.c.h.b16 %v4228
        %v4325 = vunpack.c.l.b16 %v4229
        %v4326 = vunpack.c.h.b16 %v4229
        %v4327 = vunpack.c.l.b16 %v4230
        %v4328 = vunpack.c.h.b16 %v4230
        %v4329 = vunpack.c.l.b16 %v4231
        %v4330 = vunpack.c.h.b16 %v4231
        %v4331 = vunpack.c.l.b16 %v4232
        %v4332 = vunpack.c.h.b16 %v4232
        %v4333 = vunpack.c.l.b16 %v4233
        %v4334 = vunpack.c.h.b16 %v4233
        %v4335 = vunpack.c.l.b16 %v4234
        %v4336 = vunpack.c.h.b16 %v4234
        %v4337 = vunpack.c.l.b16 %v4235
        %v4338 = vunpack.c.h.b16 %v4235
        %v4339 = vunpack.c.l.b16 %v4236
        %v4340 = vunpack.c.h.b16 %v4236
        %v4341 = vunpack.c.l.b16 %v4237
        %v4342 = vunpack.c.h.b16 %v4237
        %v4343 = vunpack.c.l.b16 %v4238
        %v4344 = vunpack.c.h.b16 %v4238
        %v4345 = vunpack.c.l.b16 %v4239
        %v4346 = vunpack.c.h.b16 %v4239
        %v4347 = vunpack.c.l.b16 %v4240
        %v4348 = vunpack.c.h.b16 %v4240
        %v4349 = vunpack.c.l.b16 %v4241
        %v4350 = vunpack.c.h.b16 %v4241
        %v4351 = vunpack.c.l.b16 %v4242
        %v4352 = vunpack.c.h.b16 %v4242
        %v4353 = vunpack.c.l.b16 %v4243
        %v4354 = vunpack.c.h.b16 %v4243
        %v4355 = vunpack.c.l.b16 %v4244
        %v4356 = vunpack.c.h.b16 %v4244
        %v4357 = vunpack.c.l.b16 %v4245
        %v4358 = vunpack.c.h.b16 %v4245
        %v4359 = vpack.c.b16 %v4299, %v4295
        %v4360 = vpack.c.b16 %v4300, %v4296
        %v4361 = vpack.c.b16 %v4301, %v4297
        %v4362 = vpack.c.b16 %v4302, %v4298
        %v4363 = vpack.c.b16 %v4307, %v4303
        %v4364 = vpack.c.b16 %v4308, %v4304
        %v4365 = vpack.c.b16 %v4309, %v4305
        %v4366 = vpack.c.b16 %v4310, %v4306
        %v4367 = vpack.c.b16 %v4315, %v4311
        %v4368 = vpack.c.b16 %v4316, %v4312
        %v4369 = vpack.c.b16 %v4317, %v4313
        %v4370 = vpack.c.b16 %v4318, %v4314
        %v4371 = vpack.c.b16 %v4323, %v4319
        %v4372 = vpack.c.b16 %v4324, %v4320
        %v4373 = vpack.c.b16 %v4325, %v4321
        %v4374 = vpack.c.b16 %v4326, %v4322
        %v4375 = vpack.c.b16 %v4331, %v4327
        %v4376 = vpack.c.b16 %v4332, %v4328
        %v4377 = vpack.c.b16 %v4333, %v4329
        %v4378 = vpack.c.b16 %v4334, %v4330
        %v4379 = vpack.c.b16 %v4339, %v4335
        %v4380 = vpack.c.b16 %v4340, %v4336
        %v4381 = vpack.c.b16 %v4341, %v4337
        %v4382 = vpack.c.b16 %v4342, %v4338
        %v4383 = vpack.c.b16 %v4347, %v4343
        %v4384 = vpack.c.b16 %v4348, %v4344
        %v4385 = vpack.c.b16 %v4349, %v4345
        %v4386 = vpack.c.b16 %v4350, %v4346
        %v4387 = vpack.c.b16 %v4355, %v4351
        %v4388 = vpack.c.b16 %v4356, %v4352
        %v4389 = vpack.c.b16 %v4357, %v4353
        %v4390 = vpack.c.b16 %v4358, %v4354
        %4423 = vmatprep.subr.bf16.mxu0 %v4388
        %4424 = vmatpush1.bf16.msra.mxu0 %v4387
        %4425 = vmatprep.subr.bf16.mxu0 %v4384
        %4426 = vmatpush1.bf16.msra.mxu0 %v4383
        %4427 = vmatprep.subr.bf16.mxu0 %v4380
        %4428 = vmatpush1.bf16.msra.mxu0 %v4379
        %4429 = vmatprep.subr.bf16.mxu0 %v4376
        %4430 = vmatpush1.bf16.msra.mxu0 %v4375
        %4431 = vmatprep.subr.bf16.mxu0 %v4372
        %4432 = vmatpush1.bf16.msra.mxu0 %v4371
        %4433 = vmatprep.subr.bf16.mxu0 %v4368
        %4434 = vmatpush1.bf16.msra.mxu0 %v4367
        %4435 = vmatprep.subr.bf16.mxu0 %v4364
        %4436 = vmatpush1.bf16.msra.mxu0 %v4363
        %4437 = vmatprep.subr.bf16.mxu0 %v4360
        %4438 = vmatpush1.bf16.msra.mxu0 %v4359
        %4439 = vmatprep.subr.bf16.mxu0 0
        %4440 = vmatpush2.bf16.msra.mxu0 0
        %4441 = vmatprep.subr.bf16.mxu0 0
        %4442 = vmatpush2.bf16.msra.mxu0 0
        %4443 = vmatprep.subr.bf16.mxu0 0
        %4444 = vmatpush2.bf16.msra.mxu0 0
        %4445 = vmatprep.subr.bf16.mxu0 0
        %4446 = vmatpush2.bf16.msra.mxu0 0
        %4447 = vmatprep.subr.bf16.mxu0 0
        %4448 = vmatpush2.bf16.msra.mxu0 0
        %4449 = vmatprep.subr.bf16.mxu0 0
        %4450 = vmatpush2.bf16.msra.mxu0 0
        %4451 = vmatprep.subr.bf16.mxu0 0
        %4452 = vmatpush2.bf16.msra.mxu0 0
        %4453 = vmatprep.subr.bf16.mxu0 0
        %4454 = vmatpush2.bf16.msra.mxu0 0
        %4455 = vmatprep.mubr.bf16.mxu0 0
        %4456 = vmatmul.mubr.bf16.gmra.mxu0 %v4261
        %v4457 = vpop.f32.mrf.mxu0
        %v4458 = vadd.f32 0.0, %v4457
        %v4459 = vpop.f32.mrf.mxu0
        %v4460 = vadd.f32 0.0, %v4459
        %v4461 = vpop.f32.mrf.mxu0
        %v4462 = vpop.f32.mrf.mxu0
        %4463 = vdwg.mxu0
        %4464 = vmatprep.subr.bf16.mxu0 %v4390
        %4465 = vmatpush1.bf16.msra.mxu0 %v4389
        %4466 = vmatprep.subr.bf16.mxu0 %v4386
        %4467 = vmatpush1.bf16.msra.mxu0 %v4385
        %4468 = vmatprep.subr.bf16.mxu0 %v4382
        %4469 = vmatpush1.bf16.msra.mxu0 %v4381
        %4470 = vmatprep.subr.bf16.mxu0 %v4378
        %4471 = vmatpush1.bf16.msra.mxu0 %v4377
        %4472 = vmatprep.subr.bf16.mxu0 %v4374
        %4473 = vmatpush1.bf16.msra.mxu0 %v4373
        %4474 = vmatprep.subr.bf16.mxu0 %v4370
        %4475 = vmatpush1.bf16.msra.mxu0 %v4369
        %4476 = vmatprep.subr.bf16.mxu0 %v4366
        %4477 = vmatpush1.bf16.msra.mxu0 %v4365
        %4478 = vmatprep.subr.bf16.mxu0 %v4362
        %4479 = vmatpush1.bf16.msra.mxu0 %v4361
        %4480 = vmatprep.subr.bf16.mxu0 0
        %4481 = vmatpush2.bf16.msra.mxu0 0
        %4482 = vmatprep.subr.bf16.mxu0 0
        %4483 = vmatpush2.bf16.msra.mxu0 0
        %4484 = vmatprep.subr.bf16.mxu0 0
        %4485 = vmatpush2.bf16.msra.mxu0 0
        %4486 = vmatprep.subr.bf16.mxu0 0
        %4487 = vmatpush2.bf16.msra.mxu0 0
        %4488 = vmatprep.subr.bf16.mxu0 0
        %4489 = vmatpush2.bf16.msra.mxu0 0
        %4490 = vmatprep.subr.bf16.mxu0 0
        %4491 = vmatpush2.bf16.msra.mxu0 0
        %4492 = vmatprep.subr.bf16.mxu0 0
        %4493 = vmatpush2.bf16.msra.mxu0 0
        %4494 = vmatprep.subr.bf16.mxu0 0
        %4495 = vmatpush2.bf16.msra.mxu0 0
        %4496 = vmatprep.mubr.bf16.mxu0 0
        %4497 = vmatmul.mubr.bf16.gmra.mxu0 %v4261
        %v4498 = vpop.f32.mrf.mxu0
        %v4499 = vadd.f32 0.0, %v4498
        %v4500 = vpop.f32.mrf.mxu0
        %v4501 = vadd.f32 0.0, %v4500
        %v4502 = vpop.f32.mrf.mxu0
        %v4503 = vpop.f32.mrf.mxu0
        %4504 = vdwg.mxu0
        %v4505 = vadd.f32 %v4209, %v4458
        %v4506 = vadd.f32 %v4210, %v4460
        %v4507 = vadd.f32 %v4211, %v4499
        %v4508 = vadd.f32 %v4212, %v4501
        %v4510 = vunpack.c.l.s4 1966171168
        %v4511 = vunpack.c.0.s8 %v4510
        %v4512 = vlaneseq
        %v4513 = vshrl.u32 %v4512, 7
        %v4514 = vsub.s32 %v4511, %v4513
        %v4515 = vrot.slane %v3257, %v4514
        %v4516 = vcombine.high %v4515, %v4515
        %v4518 = vunpack.c.l.s4 1966171168
        %v4519 = vunpack.c.0.s8 %v4518
        %v4520 = vlaneseq
        %v4521 = vshrl.u32 %v4520, 7
        %v4522 = vsub.s32 %v4519, %v4521
        %v4523 = vrot.slane %v4515, %v4522
        %v4525 = vunpack.c.l.s4 1966171168
        %v4526 = vunpack.c.0.s8 %v4525
        %v4527 = vlaneseq
        %v4528 = vshrl.u32 %v4527, 7
        %v4529 = vsub.s32 %v4526, %v4528
        %v4530 = vrot.slane %v4516, %v4529
        %v4532 = vshrl.u32 %v4523, 16
        %v4534 = vrot.slane %v4532, 7
        %v4535 = vrot.slane %v4534, 1
        %v4537 = vshll.u32 %v4530, 16
        %v4539 = vsel %vm3350, %v4535, %v4537
        %s4540 = scalar_lea.vmem [#allocation7], 1024
        %v4541 = vld [vmem:[%s4540] sm:$0xff]
        %v4542 = vld [vmem:[%s4540 + $0x8] sm:$0xff]
        %v4543 = vld [vmem:[%s4540 + $0x10] sm:$0xff]
        %v4544 = vld [vmem:[%s4540 + $0x18] sm:$0xff]
        %v4545 = vld [vmem:[%s4540 + $0x20] sm:$0xff]
        %v4546 = vld [vmem:[%s4540 + $0x28] sm:$0xff]
        %v4547 = vld [vmem:[%s4540 + $0x30] sm:$0xff]
        %v4548 = vld [vmem:[%s4540 + $0x38] sm:$0xff]
        %v4549 = vld [vmem:[%s4540 + $0x40] sm:$0xff]
        %v4550 = vld [vmem:[%s4540 + $0x48] sm:$0xff]
        %v4551 = vld [vmem:[%s4540 + $0x50] sm:$0xff]
        %v4552 = vld [vmem:[%s4540 + $0x58] sm:$0xff]
        %v4553 = vld [vmem:[%s4540 + $0x60] sm:$0xff]
        %v4554 = vld [vmem:[%s4540 + $0x68] sm:$0xff]
        %v4555 = vld [vmem:[%s4540 + $0x70] sm:$0xff]
        %v4556 = vld [vmem:[%s4540 + $0x78] sm:$0xff]
        %v4557 = vld [vmem:[%s4540 + $0x80] sm:$0xff]
        %v4558 = vld [vmem:[%s4540 + $0x88] sm:$0xff]
        %v4559 = vld [vmem:[%s4540 + $0x90] sm:$0xff]
        %v4560 = vld [vmem:[%s4540 + $0x98] sm:$0xff]
        %v4561 = vld [vmem:[%s4540 + $0xa0] sm:$0xff]
        %v4562 = vld [vmem:[%s4540 + $0xa8] sm:$0xff]
        %v4563 = vld [vmem:[%s4540 + $0xb0] sm:$0xff]
        %v4564 = vld [vmem:[%s4540 + $0xb8] sm:$0xff]
        %v4565 = vld [vmem:[%s4540 + $0xc0] sm:$0xff]
        %v4566 = vld [vmem:[%s4540 + $0xc8] sm:$0xff]
        %v4567 = vld [vmem:[%s4540 + $0xd0] sm:$0xff]
        %v4568 = vld [vmem:[%s4540 + $0xd8] sm:$0xff]
        %v4569 = vld [vmem:[%s4540 + $0xe0] sm:$0xff]
        %v4570 = vld [vmem:[%s4540 + $0xe8] sm:$0xff]
        %v4571 = vld [vmem:[%s4540 + $0xf0] sm:$0xff]
        %v4572 = vld [vmem:[%s4540 + $0xf8] sm:$0xff]
        %v4573 = vcombine.low %v3368, %v4539
        %v4575 = vunpack.c.l.s4 1966171168
        %v4576 = vunpack.c.0.s8 %v4575
        %v4577 = vlaneseq
        %v4578 = vshrl.u32 %v4577, 7
        %v4579 = vsub.s32 %v4576, %v4578
        %v4580 = vrot.slane %v4573, %v4579
        %v4582 = vunpack.c.l.s4 1966171168
        %v4583 = vunpack.c.0.s8 %v4582
        %v4584 = vlaneseq
        %v4585 = vshrl.u32 %v4584, 7
        %v4586 = vsub.s32 %v4583, %v4585
        %v4587 = vrot.slane %v4580, %v4586
        %v4621 = vunpack.c.l.b16 %v4541
        %v4622 = vunpack.c.h.b16 %v4541
        %v4623 = vunpack.c.l.b16 %v4542
        %v4624 = vunpack.c.h.b16 %v4542
        %v4625 = vunpack.c.l.b16 %v4543
        %v4626 = vunpack.c.h.b16 %v4543
        %v4627 = vunpack.c.l.b16 %v4544
        %v4628 = vunpack.c.h.b16 %v4544
        %v4629 = vunpack.c.l.b16 %v4545
        %v4630 = vunpack.c.h.b16 %v4545
        %v4631 = vunpack.c.l.b16 %v4546
        %v4632 = vunpack.c.h.b16 %v4546
        %v4633 = vunpack.c.l.b16 %v4547
        %v4634 = vunpack.c.h.b16 %v4547
        %v4635 = vunpack.c.l.b16 %v4548
        %v4636 = vunpack.c.h.b16 %v4548
        %v4637 = vunpack.c.l.b16 %v4549
        %v4638 = vunpack.c.h.b16 %v4549
        %v4639 = vunpack.c.l.b16 %v4550
        %v4640 = vunpack.c.h.b16 %v4550
        %v4641 = vunpack.c.l.b16 %v4551
        %v4642 = vunpack.c.h.b16 %v4551
        %v4643 = vunpack.c.l.b16 %v4552
        %v4644 = vunpack.c.h.b16 %v4552
        %v4645 = vunpack.c.l.b16 %v4553
        %v4646 = vunpack.c.h.b16 %v4553
        %v4647 = vunpack.c.l.b16 %v4554
        %v4648 = vunpack.c.h.b16 %v4554
        %v4649 = vunpack.c.l.b16 %v4555
        %v4650 = vunpack.c.h.b16 %v4555
        %v4651 = vunpack.c.l.b16 %v4556
        %v4652 = vunpack.c.h.b16 %v4556
        %v4653 = vunpack.c.l.b16 %v4557
        %v4654 = vunpack.c.h.b16 %v4557
        %v4655 = vunpack.c.l.b16 %v4558
        %v4656 = vunpack.c.h.b16 %v4558
        %v4657 = vunpack.c.l.b16 %v4559
        %v4658 = vunpack.c.h.b16 %v4559
        %v4659 = vunpack.c.l.b16 %v4560
        %v4660 = vunpack.c.h.b16 %v4560
        %v4661 = vunpack.c.l.b16 %v4561
        %v4662 = vunpack.c.h.b16 %v4561
        %v4663 = vunpack.c.l.b16 %v4562
        %v4664 = vunpack.c.h.b16 %v4562
        %v4665 = vunpack.c.l.b16 %v4563
        %v4666 = vunpack.c.h.b16 %v4563
        %v4667 = vunpack.c.l.b16 %v4564
        %v4668 = vunpack.c.h.b16 %v4564
        %v4669 = vunpack.c.l.b16 %v4565
        %v4670 = vunpack.c.h.b16 %v4565
        %v4671 = vunpack.c.l.b16 %v4566
        %v4672 = vunpack.c.h.b16 %v4566
        %v4673 = vunpack.c.l.b16 %v4567
        %v4674 = vunpack.c.h.b16 %v4567
        %v4675 = vunpack.c.l.b16 %v4568
        %v4676 = vunpack.c.h.b16 %v4568
        %v4677 = vunpack.c.l.b16 %v4569
        %v4678 = vunpack.c.h.b16 %v4569
        %v4679 = vunpack.c.l.b16 %v4570
        %v4680 = vunpack.c.h.b16 %v4570
        %v4681 = vunpack.c.l.b16 %v4571
        %v4682 = vunpack.c.h.b16 %v4571
        %v4683 = vunpack.c.l.b16 %v4572
        %v4684 = vunpack.c.h.b16 %v4572
        %v4685 = vpack.c.b16 %v4625, %v4621
        %v4686 = vpack.c.b16 %v4626, %v4622
        %v4687 = vpack.c.b16 %v4627, %v4623
        %v4688 = vpack.c.b16 %v4628, %v4624
        %v4689 = vpack.c.b16 %v4633, %v4629
        %v4690 = vpack.c.b16 %v4634, %v4630
        %v4691 = vpack.c.b16 %v4635, %v4631
        %v4692 = vpack.c.b16 %v4636, %v4632
        %v4693 = vpack.c.b16 %v4641, %v4637
        %v4694 = vpack.c.b16 %v4642, %v4638
        %v4695 = vpack.c.b16 %v4643, %v4639
        %v4696 = vpack.c.b16 %v4644, %v4640
        %v4697 = vpack.c.b16 %v4649, %v4645
        %v4698 = vpack.c.b16 %v4650, %v4646
        %v4699 = vpack.c.b16 %v4651, %v4647
        %v4700 = vpack.c.b16 %v4652, %v4648
        %v4701 = vpack.c.b16 %v4657, %v4653
        %v4702 = vpack.c.b16 %v4658, %v4654
        %v4703 = vpack.c.b16 %v4659, %v4655
        %v4704 = vpack.c.b16 %v4660, %v4656
        %v4705 = vpack.c.b16 %v4665, %v4661
        %v4706 = vpack.c.b16 %v4666, %v4662
        %v4707 = vpack.c.b16 %v4667, %v4663
        %v4708 = vpack.c.b16 %v4668, %v4664
        %v4709 = vpack.c.b16 %v4673, %v4669
        %v4710 = vpack.c.b16 %v4674, %v4670
        %v4711 = vpack.c.b16 %v4675, %v4671
        %v4712 = vpack.c.b16 %v4676, %v4672
        %v4713 = vpack.c.b16 %v4681, %v4677
        %v4714 = vpack.c.b16 %v4682, %v4678
        %v4715 = vpack.c.b16 %v4683, %v4679
        %v4716 = vpack.c.b16 %v4684, %v4680
        %4749 = vmatprep.subr.bf16.mxu0 %v4714
        %4750 = vmatpush1.bf16.msra.mxu0 %v4713
        %4751 = vmatprep.subr.bf16.mxu0 %v4710
        %4752 = vmatpush1.bf16.msra.mxu0 %v4709
        %4753 = vmatprep.subr.bf16.mxu0 %v4706
        %4754 = vmatpush1.bf16.msra.mxu0 %v4705
        %4755 = vmatprep.subr.bf16.mxu0 %v4702
        %4756 = vmatpush1.bf16.msra.mxu0 %v4701
        %4757 = vmatprep.subr.bf16.mxu0 %v4698
        %4758 = vmatpush1.bf16.msra.mxu0 %v4697
        %4759 = vmatprep.subr.bf16.mxu0 %v4694
        %4760 = vmatpush1.bf16.msra.mxu0 %v4693
        %4761 = vmatprep.subr.bf16.mxu0 %v4690
        %4762 = vmatpush1.bf16.msra.mxu0 %v4689
        %4763 = vmatprep.subr.bf16.mxu0 %v4686
        %4764 = vmatpush1.bf16.msra.mxu0 %v4685
        %4765 = vmatprep.subr.bf16.mxu0 0
        %4766 = vmatpush2.bf16.msra.mxu0 0
        %4767 = vmatprep.subr.bf16.mxu0 0
        %4768 = vmatpush2.bf16.msra.mxu0 0
        %4769 = vmatprep.subr.bf16.mxu0 0
        %4770 = vmatpush2.bf16.msra.mxu0 0
        %4771 = vmatprep.subr.bf16.mxu0 0
        %4772 = vmatpush2.bf16.msra.mxu0 0
        %4773 = vmatprep.subr.bf16.mxu0 0
        %4774 = vmatpush2.bf16.msra.mxu0 0
        %4775 = vmatprep.subr.bf16.mxu0 0
        %4776 = vmatpush2.bf16.msra.mxu0 0
        %4777 = vmatprep.subr.bf16.mxu0 0
        %4778 = vmatpush2.bf16.msra.mxu0 0
        %4779 = vmatprep.subr.bf16.mxu0 0
        %4780 = vmatpush2.bf16.msra.mxu0 0
        %4781 = vmatprep.mubr.bf16.mxu0 0
        %4782 = vmatmul.mubr.bf16.gmra.mxu0 %v4587
        %v4783 = vpop.f32.mrf.mxu0
        %v4784 = vadd.f32 0.0, %v4783
        %v4785 = vpop.f32.mrf.mxu0
        %v4786 = vadd.f32 0.0, %v4785
        %v4787 = vpop.f32.mrf.mxu0
        %v4788 = vpop.f32.mrf.mxu0
        %4789 = vdwg.mxu0
        %4790 = vmatprep.subr.bf16.mxu0 %v4716
        %4791 = vmatpush1.bf16.msra.mxu0 %v4715
        %4792 = vmatprep.subr.bf16.mxu0 %v4712
        %4793 = vmatpush1.bf16.msra.mxu0 %v4711
        %4794 = vmatprep.subr.bf16.mxu0 %v4708
        %4795 = vmatpush1.bf16.msra.mxu0 %v4707
        %4796 = vmatprep.subr.bf16.mxu0 %v4704
        %4797 = vmatpush1.bf16.msra.mxu0 %v4703
        %4798 = vmatprep.subr.bf16.mxu0 %v4700
        %4799 = vmatpush1.bf16.msra.mxu0 %v4699
        %4800 = vmatprep.subr.bf16.mxu0 %v4696
        %4801 = vmatpush1.bf16.msra.mxu0 %v4695
        %4802 = vmatprep.subr.bf16.mxu0 %v4692
        %4803 = vmatpush1.bf16.msra.mxu0 %v4691
        %4804 = vmatprep.subr.bf16.mxu0 %v4688
        %4805 = vmatpush1.bf16.msra.mxu0 %v4687
        %4806 = vmatprep.subr.bf16.mxu0 0
        %4807 = vmatpush2.bf16.msra.mxu0 0
        %4808 = vmatprep.subr.bf16.mxu0 0
        %4809 = vmatpush2.bf16.msra.mxu0 0
        %4810 = vmatprep.subr.bf16.mxu0 0
        %4811 = vmatpush2.bf16.msra.mxu0 0
        %4812 = vmatprep.subr.bf16.mxu0 0
        %4813 = vmatpush2.bf16.msra.mxu0 0
        %4814 = vmatprep.subr.bf16.mxu0 0
        %4815 = vmatpush2.bf16.msra.mxu0 0
        %4816 = vmatprep.subr.bf16.mxu0 0
        %4817 = vmatpush2.bf16.msra.mxu0 0
        %4818 = vmatprep.subr.bf16.mxu0 0
        %4819 = vmatpush2.bf16.msra.mxu0 0
        %4820 = vmatprep.subr.bf16.mxu0 0
        %4821 = vmatpush2.bf16.msra.mxu0 0
        %4822 = vmatprep.mubr.bf16.mxu0 0
        %4823 = vmatmul.mubr.bf16.gmra.mxu0 %v4587
        %v4824 = vpop.f32.mrf.mxu0
        %v4825 = vadd.f32 0.0, %v4824
        %v4826 = vpop.f32.mrf.mxu0
        %v4827 = vadd.f32 0.0, %v4826
        %v4828 = vpop.f32.mrf.mxu0
        %v4829 = vpop.f32.mrf.mxu0
        %4830 = vdwg.mxu0
        %v4831 = vadd.f32 %v4505, %v4784
        %v4832 = vadd.f32 %v4506, %v4786
        %v4833 = vadd.f32 %v4507, %v4825
        %v4834 = vadd.f32 %v4508, %v4827
        %s4835 = scalar_lea.vmem [#allocation7], 1280
        %v4836 = vld [vmem:[%s4835] sm:$0xff]
        %v4837 = vld [vmem:[%s4835 + $0x8] sm:$0xff]
        %v4838 = vld [vmem:[%s4835 + $0x10] sm:$0xff]
        %v4839 = vld [vmem:[%s4835 + $0x18] sm:$0xff]
        %v4840 = vld [vmem:[%s4835 + $0x20] sm:$0xff]
        %v4841 = vld [vmem:[%s4835 + $0x28] sm:$0xff]
        %v4842 = vld [vmem:[%s4835 + $0x30] sm:$0xff]
        %v4843 = vld [vmem:[%s4835 + $0x38] sm:$0xff]
        %v4844 = vld [vmem:[%s4835 + $0x40] sm:$0xff]
        %v4845 = vld [vmem:[%s4835 + $0x48] sm:$0xff]
        %v4846 = vld [vmem:[%s4835 + $0x50] sm:$0xff]
        %v4847 = vld [vmem:[%s4835 + $0x58] sm:$0xff]
        %v4848 = vld [vmem:[%s4835 + $0x60] sm:$0xff]
        %v4849 = vld [vmem:[%s4835 + $0x68] sm:$0xff]
        %v4850 = vld [vmem:[%s4835 + $0x70] sm:$0xff]
        %v4851 = vld [vmem:[%s4835 + $0x78] sm:$0xff]
        %v4852 = vld [vmem:[%s4835 + $0x80] sm:$0xff]
        %v4853 = vld [vmem:[%s4835 + $0x88] sm:$0xff]
        %v4854 = vld [vmem:[%s4835 + $0x90] sm:$0xff]
        %v4855 = vld [vmem:[%s4835 + $0x98] sm:$0xff]
        %v4856 = vld [vmem:[%s4835 + $0xa0] sm:$0xff]
        %v4857 = vld [vmem:[%s4835 + $0xa8] sm:$0xff]
        %v4858 = vld [vmem:[%s4835 + $0xb0] sm:$0xff]
        %v4859 = vld [vmem:[%s4835 + $0xb8] sm:$0xff]
        %v4860 = vld [vmem:[%s4835 + $0xc0] sm:$0xff]
        %v4861 = vld [vmem:[%s4835 + $0xc8] sm:$0xff]
        %v4862 = vld [vmem:[%s4835 + $0xd0] sm:$0xff]
        %v4863 = vld [vmem:[%s4835 + $0xd8] sm:$0xff]
        %v4864 = vld [vmem:[%s4835 + $0xe0] sm:$0xff]
        %v4865 = vld [vmem:[%s4835 + $0xe8] sm:$0xff]
        %v4866 = vld [vmem:[%s4835 + $0xf0] sm:$0xff]
        %v4867 = vld [vmem:[%s4835 + $0xf8] sm:$0xff]
        %v4868 = vcombine.low %v3335, %v4530
        %v4870 = vunpack.c.l.s4 1966171168
        %v4871 = vunpack.c.0.s8 %v4870
        %v4872 = vlaneseq
        %v4873 = vshrl.u32 %v4872, 7
        %v4874 = vsub.s32 %v4871, %v4873
        %v4875 = vrot.slane %v4868, %v4874
        %v4877 = vunpack.c.l.s4 1966171168
        %v4878 = vunpack.c.0.s8 %v4877
        %v4879 = vlaneseq
        %v4880 = vshrl.u32 %v4879, 7
        %v4881 = vsub.s32 %v4878, %v4880
        %v4882 = vrot.slane %v4875, %v4881
        %v4916 = vunpack.c.l.b16 %v4836
        %v4917 = vunpack.c.h.b16 %v4836
        %v4918 = vunpack.c.l.b16 %v4837
        %v4919 = vunpack.c.h.b16 %v4837
        %v4920 = vunpack.c.l.b16 %v4838
        %v4921 = vunpack.c.h.b16 %v4838
        %v4922 = vunpack.c.l.b16 %v4839
        %v4923 = vunpack.c.h.b16 %v4839
        %v4924 = vunpack.c.l.b16 %v4840
        %v4925 = vunpack.c.h.b16 %v4840
        %v4926 = vunpack.c.l.b16 %v4841
        %v4927 = vunpack.c.h.b16 %v4841
        %v4928 = vunpack.c.l.b16 %v4842
        %v4929 = vunpack.c.h.b16 %v4842
        %v4930 = vunpack.c.l.b16 %v4843
        %v4931 = vunpack.c.h.b16 %v4843
        %v4932 = vunpack.c.l.b16 %v4844
        %v4933 = vunpack.c.h.b16 %v4844
        %v4934 = vunpack.c.l.b16 %v4845
        %v4935 = vunpack.c.h.b16 %v4845
        %v4936 = vunpack.c.l.b16 %v4846
        %v4937 = vunpack.c.h.b16 %v4846
        %v4938 = vunpack.c.l.b16 %v4847
        %v4939 = vunpack.c.h.b16 %v4847
        %v4940 = vunpack.c.l.b16 %v4848
        %v4941 = vunpack.c.h.b16 %v4848
        %v4942 = vunpack.c.l.b16 %v4849
        %v4943 = vunpack.c.h.b16 %v4849
        %v4944 = vunpack.c.l.b16 %v4850
        %v4945 = vunpack.c.h.b16 %v4850
        %v4946 = vunpack.c.l.b16 %v4851
        %v4947 = vunpack.c.h.b16 %v4851
        %v4948 = vunpack.c.l.b16 %v4852
        %v4949 = vunpack.c.h.b16 %v4852
        %v4950 = vunpack.c.l.b16 %v4853
        %v4951 = vunpack.c.h.b16 %v4853
        %v4952 = vunpack.c.l.b16 %v4854
        %v4953 = vunpack.c.h.b16 %v4854
        %v4954 = vunpack.c.l.b16 %v4855
        %v4955 = vunpack.c.h.b16 %v4855
        %v4956 = vunpack.c.l.b16 %v4856
        %v4957 = vunpack.c.h.b16 %v4856
        %v4958 = vunpack.c.l.b16 %v4857
        %v4959 = vunpack.c.h.b16 %v4857
        %v4960 = vunpack.c.l.b16 %v4858
        %v4961 = vunpack.c.h.b16 %v4858
        %v4962 = vunpack.c.l.b16 %v4859
        %v4963 = vunpack.c.h.b16 %v4859
        %v4964 = vunpack.c.l.b16 %v4860
        %v4965 = vunpack.c.h.b16 %v4860
        %v4966 = vunpack.c.l.b16 %v4861
        %v4967 = vunpack.c.h.b16 %v4861
        %v4968 = vunpack.c.l.b16 %v4862
        %v4969 = vunpack.c.h.b16 %v4862
        %v4970 = vunpack.c.l.b16 %v4863
        %v4971 = vunpack.c.h.b16 %v4863
        %v4972 = vunpack.c.l.b16 %v4864
        %v4973 = vunpack.c.h.b16 %v4864
        %v4974 = vunpack.c.l.b16 %v4865
        %v4975 = vunpack.c.h.b16 %v4865
        %v4976 = vunpack.c.l.b16 %v4866
        %v4977 = vunpack.c.h.b16 %v4866
        %v4978 = vunpack.c.l.b16 %v4867
        %v4979 = vunpack.c.h.b16 %v4867
        %v4980 = vpack.c.b16 %v4920, %v4916
        %v4981 = vpack.c.b16 %v4921, %v4917
        %v4982 = vpack.c.b16 %v4922, %v4918
        %v4983 = vpack.c.b16 %v4923, %v4919
        %v4984 = vpack.c.b16 %v4928, %v4924
        %v4985 = vpack.c.b16 %v4929, %v4925
        %v4986 = vpack.c.b16 %v4930, %v4926
        %v4987 = vpack.c.b16 %v4931, %v4927
        %v4988 = vpack.c.b16 %v4936, %v4932
        %v4989 = vpack.c.b16 %v4937, %v4933
        %v4990 = vpack.c.b16 %v4938, %v4934
        %v4991 = vpack.c.b16 %v4939, %v4935
        %v4992 = vpack.c.b16 %v4944, %v4940
        %v4993 = vpack.c.b16 %v4945, %v4941
        %v4994 = vpack.c.b16 %v4946, %v4942
        %v4995 = vpack.c.b16 %v4947, %v4943
        %v4996 = vpack.c.b16 %v4952, %v4948
        %v4997 = vpack.c.b16 %v4953, %v4949
        %v4998 = vpack.c.b16 %v4954, %v4950
        %v4999 = vpack.c.b16 %v4955, %v4951
        %v5000 = vpack.c.b16 %v4960, %v4956
        %v5001 = vpack.c.b16 %v4961, %v4957
        %v5002 = vpack.c.b16 %v4962, %v4958
        %v5003 = vpack.c.b16 %v4963, %v4959
        %v5004 = vpack.c.b16 %v4968, %v4964
        %v5005 = vpack.c.b16 %v4969, %v4965
        %v5006 = vpack.c.b16 %v4970, %v4966
        %v5007 = vpack.c.b16 %v4971, %v4967
        %v5008 = vpack.c.b16 %v4976, %v4972
        %v5009 = vpack.c.b16 %v4977, %v4973
        %v5010 = vpack.c.b16 %v4978, %v4974
        %v5011 = vpack.c.b16 %v4979, %v4975
        %5044 = vmatprep.subr.bf16.mxu0 %v5009
        %5045 = vmatpush1.bf16.msra.mxu0 %v5008
        %5046 = vmatprep.subr.bf16.mxu0 %v5005
        %5047 = vmatpush1.bf16.msra.mxu0 %v5004
        %5048 = vmatprep.subr.bf16.mxu0 %v5001
        %5049 = vmatpush1.bf16.msra.mxu0 %v5000
        %5050 = vmatprep.subr.bf16.mxu0 %v4997
        %5051 = vmatpush1.bf16.msra.mxu0 %v4996
        %5052 = vmatprep.subr.bf16.mxu0 %v4993
        %5053 = vmatpush1.bf16.msra.mxu0 %v4992
        %5054 = vmatprep.subr.bf16.mxu0 %v4989
        %5055 = vmatpush1.bf16.msra.mxu0 %v4988
        %5056 = vmatprep.subr.bf16.mxu0 %v4985
        %5057 = vmatpush1.bf16.msra.mxu0 %v4984
        %5058 = vmatprep.subr.bf16.mxu0 %v4981
        %5059 = vmatpush1.bf16.msra.mxu0 %v4980
        %5060 = vmatprep.subr.bf16.mxu0 0
        %5061 = vmatpush2.bf16.msra.mxu0 0
        %5062 = vmatprep.subr.bf16.mxu0 0
        %5063 = vmatpush2.bf16.msra.mxu0 0
        %5064 = vmatprep.subr.bf16.mxu0 0
        %5065 = vmatpush2.bf16.msra.mxu0 0
        %5066 = vmatprep.subr.bf16.mxu0 0
        %5067 = vmatpush2.bf16.msra.mxu0 0
        %5068 = vmatprep.subr.bf16.mxu0 0
        %5069 = vmatpush2.bf16.msra.mxu0 0
        %5070 = vmatprep.subr.bf16.mxu0 0
        %5071 = vmatpush2.bf16.msra.mxu0 0
        %5072 = vmatprep.subr.bf16.mxu0 0
        %5073 = vmatpush2.bf16.msra.mxu0 0
        %5074 = vmatprep.subr.bf16.mxu0 0
        %5075 = vmatpush2.bf16.msra.mxu0 0
        %5076 = vmatprep.mubr.bf16.mxu0 0
        %5077 = vmatmul.mubr.bf16.gmra.mxu0 %v4882
        %v5078 = vpop.f32.mrf.mxu0
        %v5079 = vadd.f32 0.0, %v5078
        %v5080 = vpop.f32.mrf.mxu0
        %v5081 = vadd.f32 0.0, %v5080
        %v5082 = vpop.f32.mrf.mxu0
        %v5083 = vpop.f32.mrf.mxu0
        %5084 = vdwg.mxu0
        %5085 = vmatprep.subr.bf16.mxu0 %v5011
        %5086 = vmatpush1.bf16.msra.mxu0 %v5010
        %5087 = vmatprep.subr.bf16.mxu0 %v5007
        %5088 = vmatpush1.bf16.msra.mxu0 %v5006
        %5089 = vmatprep.subr.bf16.mxu0 %v5003
        %5090 = vmatpush1.bf16.msra.mxu0 %v5002
        %5091 = vmatprep.subr.bf16.mxu0 %v4999
        %5092 = vmatpush1.bf16.msra.mxu0 %v4998
        %5093 = vmatprep.subr.bf16.mxu0 %v4995
        %5094 = vmatpush1.bf16.msra.mxu0 %v4994
        %5095 = vmatprep.subr.bf16.mxu0 %v4991
        %5096 = vmatpush1.bf16.msra.mxu0 %v4990
        %5097 = vmatprep.subr.bf16.mxu0 %v4987
        %5098 = vmatpush1.bf16.msra.mxu0 %v4986
        %5099 = vmatprep.subr.bf16.mxu0 %v4983
        %5100 = vmatpush1.bf16.msra.mxu0 %v4982
        %5101 = vmatprep.subr.bf16.mxu0 0
        %5102 = vmatpush2.bf16.msra.mxu0 0
        %5103 = vmatprep.subr.bf16.mxu0 0
        %5104 = vmatpush2.bf16.msra.mxu0 0
        %5105 = vmatprep.subr.bf16.mxu0 0
        %5106 = vmatpush2.bf16.msra.mxu0 0
        %5107 = vmatprep.subr.bf16.mxu0 0
        %5108 = vmatpush2.bf16.msra.mxu0 0
        %5109 = vmatprep.subr.bf16.mxu0 0
        %5110 = vmatpush2.bf16.msra.mxu0 0
        %5111 = vmatprep.subr.bf16.mxu0 0
        %5112 = vmatpush2.bf16.msra.mxu0 0
        %5113 = vmatprep.subr.bf16.mxu0 0
        %5114 = vmatpush2.bf16.msra.mxu0 0
        %5115 = vmatprep.subr.bf16.mxu0 0
        %5116 = vmatpush2.bf16.msra.mxu0 0
        %5117 = vmatprep.mubr.bf16.mxu0 0
        %5118 = vmatmul.mubr.bf16.gmra.mxu0 %v4882
        %v5119 = vpop.f32.mrf.mxu0
        %v5120 = vadd.f32 0.0, %v5119
        %v5121 = vpop.f32.mrf.mxu0
        %v5122 = vadd.f32 0.0, %v5121
        %v5123 = vpop.f32.mrf.mxu0
        %v5124 = vpop.f32.mrf.mxu0
        %5125 = vdwg.mxu0
        %v5126 = vadd.f32 %v4831, %v5079
        %v5127 = vadd.f32 %v4832, %v5081
        %v5128 = vadd.f32 %v4833, %v5120
        %v5129 = vadd.f32 %v4834, %v5122
        %s5130 = scalar_lea.vmem [#allocation7], 1536
        %v5131 = vld [vmem:[%s5130] sm:$0xff]
        %v5132 = vld [vmem:[%s5130 + $0x8] sm:$0xff]
        %v5133 = vld [vmem:[%s5130 + $0x10] sm:$0xff]
        %v5134 = vld [vmem:[%s5130 + $0x18] sm:$0xff]
        %v5135 = vld [vmem:[%s5130 + $0x20] sm:$0xff]
        %v5136 = vld [vmem:[%s5130 + $0x28] sm:$0xff]
        %v5137 = vld [vmem:[%s5130 + $0x30] sm:$0xff]
        %v5138 = vld [vmem:[%s5130 + $0x38] sm:$0xff]
        %v5139 = vld [vmem:[%s5130 + $0x40] sm:$0xff]
        %v5140 = vld [vmem:[%s5130 + $0x48] sm:$0xff]
        %v5141 = vld [vmem:[%s5130 + $0x50] sm:$0xff]
        %v5142 = vld [vmem:[%s5130 + $0x58] sm:$0xff]
        %v5143 = vld [vmem:[%s5130 + $0x60] sm:$0xff]
        %v5144 = vld [vmem:[%s5130 + $0x68] sm:$0xff]
        %v5145 = vld [vmem:[%s5130 + $0x70] sm:$0xff]
        %v5146 = vld [vmem:[%s5130 + $0x78] sm:$0xff]
        %v5147 = vld [vmem:[%s5130 + $0x80] sm:$0xff]
        %v5148 = vld [vmem:[%s5130 + $0x88] sm:$0xff]
        %v5149 = vld [vmem:[%s5130 + $0x90] sm:$0xff]
        %v5150 = vld [vmem:[%s5130 + $0x98] sm:$0xff]
        %v5151 = vld [vmem:[%s5130 + $0xa0] sm:$0xff]
        %v5152 = vld [vmem:[%s5130 + $0xa8] sm:$0xff]
        %v5153 = vld [vmem:[%s5130 + $0xb0] sm:$0xff]
        %v5154 = vld [vmem:[%s5130 + $0xb8] sm:$0xff]
        %v5155 = vld [vmem:[%s5130 + $0xc0] sm:$0xff]
        %v5156 = vld [vmem:[%s5130 + $0xc8] sm:$0xff]
        %v5157 = vld [vmem:[%s5130 + $0xd0] sm:$0xff]
        %v5158 = vld [vmem:[%s5130 + $0xd8] sm:$0xff]
        %v5159 = vld [vmem:[%s5130 + $0xe0] sm:$0xff]
        %v5160 = vld [vmem:[%s5130 + $0xe8] sm:$0xff]
        %v5161 = vld [vmem:[%s5130 + $0xf0] sm:$0xff]
        %v5162 = vld [vmem:[%s5130 + $0xf8] sm:$0xff]
        %v5163 = vcombine.low %v3257, %v3255
        %v5165 = vunpack.c.l.s4 1966171168
        %v5166 = vunpack.c.0.s8 %v5165
        %v5167 = vlaneseq
        %v5168 = vshrl.u32 %v5167, 7
        %v5169 = vsub.s32 %v5166, %v5168
        %v5170 = vrot.slane %v5163, %v5169
        %v5172 = vunpack.c.l.s4 1966171168
        %v5173 = vunpack.c.0.s8 %v5172
        %v5174 = vlaneseq
        %v5175 = vshrl.u32 %v5174, 7
        %v5176 = vsub.s32 %v5173, %v5175
        %v5177 = vrot.slane %v5170, %v5176
        %v5211 = vunpack.c.l.b16 %v5131
        %v5212 = vunpack.c.h.b16 %v5131
        %v5213 = vunpack.c.l.b16 %v5132
        %v5214 = vunpack.c.h.b16 %v5132
        %v5215 = vunpack.c.l.b16 %v5133
        %v5216 = vunpack.c.h.b16 %v5133
        %v5217 = vunpack.c.l.b16 %v5134
        %v5218 = vunpack.c.h.b16 %v5134
        %v5219 = vunpack.c.l.b16 %v5135
        %v5220 = vunpack.c.h.b16 %v5135
        %v5221 = vunpack.c.l.b16 %v5136
        %v5222 = vunpack.c.h.b16 %v5136
        %v5223 = vunpack.c.l.b16 %v5137
        %v5224 = vunpack.c.h.b16 %v5137
        %v5225 = vunpack.c.l.b16 %v5138
        %v5226 = vunpack.c.h.b16 %v5138
        %v5227 = vunpack.c.l.b16 %v5139
        %v5228 = vunpack.c.h.b16 %v5139
        %v5229 = vunpack.c.l.b16 %v5140
        %v5230 = vunpack.c.h.b16 %v5140
        %v5231 = vunpack.c.l.b16 %v5141
        %v5232 = vunpack.c.h.b16 %v5141
        %v5233 = vunpack.c.l.b16 %v5142
        %v5234 = vunpack.c.h.b16 %v5142
        %v5235 = vunpack.c.l.b16 %v5143
        %v5236 = vunpack.c.h.b16 %v5143
        %v5237 = vunpack.c.l.b16 %v5144
        %v5238 = vunpack.c.h.b16 %v5144
        %v5239 = vunpack.c.l.b16 %v5145
        %v5240 = vunpack.c.h.b16 %v5145
        %v5241 = vunpack.c.l.b16 %v5146
        %v5242 = vunpack.c.h.b16 %v5146
        %v5243 = vunpack.c.l.b16 %v5147
        %v5244 = vunpack.c.h.b16 %v5147
        %v5245 = vunpack.c.l.b16 %v5148
        %v5246 = vunpack.c.h.b16 %v5148
        %v5247 = vunpack.c.l.b16 %v5149
        %v5248 = vunpack.c.h.b16 %v5149
        %v5249 = vunpack.c.l.b16 %v5150
        %v5250 = vunpack.c.h.b16 %v5150
        %v5251 = vunpack.c.l.b16 %v5151
        %v5252 = vunpack.c.h.b16 %v5151
        %v5253 = vunpack.c.l.b16 %v5152
        %v5254 = vunpack.c.h.b16 %v5152
        %v5255 = vunpack.c.l.b16 %v5153
        %v5256 = vunpack.c.h.b16 %v5153
        %v5257 = vunpack.c.l.b16 %v5154
        %v5258 = vunpack.c.h.b16 %v5154
        %v5259 = vunpack.c.l.b16 %v5155
        %v5260 = vunpack.c.h.b16 %v5155
        %v5261 = vunpack.c.l.b16 %v5156
        %v5262 = vunpack.c.h.b16 %v5156
        %v5263 = vunpack.c.l.b16 %v5157
        %v5264 = vunpack.c.h.b16 %v5157
        %v5265 = vunpack.c.l.b16 %v5158
        %v5266 = vunpack.c.h.b16 %v5158
        %v5267 = vunpack.c.l.b16 %v5159
        %v5268 = vunpack.c.h.b16 %v5159
        %v5269 = vunpack.c.l.b16 %v5160
        %v5270 = vunpack.c.h.b16 %v5160
        %v5271 = vunpack.c.l.b16 %v5161
        %v5272 = vunpack.c.h.b16 %v5161
        %v5273 = vunpack.c.l.b16 %v5162
        %v5274 = vunpack.c.h.b16 %v5162
        %v5275 = vpack.c.b16 %v5215, %v5211
        %v5276 = vpack.c.b16 %v5216, %v5212
        %v5277 = vpack.c.b16 %v5217, %v5213
        %v5278 = vpack.c.b16 %v5218, %v5214
        %v5279 = vpack.c.b16 %v5223, %v5219
        %v5280 = vpack.c.b16 %v5224, %v5220
        %v5281 = vpack.c.b16 %v5225, %v5221
        %v5282 = vpack.c.b16 %v5226, %v5222
        %v5283 = vpack.c.b16 %v5231, %v5227
        %v5284 = vpack.c.b16 %v5232, %v5228
        %v5285 = vpack.c.b16 %v5233, %v5229
        %v5286 = vpack.c.b16 %v5234, %v5230
        %v5287 = vpack.c.b16 %v5239, %v5235
        %v5288 = vpack.c.b16 %v5240, %v5236
        %v5289 = vpack.c.b16 %v5241, %v5237
        %v5290 = vpack.c.b16 %v5242, %v5238
        %v5291 = vpack.c.b16 %v5247, %v5243
        %v5292 = vpack.c.b16 %v5248, %v5244
        %v5293 = vpack.c.b16 %v5249, %v5245
        %v5294 = vpack.c.b16 %v5250, %v5246
        %v5295 = vpack.c.b16 %v5255, %v5251
        %v5296 = vpack.c.b16 %v5256, %v5252
        %v5297 = vpack.c.b16 %v5257, %v5253
        %v5298 = vpack.c.b16 %v5258, %v5254
        %v5299 = vpack.c.b16 %v5263, %v5259
        %v5300 = vpack.c.b16 %v5264, %v5260
        %v5301 = vpack.c.b16 %v5265, %v5261
        %v5302 = vpack.c.b16 %v5266, %v5262
        %v5303 = vpack.c.b16 %v5271, %v5267
        %v5304 = vpack.c.b16 %v5272, %v5268
        %v5305 = vpack.c.b16 %v5273, %v5269
        %v5306 = vpack.c.b16 %v5274, %v5270
        %5339 = vmatprep.subr.bf16.mxu0 %v5304
        %5340 = vmatpush1.bf16.msra.mxu0 %v5303
        %5341 = vmatprep.subr.bf16.mxu0 %v5300
        %5342 = vmatpush1.bf16.msra.mxu0 %v5299
        %5343 = vmatprep.subr.bf16.mxu0 %v5296
        %5344 = vmatpush1.bf16.msra.mxu0 %v5295
        %5345 = vmatprep.subr.bf16.mxu0 %v5292
        %5346 = vmatpush1.bf16.msra.mxu0 %v5291
        %5347 = vmatprep.subr.bf16.mxu0 %v5288
        %5348 = vmatpush1.bf16.msra.mxu0 %v5287
        %5349 = vmatprep.subr.bf16.mxu0 %v5284
        %5350 = vmatpush1.bf16.msra.mxu0 %v5283
        %5351 = vmatprep.subr.bf16.mxu0 %v5280
        %5352 = vmatpush1.bf16.msra.mxu0 %v5279
        %5353 = vmatprep.subr.bf16.mxu0 %v5276
        %5354 = vmatpush1.bf16.msra.mxu0 %v5275
        %5355 = vmatprep.subr.bf16.mxu0 0
        %5356 = vmatpush2.bf16.msra.mxu0 0
        %5357 = vmatprep.subr.bf16.mxu0 0
        %5358 = vmatpush2.bf16.msra.mxu0 0
        %5359 = vmatprep.subr.bf16.mxu0 0
        %5360 = vmatpush2.bf16.msra.mxu0 0
        %5361 = vmatprep.subr.bf16.mxu0 0
        %5362 = vmatpush2.bf16.msra.mxu0 0
        %5363 = vmatprep.subr.bf16.mxu0 0
        %5364 = vmatpush2.bf16.msra.mxu0 0
        %5365 = vmatprep.subr.bf16.mxu0 0
        %5366 = vmatpush2.bf16.msra.mxu0 0
        %5367 = vmatprep.subr.bf16.mxu0 0
        %5368 = vmatpush2.bf16.msra.mxu0 0
        %5369 = vmatprep.subr.bf16.mxu0 0
        %5370 = vmatpush2.bf16.msra.mxu0 0
        %5371 = vmatprep.mubr.bf16.mxu0 0
        %5372 = vmatmul.mubr.bf16.gmra.mxu0 %v5177
        %v5373 = vpop.f32.mrf.mxu0
        %v5374 = vadd.f32 0.0, %v5373
        %v5375 = vpop.f32.mrf.mxu0
        %v5376 = vadd.f32 0.0, %v5375
        %v5377 = vpop.f32.mrf.mxu0
        %v5378 = vpop.f32.mrf.mxu0
        %5379 = vdwg.mxu0
        %5380 = vmatprep.subr.bf16.mxu0 %v5306
        %5381 = vmatpush1.bf16.msra.mxu0 %v5305
        %5382 = vmatprep.subr.bf16.mxu0 %v5302
        %5383 = vmatpush1.bf16.msra.mxu0 %v5301
        %5384 = vmatprep.subr.bf16.mxu0 %v5298
        %5385 = vmatpush1.bf16.msra.mxu0 %v5297
        %5386 = vmatprep.subr.bf16.mxu0 %v5294
        %5387 = vmatpush1.bf16.msra.mxu0 %v5293
        %5388 = vmatprep.subr.bf16.mxu0 %v5290
        %5389 = vmatpush1.bf16.msra.mxu0 %v5289
        %5390 = vmatprep.subr.bf16.mxu0 %v5286
        %5391 = vmatpush1.bf16.msra.mxu0 %v5285
        %5392 = vmatprep.subr.bf16.mxu0 %v5282
        %5393 = vmatpush1.bf16.msra.mxu0 %v5281
        %5394 = vmatprep.subr.bf16.mxu0 %v5278
        %5395 = vmatpush1.bf16.msra.mxu0 %v5277
        %5396 = vmatprep.subr.bf16.mxu0 0
        %5397 = vmatpush2.bf16.msra.mxu0 0
        %5398 = vmatprep.subr.bf16.mxu0 0
        %5399 = vmatpush2.bf16.msra.mxu0 0
        %5400 = vmatprep.subr.bf16.mxu0 0
        %5401 = vmatpush2.bf16.msra.mxu0 0
        %5402 = vmatprep.subr.bf16.mxu0 0
        %5403 = vmatpush2.bf16.msra.mxu0 0
        %5404 = vmatprep.subr.bf16.mxu0 0
        %5405 = vmatpush2.bf16.msra.mxu0 0
        %5406 = vmatprep.subr.bf16.mxu0 0
        %5407 = vmatpush2.bf16.msra.mxu0 0
        %5408 = vmatprep.subr.bf16.mxu0 0
        %5409 = vmatpush2.bf16.msra.mxu0 0
        %5410 = vmatprep.subr.bf16.mxu0 0
        %5411 = vmatpush2.bf16.msra.mxu0 0
        %5412 = vmatprep.mubr.bf16.mxu0 0
        %5413 = vmatmul.mubr.bf16.gmra.mxu0 %v5177
        %v5414 = vpop.f32.mrf.mxu0
        %v5415 = vadd.f32 0.0, %v5414
        %v5416 = vpop.f32.mrf.mxu0
        %v5417 = vadd.f32 0.0, %v5416
        %v5418 = vpop.f32.mrf.mxu0
        %v5419 = vpop.f32.mrf.mxu0
        %5420 = vdwg.mxu0
        %v5421 = vadd.f32 %v5126, %v5374
        %v5422 = vadd.f32 %v5127, %v5376
        %v5423 = vadd.f32 %v5128, %v5415
        %v5424 = vadd.f32 %v5129, %v5417
        %s5425 = scalar_lea.vmem [#allocation7], 1792
        %v5426 = vld [vmem:[%s5425] sm:$0xff]
        %v5427 = vld [vmem:[%s5425 + $0x8] sm:$0xff]
        %v5428 = vld [vmem:[%s5425 + $0x10] sm:$0xff]
        %v5429 = vld [vmem:[%s5425 + $0x18] sm:$0xff]
        %v5430 = vld [vmem:[%s5425 + $0x20] sm:$0xff]
        %v5431 = vld [vmem:[%s5425 + $0x28] sm:$0xff]
        %v5432 = vld [vmem:[%s5425 + $0x30] sm:$0xff]
        %v5433 = vld [vmem:[%s5425 + $0x38] sm:$0xff]
        %v5434 = vld [vmem:[%s5425 + $0x40] sm:$0xff]
        %v5435 = vld [vmem:[%s5425 + $0x48] sm:$0xff]
        %v5436 = vld [vmem:[%s5425 + $0x50] sm:$0xff]
        %v5437 = vld [vmem:[%s5425 + $0x58] sm:$0xff]
        %v5438 = vld [vmem:[%s5425 + $0x60] sm:$0xff]
        %v5439 = vld [vmem:[%s5425 + $0x68] sm:$0xff]
        %v5440 = vld [vmem:[%s5425 + $0x70] sm:$0xff]
        %v5441 = vld [vmem:[%s5425 + $0x78] sm:$0xff]
        %v5442 = vld [vmem:[%s5425 + $0x80] sm:$0xff]
        %v5443 = vld [vmem:[%s5425 + $0x88] sm:$0xff]
        %v5444 = vld [vmem:[%s5425 + $0x90] sm:$0xff]
        %v5445 = vld [vmem:[%s5425 + $0x98] sm:$0xff]
        %v5446 = vld [vmem:[%s5425 + $0xa0] sm:$0xff]
        %v5447 = vld [vmem:[%s5425 + $0xa8] sm:$0xff]
        %v5448 = vld [vmem:[%s5425 + $0xb0] sm:$0xff]
        %v5449 = vld [vmem:[%s5425 + $0xb8] sm:$0xff]
        %v5450 = vld [vmem:[%s5425 + $0xc0] sm:$0xff]
        %v5451 = vld [vmem:[%s5425 + $0xc8] sm:$0xff]
        %v5452 = vld [vmem:[%s5425 + $0xd0] sm:$0xff]
        %v5453 = vld [vmem:[%s5425 + $0xd8] sm:$0xff]
        %v5454 = vld [vmem:[%s5425 + $0xe0] sm:$0xff]
        %v5455 = vld [vmem:[%s5425 + $0xe8] sm:$0xff]
        %v5456 = vld [vmem:[%s5425 + $0xf0] sm:$0xff]
        %v5457 = vld [vmem:[%s5425 + $0xf8] sm:$0xff]
        %v5458 = vcombine.low %v4539, %v3359
        %v5460 = vunpack.c.l.s4 1966171168
        %v5461 = vunpack.c.0.s8 %v5460
        %v5462 = vlaneseq
        %v5463 = vshrl.u32 %v5462, 7
        %v5464 = vsub.s32 %v5461, %v5463
        %v5465 = vrot.slane %v5458, %v5464
        %v5467 = vunpack.c.l.s4 1966171168
        %v5468 = vunpack.c.0.s8 %v5467
        %v5469 = vlaneseq
        %v5470 = vshrl.u32 %v5469, 7
        %v5471 = vsub.s32 %v5468, %v5470
        %v5472 = vrot.slane %v5465, %v5471
        %v5506 = vunpack.c.l.b16 %v5426
        %v5507 = vunpack.c.h.b16 %v5426
        %v5508 = vunpack.c.l.b16 %v5427
        %v5509 = vunpack.c.h.b16 %v5427
        %v5510 = vunpack.c.l.b16 %v5428
        %v5511 = vunpack.c.h.b16 %v5428
        %v5512 = vunpack.c.l.b16 %v5429
        %v5513 = vunpack.c.h.b16 %v5429
        %v5514 = vunpack.c.l.b16 %v5430
        %v5515 = vunpack.c.h.b16 %v5430
        %v5516 = vunpack.c.l.b16 %v5431
        %v5517 = vunpack.c.h.b16 %v5431
        %v5518 = vunpack.c.l.b16 %v5432
        %v5519 = vunpack.c.h.b16 %v5432
        %v5520 = vunpack.c.l.b16 %v5433
        %v5521 = vunpack.c.h.b16 %v5433
        %v5522 = vunpack.c.l.b16 %v5434
        %v5523 = vunpack.c.h.b16 %v5434
        %v5524 = vunpack.c.l.b16 %v5435
        %v5525 = vunpack.c.h.b16 %v5435
        %v5526 = vunpack.c.l.b16 %v5436
        %v5527 = vunpack.c.h.b16 %v5436
        %v5528 = vunpack.c.l.b16 %v5437
        %v5529 = vunpack.c.h.b16 %v5437
        %v5530 = vunpack.c.l.b16 %v5438
        %v5531 = vunpack.c.h.b16 %v5438
        %v5532 = vunpack.c.l.b16 %v5439
        %v5533 = vunpack.c.h.b16 %v5439
        %v5534 = vunpack.c.l.b16 %v5440
        %v5535 = vunpack.c.h.b16 %v5440
        %v5536 = vunpack.c.l.b16 %v5441
        %v5537 = vunpack.c.h.b16 %v5441
        %v5538 = vunpack.c.l.b16 %v5442
        %v5539 = vunpack.c.h.b16 %v5442
        %v5540 = vunpack.c.l.b16 %v5443
        %v5541 = vunpack.c.h.b16 %v5443
        %v5542 = vunpack.c.l.b16 %v5444
        %v5543 = vunpack.c.h.b16 %v5444
        %v5544 = vunpack.c.l.b16 %v5445
        %v5545 = vunpack.c.h.b16 %v5445
        %v5546 = vunpack.c.l.b16 %v5446
        %v5547 = vunpack.c.h.b16 %v5446
        %v5548 = vunpack.c.l.b16 %v5447
        %v5549 = vunpack.c.h.b16 %v5447
        %v5550 = vunpack.c.l.b16 %v5448
        %v5551 = vunpack.c.h.b16 %v5448
        %v5552 = vunpack.c.l.b16 %v5449
        %v5553 = vunpack.c.h.b16 %v5449
        %v5554 = vunpack.c.l.b16 %v5450
        %v5555 = vunpack.c.h.b16 %v5450
        %v5556 = vunpack.c.l.b16 %v5451
        %v5557 = vunpack.c.h.b16 %v5451
        %v5558 = vunpack.c.l.b16 %v5452
        %v5559 = vunpack.c.h.b16 %v5452
        %v5560 = vunpack.c.l.b16 %v5453
        %v5561 = vunpack.c.h.b16 %v5453
        %v5562 = vunpack.c.l.b16 %v5454
        %v5563 = vunpack.c.h.b16 %v5454
        %v5564 = vunpack.c.l.b16 %v5455
        %v5565 = vunpack.c.h.b16 %v5455
        %v5566 = vunpack.c.l.b16 %v5456
        %v5567 = vunpack.c.h.b16 %v5456
        %v5568 = vunpack.c.l.b16 %v5457
        %v5569 = vunpack.c.h.b16 %v5457
        %v5570 = vpack.c.b16 %v5510, %v5506
        %v5571 = vpack.c.b16 %v5511, %v5507
        %v5572 = vpack.c.b16 %v5512, %v5508
        %v5573 = vpack.c.b16 %v5513, %v5509
        %v5574 = vpack.c.b16 %v5518, %v5514
        %v5575 = vpack.c.b16 %v5519, %v5515
        %v5576 = vpack.c.b16 %v5520, %v5516
        %v5577 = vpack.c.b16 %v5521, %v5517
        %v5578 = vpack.c.b16 %v5526, %v5522
        %v5579 = vpack.c.b16 %v5527, %v5523
        %v5580 = vpack.c.b16 %v5528, %v5524
        %v5581 = vpack.c.b16 %v5529, %v5525
        %v5582 = vpack.c.b16 %v5534, %v5530
        %v5583 = vpack.c.b16 %v5535, %v5531
        %v5584 = vpack.c.b16 %v5536, %v5532
        %v5585 = vpack.c.b16 %v5537, %v5533
        %v5586 = vpack.c.b16 %v5542, %v5538
        %v5587 = vpack.c.b16 %v5543, %v5539
        %v5588 = vpack.c.b16 %v5544, %v5540
        %v5589 = vpack.c.b16 %v5545, %v5541
        %v5590 = vpack.c.b16 %v5550, %v5546
        %v5591 = vpack.c.b16 %v5551, %v5547
        %v5592 = vpack.c.b16 %v5552, %v5548
        %v5593 = vpack.c.b16 %v5553, %v5549
        %v5594 = vpack.c.b16 %v5558, %v5554
        %v5595 = vpack.c.b16 %v5559, %v5555
        %v5596 = vpack.c.b16 %v5560, %v5556
        %v5597 = vpack.c.b16 %v5561, %v5557
        %v5598 = vpack.c.b16 %v5566, %v5562
        %v5599 = vpack.c.b16 %v5567, %v5563
        %v5600 = vpack.c.b16 %v5568, %v5564
        %v5601 = vpack.c.b16 %v5569, %v5565
        %5634 = vmatprep.subr.bf16.mxu0 %v5599
        %5635 = vmatpush1.bf16.msra.mxu0 %v5598
        %5636 = vmatprep.subr.bf16.mxu0 %v5595
        %5637 = vmatpush1.bf16.msra.mxu0 %v5594
        %5638 = vmatprep.subr.bf16.mxu0 %v5591
        %5639 = vmatpush1.bf16.msra.mxu0 %v5590
        %5640 = vmatprep.subr.bf16.mxu0 %v5587
        %5641 = vmatpush1.bf16.msra.mxu0 %v5586
        %5642 = vmatprep.subr.bf16.mxu0 %v5583
        %5643 = vmatpush1.bf16.msra.mxu0 %v5582
        %5644 = vmatprep.subr.bf16.mxu0 %v5579
        %5645 = vmatpush1.bf16.msra.mxu0 %v5578
        %5646 = vmatprep.subr.bf16.mxu0 %v5575
        %5647 = vmatpush1.bf16.msra.mxu0 %v5574
        %5648 = vmatprep.subr.bf16.mxu0 %v5571
        %5649 = vmatpush1.bf16.msra.mxu0 %v5570
        %5650 = vmatprep.subr.bf16.mxu0 0
        %5651 = vmatpush2.bf16.msra.mxu0 0
        %5652 = vmatprep.subr.bf16.mxu0 0
        %5653 = vmatpush2.bf16.msra.mxu0 0
        %5654 = vmatprep.subr.bf16.mxu0 0
        %5655 = vmatpush2.bf16.msra.mxu0 0
        %5656 = vmatprep.subr.bf16.mxu0 0
        %5657 = vmatpush2.bf16.msra.mxu0 0
        %5658 = vmatprep.subr.bf16.mxu0 0
        %5659 = vmatpush2.bf16.msra.mxu0 0
        %5660 = vmatprep.subr.bf16.mxu0 0
        %5661 = vmatpush2.bf16.msra.mxu0 0
        %5662 = vmatprep.subr.bf16.mxu0 0
        %5663 = vmatpush2.bf16.msra.mxu0 0
        %5664 = vmatprep.subr.bf16.mxu0 0
        %5665 = vmatpush2.bf16.msra.mxu0 0
        %5666 = vmatprep.mubr.bf16.mxu0 0
        %5667 = vmatmul.mubr.bf16.gmra.mxu0 %v5472
        %v5668 = vpop.f32.mrf.mxu0
        %v5669 = vadd.f32 0.0, %v5668
        %v5670 = vpop.f32.mrf.mxu0
        %v5671 = vadd.f32 0.0, %v5670
        %v5672 = vpop.f32.mrf.mxu0
        %v5673 = vpop.f32.mrf.mxu0
        %5674 = vdwg.mxu0
        %5675 = vmatprep.subr.bf16.mxu0 %v5601
        %5676 = vmatpush1.bf16.msra.mxu0 %v5600
        %5677 = vmatprep.subr.bf16.mxu0 %v5597
        %5678 = vmatpush1.bf16.msra.mxu0 %v5596
        %5679 = vmatprep.subr.bf16.mxu0 %v5593
        %5680 = vmatpush1.bf16.msra.mxu0 %v5592
        %5681 = vmatprep.subr.bf16.mxu0 %v5589
        %5682 = vmatpush1.bf16.msra.mxu0 %v5588
        %5683 = vmatprep.subr.bf16.mxu0 %v5585
        %5684 = vmatpush1.bf16.msra.mxu0 %v5584
        %5685 = vmatprep.subr.bf16.mxu0 %v5581
        %5686 = vmatpush1.bf16.msra.mxu0 %v5580
        %5687 = vmatprep.subr.bf16.mxu0 %v5577
        %5688 = vmatpush1.bf16.msra.mxu0 %v5576
        %5689 = vmatprep.subr.bf16.mxu0 %v5573
        %5690 = vmatpush1.bf16.msra.mxu0 %v5572
        %5691 = vmatprep.subr.bf16.mxu0 0
        %5692 = vmatpush2.bf16.msra.mxu0 0
        %5693 = vmatprep.subr.bf16.mxu0 0
        %5694 = vmatpush2.bf16.msra.mxu0 0
        %5695 = vmatprep.subr.bf16.mxu0 0
        %5696 = vmatpush2.bf16.msra.mxu0 0
        %5697 = vmatprep.subr.bf16.mxu0 0
        %5698 = vmatpush2.bf16.msra.mxu0 0
        %5699 = vmatprep.subr.bf16.mxu0 0
        %5700 = vmatpush2.bf16.msra.mxu0 0
        %5701 = vmatprep.subr.bf16.mxu0 0
        %5702 = vmatpush2.bf16.msra.mxu0 0
        %5703 = vmatprep.subr.bf16.mxu0 0
        %5704 = vmatpush2.bf16.msra.mxu0 0
        %5705 = vmatprep.subr.bf16.mxu0 0
        %5706 = vmatpush2.bf16.msra.mxu0 0
        %5707 = vmatprep.mubr.bf16.mxu0 0
        %5708 = vmatmul.mubr.bf16.gmra.mxu0 %v5472
        %v5709 = vpop.f32.mrf.mxu0
        %v5710 = vadd.f32 0.0, %v5709
        %v5711 = vpop.f32.mrf.mxu0
        %v5712 = vadd.f32 0.0, %v5711
        %v5713 = vpop.f32.mrf.mxu0
        %v5714 = vpop.f32.mrf.mxu0
        %5715 = vdwg.mxu0
        %v5716 = vadd.f32 %v5421, %v5669
        %v5717 = vadd.f32 %v5422, %v5671
        %v5718 = vadd.f32 %v5423, %v5710
        %v5719 = vadd.f32 %v5424, %v5712
        %s5720 = scalar_lea.vmem [#allocation7], 2048
        %v5721 = vld [vmem:[%s5720] sm:$0xff]
        %v5722 = vld [vmem:[%s5720 + $0x8] sm:$0xff]
        %v5723 = vld [vmem:[%s5720 + $0x10] sm:$0xff]
        %v5724 = vld [vmem:[%s5720 + $0x18] sm:$0xff]
        %v5725 = vld [vmem:[%s5720 + $0x20] sm:$0xff]
        %v5726 = vld [vmem:[%s5720 + $0x28] sm:$0xff]
        %v5727 = vld [vmem:[%s5720 + $0x30] sm:$0xff]
        %v5728 = vld [vmem:[%s5720 + $0x38] sm:$0xff]
        %v5729 = vld [vmem:[%s5720 + $0x40] sm:$0xff]
        %v5730 = vld [vmem:[%s5720 + $0x48] sm:$0xff]
        %v5731 = vld [vmem:[%s5720 + $0x50] sm:$0xff]
        %v5732 = vld [vmem:[%s5720 + $0x58] sm:$0xff]
        %v5733 = vld [vmem:[%s5720 + $0x60] sm:$0xff]
        %v5734 = vld [vmem:[%s5720 + $0x68] sm:$0xff]
        %v5735 = vld [vmem:[%s5720 + $0x70] sm:$0xff]
        %v5736 = vld [vmem:[%s5720 + $0x78] sm:$0xff]
        %v5737 = vld [vmem:[%s5720 + $0x80] sm:$0xff]
        %v5738 = vld [vmem:[%s5720 + $0x88] sm:$0xff]
        %v5739 = vld [vmem:[%s5720 + $0x90] sm:$0xff]
        %v5740 = vld [vmem:[%s5720 + $0x98] sm:$0xff]
        %v5741 = vld [vmem:[%s5720 + $0xa0] sm:$0xff]
        %v5742 = vld [vmem:[%s5720 + $0xa8] sm:$0xff]
        %v5743 = vld [vmem:[%s5720 + $0xb0] sm:$0xff]
        %v5744 = vld [vmem:[%s5720 + $0xb8] sm:$0xff]
        %v5745 = vld [vmem:[%s5720 + $0xc0] sm:$0xff]
        %v5746 = vld [vmem:[%s5720 + $0xc8] sm:$0xff]
        %v5747 = vld [vmem:[%s5720 + $0xd0] sm:$0xff]
        %v5748 = vld [vmem:[%s5720 + $0xd8] sm:$0xff]
        %v5749 = vld [vmem:[%s5720 + $0xe0] sm:$0xff]
        %v5750 = vld [vmem:[%s5720 + $0xe8] sm:$0xff]
        %v5751 = vld [vmem:[%s5720 + $0xf0] sm:$0xff]
        %v5752 = vld [vmem:[%s5720 + $0xf8] sm:$0xff]
        %v5753 = vcombine.low %v4530, %v3313
        %v5755 = vunpack.c.l.s4 1966171168
        %v5756 = vunpack.c.0.s8 %v5755
        %v5757 = vlaneseq
        %v5758 = vshrl.u32 %v5757, 7
        %v5759 = vsub.s32 %v5756, %v5758
        %v5760 = vrot.slane %v5753, %v5759
        %v5762 = vunpack.c.l.s4 1966171168
        %v5763 = vunpack.c.0.s8 %v5762
        %v5764 = vlaneseq
        %v5765 = vshrl.u32 %v5764, 7
        %v5766 = vsub.s32 %v5763, %v5765
        %v5767 = vrot.slane %v5760, %v5766
        %v5801 = vunpack.c.l.b16 %v5721
        %v5802 = vunpack.c.h.b16 %v5721
        %v5803 = vunpack.c.l.b16 %v5722
        %v5804 = vunpack.c.h.b16 %v5722
        %v5805 = vunpack.c.l.b16 %v5723
        %v5806 = vunpack.c.h.b16 %v5723
        %v5807 = vunpack.c.l.b16 %v5724
        %v5808 = vunpack.c.h.b16 %v5724
        %v5809 = vunpack.c.l.b16 %v5725
        %v5810 = vunpack.c.h.b16 %v5725
        %v5811 = vunpack.c.l.b16 %v5726
        %v5812 = vunpack.c.h.b16 %v5726
        %v5813 = vunpack.c.l.b16 %v5727
        %v5814 = vunpack.c.h.b16 %v5727
        %v5815 = vunpack.c.l.b16 %v5728
        %v5816 = vunpack.c.h.b16 %v5728
        %v5817 = vunpack.c.l.b16 %v5729
        %v5818 = vunpack.c.h.b16 %v5729
        %v5819 = vunpack.c.l.b16 %v5730
        %v5820 = vunpack.c.h.b16 %v5730
        %v5821 = vunpack.c.l.b16 %v5731
        %v5822 = vunpack.c.h.b16 %v5731
        %v5823 = vunpack.c.l.b16 %v5732
        %v5824 = vunpack.c.h.b16 %v5732
        %v5825 = vunpack.c.l.b16 %v5733
        %v5826 = vunpack.c.h.b16 %v5733
        %v5827 = vunpack.c.l.b16 %v5734
        %v5828 = vunpack.c.h.b16 %v5734
        %v5829 = vunpack.c.l.b16 %v5735
        %v5830 = vunpack.c.h.b16 %v5735
        %v5831 = vunpack.c.l.b16 %v5736
        %v5832 = vunpack.c.h.b16 %v5736
        %v5833 = vunpack.c.l.b16 %v5737
        %v5834 = vunpack.c.h.b16 %v5737
        %v5835 = vunpack.c.l.b16 %v5738
        %v5836 = vunpack.c.h.b16 %v5738
        %v5837 = vunpack.c.l.b16 %v5739
        %v5838 = vunpack.c.h.b16 %v5739
        %v5839 = vunpack.c.l.b16 %v5740
        %v5840 = vunpack.c.h.b16 %v5740
        %v5841 = vunpack.c.l.b16 %v5741
        %v5842 = vunpack.c.h.b16 %v5741
        %v5843 = vunpack.c.l.b16 %v5742
        %v5844 = vunpack.c.h.b16 %v5742
        %v5845 = vunpack.c.l.b16 %v5743
        %v5846 = vunpack.c.h.b16 %v5743
        %v5847 = vunpack.c.l.b16 %v5744
        %v5848 = vunpack.c.h.b16 %v5744
        %v5849 = vunpack.c.l.b16 %v5745
        %v5850 = vunpack.c.h.b16 %v5745
        %v5851 = vunpack.c.l.b16 %v5746
        %v5852 = vunpack.c.h.b16 %v5746
        %v5853 = vunpack.c.l.b16 %v5747
        %v5854 = vunpack.c.h.b16 %v5747
        %v5855 = vunpack.c.l.b16 %v5748
        %v5856 = vunpack.c.h.b16 %v5748
        %v5857 = vunpack.c.l.b16 %v5749
        %v5858 = vunpack.c.h.b16 %v5749
        %v5859 = vunpack.c.l.b16 %v5750
        %v5860 = vunpack.c.h.b16 %v5750
        %v5861 = vunpack.c.l.b16 %v5751
        %v5862 = vunpack.c.h.b16 %v5751
        %v5863 = vunpack.c.l.b16 %v5752
        %v5864 = vunpack.c.h.b16 %v5752
        %v5865 = vpack.c.b16 %v5805, %v5801
        %v5866 = vpack.c.b16 %v5806, %v5802
        %v5867 = vpack.c.b16 %v5807, %v5803
        %v5868 = vpack.c.b16 %v5808, %v5804
        %v5869 = vpack.c.b16 %v5813, %v5809
        %v5870 = vpack.c.b16 %v5814, %v5810
        %v5871 = vpack.c.b16 %v5815, %v5811
        %v5872 = vpack.c.b16 %v5816, %v5812
        %v5873 = vpack.c.b16 %v5821, %v5817
        %v5874 = vpack.c.b16 %v5822, %v5818
        %v5875 = vpack.c.b16 %v5823, %v5819
        %v5876 = vpack.c.b16 %v5824, %v5820
        %v5877 = vpack.c.b16 %v5829, %v5825
        %v5878 = vpack.c.b16 %v5830, %v5826
        %v5879 = vpack.c.b16 %v5831, %v5827
        %v5880 = vpack.c.b16 %v5832, %v5828
        %v5881 = vpack.c.b16 %v5837, %v5833
        %v5882 = vpack.c.b16 %v5838, %v5834
        %v5883 = vpack.c.b16 %v5839, %v5835
        %v5884 = vpack.c.b16 %v5840, %v5836
        %v5885 = vpack.c.b16 %v5845, %v5841
        %v5886 = vpack.c.b16 %v5846, %v5842
        %v5887 = vpack.c.b16 %v5847, %v5843
        %v5888 = vpack.c.b16 %v5848, %v5844
        %v5889 = vpack.c.b16 %v5853, %v5849
        %v5890 = vpack.c.b16 %v5854, %v5850
        %v5891 = vpack.c.b16 %v5855, %v5851
        %v5892 = vpack.c.b16 %v5856, %v5852
        %v5893 = vpack.c.b16 %v5861, %v5857
        %v5894 = vpack.c.b16 %v5862, %v5858
        %v5895 = vpack.c.b16 %v5863, %v5859
        %v5896 = vpack.c.b16 %v5864, %v5860
        %5929 = vmatprep.subr.bf16.mxu0 %v5894
        %5930 = vmatpush1.bf16.msra.mxu0 %v5893
        %5931 = vmatprep.subr.bf16.mxu0 %v5890
        %5932 = vmatpush1.bf16.msra.mxu0 %v5889
        %5933 = vmatprep.subr.bf16.mxu0 %v5886
        %5934 = vmatpush1.bf16.msra.mxu0 %v5885
        %5935 = vmatprep.subr.bf16.mxu0 %v5882
        %5936 = vmatpush1.bf16.msra.mxu0 %v5881
        %5937 = vmatprep.subr.bf16.mxu0 %v5878
        %5938 = vmatpush1.bf16.msra.mxu0 %v5877
        %5939 = vmatprep.subr.bf16.mxu0 %v5874
        %5940 = vmatpush1.bf16.msra.mxu0 %v5873
        %5941 = vmatprep.subr.bf16.mxu0 %v5870
        %5942 = vmatpush1.bf16.msra.mxu0 %v5869
        %5943 = vmatprep.subr.bf16.mxu0 %v5866
        %5944 = vmatpush1.bf16.msra.mxu0 %v5865
        %5945 = vmatprep.subr.bf16.mxu0 0
        %5946 = vmatpush2.bf16.msra.mxu0 0
        %5947 = vmatprep.subr.bf16.mxu0 0
        %5948 = vmatpush2.bf16.msra.mxu0 0
        %5949 = vmatprep.subr.bf16.mxu0 0
        %5950 = vmatpush2.bf16.msra.mxu0 0
        %5951 = vmatprep.subr.bf16.mxu0 0
        %5952 = vmatpush2.bf16.msra.mxu0 0
        %5953 = vmatprep.subr.bf16.mxu0 0
        %5954 = vmatpush2.bf16.msra.mxu0 0
        %5955 = vmatprep.subr.bf16.mxu0 0
        %5956 = vmatpush2.bf16.msra.mxu0 0
        %5957 = vmatprep.subr.bf16.mxu0 0
        %5958 = vmatpush2.bf16.msra.mxu0 0
        %5959 = vmatprep.subr.bf16.mxu0 0
        %5960 = vmatpush2.bf16.msra.mxu0 0
        %5961 = vmatprep.mubr.bf16.mxu0 0
        %5962 = vmatmul.mubr.bf16.gmra.mxu0 %v5767
        %v5963 = vpop.f32.mrf.mxu0
        %v5964 = vadd.f32 0.0, %v5963
        %v5965 = vpop.f32.mrf.mxu0
        %v5966 = vadd.f32 0.0, %v5965
        %v5967 = vpop.f32.mrf.mxu0
        %v5968 = vpop.f32.mrf.mxu0
        %5969 = vdwg.mxu0
        %5970 = vmatprep.subr.bf16.mxu0 %v5896
        %5971 = vmatpush1.bf16.msra.mxu0 %v5895
        %5972 = vmatprep.subr.bf16.mxu0 %v5892
        %5973 = vmatpush1.bf16.msra.mxu0 %v5891
        %5974 = vmatprep.subr.bf16.mxu0 %v5888
        %5975 = vmatpush1.bf16.msra.mxu0 %v5887
        %5976 = vmatprep.subr.bf16.mxu0 %v5884
        %5977 = vmatpush1.bf16.msra.mxu0 %v5883
        %5978 = vmatprep.subr.bf16.mxu0 %v5880
        %5979 = vmatpush1.bf16.msra.mxu0 %v5879
        %5980 = vmatprep.subr.bf16.mxu0 %v5876
        %5981 = vmatpush1.bf16.msra.mxu0 %v5875
        %5982 = vmatprep.subr.bf16.mxu0 %v5872
        %5983 = vmatpush1.bf16.msra.mxu0 %v5871
        %5984 = vmatprep.subr.bf16.mxu0 %v5868
        %5985 = vmatpush1.bf16.msra.mxu0 %v5867
        %5986 = vmatprep.subr.bf16.mxu0 0
        %5987 = vmatpush2.bf16.msra.mxu0 0
        %5988 = vmatprep.subr.bf16.mxu0 0
        %5989 = vmatpush2.bf16.msra.mxu0 0
        %5990 = vmatprep.subr.bf16.mxu0 0
        %5991 = vmatpush2.bf16.msra.mxu0 0
        %5992 = vmatprep.subr.bf16.mxu0 0
        %5993 = vmatpush2.bf16.msra.mxu0 0
        %5994 = vmatprep.subr.bf16.mxu0 0
        %5995 = vmatpush2.bf16.msra.mxu0 0
        %5996 = vmatprep.subr.bf16.mxu0 0
        %5997 = vmatpush2.bf16.msra.mxu0 0
        %5998 = vmatprep.subr.bf16.mxu0 0
        %5999 = vmatpush2.bf16.msra.mxu0 0
        %6000 = vmatprep.subr.bf16.mxu0 0
        %6001 = vmatpush2.bf16.msra.mxu0 0
        %6002 = vmatprep.mubr.bf16.mxu0 0
        %6003 = vmatmul.mubr.bf16.gmra.mxu0 %v5767
        %v6004 = vpop.f32.mrf.mxu0
        %v6005 = vadd.f32 0.0, %v6004
        %v6006 = vpop.f32.mrf.mxu0
        %v6007 = vadd.f32 0.0, %v6006
        %v6008 = vpop.f32.mrf.mxu0
        %v6009 = vpop.f32.mrf.mxu0
        %6010 = vdwg.mxu0
        %v6011 = vadd.f32 %v5716, %v5964
        %v6012 = vadd.f32 %v5717, %v5966
        %v6013 = vadd.f32 %v5718, %v6005
        %v6014 = vadd.f32 %v5719, %v6007
        %v6015 = vld [vmem:[%s6] sm:$0xf]
        %v6017 = vlaneseq
        %v6018 = vshrl.u32 %v6017, 7
        %v6019 = vsub.s32 0, %v6018
        %v6020 = vrot.slane %v6015, %v6019
        %v6021 = vlaneseq
        %v6022 = vshrl.u32 %v6021, 7
        %v6023 = vsub.s32 1, %v6022
        %v6024 = vrot.slane %v6015, %v6023
        %v6025 = vlaneseq
        %v6026 = vshrl.u32 %v6025, 7
        %v6027 = vsub.s32 2, %v6026
        %v6028 = vrot.slane %v6015, %v6027
        %v6029 = vlaneseq
        %v6030 = vshrl.u32 %v6029, 7
        %v6031 = vsub.s32 3, %v6030
        %v6032 = vrot.slane %v6015, %v6031
        %v6037 = vadd.f32 %v6011, %v6020
        %v6038 = vadd.f32 %v6012, %v6024
        %v6039 = vadd.f32 %v6013, %v6028
        %v6040 = vadd.f32 %v6014, %v6032
        %v6041 = vmax.f32 %v6037, 0.0
        %v6042 = vmax.f32 %v6038, 0.0
        %v6043 = vmax.f32 %v6039, 0.0
        %v6044 = vmax.f32 %v6040, 0.0
        %v6049 = vcombine.low %v6041, %v6042
        %v6050 = vcombine.low %v6043, %v6044
        %v6052 = vunpack.c.l.s4 1983009808
        %v6053 = vunpack.c.0.s8 %v6052
        %v6054 = vlaneseq
        %v6055 = vshrl.u32 %v6054, 7
        %v6056 = vsub.s32 %v6053, %v6055
        %v6057 = vrot.slane %v6049, %v6056
        %v6059 = vunpack.c.l.s4 1983009808
        %v6060 = vunpack.c.0.s8 %v6059
        %v6061 = vlaneseq
        %v6062 = vshrl.u32 %v6061, 7
        %v6063 = vsub.s32 %v6060, %v6062
        %v6064 = vrot.slane %v6050, %v6063
        %v6065 = vcombine.low %v6057, %v6064
        %v6066 = vcombine.high %v6057, %v6064
        %v6069 = vrot.slane %v6065, 7
        %v6070 = vrot.slane %v6069, 2
        %v6071 = vrot.slane %v6066, 7
        %v6072 = vrot.slane %v6071, 2
        %v6075 = vmax.f32 %v6065, %v6070
        %v6076 = vmax.f32 %v6066, %v6072
        %v6077 = vmax.f32 %v6075, %v6076
        %v6079 = vlaneseq
        %v6080 = vshrl.u32 %v6079, 7
        %v6081 = vsub.s32 0, %v6080
        %v6082 = vrot.slane %v6077, %v6081
        %v6083 = vlaneseq
        %v6084 = vshrl.u32 %v6083, 7
        %v6085 = vsub.s32 2, %v6084
        %v6086 = vrot.slane %v6077, %v6085
        %v6087 = vlaneseq
        %v6088 = vshrl.u32 %v6087, 7
        %v6089 = vsub.s32 4, %v6088
        %v6090 = vrot.slane %v6077, %v6089
        %v6091 = vlaneseq
        %v6092 = vshrl.u32 %v6091, 7
        %v6093 = vsub.s32 6, %v6092
        %v6094 = vrot.slane %v6077, %v6093
        %v6099 = vpack.c.bf16 %v6082, %v6082
        %v6100 = vpack.c.bf16 %v6086, %v6086
        %v6101 = vpack.c.bf16 %v6090, %v6090
        %v6102 = vpack.c.bf16 %v6094, %v6094
        %v6103 = vld [vmem:[#allocation8] sm:$0xff]
        %v6104 = vld [vmem:[#allocation8 + $0x8] sm:$0xff]
        %v6105 = vld [vmem:[#allocation8 + $0x10] sm:$0xff]
        %v6106 = vld [vmem:[#allocation8 + $0x18] sm:$0xff]
        %v6107 = vld [vmem:[#allocation8 + $0x20] sm:$0xff]
        %v6108 = vld [vmem:[#allocation8 + $0x28] sm:$0xff]
        %v6109 = vld [vmem:[#allocation8 + $0x30] sm:$0xff]
        %v6110 = vld [vmem:[#allocation8 + $0x38] sm:$0xff]
        %v6111 = vld [vmem:[#allocation8 + $0x40] sm:$0xff]
        %v6112 = vld [vmem:[#allocation8 + $0x48] sm:$0xff]
        %v6113 = vld [vmem:[#allocation8 + $0x50] sm:$0xff]
        %v6114 = vld [vmem:[#allocation8 + $0x58] sm:$0xff]
        %v6115 = vld [vmem:[#allocation8 + $0x60] sm:$0xff]
        %v6116 = vld [vmem:[#allocation8 + $0x68] sm:$0xff]
        %v6117 = vld [vmem:[#allocation8 + $0x70] sm:$0xff]
        %v6118 = vld [vmem:[#allocation8 + $0x78] sm:$0xff]
        %v6119 = vld [vmem:[#allocation8 + $0x80] sm:$0xff]
        %v6120 = vld [vmem:[#allocation8 + $0x88] sm:$0xff]
        %v6121 = vld [vmem:[#allocation8 + $0x90] sm:$0xff]
        %v6122 = vld [vmem:[#allocation8 + $0x98] sm:$0xff]
        %v6123 = vld [vmem:[#allocation8 + $0xa0] sm:$0xff]
        %v6124 = vld [vmem:[#allocation8 + $0xa8] sm:$0xff]
        %v6125 = vld [vmem:[#allocation8 + $0xb0] sm:$0xff]
        %v6126 = vld [vmem:[#allocation8 + $0xb8] sm:$0xff]
        %v6127 = vld [vmem:[#allocation8 + $0xc0] sm:$0xff]
        %v6128 = vld [vmem:[#allocation8 + $0xc8] sm:$0xff]
        %v6129 = vld [vmem:[#allocation8 + $0xd0] sm:$0xff]
        %v6130 = vld [vmem:[#allocation8 + $0xd8] sm:$0xff]
        %v6131 = vld [vmem:[#allocation8 + $0xe0] sm:$0xff]
        %v6132 = vld [vmem:[#allocation8 + $0xe8] sm:$0xff]
        %v6133 = vld [vmem:[#allocation8 + $0xf0] sm:$0xff]
        %v6134 = vld [vmem:[#allocation8 + $0xf8] sm:$0xff]
        %v6135 = vld [vmem:[#allocation8 + $0x100] sm:$0xff]
        %v6136 = vld [vmem:[#allocation8 + $0x108] sm:$0xff]
        %v6137 = vld [vmem:[#allocation8 + $0x110] sm:$0xff]
        %v6138 = vld [vmem:[#allocation8 + $0x118] sm:$0xff]
        %v6139 = vld [vmem:[#allocation8 + $0x120] sm:$0xff]
        %v6140 = vld [vmem:[#allocation8 + $0x128] sm:$0xff]
        %v6141 = vld [vmem:[#allocation8 + $0x130] sm:$0xff]
        %v6142 = vld [vmem:[#allocation8 + $0x138] sm:$0xff]
        %v6143 = vld [vmem:[#allocation8 + $0x140] sm:$0xff]
        %v6144 = vld [vmem:[#allocation8 + $0x148] sm:$0xff]
        %v6145 = vld [vmem:[#allocation8 + $0x150] sm:$0xff]
        %v6146 = vld [vmem:[#allocation8 + $0x158] sm:$0xff]
        %v6147 = vld [vmem:[#allocation8 + $0x160] sm:$0xff]
        %v6148 = vld [vmem:[#allocation8 + $0x168] sm:$0xff]
        %v6149 = vld [vmem:[#allocation8 + $0x170] sm:$0xff]
        %v6150 = vld [vmem:[#allocation8 + $0x178] sm:$0xff]
        %v6151 = vld [vmem:[#allocation8 + $0x180] sm:$0xff]
        %v6152 = vld [vmem:[#allocation8 + $0x188] sm:$0xff]
        %v6153 = vld [vmem:[#allocation8 + $0x190] sm:$0xff]
        %v6154 = vld [vmem:[#allocation8 + $0x198] sm:$0xff]
        %v6155 = vld [vmem:[#allocation8 + $0x1a0] sm:$0xff]
        %v6156 = vld [vmem:[#allocation8 + $0x1a8] sm:$0xff]
        %v6157 = vld [vmem:[#allocation8 + $0x1b0] sm:$0xff]
        %v6158 = vld [vmem:[#allocation8 + $0x1b8] sm:$0xff]
        %v6159 = vld [vmem:[#allocation8 + $0x1c0] sm:$0xff]
        %v6160 = vld [vmem:[#allocation8 + $0x1c8] sm:$0xff]
        %v6161 = vld [vmem:[#allocation8 + $0x1d0] sm:$0xff]
        %v6162 = vld [vmem:[#allocation8 + $0x1d8] sm:$0xff]
        %v6163 = vld [vmem:[#allocation8 + $0x1e0] sm:$0xff]
        %v6164 = vld [vmem:[#allocation8 + $0x1e8] sm:$0xff]
        %v6165 = vld [vmem:[#allocation8 + $0x1f0] sm:$0xff]
        %v6166 = vld [vmem:[#allocation8 + $0x1f8] sm:$0xff]
        %v6167 = vld [vmem:[#allocation8 + $0x200] sm:$0xff]
        %v6168 = vld [vmem:[#allocation8 + $0x208] sm:$0xff]
        %v6169 = vld [vmem:[#allocation8 + $0x210] sm:$0xff]
        %v6170 = vld [vmem:[#allocation8 + $0x218] sm:$0xff]
        %v6171 = vld [vmem:[#allocation8 + $0x220] sm:$0xff]
        %v6172 = vld [vmem:[#allocation8 + $0x228] sm:$0xff]
        %v6173 = vld [vmem:[#allocation8 + $0x230] sm:$0xff]
        %v6174 = vld [vmem:[#allocation8 + $0x238] sm:$0xff]
        %v6175 = vld [vmem:[#allocation8 + $0x240] sm:$0xff]
        %v6176 = vld [vmem:[#allocation8 + $0x248] sm:$0xff]
        %v6177 = vld [vmem:[#allocation8 + $0x250] sm:$0xff]
        %v6178 = vld [vmem:[#allocation8 + $0x258] sm:$0xff]
        %v6179 = vld [vmem:[#allocation8 + $0x260] sm:$0xff]
        %v6180 = vld [vmem:[#allocation8 + $0x268] sm:$0xff]
        %v6181 = vld [vmem:[#allocation8 + $0x270] sm:$0xff]
        %v6182 = vld [vmem:[#allocation8 + $0x278] sm:$0xff]
        %v6183 = vld [vmem:[#allocation8 + $0x280] sm:$0xff]
        %v6184 = vld [vmem:[#allocation8 + $0x288] sm:$0xff]
        %v6185 = vld [vmem:[#allocation8 + $0x290] sm:$0xff]
        %v6186 = vld [vmem:[#allocation8 + $0x298] sm:$0xff]
        %v6187 = vld [vmem:[#allocation8 + $0x2a0] sm:$0xff]
        %v6188 = vld [vmem:[#allocation8 + $0x2a8] sm:$0xff]
        %v6189 = vld [vmem:[#allocation8 + $0x2b0] sm:$0xff]
        %v6190 = vld [vmem:[#allocation8 + $0x2b8] sm:$0xff]
        %v6191 = vld [vmem:[#allocation8 + $0x2c0] sm:$0xff]
        %v6192 = vld [vmem:[#allocation8 + $0x2c8] sm:$0xff]
        %v6193 = vld [vmem:[#allocation8 + $0x2d0] sm:$0xff]
        %v6194 = vld [vmem:[#allocation8 + $0x2d8] sm:$0xff]
        %v6195 = vld [vmem:[#allocation8 + $0x2e0] sm:$0xff]
        %v6196 = vld [vmem:[#allocation8 + $0x2e8] sm:$0xff]
        %v6197 = vld [vmem:[#allocation8 + $0x2f0] sm:$0xff]
        %v6198 = vld [vmem:[#allocation8 + $0x2f8] sm:$0xff]
        %v6199 = vld [vmem:[#allocation8 + $0x300] sm:$0xff]
        %v6200 = vld [vmem:[#allocation8 + $0x308] sm:$0xff]
        %v6201 = vld [vmem:[#allocation8 + $0x310] sm:$0xff]
        %v6202 = vld [vmem:[#allocation8 + $0x318] sm:$0xff]
        %v6203 = vld [vmem:[#allocation8 + $0x320] sm:$0xff]
        %v6204 = vld [vmem:[#allocation8 + $0x328] sm:$0xff]
        %v6205 = vld [vmem:[#allocation8 + $0x330] sm:$0xff]
        %v6206 = vld [vmem:[#allocation8 + $0x338] sm:$0xff]
        %v6207 = vld [vmem:[#allocation8 + $0x340] sm:$0xff]
        %v6208 = vld [vmem:[#allocation8 + $0x348] sm:$0xff]
        %v6209 = vld [vmem:[#allocation8 + $0x350] sm:$0xff]
        %v6210 = vld [vmem:[#allocation8 + $0x358] sm:$0xff]
        %v6211 = vld [vmem:[#allocation8 + $0x360] sm:$0xff]
        %v6212 = vld [vmem:[#allocation8 + $0x368] sm:$0xff]
        %v6213 = vld [vmem:[#allocation8 + $0x370] sm:$0xff]
        %v6214 = vld [vmem:[#allocation8 + $0x378] sm:$0xff]
        %v6215 = vld [vmem:[#allocation8 + $0x380] sm:$0xff]
        %v6216 = vld [vmem:[#allocation8 + $0x388] sm:$0xff]
        %v6217 = vld [vmem:[#allocation8 + $0x390] sm:$0xff]
        %v6218 = vld [vmem:[#allocation8 + $0x398] sm:$0xff]
        %v6219 = vld [vmem:[#allocation8 + $0x3a0] sm:$0xff]
        %v6220 = vld [vmem:[#allocation8 + $0x3a8] sm:$0xff]
        %v6221 = vld [vmem:[#allocation8 + $0x3b0] sm:$0xff]
        %v6222 = vld [vmem:[#allocation8 + $0x3b8] sm:$0xff]
        %v6223 = vld [vmem:[#allocation8 + $0x3c0] sm:$0xff]
        %v6224 = vld [vmem:[#allocation8 + $0x3c8] sm:$0xff]
        %v6225 = vld [vmem:[#allocation8 + $0x3d0] sm:$0xff]
        %v6226 = vld [vmem:[#allocation8 + $0x3d8] sm:$0xff]
        %v6227 = vld [vmem:[#allocation8 + $0x3e0] sm:$0xff]
        %v6228 = vld [vmem:[#allocation8 + $0x3e8] sm:$0xff]
        %v6229 = vld [vmem:[#allocation8 + $0x3f0] sm:$0xff]
        %v6230 = vld [vmem:[#allocation8 + $0x3f8] sm:$0xff]
        %v6231 = vld [vmem:[%s8] sm:$0xf]
        %v6360 = vunpack.c.l.b16 %v6103
        %v6361 = vunpack.c.h.b16 %v6103
        %v6362 = vunpack.c.l.b16 %v6104
        %v6363 = vunpack.c.h.b16 %v6104
        %v6364 = vunpack.c.l.b16 %v6105
        %v6365 = vunpack.c.h.b16 %v6105
        %v6366 = vunpack.c.l.b16 %v6106
        %v6367 = vunpack.c.h.b16 %v6106
        %v6368 = vunpack.c.l.b16 %v6107
        %v6369 = vunpack.c.h.b16 %v6107
        %v6370 = vunpack.c.l.b16 %v6108
        %v6371 = vunpack.c.h.b16 %v6108
        %v6372 = vunpack.c.l.b16 %v6109
        %v6373 = vunpack.c.h.b16 %v6109
        %v6374 = vunpack.c.l.b16 %v6110
        %v6375 = vunpack.c.h.b16 %v6110
        %v6376 = vunpack.c.l.b16 %v6111
        %v6377 = vunpack.c.h.b16 %v6111
        %v6378 = vunpack.c.l.b16 %v6112
        %v6379 = vunpack.c.h.b16 %v6112
        %v6380 = vunpack.c.l.b16 %v6113
        %v6381 = vunpack.c.h.b16 %v6113
        %v6382 = vunpack.c.l.b16 %v6114
        %v6383 = vunpack.c.h.b16 %v6114
        %v6384 = vunpack.c.l.b16 %v6115
        %v6385 = vunpack.c.h.b16 %v6115
        %v6386 = vunpack.c.l.b16 %v6116
        %v6387 = vunpack.c.h.b16 %v6116
        %v6388 = vunpack.c.l.b16 %v6117
        %v6389 = vunpack.c.h.b16 %v6117
        %v6390 = vunpack.c.l.b16 %v6118
        %v6391 = vunpack.c.h.b16 %v6118
        %v6392 = vunpack.c.l.b16 %v6119
        %v6393 = vunpack.c.h.b16 %v6119
        %v6394 = vunpack.c.l.b16 %v6120
        %v6395 = vunpack.c.h.b16 %v6120
        %v6396 = vunpack.c.l.b16 %v6121
        %v6397 = vunpack.c.h.b16 %v6121
        %v6398 = vunpack.c.l.b16 %v6122
        %v6399 = vunpack.c.h.b16 %v6122
        %v6400 = vunpack.c.l.b16 %v6123
        %v6401 = vunpack.c.h.b16 %v6123
        %v6402 = vunpack.c.l.b16 %v6124
        %v6403 = vunpack.c.h.b16 %v6124
        %v6404 = vunpack.c.l.b16 %v6125
        %v6405 = vunpack.c.h.b16 %v6125
        %v6406 = vunpack.c.l.b16 %v6126
        %v6407 = vunpack.c.h.b16 %v6126
        %v6408 = vunpack.c.l.b16 %v6127
        %v6409 = vunpack.c.h.b16 %v6127
        %v6410 = vunpack.c.l.b16 %v6128
        %v6411 = vunpack.c.h.b16 %v6128
        %v6412 = vunpack.c.l.b16 %v6129
        %v6413 = vunpack.c.h.b16 %v6129
        %v6414 = vunpack.c.l.b16 %v6130
        %v6415 = vunpack.c.h.b16 %v6130
        %v6416 = vunpack.c.l.b16 %v6131
        %v6417 = vunpack.c.h.b16 %v6131
        %v6418 = vunpack.c.l.b16 %v6132
        %v6419 = vunpack.c.h.b16 %v6132
        %v6420 = vunpack.c.l.b16 %v6133
        %v6421 = vunpack.c.h.b16 %v6133
        %v6422 = vunpack.c.l.b16 %v6134
        %v6423 = vunpack.c.h.b16 %v6134
        %v6424 = vunpack.c.l.b16 %v6135
        %v6425 = vunpack.c.h.b16 %v6135
        %v6426 = vunpack.c.l.b16 %v6136
        %v6427 = vunpack.c.h.b16 %v6136
        %v6428 = vunpack.c.l.b16 %v6137
        %v6429 = vunpack.c.h.b16 %v6137
        %v6430 = vunpack.c.l.b16 %v6138
        %v6431 = vunpack.c.h.b16 %v6138
        %v6432 = vunpack.c.l.b16 %v6139
        %v6433 = vunpack.c.h.b16 %v6139
        %v6434 = vunpack.c.l.b16 %v6140
        %v6435 = vunpack.c.h.b16 %v6140
        %v6436 = vunpack.c.l.b16 %v6141
        %v6437 = vunpack.c.h.b16 %v6141
        %v6438 = vunpack.c.l.b16 %v6142
        %v6439 = vunpack.c.h.b16 %v6142
        %v6440 = vunpack.c.l.b16 %v6143
        %v6441 = vunpack.c.h.b16 %v6143
        %v6442 = vunpack.c.l.b16 %v6144
        %v6443 = vunpack.c.h.b16 %v6144
        %v6444 = vunpack.c.l.b16 %v6145
        %v6445 = vunpack.c.h.b16 %v6145
        %v6446 = vunpack.c.l.b16 %v6146
        %v6447 = vunpack.c.h.b16 %v6146
        %v6448 = vunpack.c.l.b16 %v6147
        %v6449 = vunpack.c.h.b16 %v6147
        %v6450 = vunpack.c.l.b16 %v6148
        %v6451 = vunpack.c.h.b16 %v6148
        %v6452 = vunpack.c.l.b16 %v6149
        %v6453 = vunpack.c.h.b16 %v6149
        %v6454 = vunpack.c.l.b16 %v6150
        %v6455 = vunpack.c.h.b16 %v6150
        %v6456 = vunpack.c.l.b16 %v6151
        %v6457 = vunpack.c.h.b16 %v6151
        %v6458 = vunpack.c.l.b16 %v6152
        %v6459 = vunpack.c.h.b16 %v6152
        %v6460 = vunpack.c.l.b16 %v6153
        %v6461 = vunpack.c.h.b16 %v6153
        %v6462 = vunpack.c.l.b16 %v6154
        %v6463 = vunpack.c.h.b16 %v6154
        %v6464 = vunpack.c.l.b16 %v6155
        %v6465 = vunpack.c.h.b16 %v6155
        %v6466 = vunpack.c.l.b16 %v6156
        %v6467 = vunpack.c.h.b16 %v6156
        %v6468 = vunpack.c.l.b16 %v6157
        %v6469 = vunpack.c.h.b16 %v6157
        %v6470 = vunpack.c.l.b16 %v6158
        %v6471 = vunpack.c.h.b16 %v6158
        %v6472 = vunpack.c.l.b16 %v6159
        %v6473 = vunpack.c.h.b16 %v6159
        %v6474 = vunpack.c.l.b16 %v6160
        %v6475 = vunpack.c.h.b16 %v6160
        %v6476 = vunpack.c.l.b16 %v6161
        %v6477 = vunpack.c.h.b16 %v6161
        %v6478 = vunpack.c.l.b16 %v6162
        %v6479 = vunpack.c.h.b16 %v6162
        %v6480 = vunpack.c.l.b16 %v6163
        %v6481 = vunpack.c.h.b16 %v6163
        %v6482 = vunpack.c.l.b16 %v6164
        %v6483 = vunpack.c.h.b16 %v6164
        %v6484 = vunpack.c.l.b16 %v6165
        %v6485 = vunpack.c.h.b16 %v6165
        %v6486 = vunpack.c.l.b16 %v6166
        %v6487 = vunpack.c.h.b16 %v6166
        %v6488 = vunpack.c.l.b16 %v6167
        %v6489 = vunpack.c.h.b16 %v6167
        %v6490 = vunpack.c.l.b16 %v6168
        %v6491 = vunpack.c.h.b16 %v6168
        %v6492 = vunpack.c.l.b16 %v6169
        %v6493 = vunpack.c.h.b16 %v6169
        %v6494 = vunpack.c.l.b16 %v6170
        %v6495 = vunpack.c.h.b16 %v6170
        %v6496 = vunpack.c.l.b16 %v6171
        %v6497 = vunpack.c.h.b16 %v6171
        %v6498 = vunpack.c.l.b16 %v6172
        %v6499 = vunpack.c.h.b16 %v6172
        %v6500 = vunpack.c.l.b16 %v6173
        %v6501 = vunpack.c.h.b16 %v6173
        %v6502 = vunpack.c.l.b16 %v6174
        %v6503 = vunpack.c.h.b16 %v6174
        %v6504 = vunpack.c.l.b16 %v6175
        %v6505 = vunpack.c.h.b16 %v6175
        %v6506 = vunpack.c.l.b16 %v6176
        %v6507 = vunpack.c.h.b16 %v6176
        %v6508 = vunpack.c.l.b16 %v6177
        %v6509 = vunpack.c.h.b16 %v6177
        %v6510 = vunpack.c.l.b16 %v6178
        %v6511 = vunpack.c.h.b16 %v6178
        %v6512 = vunpack.c.l.b16 %v6179
        %v6513 = vunpack.c.h.b16 %v6179
        %v6514 = vunpack.c.l.b16 %v6180
        %v6515 = vunpack.c.h.b16 %v6180
        %v6516 = vunpack.c.l.b16 %v6181
        %v6517 = vunpack.c.h.b16 %v6181
        %v6518 = vunpack.c.l.b16 %v6182
        %v6519 = vunpack.c.h.b16 %v6182
        %v6520 = vunpack.c.l.b16 %v6183
        %v6521 = vunpack.c.h.b16 %v6183
        %v6522 = vunpack.c.l.b16 %v6184
        %v6523 = vunpack.c.h.b16 %v6184
        %v6524 = vunpack.c.l.b16 %v6185
        %v6525 = vunpack.c.h.b16 %v6185
        %v6526 = vunpack.c.l.b16 %v6186
        %v6527 = vunpack.c.h.b16 %v6186
        %v6528 = vunpack.c.l.b16 %v6187
        %v6529 = vunpack.c.h.b16 %v6187
        %v6530 = vunpack.c.l.b16 %v6188
        %v6531 = vunpack.c.h.b16 %v6188
        %v6532 = vunpack.c.l.b16 %v6189
        %v6533 = vunpack.c.h.b16 %v6189
        %v6534 = vunpack.c.l.b16 %v6190
        %v6535 = vunpack.c.h.b16 %v6190
        %v6536 = vunpack.c.l.b16 %v6191
        %v6537 = vunpack.c.h.b16 %v6191
        %v6538 = vunpack.c.l.b16 %v6192
        %v6539 = vunpack.c.h.b16 %v6192
        %v6540 = vunpack.c.l.b16 %v6193
        %v6541 = vunpack.c.h.b16 %v6193
        %v6542 = vunpack.c.l.b16 %v6194
        %v6543 = vunpack.c.h.b16 %v6194
        %v6544 = vunpack.c.l.b16 %v6195
        %v6545 = vunpack.c.h.b16 %v6195
        %v6546 = vunpack.c.l.b16 %v6196
        %v6547 = vunpack.c.h.b16 %v6196
        %v6548 = vunpack.c.l.b16 %v6197
        %v6549 = vunpack.c.h.b16 %v6197
        %v6550 = vunpack.c.l.b16 %v6198
        %v6551 = vunpack.c.h.b16 %v6198
        %v6552 = vunpack.c.l.b16 %v6199
        %v6553 = vunpack.c.h.b16 %v6199
        %v6554 = vunpack.c.l.b16 %v6200
        %v6555 = vunpack.c.h.b16 %v6200
        %v6556 = vunpack.c.l.b16 %v6201
        %v6557 = vunpack.c.h.b16 %v6201
        %v6558 = vunpack.c.l.b16 %v6202
        %v6559 = vunpack.c.h.b16 %v6202
        %v6560 = vunpack.c.l.b16 %v6203
        %v6561 = vunpack.c.h.b16 %v6203
        %v6562 = vunpack.c.l.b16 %v6204
        %v6563 = vunpack.c.h.b16 %v6204
        %v6564 = vunpack.c.l.b16 %v6205
        %v6565 = vunpack.c.h.b16 %v6205
        %v6566 = vunpack.c.l.b16 %v6206
        %v6567 = vunpack.c.h.b16 %v6206
        %v6568 = vunpack.c.l.b16 %v6207
        %v6569 = vunpack.c.h.b16 %v6207
        %v6570 = vunpack.c.l.b16 %v6208
        %v6571 = vunpack.c.h.b16 %v6208
        %v6572 = vunpack.c.l.b16 %v6209
        %v6573 = vunpack.c.h.b16 %v6209
        %v6574 = vunpack.c.l.b16 %v6210
        %v6575 = vunpack.c.h.b16 %v6210
        %v6576 = vunpack.c.l.b16 %v6211
        %v6577 = vunpack.c.h.b16 %v6211
        %v6578 = vunpack.c.l.b16 %v6212
        %v6579 = vunpack.c.h.b16 %v6212
        %v6580 = vunpack.c.l.b16 %v6213
        %v6581 = vunpack.c.h.b16 %v6213
        %v6582 = vunpack.c.l.b16 %v6214
        %v6583 = vunpack.c.h.b16 %v6214
        %v6584 = vunpack.c.l.b16 %v6215
        %v6585 = vunpack.c.h.b16 %v6215
        %v6586 = vunpack.c.l.b16 %v6216
        %v6587 = vunpack.c.h.b16 %v6216
        %v6588 = vunpack.c.l.b16 %v6217
        %v6589 = vunpack.c.h.b16 %v6217
        %v6590 = vunpack.c.l.b16 %v6218
        %v6591 = vunpack.c.h.b16 %v6218
        %v6592 = vunpack.c.l.b16 %v6219
        %v6593 = vunpack.c.h.b16 %v6219
        %v6594 = vunpack.c.l.b16 %v6220
        %v6595 = vunpack.c.h.b16 %v6220
        %v6596 = vunpack.c.l.b16 %v6221
        %v6597 = vunpack.c.h.b16 %v6221
        %v6598 = vunpack.c.l.b16 %v6222
        %v6599 = vunpack.c.h.b16 %v6222
        %v6600 = vunpack.c.l.b16 %v6223
        %v6601 = vunpack.c.h.b16 %v6223
        %v6602 = vunpack.c.l.b16 %v6224
        %v6603 = vunpack.c.h.b16 %v6224
        %v6604 = vunpack.c.l.b16 %v6225
        %v6605 = vunpack.c.h.b16 %v6225
        %v6606 = vunpack.c.l.b16 %v6226
        %v6607 = vunpack.c.h.b16 %v6226
        %v6608 = vunpack.c.l.b16 %v6227
        %v6609 = vunpack.c.h.b16 %v6227
        %v6610 = vunpack.c.l.b16 %v6228
        %v6611 = vunpack.c.h.b16 %v6228
        %v6612 = vunpack.c.l.b16 %v6229
        %v6613 = vunpack.c.h.b16 %v6229
        %v6614 = vunpack.c.l.b16 %v6230
        %v6615 = vunpack.c.h.b16 %v6230
        %v6616 = vpack.c.b16 %v6364, %v6360
        %v6617 = vpack.c.b16 %v6365, %v6361
        %v6618 = vpack.c.b16 %v6366, %v6362
        %v6619 = vpack.c.b16 %v6367, %v6363
        %v6620 = vpack.c.b16 %v6372, %v6368
        %v6621 = vpack.c.b16 %v6373, %v6369
        %v6622 = vpack.c.b16 %v6374, %v6370
        %v6623 = vpack.c.b16 %v6375, %v6371
        %v6624 = vpack.c.b16 %v6380, %v6376
        %v6625 = vpack.c.b16 %v6381, %v6377
        %v6626 = vpack.c.b16 %v6382, %v6378
        %v6627 = vpack.c.b16 %v6383, %v6379
        %v6628 = vpack.c.b16 %v6388, %v6384
        %v6629 = vpack.c.b16 %v6389, %v6385
        %v6630 = vpack.c.b16 %v6390, %v6386
        %v6631 = vpack.c.b16 %v6391, %v6387
        %v6632 = vpack.c.b16 %v6396, %v6392
        %v6633 = vpack.c.b16 %v6397, %v6393
        %v6634 = vpack.c.b16 %v6398, %v6394
        %v6635 = vpack.c.b16 %v6399, %v6395
        %v6636 = vpack.c.b16 %v6404, %v6400
        %v6637 = vpack.c.b16 %v6405, %v6401
        %v6638 = vpack.c.b16 %v6406, %v6402
        %v6639 = vpack.c.b16 %v6407, %v6403
        %v6640 = vpack.c.b16 %v6412, %v6408
        %v6641 = vpack.c.b16 %v6413, %v6409
        %v6642 = vpack.c.b16 %v6414, %v6410
        %v6643 = vpack.c.b16 %v6415, %v6411
        %v6644 = vpack.c.b16 %v6420, %v6416
        %v6645 = vpack.c.b16 %v6421, %v6417
        %v6646 = vpack.c.b16 %v6422, %v6418
        %v6647 = vpack.c.b16 %v6423, %v6419
        %v6648 = vpack.c.b16 %v6428, %v6424
        %v6649 = vpack.c.b16 %v6429, %v6425
        %v6650 = vpack.c.b16 %v6430, %v6426
        %v6651 = vpack.c.b16 %v6431, %v6427
        %v6652 = vpack.c.b16 %v6436, %v6432
        %v6653 = vpack.c.b16 %v6437, %v6433
        %v6654 = vpack.c.b16 %v6438, %v6434
        %v6655 = vpack.c.b16 %v6439, %v6435
        %v6656 = vpack.c.b16 %v6444, %v6440
        %v6657 = vpack.c.b16 %v6445, %v6441
        %v6658 = vpack.c.b16 %v6446, %v6442
        %v6659 = vpack.c.b16 %v6447, %v6443
        %v6660 = vpack.c.b16 %v6452, %v6448
        %v6661 = vpack.c.b16 %v6453, %v6449
        %v6662 = vpack.c.b16 %v6454, %v6450
        %v6663 = vpack.c.b16 %v6455, %v6451
        %v6664 = vpack.c.b16 %v6460, %v6456
        %v6665 = vpack.c.b16 %v6461, %v6457
        %v6666 = vpack.c.b16 %v6462, %v6458
        %v6667 = vpack.c.b16 %v6463, %v6459
        %v6668 = vpack.c.b16 %v6468, %v6464
        %v6669 = vpack.c.b16 %v6469, %v6465
        %v6670 = vpack.c.b16 %v6470, %v6466
        %v6671 = vpack.c.b16 %v6471, %v6467
        %v6672 = vpack.c.b16 %v6476, %v6472
        %v6673 = vpack.c.b16 %v6477, %v6473
        %v6674 = vpack.c.b16 %v6478, %v6474
        %v6675 = vpack.c.b16 %v6479, %v6475
        %v6676 = vpack.c.b16 %v6484, %v6480
        %v6677 = vpack.c.b16 %v6485, %v6481
        %v6678 = vpack.c.b16 %v6486, %v6482
        %v6679 = vpack.c.b16 %v6487, %v6483
        %v6680 = vpack.c.b16 %v6492, %v6488
        %v6681 = vpack.c.b16 %v6493, %v6489
        %v6682 = vpack.c.b16 %v6494, %v6490
        %v6683 = vpack.c.b16 %v6495, %v6491
        %v6684 = vpack.c.b16 %v6500, %v6496
        %v6685 = vpack.c.b16 %v6501, %v6497
        %v6686 = vpack.c.b16 %v6502, %v6498
        %v6687 = vpack.c.b16 %v6503, %v6499
        %v6688 = vpack.c.b16 %v6508, %v6504
        %v6689 = vpack.c.b16 %v6509, %v6505
        %v6690 = vpack.c.b16 %v6510, %v6506
        %v6691 = vpack.c.b16 %v6511, %v6507
        %v6692 = vpack.c.b16 %v6516, %v6512
        %v6693 = vpack.c.b16 %v6517, %v6513
        %v6694 = vpack.c.b16 %v6518, %v6514
        %v6695 = vpack.c.b16 %v6519, %v6515
        %v6696 = vpack.c.b16 %v6524, %v6520
        %v6697 = vpack.c.b16 %v6525, %v6521
        %v6698 = vpack.c.b16 %v6526, %v6522
        %v6699 = vpack.c.b16 %v6527, %v6523
        %v6700 = vpack.c.b16 %v6532, %v6528
        %v6701 = vpack.c.b16 %v6533, %v6529
        %v6702 = vpack.c.b16 %v6534, %v6530
        %v6703 = vpack.c.b16 %v6535, %v6531
        %v6704 = vpack.c.b16 %v6540, %v6536
        %v6705 = vpack.c.b16 %v6541, %v6537
        %v6706 = vpack.c.b16 %v6542, %v6538
        %v6707 = vpack.c.b16 %v6543, %v6539
        %v6708 = vpack.c.b16 %v6548, %v6544
        %v6709 = vpack.c.b16 %v6549, %v6545
        %v6710 = vpack.c.b16 %v6550, %v6546
        %v6711 = vpack.c.b16 %v6551, %v6547
        %v6712 = vpack.c.b16 %v6556, %v6552
        %v6713 = vpack.c.b16 %v6557, %v6553
        %v6714 = vpack.c.b16 %v6558, %v6554
        %v6715 = vpack.c.b16 %v6559, %v6555
        %v6716 = vpack.c.b16 %v6564, %v6560
        %v6717 = vpack.c.b16 %v6565, %v6561
        %v6718 = vpack.c.b16 %v6566, %v6562
        %v6719 = vpack.c.b16 %v6567, %v6563
        %v6720 = vpack.c.b16 %v6572, %v6568
        %v6721 = vpack.c.b16 %v6573, %v6569
        %v6722 = vpack.c.b16 %v6574, %v6570
        %v6723 = vpack.c.b16 %v6575, %v6571
        %v6724 = vpack.c.b16 %v6580, %v6576
        %v6725 = vpack.c.b16 %v6581, %v6577
        %v6726 = vpack.c.b16 %v6582, %v6578
        %v6727 = vpack.c.b16 %v6583, %v6579
        %v6728 = vpack.c.b16 %v6588, %v6584
        %v6729 = vpack.c.b16 %v6589, %v6585
        %v6730 = vpack.c.b16 %v6590, %v6586
        %v6731 = vpack.c.b16 %v6591, %v6587
        %v6732 = vpack.c.b16 %v6596, %v6592
        %v6733 = vpack.c.b16 %v6597, %v6593
        %v6734 = vpack.c.b16 %v6598, %v6594
        %v6735 = vpack.c.b16 %v6599, %v6595
        %v6736 = vpack.c.b16 %v6604, %v6600
        %v6737 = vpack.c.b16 %v6605, %v6601
        %v6738 = vpack.c.b16 %v6606, %v6602
        %v6739 = vpack.c.b16 %v6607, %v6603
        %v6740 = vpack.c.b16 %v6612, %v6608
        %v6741 = vpack.c.b16 %v6613, %v6609
        %v6742 = vpack.c.b16 %v6614, %v6610
        %v6743 = vpack.c.b16 %v6615, %v6611
        %v6873 = vlaneseq
        %v6874 = vshrl.u32 %v6873, 7
        %v6875 = vsub.s32 0, %v6874
        %v6876 = vrot.slane %v6231, %v6875
        %v6877 = vlaneseq
        %v6878 = vshrl.u32 %v6877, 7
        %v6879 = vsub.s32 1, %v6878
        %v6880 = vrot.slane %v6231, %v6879
        %v6881 = vlaneseq
        %v6882 = vshrl.u32 %v6881, 7
        %v6883 = vsub.s32 2, %v6882
        %v6884 = vrot.slane %v6231, %v6883
        %v6885 = vlaneseq
        %v6886 = vshrl.u32 %v6885, 7
        %v6887 = vsub.s32 3, %v6886
        %v6888 = vrot.slane %v6231, %v6887
        %6893 = vmatprep.subr.bf16.mxu0 %v6645
        %6894 = vmatpush1.bf16.msra.mxu0 %v6644
        %6895 = vmatprep.subr.bf16.mxu0 %v6641
        %6896 = vmatpush1.bf16.msra.mxu0 %v6640
        %6897 = vmatprep.subr.bf16.mxu0 %v6637
        %6898 = vmatpush1.bf16.msra.mxu0 %v6636
        %6899 = vmatprep.subr.bf16.mxu0 %v6633
        %6900 = vmatpush1.bf16.msra.mxu0 %v6632
        %6901 = vmatprep.subr.bf16.mxu0 %v6629
        %6902 = vmatpush1.bf16.msra.mxu0 %v6628
        %6903 = vmatprep.subr.bf16.mxu0 %v6625
        %6904 = vmatpush1.bf16.msra.mxu0 %v6624
        %6905 = vmatprep.subr.bf16.mxu0 %v6621
        %6906 = vmatpush1.bf16.msra.mxu0 %v6620
        %6907 = vmatprep.subr.bf16.mxu0 %v6617
        %6908 = vmatpush1.bf16.msra.mxu0 %v6616
        %6909 = vmatprep.subr.bf16.mxu0 %v6677
        %6910 = vmatpush2.bf16.msra.mxu0 %v6676
        %6911 = vmatprep.subr.bf16.mxu0 %v6673
        %6912 = vmatpush2.bf16.msra.mxu0 %v6672
        %6913 = vmatprep.subr.bf16.mxu0 %v6669
        %6914 = vmatpush2.bf16.msra.mxu0 %v6668
        %6915 = vmatprep.subr.bf16.mxu0 %v6665
        %6916 = vmatpush2.bf16.msra.mxu0 %v6664
        %6917 = vmatprep.subr.bf16.mxu0 %v6661
        %6918 = vmatpush2.bf16.msra.mxu0 %v6660
        %6919 = vmatprep.subr.bf16.mxu0 %v6657
        %6920 = vmatpush2.bf16.msra.mxu0 %v6656
        %6921 = vmatprep.subr.bf16.mxu0 %v6653
        %6922 = vmatpush2.bf16.msra.mxu0 %v6652
        %6923 = vmatprep.subr.bf16.mxu0 %v6649
        %6924 = vmatpush2.bf16.msra.mxu0 %v6648
        %6925 = vmatprep.mubr.bf16.mxu0 %v6100
        %6926 = vmatmul.mubr.bf16.gmra.mxu0 %v6099
        %v6927 = vpop.f32.mrf.mxu0
        %v6928 = vadd.f32 %v6876, %v6927
        %v6929 = vpop.f32.mrf.mxu0
        %v6930 = vadd.f32 %v6880, %v6929
        %v6931 = vpop.f32.mrf.mxu0
        %v6932 = vpop.f32.mrf.mxu0
        %6933 = vdwg.mxu0
        %6934 = vmatprep.subr.bf16.mxu0 %v6709
        %6935 = vmatpush1.bf16.msra.mxu0 %v6708
        %6936 = vmatprep.subr.bf16.mxu0 %v6705
        %6937 = vmatpush1.bf16.msra.mxu0 %v6704
        %6938 = vmatprep.subr.bf16.mxu0 %v6701
        %6939 = vmatpush1.bf16.msra.mxu0 %v6700
        %6940 = vmatprep.subr.bf16.mxu0 %v6697
        %6941 = vmatpush1.bf16.msra.mxu0 %v6696
        %6942 = vmatprep.subr.bf16.mxu0 %v6693
        %6943 = vmatpush1.bf16.msra.mxu0 %v6692
        %6944 = vmatprep.subr.bf16.mxu0 %v6689
        %6945 = vmatpush1.bf16.msra.mxu0 %v6688
        %6946 = vmatprep.subr.bf16.mxu0 %v6685
        %6947 = vmatpush1.bf16.msra.mxu0 %v6684
        %6948 = vmatprep.subr.bf16.mxu0 %v6681
        %6949 = vmatpush1.bf16.msra.mxu0 %v6680
        %6950 = vmatprep.subr.bf16.mxu0 %v6741
        %6951 = vmatpush2.bf16.msra.mxu0 %v6740
        %6952 = vmatprep.subr.bf16.mxu0 %v6737
        %6953 = vmatpush2.bf16.msra.mxu0 %v6736
        %6954 = vmatprep.subr.bf16.mxu0 %v6733
        %6955 = vmatpush2.bf16.msra.mxu0 %v6732
        %6956 = vmatprep.subr.bf16.mxu0 %v6729
        %6957 = vmatpush2.bf16.msra.mxu0 %v6728
        %6958 = vmatprep.subr.bf16.mxu0 %v6725
        %6959 = vmatpush2.bf16.msra.mxu0 %v6724
        %6960 = vmatprep.subr.bf16.mxu0 %v6721
        %6961 = vmatpush2.bf16.msra.mxu0 %v6720
        %6962 = vmatprep.subr.bf16.mxu0 %v6717
        %6963 = vmatpush2.bf16.msra.mxu0 %v6716
        %6964 = vmatprep.subr.bf16.mxu0 %v6713
        %6965 = vmatpush2.bf16.msra.mxu0 %v6712
        %6966 = vmatprep.mubr.bf16.mxu0 %v6102
        %6967 = vmatmul.mubr.bf16.gmra.mxu0 %v6101
        %v6968 = vpop.f32.mrf.mxu0
        %v6969 = vadd.f32 %v6928, %v6968
        %v6970 = vpop.f32.mrf.mxu0
        %v6971 = vadd.f32 %v6930, %v6970
        %v6972 = vpop.f32.mrf.mxu0
        %v6973 = vpop.f32.mrf.mxu0
        %6974 = vdwg.mxu0
        %6975 = vmatprep.subr.bf16.mxu0 %v6647
        %6976 = vmatpush1.bf16.msra.mxu0 %v6646
        %6977 = vmatprep.subr.bf16.mxu0 %v6643
        %6978 = vmatpush1.bf16.msra.mxu0 %v6642
        %6979 = vmatprep.subr.bf16.mxu0 %v6639
        %6980 = vmatpush1.bf16.msra.mxu0 %v6638
        %6981 = vmatprep.subr.bf16.mxu0 %v6635
        %6982 = vmatpush1.bf16.msra.mxu0 %v6634
        %6983 = vmatprep.subr.bf16.mxu0 %v6631
        %6984 = vmatpush1.bf16.msra.mxu0 %v6630
        %6985 = vmatprep.subr.bf16.mxu0 %v6627
        %6986 = vmatpush1.bf16.msra.mxu0 %v6626
        %6987 = vmatprep.subr.bf16.mxu0 %v6623
        %6988 = vmatpush1.bf16.msra.mxu0 %v6622
        %6989 = vmatprep.subr.bf16.mxu0 %v6619
        %6990 = vmatpush1.bf16.msra.mxu0 %v6618
        %6991 = vmatprep.subr.bf16.mxu0 %v6679
        %6992 = vmatpush2.bf16.msra.mxu0 %v6678
        %6993 = vmatprep.subr.bf16.mxu0 %v6675
        %6994 = vmatpush2.bf16.msra.mxu0 %v6674
        %6995 = vmatprep.subr.bf16.mxu0 %v6671
        %6996 = vmatpush2.bf16.msra.mxu0 %v6670
        %6997 = vmatprep.subr.bf16.mxu0 %v6667
        %6998 = vmatpush2.bf16.msra.mxu0 %v6666
        %6999 = vmatprep.subr.bf16.mxu0 %v6663
        %7000 = vmatpush2.bf16.msra.mxu0 %v6662
        %7001 = vmatprep.subr.bf16.mxu0 %v6659
        %7002 = vmatpush2.bf16.msra.mxu0 %v6658
        %7003 = vmatprep.subr.bf16.mxu0 %v6655
        %7004 = vmatpush2.bf16.msra.mxu0 %v6654
        %7005 = vmatprep.subr.bf16.mxu0 %v6651
        %7006 = vmatpush2.bf16.msra.mxu0 %v6650
        %7007 = vmatprep.mubr.bf16.mxu0 %v6100
        %7008 = vmatmul.mubr.bf16.gmra.mxu0 %v6099
        %v7009 = vpop.f32.mrf.mxu0
        %v7010 = vadd.f32 %v6884, %v7009
        %v7011 = vpop.f32.mrf.mxu0
        %v7012 = vadd.f32 %v6888, %v7011
        %v7013 = vpop.f32.mrf.mxu0
        %v7014 = vpop.f32.mrf.mxu0
        %7015 = vdwg.mxu0
        %7016 = vmatprep.subr.bf16.mxu0 %v6711
        %7017 = vmatpush1.bf16.msra.mxu0 %v6710
        %7018 = vmatprep.subr.bf16.mxu0 %v6707
        %7019 = vmatpush1.bf16.msra.mxu0 %v6706
        %7020 = vmatprep.subr.bf16.mxu0 %v6703
        %7021 = vmatpush1.bf16.msra.mxu0 %v6702
        %7022 = vmatprep.subr.bf16.mxu0 %v6699
        %7023 = vmatpush1.bf16.msra.mxu0 %v6698
        %7024 = vmatprep.subr.bf16.mxu0 %v6695
        %7025 = vmatpush1.bf16.msra.mxu0 %v6694
        %7026 = vmatprep.subr.bf16.mxu0 %v6691
        %7027 = vmatpush1.bf16.msra.mxu0 %v6690
        %7028 = vmatprep.subr.bf16.mxu0 %v6687
        %7029 = vmatpush1.bf16.msra.mxu0 %v6686
        %7030 = vmatprep.subr.bf16.mxu0 %v6683
        %7031 = vmatpush1.bf16.msra.mxu0 %v6682
        %7032 = vmatprep.subr.bf16.mxu0 %v6743
        %7033 = vmatpush2.bf16.msra.mxu0 %v6742
        %7034 = vmatprep.subr.bf16.mxu0 %v6739
        %7035 = vmatpush2.bf16.msra.mxu0 %v6738
        %7036 = vmatprep.subr.bf16.mxu0 %v6735
        %7037 = vmatpush2.bf16.msra.mxu0 %v6734
        %7038 = vmatprep.subr.bf16.mxu0 %v6731
        %7039 = vmatpush2.bf16.msra.mxu0 %v6730
        %7040 = vmatprep.subr.bf16.mxu0 %v6727
        %7041 = vmatpush2.bf16.msra.mxu0 %v6726
        %7042 = vmatprep.subr.bf16.mxu0 %v6723
        %7043 = vmatpush2.bf16.msra.mxu0 %v6722
        %7044 = vmatprep.subr.bf16.mxu0 %v6719
        %7045 = vmatpush2.bf16.msra.mxu0 %v6718
        %7046 = vmatprep.subr.bf16.mxu0 %v6715
        %7047 = vmatpush2.bf16.msra.mxu0 %v6714
        %7048 = vmatprep.mubr.bf16.mxu0 %v6102
        %7049 = vmatmul.mubr.bf16.gmra.mxu0 %v6101
        %v7050 = vpop.f32.mrf.mxu0
        %v7051 = vadd.f32 %v7010, %v7050
        %v7052 = vpop.f32.mrf.mxu0
        %v7053 = vadd.f32 %v7012, %v7052
        %v7054 = vpop.f32.mrf.mxu0
        %v7055 = vpop.f32.mrf.mxu0
        %7056 = vdwg.mxu0
        %v7057 = vmax.f32 %v6969, 0.0
        %v7058 = vmax.f32 %v6971, 0.0
        %v7059 = vmax.f32 %v7051, 0.0
        %v7060 = vmax.f32 %v7053, 0.0
        %v7061 = vpack.c.bf16 %v7057, %v7057
        %v7062 = vpack.c.bf16 %v7058, %v7058
        %v7063 = vpack.c.bf16 %v7059, %v7059
        %v7064 = vpack.c.bf16 %v7060, %v7060
        %v7065 = vld [vmem:[#allocation10] sm:$0xff]
        %v7066 = vld [vmem:[#allocation10 + $0x8] sm:$0xff]
        %v7067 = vld [vmem:[#allocation10 + $0x10] sm:$0xff]
        %v7068 = vld [vmem:[#allocation10 + $0x18] sm:$0xff]
        %v7069 = vld [vmem:[#allocation10 + $0x20] sm:$0xff]
        %v7070 = vld [vmem:[#allocation10 + $0x28] sm:$0xff]
        %v7071 = vld [vmem:[#allocation10 + $0x30] sm:$0xff]
        %v7072 = vld [vmem:[#allocation10 + $0x38] sm:$0xff]
        %v7073 = vld [vmem:[#allocation10 + $0x40] sm:$0xff]
        %v7074 = vld [vmem:[#allocation10 + $0x48] sm:$0xff]
        %v7075 = vld [vmem:[#allocation10 + $0x50] sm:$0xff]
        %v7076 = vld [vmem:[#allocation10 + $0x58] sm:$0xff]
        %v7077 = vld [vmem:[#allocation10 + $0x60] sm:$0xff]
        %v7078 = vld [vmem:[#allocation10 + $0x68] sm:$0xff]
        %v7079 = vld [vmem:[#allocation10 + $0x70] sm:$0xff]
        %v7080 = vld [vmem:[#allocation10 + $0x78] sm:$0xff]
        %v7081 = vld [vmem:[#allocation10 + $0x80] sm:$0xff]
        %v7082 = vld [vmem:[#allocation10 + $0x88] sm:$0xff]
        %v7083 = vld [vmem:[#allocation10 + $0x90] sm:$0xff]
        %v7084 = vld [vmem:[#allocation10 + $0x98] sm:$0xff]
        %v7085 = vld [vmem:[#allocation10 + $0xa0] sm:$0xff]
        %v7086 = vld [vmem:[#allocation10 + $0xa8] sm:$0xff]
        %v7087 = vld [vmem:[#allocation10 + $0xb0] sm:$0xff]
        %v7088 = vld [vmem:[#allocation10 + $0xb8] sm:$0xff]
        %v7089 = vld [vmem:[#allocation10 + $0xc0] sm:$0xff]
        %v7090 = vld [vmem:[#allocation10 + $0xc8] sm:$0xff]
        %v7091 = vld [vmem:[#allocation10 + $0xd0] sm:$0xff]
        %v7092 = vld [vmem:[#allocation10 + $0xd8] sm:$0xff]
        %v7093 = vld [vmem:[#allocation10 + $0xe0] sm:$0xff]
        %v7094 = vld [vmem:[#allocation10 + $0xe8] sm:$0xff]
        %v7095 = vld [vmem:[#allocation10 + $0xf0] sm:$0xff]
        %v7096 = vld [vmem:[#allocation10 + $0xf8] sm:$0xff]
        %v7097 = vld [vmem:[#allocation10 + $0x100] sm:$0xff]
        %v7098 = vld [vmem:[#allocation10 + $0x108] sm:$0xff]
        %v7099 = vld [vmem:[#allocation10 + $0x110] sm:$0xff]
        %v7100 = vld [vmem:[#allocation10 + $0x118] sm:$0xff]
        %v7101 = vld [vmem:[#allocation10 + $0x120] sm:$0xff]
        %v7102 = vld [vmem:[#allocation10 + $0x128] sm:$0xff]
        %v7103 = vld [vmem:[#allocation10 + $0x130] sm:$0xff]
        %v7104 = vld [vmem:[#allocation10 + $0x138] sm:$0xff]
        %v7105 = vld [vmem:[#allocation10 + $0x140] sm:$0xff]
        %v7106 = vld [vmem:[#allocation10 + $0x148] sm:$0xff]
        %v7107 = vld [vmem:[#allocation10 + $0x150] sm:$0xff]
        %v7108 = vld [vmem:[#allocation10 + $0x158] sm:$0xff]
        %v7109 = vld [vmem:[#allocation10 + $0x160] sm:$0xff]
        %v7110 = vld [vmem:[#allocation10 + $0x168] sm:$0xff]
        %v7111 = vld [vmem:[#allocation10 + $0x170] sm:$0xff]
        %v7112 = vld [vmem:[#allocation10 + $0x178] sm:$0xff]
        %v7113 = vld [vmem:[#allocation10 + $0x180] sm:$0xff]
        %v7114 = vld [vmem:[#allocation10 + $0x188] sm:$0xff]
        %v7115 = vld [vmem:[#allocation10 + $0x190] sm:$0xff]
        %v7116 = vld [vmem:[#allocation10 + $0x198] sm:$0xff]
        %v7117 = vld [vmem:[#allocation10 + $0x1a0] sm:$0xff]
        %v7118 = vld [vmem:[#allocation10 + $0x1a8] sm:$0xff]
        %v7119 = vld [vmem:[#allocation10 + $0x1b0] sm:$0xff]
        %v7120 = vld [vmem:[#allocation10 + $0x1b8] sm:$0xff]
        %v7121 = vld [vmem:[#allocation10 + $0x1c0] sm:$0xff]
        %v7122 = vld [vmem:[#allocation10 + $0x1c8] sm:$0xff]
        %v7123 = vld [vmem:[#allocation10 + $0x1d0] sm:$0xff]
        %v7124 = vld [vmem:[#allocation10 + $0x1d8] sm:$0xff]
        %v7125 = vld [vmem:[#allocation10 + $0x1e0] sm:$0xff]
        %v7126 = vld [vmem:[#allocation10 + $0x1e8] sm:$0xff]
        %v7127 = vld [vmem:[#allocation10 + $0x1f0] sm:$0xff]
        %v7128 = vld [vmem:[#allocation10 + $0x1f8] sm:$0xff]
        %v7129 = vld [vmem:[#allocation10 + $0x200] sm:$0xff]
        %v7130 = vld [vmem:[#allocation10 + $0x208] sm:$0xff]
        %v7131 = vld [vmem:[#allocation10 + $0x210] sm:$0xff]
        %v7132 = vld [vmem:[#allocation10 + $0x218] sm:$0xff]
        %v7133 = vld [vmem:[#allocation10 + $0x220] sm:$0xff]
        %v7134 = vld [vmem:[#allocation10 + $0x228] sm:$0xff]
        %v7135 = vld [vmem:[#allocation10 + $0x230] sm:$0xff]
        %v7136 = vld [vmem:[#allocation10 + $0x238] sm:$0xff]
        %v7137 = vld [vmem:[#allocation10 + $0x240] sm:$0xff]
        %v7138 = vld [vmem:[#allocation10 + $0x248] sm:$0xff]
        %v7139 = vld [vmem:[#allocation10 + $0x250] sm:$0xff]
        %v7140 = vld [vmem:[#allocation10 + $0x258] sm:$0xff]
        %v7141 = vld [vmem:[#allocation10 + $0x260] sm:$0xff]
        %v7142 = vld [vmem:[#allocation10 + $0x268] sm:$0xff]
        %v7143 = vld [vmem:[#allocation10 + $0x270] sm:$0xff]
        %v7144 = vld [vmem:[#allocation10 + $0x278] sm:$0xff]
        %v7145 = vld [vmem:[#allocation10 + $0x280] sm:$0xff]
        %v7146 = vld [vmem:[#allocation10 + $0x288] sm:$0xff]
        %v7147 = vld [vmem:[#allocation10 + $0x290] sm:$0xff]
        %v7148 = vld [vmem:[#allocation10 + $0x298] sm:$0xff]
        %v7149 = vld [vmem:[#allocation10 + $0x2a0] sm:$0xff]
        %v7150 = vld [vmem:[#allocation10 + $0x2a8] sm:$0xff]
        %v7151 = vld [vmem:[#allocation10 + $0x2b0] sm:$0xff]
        %v7152 = vld [vmem:[#allocation10 + $0x2b8] sm:$0xff]
        %v7153 = vld [vmem:[#allocation10 + $0x2c0] sm:$0xff]
        %v7154 = vld [vmem:[#allocation10 + $0x2c8] sm:$0xff]
        %v7155 = vld [vmem:[#allocation10 + $0x2d0] sm:$0xff]
        %v7156 = vld [vmem:[#allocation10 + $0x2d8] sm:$0xff]
        %v7157 = vld [vmem:[#allocation10 + $0x2e0] sm:$0xff]
        %v7158 = vld [vmem:[#allocation10 + $0x2e8] sm:$0xff]
        %v7159 = vld [vmem:[#allocation10 + $0x2f0] sm:$0xff]
        %v7160 = vld [vmem:[#allocation10 + $0x2f8] sm:$0xff]
        %v7161 = vld [vmem:[#allocation10 + $0x300] sm:$0xff]
        %v7162 = vld [vmem:[#allocation10 + $0x308] sm:$0xff]
        %v7163 = vld [vmem:[#allocation10 + $0x310] sm:$0xff]
        %v7164 = vld [vmem:[#allocation10 + $0x318] sm:$0xff]
        %v7165 = vld [vmem:[#allocation10 + $0x320] sm:$0xff]
        %v7166 = vld [vmem:[#allocation10 + $0x328] sm:$0xff]
        %v7167 = vld [vmem:[#allocation10 + $0x330] sm:$0xff]
        %v7168 = vld [vmem:[#allocation10 + $0x338] sm:$0xff]
        %v7169 = vld [vmem:[#allocation10 + $0x340] sm:$0xff]
        %v7170 = vld [vmem:[#allocation10 + $0x348] sm:$0xff]
        %v7171 = vld [vmem:[#allocation10 + $0x350] sm:$0xff]
        %v7172 = vld [vmem:[#allocation10 + $0x358] sm:$0xff]
        %v7173 = vld [vmem:[#allocation10 + $0x360] sm:$0xff]
        %v7174 = vld [vmem:[#allocation10 + $0x368] sm:$0xff]
        %v7175 = vld [vmem:[#allocation10 + $0x370] sm:$0xff]
        %v7176 = vld [vmem:[#allocation10 + $0x378] sm:$0xff]
        %v7177 = vld [vmem:[#allocation10 + $0x380] sm:$0xff]
        %v7178 = vld [vmem:[#allocation10 + $0x388] sm:$0xff]
        %v7179 = vld [vmem:[#allocation10 + $0x390] sm:$0xff]
        %v7180 = vld [vmem:[#allocation10 + $0x398] sm:$0xff]
        %v7181 = vld [vmem:[#allocation10 + $0x3a0] sm:$0xff]
        %v7182 = vld [vmem:[#allocation10 + $0x3a8] sm:$0xff]
        %v7183 = vld [vmem:[#allocation10 + $0x3b0] sm:$0xff]
        %v7184 = vld [vmem:[#allocation10 + $0x3b8] sm:$0xff]
        %v7185 = vld [vmem:[#allocation10 + $0x3c0] sm:$0xff]
        %v7186 = vld [vmem:[#allocation10 + $0x3c8] sm:$0xff]
        %v7187 = vld [vmem:[#allocation10 + $0x3d0] sm:$0xff]
        %v7188 = vld [vmem:[#allocation10 + $0x3d8] sm:$0xff]
        %v7189 = vld [vmem:[#allocation10 + $0x3e0] sm:$0xff]
        %v7190 = vld [vmem:[#allocation10 + $0x3e8] sm:$0xff]
        %v7191 = vld [vmem:[#allocation10 + $0x3f0] sm:$0xff]
        %v7192 = vld [vmem:[#allocation10 + $0x3f8] sm:$0xff]
        %v7193 = vld [vmem:[%s10] sm:$0xf]
        %v7322 = vunpack.c.l.b16 %v7065
        %v7323 = vunpack.c.h.b16 %v7065
        %v7324 = vunpack.c.l.b16 %v7066
        %v7325 = vunpack.c.h.b16 %v7066
        %v7326 = vunpack.c.l.b16 %v7067
        %v7327 = vunpack.c.h.b16 %v7067
        %v7328 = vunpack.c.l.b16 %v7068
        %v7329 = vunpack.c.h.b16 %v7068
        %v7330 = vunpack.c.l.b16 %v7069
        %v7331 = vunpack.c.h.b16 %v7069
        %v7332 = vunpack.c.l.b16 %v7070
        %v7333 = vunpack.c.h.b16 %v7070
        %v7334 = vunpack.c.l.b16 %v7071
        %v7335 = vunpack.c.h.b16 %v7071
        %v7336 = vunpack.c.l.b16 %v7072
        %v7337 = vunpack.c.h.b16 %v7072
        %v7338 = vunpack.c.l.b16 %v7073
        %v7339 = vunpack.c.h.b16 %v7073
        %v7340 = vunpack.c.l.b16 %v7074
        %v7341 = vunpack.c.h.b16 %v7074
        %v7342 = vunpack.c.l.b16 %v7075
        %v7343 = vunpack.c.h.b16 %v7075
        %v7344 = vunpack.c.l.b16 %v7076
        %v7345 = vunpack.c.h.b16 %v7076
        %v7346 = vunpack.c.l.b16 %v7077
        %v7347 = vunpack.c.h.b16 %v7077
        %v7348 = vunpack.c.l.b16 %v7078
        %v7349 = vunpack.c.h.b16 %v7078
        %v7350 = vunpack.c.l.b16 %v7079
        %v7351 = vunpack.c.h.b16 %v7079
        %v7352 = vunpack.c.l.b16 %v7080
        %v7353 = vunpack.c.h.b16 %v7080
        %v7354 = vunpack.c.l.b16 %v7081
        %v7355 = vunpack.c.h.b16 %v7081
        %v7356 = vunpack.c.l.b16 %v7082
        %v7357 = vunpack.c.h.b16 %v7082
        %v7358 = vunpack.c.l.b16 %v7083
        %v7359 = vunpack.c.h.b16 %v7083
        %v7360 = vunpack.c.l.b16 %v7084
        %v7361 = vunpack.c.h.b16 %v7084
        %v7362 = vunpack.c.l.b16 %v7085
        %v7363 = vunpack.c.h.b16 %v7085
        %v7364 = vunpack.c.l.b16 %v7086
        %v7365 = vunpack.c.h.b16 %v7086
        %v7366 = vunpack.c.l.b16 %v7087
        %v7367 = vunpack.c.h.b16 %v7087
        %v7368 = vunpack.c.l.b16 %v7088
        %v7369 = vunpack.c.h.b16 %v7088
        %v7370 = vunpack.c.l.b16 %v7089
        %v7371 = vunpack.c.h.b16 %v7089
        %v7372 = vunpack.c.l.b16 %v7090
        %v7373 = vunpack.c.h.b16 %v7090
        %v7374 = vunpack.c.l.b16 %v7091
        %v7375 = vunpack.c.h.b16 %v7091
        %v7376 = vunpack.c.l.b16 %v7092
        %v7377 = vunpack.c.h.b16 %v7092
        %v7378 = vunpack.c.l.b16 %v7093
        %v7379 = vunpack.c.h.b16 %v7093
        %v7380 = vunpack.c.l.b16 %v7094
        %v7381 = vunpack.c.h.b16 %v7094
        %v7382 = vunpack.c.l.b16 %v7095
        %v7383 = vunpack.c.h.b16 %v7095
        %v7384 = vunpack.c.l.b16 %v7096
        %v7385 = vunpack.c.h.b16 %v7096
        %v7386 = vunpack.c.l.b16 %v7097
        %v7387 = vunpack.c.h.b16 %v7097
        %v7388 = vunpack.c.l.b16 %v7098
        %v7389 = vunpack.c.h.b16 %v7098
        %v7390 = vunpack.c.l.b16 %v7099
        %v7391 = vunpack.c.h.b16 %v7099
        %v7392 = vunpack.c.l.b16 %v7100
        %v7393 = vunpack.c.h.b16 %v7100
        %v7394 = vunpack.c.l.b16 %v7101
        %v7395 = vunpack.c.h.b16 %v7101
        %v7396 = vunpack.c.l.b16 %v7102
        %v7397 = vunpack.c.h.b16 %v7102
        %v7398 = vunpack.c.l.b16 %v7103
        %v7399 = vunpack.c.h.b16 %v7103
        %v7400 = vunpack.c.l.b16 %v7104
        %v7401 = vunpack.c.h.b16 %v7104
        %v7402 = vunpack.c.l.b16 %v7105
        %v7403 = vunpack.c.h.b16 %v7105
        %v7404 = vunpack.c.l.b16 %v7106
        %v7405 = vunpack.c.h.b16 %v7106
        %v7406 = vunpack.c.l.b16 %v7107
        %v7407 = vunpack.c.h.b16 %v7107
        %v7408 = vunpack.c.l.b16 %v7108
        %v7409 = vunpack.c.h.b16 %v7108
        %v7410 = vunpack.c.l.b16 %v7109
        %v7411 = vunpack.c.h.b16 %v7109
        %v7412 = vunpack.c.l.b16 %v7110
        %v7413 = vunpack.c.h.b16 %v7110
        %v7414 = vunpack.c.l.b16 %v7111
        %v7415 = vunpack.c.h.b16 %v7111
        %v7416 = vunpack.c.l.b16 %v7112
        %v7417 = vunpack.c.h.b16 %v7112
        %v7418 = vunpack.c.l.b16 %v7113
        %v7419 = vunpack.c.h.b16 %v7113
        %v7420 = vunpack.c.l.b16 %v7114
        %v7421 = vunpack.c.h.b16 %v7114
        %v7422 = vunpack.c.l.b16 %v7115
        %v7423 = vunpack.c.h.b16 %v7115
        %v7424 = vunpack.c.l.b16 %v7116
        %v7425 = vunpack.c.h.b16 %v7116
        %v7426 = vunpack.c.l.b16 %v7117
        %v7427 = vunpack.c.h.b16 %v7117
        %v7428 = vunpack.c.l.b16 %v7118
        %v7429 = vunpack.c.h.b16 %v7118
        %v7430 = vunpack.c.l.b16 %v7119
        %v7431 = vunpack.c.h.b16 %v7119
        %v7432 = vunpack.c.l.b16 %v7120
        %v7433 = vunpack.c.h.b16 %v7120
        %v7434 = vunpack.c.l.b16 %v7121
        %v7435 = vunpack.c.h.b16 %v7121
        %v7436 = vunpack.c.l.b16 %v7122
        %v7437 = vunpack.c.h.b16 %v7122
        %v7438 = vunpack.c.l.b16 %v7123
        %v7439 = vunpack.c.h.b16 %v7123
        %v7440 = vunpack.c.l.b16 %v7124
        %v7441 = vunpack.c.h.b16 %v7124
        %v7442 = vunpack.c.l.b16 %v7125
        %v7443 = vunpack.c.h.b16 %v7125
        %v7444 = vunpack.c.l.b16 %v7126
        %v7445 = vunpack.c.h.b16 %v7126
        %v7446 = vunpack.c.l.b16 %v7127
        %v7447 = vunpack.c.h.b16 %v7127
        %v7448 = vunpack.c.l.b16 %v7128
        %v7449 = vunpack.c.h.b16 %v7128
        %v7450 = vunpack.c.l.b16 %v7129
        %v7451 = vunpack.c.h.b16 %v7129
        %v7452 = vunpack.c.l.b16 %v7130
        %v7453 = vunpack.c.h.b16 %v7130
        %v7454 = vunpack.c.l.b16 %v7131
        %v7455 = vunpack.c.h.b16 %v7131
        %v7456 = vunpack.c.l.b16 %v7132
        %v7457 = vunpack.c.h.b16 %v7132
        %v7458 = vunpack.c.l.b16 %v7133
        %v7459 = vunpack.c.h.b16 %v7133
        %v7460 = vunpack.c.l.b16 %v7134
        %v7461 = vunpack.c.h.b16 %v7134
        %v7462 = vunpack.c.l.b16 %v7135
        %v7463 = vunpack.c.h.b16 %v7135
        %v7464 = vunpack.c.l.b16 %v7136
        %v7465 = vunpack.c.h.b16 %v7136
        %v7466 = vunpack.c.l.b16 %v7137
        %v7467 = vunpack.c.h.b16 %v7137
        %v7468 = vunpack.c.l.b16 %v7138
        %v7469 = vunpack.c.h.b16 %v7138
        %v7470 = vunpack.c.l.b16 %v7139
        %v7471 = vunpack.c.h.b16 %v7139
        %v7472 = vunpack.c.l.b16 %v7140
        %v7473 = vunpack.c.h.b16 %v7140
        %v7474 = vunpack.c.l.b16 %v7141
        %v7475 = vunpack.c.h.b16 %v7141
        %v7476 = vunpack.c.l.b16 %v7142
        %v7477 = vunpack.c.h.b16 %v7142
        %v7478 = vunpack.c.l.b16 %v7143
        %v7479 = vunpack.c.h.b16 %v7143
        %v7480 = vunpack.c.l.b16 %v7144
        %v7481 = vunpack.c.h.b16 %v7144
        %v7482 = vunpack.c.l.b16 %v7145
        %v7483 = vunpack.c.h.b16 %v7145
        %v7484 = vunpack.c.l.b16 %v7146
        %v7485 = vunpack.c.h.b16 %v7146
        %v7486 = vunpack.c.l.b16 %v7147
        %v7487 = vunpack.c.h.b16 %v7147
        %v7488 = vunpack.c.l.b16 %v7148
        %v7489 = vunpack.c.h.b16 %v7148
        %v7490 = vunpack.c.l.b16 %v7149
        %v7491 = vunpack.c.h.b16 %v7149
        %v7492 = vunpack.c.l.b16 %v7150
        %v7493 = vunpack.c.h.b16 %v7150
        %v7494 = vunpack.c.l.b16 %v7151
        %v7495 = vunpack.c.h.b16 %v7151
        %v7496 = vunpack.c.l.b16 %v7152
        %v7497 = vunpack.c.h.b16 %v7152
        %v7498 = vunpack.c.l.b16 %v7153
        %v7499 = vunpack.c.h.b16 %v7153
        %v7500 = vunpack.c.l.b16 %v7154
        %v7501 = vunpack.c.h.b16 %v7154
        %v7502 = vunpack.c.l.b16 %v7155
        %v7503 = vunpack.c.h.b16 %v7155
        %v7504 = vunpack.c.l.b16 %v7156
        %v7505 = vunpack.c.h.b16 %v7156
        %v7506 = vunpack.c.l.b16 %v7157
        %v7507 = vunpack.c.h.b16 %v7157
        %v7508 = vunpack.c.l.b16 %v7158
        %v7509 = vunpack.c.h.b16 %v7158
        %v7510 = vunpack.c.l.b16 %v7159
        %v7511 = vunpack.c.h.b16 %v7159
        %v7512 = vunpack.c.l.b16 %v7160
        %v7513 = vunpack.c.h.b16 %v7160
        %v7514 = vunpack.c.l.b16 %v7161
        %v7515 = vunpack.c.h.b16 %v7161
        %v7516 = vunpack.c.l.b16 %v7162
        %v7517 = vunpack.c.h.b16 %v7162
        %v7518 = vunpack.c.l.b16 %v7163
        %v7519 = vunpack.c.h.b16 %v7163
        %v7520 = vunpack.c.l.b16 %v7164
        %v7521 = vunpack.c.h.b16 %v7164
        %v7522 = vunpack.c.l.b16 %v7165
        %v7523 = vunpack.c.h.b16 %v7165
        %v7524 = vunpack.c.l.b16 %v7166
        %v7525 = vunpack.c.h.b16 %v7166
        %v7526 = vunpack.c.l.b16 %v7167
        %v7527 = vunpack.c.h.b16 %v7167
        %v7528 = vunpack.c.l.b16 %v7168
        %v7529 = vunpack.c.h.b16 %v7168
        %v7530 = vunpack.c.l.b16 %v7169
        %v7531 = vunpack.c.h.b16 %v7169
        %v7532 = vunpack.c.l.b16 %v7170
        %v7533 = vunpack.c.h.b16 %v7170
        %v7534 = vunpack.c.l.b16 %v7171
        %v7535 = vunpack.c.h.b16 %v7171
        %v7536 = vunpack.c.l.b16 %v7172
        %v7537 = vunpack.c.h.b16 %v7172
        %v7538 = vunpack.c.l.b16 %v7173
        %v7539 = vunpack.c.h.b16 %v7173
        %v7540 = vunpack.c.l.b16 %v7174
        %v7541 = vunpack.c.h.b16 %v7174
        %v7542 = vunpack.c.l.b16 %v7175
        %v7543 = vunpack.c.h.b16 %v7175
        %v7544 = vunpack.c.l.b16 %v7176
        %v7545 = vunpack.c.h.b16 %v7176
        %v7546 = vunpack.c.l.b16 %v7177
        %v7547 = vunpack.c.h.b16 %v7177
        %v7548 = vunpack.c.l.b16 %v7178
        %v7549 = vunpack.c.h.b16 %v7178
        %v7550 = vunpack.c.l.b16 %v7179
        %v7551 = vunpack.c.h.b16 %v7179
        %v7552 = vunpack.c.l.b16 %v7180
        %v7553 = vunpack.c.h.b16 %v7180
        %v7554 = vunpack.c.l.b16 %v7181
        %v7555 = vunpack.c.h.b16 %v7181
        %v7556 = vunpack.c.l.b16 %v7182
        %v7557 = vunpack.c.h.b16 %v7182
        %v7558 = vunpack.c.l.b16 %v7183
        %v7559 = vunpack.c.h.b16 %v7183
        %v7560 = vunpack.c.l.b16 %v7184
        %v7561 = vunpack.c.h.b16 %v7184
        %v7562 = vunpack.c.l.b16 %v7185
        %v7563 = vunpack.c.h.b16 %v7185
        %v7564 = vunpack.c.l.b16 %v7186
        %v7565 = vunpack.c.h.b16 %v7186
        %v7566 = vunpack.c.l.b16 %v7187
        %v7567 = vunpack.c.h.b16 %v7187
        %v7568 = vunpack.c.l.b16 %v7188
        %v7569 = vunpack.c.h.b16 %v7188
        %v7570 = vunpack.c.l.b16 %v7189
        %v7571 = vunpack.c.h.b16 %v7189
        %v7572 = vunpack.c.l.b16 %v7190
        %v7573 = vunpack.c.h.b16 %v7190
        %v7574 = vunpack.c.l.b16 %v7191
        %v7575 = vunpack.c.h.b16 %v7191
        %v7576 = vunpack.c.l.b16 %v7192
        %v7577 = vunpack.c.h.b16 %v7192
        %v7578 = vpack.c.b16 %v7326, %v7322
        %v7579 = vpack.c.b16 %v7327, %v7323
        %v7580 = vpack.c.b16 %v7328, %v7324
        %v7581 = vpack.c.b16 %v7329, %v7325
        %v7582 = vpack.c.b16 %v7334, %v7330
        %v7583 = vpack.c.b16 %v7335, %v7331
        %v7584 = vpack.c.b16 %v7336, %v7332
        %v7585 = vpack.c.b16 %v7337, %v7333
        %v7586 = vpack.c.b16 %v7342, %v7338
        %v7587 = vpack.c.b16 %v7343, %v7339
        %v7588 = vpack.c.b16 %v7344, %v7340
        %v7589 = vpack.c.b16 %v7345, %v7341
        %v7590 = vpack.c.b16 %v7350, %v7346
        %v7591 = vpack.c.b16 %v7351, %v7347
        %v7592 = vpack.c.b16 %v7352, %v7348
        %v7593 = vpack.c.b16 %v7353, %v7349
        %v7594 = vpack.c.b16 %v7358, %v7354
        %v7595 = vpack.c.b16 %v7359, %v7355
        %v7596 = vpack.c.b16 %v7360, %v7356
        %v7597 = vpack.c.b16 %v7361, %v7357
        %v7598 = vpack.c.b16 %v7366, %v7362
        %v7599 = vpack.c.b16 %v7367, %v7363
        %v7600 = vpack.c.b16 %v7368, %v7364
        %v7601 = vpack.c.b16 %v7369, %v7365
        %v7602 = vpack.c.b16 %v7374, %v7370
        %v7603 = vpack.c.b16 %v7375, %v7371
        %v7604 = vpack.c.b16 %v7376, %v7372
        %v7605 = vpack.c.b16 %v7377, %v7373
        %v7606 = vpack.c.b16 %v7382, %v7378
        %v7607 = vpack.c.b16 %v7383, %v7379
        %v7608 = vpack.c.b16 %v7384, %v7380
        %v7609 = vpack.c.b16 %v7385, %v7381
        %v7610 = vpack.c.b16 %v7390, %v7386
        %v7611 = vpack.c.b16 %v7391, %v7387
        %v7612 = vpack.c.b16 %v7392, %v7388
        %v7613 = vpack.c.b16 %v7393, %v7389
        %v7614 = vpack.c.b16 %v7398, %v7394
        %v7615 = vpack.c.b16 %v7399, %v7395
        %v7616 = vpack.c.b16 %v7400, %v7396
        %v7617 = vpack.c.b16 %v7401, %v7397
        %v7618 = vpack.c.b16 %v7406, %v7402
        %v7619 = vpack.c.b16 %v7407, %v7403
        %v7620 = vpack.c.b16 %v7408, %v7404
        %v7621 = vpack.c.b16 %v7409, %v7405
        %v7622 = vpack.c.b16 %v7414, %v7410
        %v7623 = vpack.c.b16 %v7415, %v7411
        %v7624 = vpack.c.b16 %v7416, %v7412
        %v7625 = vpack.c.b16 %v7417, %v7413
        %v7626 = vpack.c.b16 %v7422, %v7418
        %v7627 = vpack.c.b16 %v7423, %v7419
        %v7628 = vpack.c.b16 %v7424, %v7420
        %v7629 = vpack.c.b16 %v7425, %v7421
        %v7630 = vpack.c.b16 %v7430, %v7426
        %v7631 = vpack.c.b16 %v7431, %v7427
        %v7632 = vpack.c.b16 %v7432, %v7428
        %v7633 = vpack.c.b16 %v7433, %v7429
        %v7634 = vpack.c.b16 %v7438, %v7434
        %v7635 = vpack.c.b16 %v7439, %v7435
        %v7636 = vpack.c.b16 %v7440, %v7436
        %v7637 = vpack.c.b16 %v7441, %v7437
        %v7638 = vpack.c.b16 %v7446, %v7442
        %v7639 = vpack.c.b16 %v7447, %v7443
        %v7640 = vpack.c.b16 %v7448, %v7444
        %v7641 = vpack.c.b16 %v7449, %v7445
        %v7642 = vpack.c.b16 %v7454, %v7450
        %v7643 = vpack.c.b16 %v7455, %v7451
        %v7644 = vpack.c.b16 %v7456, %v7452
        %v7645 = vpack.c.b16 %v7457, %v7453
        %v7646 = vpack.c.b16 %v7462, %v7458
        %v7647 = vpack.c.b16 %v7463, %v7459
        %v7648 = vpack.c.b16 %v7464, %v7460
        %v7649 = vpack.c.b16 %v7465, %v7461
        %v7650 = vpack.c.b16 %v7470, %v7466
        %v7651 = vpack.c.b16 %v7471, %v7467
        %v7652 = vpack.c.b16 %v7472, %v7468
        %v7653 = vpack.c.b16 %v7473, %v7469
        %v7654 = vpack.c.b16 %v7478, %v7474
        %v7655 = vpack.c.b16 %v7479, %v7475
        %v7656 = vpack.c.b16 %v7480, %v7476
        %v7657 = vpack.c.b16 %v7481, %v7477
        %v7658 = vpack.c.b16 %v7486, %v7482
        %v7659 = vpack.c.b16 %v7487, %v7483
        %v7660 = vpack.c.b16 %v7488, %v7484
        %v7661 = vpack.c.b16 %v7489, %v7485
        %v7662 = vpack.c.b16 %v7494, %v7490
        %v7663 = vpack.c.b16 %v7495, %v7491
        %v7664 = vpack.c.b16 %v7496, %v7492
        %v7665 = vpack.c.b16 %v7497, %v7493
        %v7666 = vpack.c.b16 %v7502, %v7498
        %v7667 = vpack.c.b16 %v7503, %v7499
        %v7668 = vpack.c.b16 %v7504, %v7500
        %v7669 = vpack.c.b16 %v7505, %v7501
        %v7670 = vpack.c.b16 %v7510, %v7506
        %v7671 = vpack.c.b16 %v7511, %v7507
        %v7672 = vpack.c.b16 %v7512, %v7508
        %v7673 = vpack.c.b16 %v7513, %v7509
        %v7674 = vpack.c.b16 %v7518, %v7514
        %v7675 = vpack.c.b16 %v7519, %v7515
        %v7676 = vpack.c.b16 %v7520, %v7516
        %v7677 = vpack.c.b16 %v7521, %v7517
        %v7678 = vpack.c.b16 %v7526, %v7522
        %v7679 = vpack.c.b16 %v7527, %v7523
        %v7680 = vpack.c.b16 %v7528, %v7524
        %v7681 = vpack.c.b16 %v7529, %v7525
        %v7682 = vpack.c.b16 %v7534, %v7530
        %v7683 = vpack.c.b16 %v7535, %v7531
        %v7684 = vpack.c.b16 %v7536, %v7532
        %v7685 = vpack.c.b16 %v7537, %v7533
        %v7686 = vpack.c.b16 %v7542, %v7538
        %v7687 = vpack.c.b16 %v7543, %v7539
        %v7688 = vpack.c.b16 %v7544, %v7540
        %v7689 = vpack.c.b16 %v7545, %v7541
        %v7690 = vpack.c.b16 %v7550, %v7546
        %v7691 = vpack.c.b16 %v7551, %v7547
        %v7692 = vpack.c.b16 %v7552, %v7548
        %v7693 = vpack.c.b16 %v7553, %v7549
        %v7694 = vpack.c.b16 %v7558, %v7554
        %v7695 = vpack.c.b16 %v7559, %v7555
        %v7696 = vpack.c.b16 %v7560, %v7556
        %v7697 = vpack.c.b16 %v7561, %v7557
        %v7698 = vpack.c.b16 %v7566, %v7562
        %v7699 = vpack.c.b16 %v7567, %v7563
        %v7700 = vpack.c.b16 %v7568, %v7564
        %v7701 = vpack.c.b16 %v7569, %v7565
        %v7702 = vpack.c.b16 %v7574, %v7570
        %v7703 = vpack.c.b16 %v7575, %v7571
        %v7704 = vpack.c.b16 %v7576, %v7572
        %v7705 = vpack.c.b16 %v7577, %v7573
        %v7835 = vlaneseq
        %v7836 = vshrl.u32 %v7835, 7
        %v7837 = vsub.s32 0, %v7836
        %v7838 = vrot.slane %v7193, %v7837
        %v7839 = vlaneseq
        %v7840 = vshrl.u32 %v7839, 7
        %v7841 = vsub.s32 1, %v7840
        %v7842 = vrot.slane %v7193, %v7841
        %v7843 = vlaneseq
        %v7844 = vshrl.u32 %v7843, 7
        %v7845 = vsub.s32 2, %v7844
        %v7846 = vrot.slane %v7193, %v7845
        %v7847 = vlaneseq
        %v7848 = vshrl.u32 %v7847, 7
        %v7849 = vsub.s32 3, %v7848
        %v7850 = vrot.slane %v7193, %v7849
        %7855 = vmatprep.subr.bf16.mxu0 %v7607
        %7856 = vmatpush1.bf16.msra.mxu0 %v7606
        %7857 = vmatprep.subr.bf16.mxu0 %v7603
        %7858 = vmatpush1.bf16.msra.mxu0 %v7602
        %7859 = vmatprep.subr.bf16.mxu0 %v7599
        %7860 = vmatpush1.bf16.msra.mxu0 %v7598
        %7861 = vmatprep.subr.bf16.mxu0 %v7595
        %7862 = vmatpush1.bf16.msra.mxu0 %v7594
        %7863 = vmatprep.subr.bf16.mxu0 %v7591
        %7864 = vmatpush1.bf16.msra.mxu0 %v7590
        %7865 = vmatprep.subr.bf16.mxu0 %v7587
        %7866 = vmatpush1.bf16.msra.mxu0 %v7586
        %7867 = vmatprep.subr.bf16.mxu0 %v7583
        %7868 = vmatpush1.bf16.msra.mxu0 %v7582
        %7869 = vmatprep.subr.bf16.mxu0 %v7579
        %7870 = vmatpush1.bf16.msra.mxu0 %v7578
        %7871 = vmatprep.subr.bf16.mxu0 %v7639
        %7872 = vmatpush2.bf16.msra.mxu0 %v7638
        %7873 = vmatprep.subr.bf16.mxu0 %v7635
        %7874 = vmatpush2.bf16.msra.mxu0 %v7634
        %7875 = vmatprep.subr.bf16.mxu0 %v7631
        %7876 = vmatpush2.bf16.msra.mxu0 %v7630
        %7877 = vmatprep.subr.bf16.mxu0 %v7627
        %7878 = vmatpush2.bf16.msra.mxu0 %v7626
        %7879 = vmatprep.subr.bf16.mxu0 %v7623
        %7880 = vmatpush2.bf16.msra.mxu0 %v7622
        %7881 = vmatprep.subr.bf16.mxu0 %v7619
        %7882 = vmatpush2.bf16.msra.mxu0 %v7618
        %7883 = vmatprep.subr.bf16.mxu0 %v7615
        %7884 = vmatpush2.bf16.msra.mxu0 %v7614
        %7885 = vmatprep.subr.bf16.mxu0 %v7611
        %7886 = vmatpush2.bf16.msra.mxu0 %v7610
        %7887 = vmatprep.mubr.bf16.mxu0 %v7062
        %7888 = vmatmul.mubr.bf16.gmra.mxu0 %v7061
        %v7889 = vpop.f32.mrf.mxu0
        %v7890 = vadd.f32 %v7838, %v7889
        %v7891 = vpop.f32.mrf.mxu0
        %v7892 = vadd.f32 %v7842, %v7891
        %v7893 = vpop.f32.mrf.mxu0
        %v7894 = vpop.f32.mrf.mxu0
        %7895 = vdwg.mxu0
        %7896 = vmatprep.subr.bf16.mxu0 %v7671
        %7897 = vmatpush1.bf16.msra.mxu0 %v7670
        %7898 = vmatprep.subr.bf16.mxu0 %v7667
        %7899 = vmatpush1.bf16.msra.mxu0 %v7666
        %7900 = vmatprep.subr.bf16.mxu0 %v7663
        %7901 = vmatpush1.bf16.msra.mxu0 %v7662
        %7902 = vmatprep.subr.bf16.mxu0 %v7659
        %7903 = vmatpush1.bf16.msra.mxu0 %v7658
        %7904 = vmatprep.subr.bf16.mxu0 %v7655
        %7905 = vmatpush1.bf16.msra.mxu0 %v7654
        %7906 = vmatprep.subr.bf16.mxu0 %v7651
        %7907 = vmatpush1.bf16.msra.mxu0 %v7650
        %7908 = vmatprep.subr.bf16.mxu0 %v7647
        %7909 = vmatpush1.bf16.msra.mxu0 %v7646
        %7910 = vmatprep.subr.bf16.mxu0 %v7643
        %7911 = vmatpush1.bf16.msra.mxu0 %v7642
        %7912 = vmatprep.subr.bf16.mxu0 %v7703
        %7913 = vmatpush2.bf16.msra.mxu0 %v7702
        %7914 = vmatprep.subr.bf16.mxu0 %v7699
        %7915 = vmatpush2.bf16.msra.mxu0 %v7698
        %7916 = vmatprep.subr.bf16.mxu0 %v7695
        %7917 = vmatpush2.bf16.msra.mxu0 %v7694
        %7918 = vmatprep.subr.bf16.mxu0 %v7691
        %7919 = vmatpush2.bf16.msra.mxu0 %v7690
        %7920 = vmatprep.subr.bf16.mxu0 %v7687
        %7921 = vmatpush2.bf16.msra.mxu0 %v7686
        %7922 = vmatprep.subr.bf16.mxu0 %v7683
        %7923 = vmatpush2.bf16.msra.mxu0 %v7682
        %7924 = vmatprep.subr.bf16.mxu0 %v7679
        %7925 = vmatpush2.bf16.msra.mxu0 %v7678
        %7926 = vmatprep.subr.bf16.mxu0 %v7675
        %7927 = vmatpush2.bf16.msra.mxu0 %v7674
        %7928 = vmatprep.mubr.bf16.mxu0 %v7064
        %7929 = vmatmul.mubr.bf16.gmra.mxu0 %v7063
        %v7930 = vpop.f32.mrf.mxu0
        %v7931 = vadd.f32 %v7890, %v7930
        %v7932 = vpop.f32.mrf.mxu0
        %v7933 = vadd.f32 %v7892, %v7932
        %v7934 = vpop.f32.mrf.mxu0
        %v7935 = vpop.f32.mrf.mxu0
        %7936 = vdwg.mxu0
        %7937 = vmatprep.subr.bf16.mxu0 %v7609
        %7938 = vmatpush1.bf16.msra.mxu0 %v7608
        %7939 = vmatprep.subr.bf16.mxu0 %v7605
        %7940 = vmatpush1.bf16.msra.mxu0 %v7604
        %7941 = vmatprep.subr.bf16.mxu0 %v7601
        %7942 = vmatpush1.bf16.msra.mxu0 %v7600
        %7943 = vmatprep.subr.bf16.mxu0 %v7597
        %7944 = vmatpush1.bf16.msra.mxu0 %v7596
        %7945 = vmatprep.subr.bf16.mxu0 %v7593
        %7946 = vmatpush1.bf16.msra.mxu0 %v7592
        %7947 = vmatprep.subr.bf16.mxu0 %v7589
        %7948 = vmatpush1.bf16.msra.mxu0 %v7588
        %7949 = vmatprep.subr.bf16.mxu0 %v7585
        %7950 = vmatpush1.bf16.msra.mxu0 %v7584
        %7951 = vmatprep.subr.bf16.mxu0 %v7581
        %7952 = vmatpush1.bf16.msra.mxu0 %v7580
        %7953 = vmatprep.subr.bf16.mxu0 %v7641
        %7954 = vmatpush2.bf16.msra.mxu0 %v7640
        %7955 = vmatprep.subr.bf16.mxu0 %v7637
        %7956 = vmatpush2.bf16.msra.mxu0 %v7636
        %7957 = vmatprep.subr.bf16.mxu0 %v7633
        %7958 = vmatpush2.bf16.msra.mxu0 %v7632
        %7959 = vmatprep.subr.bf16.mxu0 %v7629
        %7960 = vmatpush2.bf16.msra.mxu0 %v7628
        %7961 = vmatprep.subr.bf16.mxu0 %v7625
        %7962 = vmatpush2.bf16.msra.mxu0 %v7624
        %7963 = vmatprep.subr.bf16.mxu0 %v7621
        %7964 = vmatpush2.bf16.msra.mxu0 %v7620
        %7965 = vmatprep.subr.bf16.mxu0 %v7617
        %7966 = vmatpush2.bf16.msra.mxu0 %v7616
        %7967 = vmatprep.subr.bf16.mxu0 %v7613
        %7968 = vmatpush2.bf16.msra.mxu0 %v7612
        %7969 = vmatprep.mubr.bf16.mxu0 %v7062
        %7970 = vmatmul.mubr.bf16.gmra.mxu0 %v7061
        %v7971 = vpop.f32.mrf.mxu0
        %v7972 = vadd.f32 %v7846, %v7971
        %v7973 = vpop.f32.mrf.mxu0
        %v7974 = vadd.f32 %v7850, %v7973
        %v7975 = vpop.f32.mrf.mxu0
        %v7976 = vpop.f32.mrf.mxu0
        %7977 = vdwg.mxu0
        %7978 = vmatprep.subr.bf16.mxu0 %v7673
        %7979 = vmatpush1.bf16.msra.mxu0 %v7672
        %7980 = vmatprep.subr.bf16.mxu0 %v7669
        %7981 = vmatpush1.bf16.msra.mxu0 %v7668
        %7982 = vmatprep.subr.bf16.mxu0 %v7665
        %7983 = vmatpush1.bf16.msra.mxu0 %v7664
        %7984 = vmatprep.subr.bf16.mxu0 %v7661
        %7985 = vmatpush1.bf16.msra.mxu0 %v7660
        %7986 = vmatprep.subr.bf16.mxu0 %v7657
        %7987 = vmatpush1.bf16.msra.mxu0 %v7656
        %7988 = vmatprep.subr.bf16.mxu0 %v7653
        %7989 = vmatpush1.bf16.msra.mxu0 %v7652
        %7990 = vmatprep.subr.bf16.mxu0 %v7649
        %7991 = vmatpush1.bf16.msra.mxu0 %v7648
        %7992 = vmatprep.subr.bf16.mxu0 %v7645
        %7993 = vmatpush1.bf16.msra.mxu0 %v7644
        %7994 = vmatprep.subr.bf16.mxu0 %v7705
        %7995 = vmatpush2.bf16.msra.mxu0 %v7704
        %7996 = vmatprep.subr.bf16.mxu0 %v7701
        %7997 = vmatpush2.bf16.msra.mxu0 %v7700
        %7998 = vmatprep.subr.bf16.mxu0 %v7697
        %7999 = vmatpush2.bf16.msra.mxu0 %v7696
        %8000 = vmatprep.subr.bf16.mxu0 %v7693
        %8001 = vmatpush2.bf16.msra.mxu0 %v7692
        %8002 = vmatprep.subr.bf16.mxu0 %v7689
        %8003 = vmatpush2.bf16.msra.mxu0 %v7688
        %8004 = vmatprep.subr.bf16.mxu0 %v7685
        %8005 = vmatpush2.bf16.msra.mxu0 %v7684
        %8006 = vmatprep.subr.bf16.mxu0 %v7681
        %8007 = vmatpush2.bf16.msra.mxu0 %v7680
        %8008 = vmatprep.subr.bf16.mxu0 %v7677
        %8009 = vmatpush2.bf16.msra.mxu0 %v7676
        %8010 = vmatprep.mubr.bf16.mxu0 %v7064
        %8011 = vmatmul.mubr.bf16.gmra.mxu0 %v7063
        %v8012 = vpop.f32.mrf.mxu0
        %v8013 = vadd.f32 %v7972, %v8012
        %v8014 = vpop.f32.mrf.mxu0
        %v8015 = vadd.f32 %v7974, %v8014
        %v8016 = vpop.f32.mrf.mxu0
        %v8017 = vpop.f32.mrf.mxu0
        %8018 = vdwg.mxu0
        %v8019 = vmax.f32 %v7931, 0.0
        %v8020 = vmax.f32 %v7933, 0.0
        %v8021 = vmax.f32 %v8013, 0.0
        %v8022 = vmax.f32 %v8015, 0.0
        %v8023 = vpack.c.bf16 %v8019, %v8019
        %v8024 = vpack.c.bf16 %v8020, %v8020
        %v8025 = vpack.c.bf16 %v8021, %v8021
        %v8026 = vpack.c.bf16 %v8022, %v8022
        %v8027 = vld [vmem:[#allocation11] sm:$0xf]
        %v8028 = vld [vmem:[#allocation11 + $0x4] sm:$0xf]
        %v8029 = vld [vmem:[#allocation11 + $0x8] sm:$0xf]
        %v8030 = vld [vmem:[#allocation11 + $0xc] sm:$0xf]
        %v8031 = vld [vmem:[#allocation11 + $0x10] sm:$0xf]
        %v8032 = vld [vmem:[#allocation11 + $0x14] sm:$0xf]
        %v8033 = vld [vmem:[#allocation11 + $0x18] sm:$0xf]
        %v8034 = vld [vmem:[#allocation11 + $0x1c] sm:$0xf]
        %v8035 = vld [vmem:[#allocation11 + $0x20] sm:$0xf]
        %v8036 = vld [vmem:[#allocation11 + $0x24] sm:$0xf]
        %v8037 = vld [vmem:[#allocation11 + $0x28] sm:$0xf]
        %v8038 = vld [vmem:[#allocation11 + $0x2c] sm:$0xf]
        %v8039 = vld [vmem:[#allocation11 + $0x30] sm:$0xf]
        %v8040 = vld [vmem:[#allocation11 + $0x34] sm:$0xf]
        %v8041 = vld [vmem:[#allocation11 + $0x38] sm:$0xf]
        %v8042 = vld [vmem:[#allocation11 + $0x3c] sm:$0xf]
        %v8043 = vld [vmem:[#allocation11 + $0x40] sm:$0xf]
        %v8044 = vld [vmem:[#allocation11 + $0x44] sm:$0xf]
        %v8045 = vld [vmem:[#allocation11 + $0x48] sm:$0xf]
        %v8046 = vld [vmem:[#allocation11 + $0x4c] sm:$0xf]
        %v8047 = vld [vmem:[#allocation11 + $0x50] sm:$0xf]
        %v8048 = vld [vmem:[#allocation11 + $0x54] sm:$0xf]
        %v8049 = vld [vmem:[#allocation11 + $0x58] sm:$0xf]
        %v8050 = vld [vmem:[#allocation11 + $0x5c] sm:$0xf]
        %v8051 = vld [vmem:[#allocation11 + $0x60] sm:$0xf]
        %v8052 = vld [vmem:[#allocation11 + $0x64] sm:$0xf]
        %v8053 = vld [vmem:[#allocation11 + $0x68] sm:$0xf]
        %v8054 = vld [vmem:[#allocation11 + $0x6c] sm:$0xf]
        %v8055 = vld [vmem:[#allocation11 + $0x70] sm:$0xf]
        %v8056 = vld [vmem:[#allocation11 + $0x74] sm:$0xf]
        %v8057 = vld [vmem:[#allocation11 + $0x78] sm:$0xf]
        %v8058 = vld [vmem:[#allocation11 + $0x7c] sm:$0xf]
        %v8059 = vld [vmem:[#allocation11 + $0x80] sm:$0xf]
        %v8060 = vld [vmem:[#allocation11 + $0x84] sm:$0xf]
        %v8061 = vld [vmem:[#allocation11 + $0x88] sm:$0xf]
        %v8062 = vld [vmem:[#allocation11 + $0x8c] sm:$0xf]
        %v8063 = vld [vmem:[#allocation11 + $0x90] sm:$0xf]
        %v8064 = vld [vmem:[#allocation11 + $0x94] sm:$0xf]
        %v8065 = vld [vmem:[#allocation11 + $0x98] sm:$0xf]
        %v8066 = vld [vmem:[#allocation11 + $0x9c] sm:$0xf]
        %v8067 = vld [vmem:[#allocation11 + $0xa0] sm:$0xf]
        %v8068 = vld [vmem:[#allocation11 + $0xa4] sm:$0xf]
        %v8069 = vld [vmem:[#allocation11 + $0xa8] sm:$0xf]
        %v8070 = vld [vmem:[#allocation11 + $0xac] sm:$0xf]
        %v8071 = vld [vmem:[#allocation11 + $0xb0] sm:$0xf]
        %v8072 = vld [vmem:[#allocation11 + $0xb4] sm:$0xf]
        %v8073 = vld [vmem:[#allocation11 + $0xb8] sm:$0xf]
        %v8074 = vld [vmem:[#allocation11 + $0xbc] sm:$0xf]
        %v8075 = vld [vmem:[#allocation11 + $0xc0] sm:$0xf]
        %v8076 = vld [vmem:[#allocation11 + $0xc4] sm:$0xf]
        %v8077 = vld [vmem:[#allocation11 + $0xc8] sm:$0xf]
        %v8078 = vld [vmem:[#allocation11 + $0xcc] sm:$0xf]
        %v8079 = vld [vmem:[#allocation11 + $0xd0] sm:$0xf]
        %v8080 = vld [vmem:[#allocation11 + $0xd4] sm:$0xf]
        %v8081 = vld [vmem:[#allocation11 + $0xd8] sm:$0xf]
        %v8082 = vld [vmem:[#allocation11 + $0xdc] sm:$0xf]
        %v8083 = vld [vmem:[#allocation11 + $0xe0] sm:$0xf]
        %v8084 = vld [vmem:[#allocation11 + $0xe4] sm:$0xf]
        %v8085 = vld [vmem:[#allocation11 + $0xe8] sm:$0xf]
        %v8086 = vld [vmem:[#allocation11 + $0xec] sm:$0xf]
        %v8087 = vld [vmem:[#allocation11 + $0xf0] sm:$0xf]
        %v8088 = vld [vmem:[#allocation11 + $0xf4] sm:$0xf]
        %v8089 = vld [vmem:[#allocation11 + $0xf8] sm:$0xf]
        %v8090 = vld [vmem:[#allocation11 + $0xfc] sm:$0xf]
        %v8091 = vld [vmem:[%s12] sm:$0x1]
        %v8156 = vunpack.c.l.b16 %v8027
        %v8157 = vunpack.c.l.b16 %v8028
        %v8158 = vunpack.c.l.b16 %v8029
        %v8159 = vunpack.c.l.b16 %v8030
        %v8160 = vunpack.c.l.b16 %v8031
        %v8161 = vunpack.c.l.b16 %v8032
        %v8162 = vunpack.c.l.b16 %v8033
        %v8163 = vunpack.c.l.b16 %v8034
        %v8164 = vunpack.c.l.b16 %v8035
        %v8165 = vunpack.c.l.b16 %v8036
        %v8166 = vunpack.c.l.b16 %v8037
        %v8167 = vunpack.c.l.b16 %v8038
        %v8168 = vunpack.c.l.b16 %v8039
        %v8169 = vunpack.c.l.b16 %v8040
        %v8170 = vunpack.c.l.b16 %v8041
        %v8171 = vunpack.c.l.b16 %v8042
        %v8172 = vunpack.c.l.b16 %v8043
        %v8173 = vunpack.c.l.b16 %v8044
        %v8174 = vunpack.c.l.b16 %v8045
        %v8175 = vunpack.c.l.b16 %v8046
        %v8176 = vunpack.c.l.b16 %v8047
        %v8177 = vunpack.c.l.b16 %v8048
        %v8178 = vunpack.c.l.b16 %v8049
        %v8179 = vunpack.c.l.b16 %v8050
        %v8180 = vunpack.c.l.b16 %v8051
        %v8181 = vunpack.c.l.b16 %v8052
        %v8182 = vunpack.c.l.b16 %v8053
        %v8183 = vunpack.c.l.b16 %v8054
        %v8184 = vunpack.c.l.b16 %v8055
        %v8185 = vunpack.c.l.b16 %v8056
        %v8186 = vunpack.c.l.b16 %v8057
        %v8187 = vunpack.c.l.b16 %v8058
        %v8188 = vunpack.c.l.b16 %v8059
        %v8189 = vunpack.c.l.b16 %v8060
        %v8190 = vunpack.c.l.b16 %v8061
        %v8191 = vunpack.c.l.b16 %v8062
        %v8192 = vunpack.c.l.b16 %v8063
        %v8193 = vunpack.c.l.b16 %v8064
        %v8194 = vunpack.c.l.b16 %v8065
        %v8195 = vunpack.c.l.b16 %v8066
        %v8196 = vunpack.c.l.b16 %v8067
        %v8197 = vunpack.c.l.b16 %v8068
        %v8198 = vunpack.c.l.b16 %v8069
        %v8199 = vunpack.c.l.b16 %v8070
        %v8200 = vunpack.c.l.b16 %v8071
        %v8201 = vunpack.c.l.b16 %v8072
        %v8202 = vunpack.c.l.b16 %v8073
        %v8203 = vunpack.c.l.b16 %v8074
        %v8204 = vunpack.c.l.b16 %v8075
        %v8205 = vunpack.c.l.b16 %v8076
        %v8206 = vunpack.c.l.b16 %v8077
        %v8207 = vunpack.c.l.b16 %v8078
        %v8208 = vunpack.c.l.b16 %v8079
        %v8209 = vunpack.c.l.b16 %v8080
        %v8210 = vunpack.c.l.b16 %v8081
        %v8211 = vunpack.c.l.b16 %v8082
        %v8212 = vunpack.c.l.b16 %v8083
        %v8213 = vunpack.c.l.b16 %v8084
        %v8214 = vunpack.c.l.b16 %v8085
        %v8215 = vunpack.c.l.b16 %v8086
        %v8216 = vunpack.c.l.b16 %v8087
        %v8217 = vunpack.c.l.b16 %v8088
        %v8218 = vunpack.c.l.b16 %v8089
        %v8219 = vunpack.c.l.b16 %v8090
        %v8220 = vpack.c.b16 %v8157, %v8156
        %v8221 = vpack.c.b16 %v8159, %v8158
        %v8222 = vpack.c.b16 %v8161, %v8160
        %v8223 = vpack.c.b16 %v8163, %v8162
        %v8224 = vpack.c.b16 %v8165, %v8164
        %v8225 = vpack.c.b16 %v8167, %v8166
        %v8226 = vpack.c.b16 %v8169, %v8168
        %v8227 = vpack.c.b16 %v8171, %v8170
        %v8228 = vpack.c.b16 %v8173, %v8172
        %v8229 = vpack.c.b16 %v8175, %v8174
        %v8230 = vpack.c.b16 %v8177, %v8176
        %v8231 = vpack.c.b16 %v8179, %v8178
        %v8232 = vpack.c.b16 %v8181, %v8180
        %v8233 = vpack.c.b16 %v8183, %v8182
        %v8234 = vpack.c.b16 %v8185, %v8184
        %v8235 = vpack.c.b16 %v8187, %v8186
        %v8236 = vpack.c.b16 %v8189, %v8188
        %v8237 = vpack.c.b16 %v8191, %v8190
        %v8238 = vpack.c.b16 %v8193, %v8192
        %v8239 = vpack.c.b16 %v8195, %v8194
        %v8240 = vpack.c.b16 %v8197, %v8196
        %v8241 = vpack.c.b16 %v8199, %v8198
        %v8242 = vpack.c.b16 %v8201, %v8200
        %v8243 = vpack.c.b16 %v8203, %v8202
        %v8244 = vpack.c.b16 %v8205, %v8204
        %v8245 = vpack.c.b16 %v8207, %v8206
        %v8246 = vpack.c.b16 %v8209, %v8208
        %v8247 = vpack.c.b16 %v8211, %v8210
        %v8248 = vpack.c.b16 %v8213, %v8212
        %v8249 = vpack.c.b16 %v8215, %v8214
        %v8250 = vpack.c.b16 %v8217, %v8216
        %v8251 = vpack.c.b16 %v8219, %v8218
        %8284 = vmatprep.subr.bf16.mxu0 0
        %8285 = vmatpush1.bf16.msra.mxu0 %v8227
        %8286 = vmatprep.subr.bf16.mxu0 0
        %8287 = vmatpush1.bf16.msra.mxu0 %v8226
        %8288 = vmatprep.subr.bf16.mxu0 0
        %8289 = vmatpush1.bf16.msra.mxu0 %v8225
        %8290 = vmatprep.subr.bf16.mxu0 0
        %8291 = vmatpush1.bf16.msra.mxu0 %v8224
        %8292 = vmatprep.subr.bf16.mxu0 0
        %8293 = vmatpush1.bf16.msra.mxu0 %v8223
        %8294 = vmatprep.subr.bf16.mxu0 0
        %8295 = vmatpush1.bf16.msra.mxu0 %v8222
        %8296 = vmatprep.subr.bf16.mxu0 0
        %8297 = vmatpush1.bf16.msra.mxu0 %v8221
        %8298 = vmatprep.subr.bf16.mxu0 0
        %8299 = vmatpush1.bf16.msra.mxu0 %v8220
        %8300 = vmatprep.subr.bf16.mxu0 0
        %8301 = vmatpush2.bf16.msra.mxu0 %v8235
        %8302 = vmatprep.subr.bf16.mxu0 0
        %8303 = vmatpush2.bf16.msra.mxu0 %v8234
        %8304 = vmatprep.subr.bf16.mxu0 0
        %8305 = vmatpush2.bf16.msra.mxu0 %v8233
        %8306 = vmatprep.subr.bf16.mxu0 0
        %8307 = vmatpush2.bf16.msra.mxu0 %v8232
        %8308 = vmatprep.subr.bf16.mxu0 0
        %8309 = vmatpush2.bf16.msra.mxu0 %v8231
        %8310 = vmatprep.subr.bf16.mxu0 0
        %8311 = vmatpush2.bf16.msra.mxu0 %v8230
        %8312 = vmatprep.subr.bf16.mxu0 0
        %8313 = vmatpush2.bf16.msra.mxu0 %v8229
        %8314 = vmatprep.subr.bf16.mxu0 0
        %8315 = vmatpush2.bf16.msra.mxu0 %v8228
        %8316 = vmatprep.mubr.bf16.mxu0 %v8024
        %8317 = vmatmul.mubr.bf16.gmra.mxu0 %v8023
        %v8318 = vpop.f32.mrf.mxu0
        %v8319 = vadd.f32 %v8091, %v8318
        %v8320 = vpop.f32.mrf.mxu0
        %v8321 = vpop.f32.mrf.mxu0
        %v8322 = vpop.f32.mrf.mxu0
        %8323 = vdwg.mxu0
        %8324 = vmatprep.subr.bf16.mxu0 0
        %8325 = vmatpush1.bf16.msra.mxu0 %v8243
        %8326 = vmatprep.subr.bf16.mxu0 0
        %8327 = vmatpush1.bf16.msra.mxu0 %v8242
        %8328 = vmatprep.subr.bf16.mxu0 0
        %8329 = vmatpush1.bf16.msra.mxu0 %v8241
        %8330 = vmatprep.subr.bf16.mxu0 0
        %8331 = vmatpush1.bf16.msra.mxu0 %v8240
        %8332 = vmatprep.subr.bf16.mxu0 0
        %8333 = vmatpush1.bf16.msra.mxu0 %v8239
        %8334 = vmatprep.subr.bf16.mxu0 0
        %8335 = vmatpush1.bf16.msra.mxu0 %v8238
        %8336 = vmatprep.subr.bf16.mxu0 0
        %8337 = vmatpush1.bf16.msra.mxu0 %v8237
        %8338 = vmatprep.subr.bf16.mxu0 0
        %8339 = vmatpush1.bf16.msra.mxu0 %v8236
        %8340 = vmatprep.subr.bf16.mxu0 0
        %8341 = vmatpush2.bf16.msra.mxu0 %v8251
        %8342 = vmatprep.subr.bf16.mxu0 0
        %8343 = vmatpush2.bf16.msra.mxu0 %v8250
        %8344 = vmatprep.subr.bf16.mxu0 0
        %8345 = vmatpush2.bf16.msra.mxu0 %v8249
        %8346 = vmatprep.subr.bf16.mxu0 0
        %8347 = vmatpush2.bf16.msra.mxu0 %v8248
        %8348 = vmatprep.subr.bf16.mxu0 0
        %8349 = vmatpush2.bf16.msra.mxu0 %v8247
        %8350 = vmatprep.subr.bf16.mxu0 0
        %8351 = vmatpush2.bf16.msra.mxu0 %v8246
        %8352 = vmatprep.subr.bf16.mxu0 0
        %8353 = vmatpush2.bf16.msra.mxu0 %v8245
        %8354 = vmatprep.subr.bf16.mxu0 0
        %8355 = vmatpush2.bf16.msra.mxu0 %v8244
        %8356 = vmatprep.mubr.bf16.mxu0 %v8026
        %8357 = vmatmul.mubr.bf16.gmra.mxu0 %v8025
        %v8358 = vpop.f32.mrf.mxu0
        %v8359 = vadd.f32 %v8319, %v8358
        %v8360 = vpop.f32.mrf.mxu0
        %v8361 = vpop.f32.mrf.mxu0
        %v8362 = vpop.f32.mrf.mxu0
        %8363 = vdwg.mxu0
        %v8364 = vxor.u32 %v8359, 2147483648
        %v8365 = vmul.f32 %v8364, 1.442695
        %v8366 = vpow.pop %v8365
        %v8367 = vadd.f32 %v8366, 1.0
        %v8368 = vrcp.pop %v8367
        %v8369 = vmul.f32 1.0, %v8368
        %v8370 = vpack.c.bf16 %v8369, %v8369
        %v8371 = vld [vmem:[#allocation13] sm:$0xf]
        %v8372 = vld [vmem:[#allocation13 + $0x4] sm:$0xf]
        %v8373 = vld [vmem:[#allocation13 + $0x8] sm:$0xf]
        %v8374 = vld [vmem:[#allocation13 + $0xc] sm:$0xf]
        %v8375 = vld [vmem:[#allocation13 + $0x10] sm:$0xf]
        %v8376 = vld [vmem:[#allocation13 + $0x14] sm:$0xf]
        %v8377 = vld [vmem:[#allocation13 + $0x18] sm:$0xf]
        %v8378 = vld [vmem:[#allocation13 + $0x1c] sm:$0xf]
        %v8379 = vld [vmem:[#allocation13 + $0x20] sm:$0xf]
        %v8380 = vld [vmem:[#allocation13 + $0x24] sm:$0xf]
        %v8381 = vld [vmem:[#allocation13 + $0x28] sm:$0xf]
        %v8382 = vld [vmem:[#allocation13 + $0x2c] sm:$0xf]
        %v8383 = vld [vmem:[#allocation13 + $0x30] sm:$0xf]
        %v8384 = vld [vmem:[#allocation13 + $0x34] sm:$0xf]
        %v8385 = vld [vmem:[#allocation13 + $0x38] sm:$0xf]
        %v8386 = vld [vmem:[#allocation13 + $0x3c] sm:$0xf]
        %v8387 = vld [vmem:[%s14] sm:$0x1]
        %v8404 = vunpack.c.l.b16 %v8371
        %v8405 = vunpack.c.l.b16 %v8372
        %v8406 = vunpack.c.l.b16 %v8373
        %v8407 = vunpack.c.l.b16 %v8374
        %v8408 = vunpack.c.l.b16 %v8375
        %v8409 = vunpack.c.l.b16 %v8376
        %v8410 = vunpack.c.l.b16 %v8377
        %v8411 = vunpack.c.l.b16 %v8378
        %v8412 = vunpack.c.l.b16 %v8379
        %v8413 = vunpack.c.l.b16 %v8380
        %v8414 = vunpack.c.l.b16 %v8381
        %v8415 = vunpack.c.l.b16 %v8382
        %v8416 = vunpack.c.l.b16 %v8383
        %v8417 = vunpack.c.l.b16 %v8384
        %v8418 = vunpack.c.l.b16 %v8385
        %v8419 = vunpack.c.l.b16 %v8386
        %v8420 = vpack.c.b16 %v8405, %v8404
        %v8421 = vpack.c.b16 %v8407, %v8406
        %v8422 = vpack.c.b16 %v8409, %v8408
        %v8423 = vpack.c.b16 %v8411, %v8410
        %v8424 = vpack.c.b16 %v8413, %v8412
        %v8425 = vpack.c.b16 %v8415, %v8414
        %v8426 = vpack.c.b16 %v8417, %v8416
        %v8427 = vpack.c.b16 %v8419, %v8418
        %8436 = vmatprep.subr.bf16.mxu0 0
        %8437 = vmatpush1.bf16.msra.mxu0 %v8427
        %8438 = vmatprep.subr.bf16.mxu0 0
        %8439 = vmatpush1.bf16.msra.mxu0 %v8426
        %8440 = vmatprep.subr.bf16.mxu0 0
        %8441 = vmatpush1.bf16.msra.mxu0 %v8425
        %8442 = vmatprep.subr.bf16.mxu0 0
        %8443 = vmatpush1.bf16.msra.mxu0 %v8424
        %8444 = vmatprep.subr.bf16.mxu0 0
        %8445 = vmatpush1.bf16.msra.mxu0 %v8423
        %8446 = vmatprep.subr.bf16.mxu0 0
        %8447 = vmatpush1.bf16.msra.mxu0 %v8422
        %8448 = vmatprep.subr.bf16.mxu0 0
        %8449 = vmatpush1.bf16.msra.mxu0 %v8421
        %8450 = vmatprep.subr.bf16.mxu0 0
        %8451 = vmatpush1.bf16.msra.mxu0 %v8420
        %8452 = vmatprep.subr.bf16.mxu0 0
        %8453 = vmatpush2.bf16.msra.mxu0 0
        %8454 = vmatprep.subr.bf16.mxu0 0
        %8455 = vmatpush2.bf16.msra.mxu0 0
        %8456 = vmatprep.subr.bf16.mxu0 0
        %8457 = vmatpush2.bf16.msra.mxu0 0
        %8458 = vmatprep.subr.bf16.mxu0 0
        %8459 = vmatpush2.bf16.msra.mxu0 0
        %8460 = vmatprep.subr.bf16.mxu0 0
        %8461 = vmatpush2.bf16.msra.mxu0 0
        %8462 = vmatprep.subr.bf16.mxu0 0
        %8463 = vmatpush2.bf16.msra.mxu0 0
        %8464 = vmatprep.subr.bf16.mxu0 0
        %8465 = vmatpush2.bf16.msra.mxu0 0
        %8466 = vmatprep.subr.bf16.mxu0 0
        %8467 = vmatpush2.bf16.msra.mxu0 0
        %8468 = vmatprep.mubr.bf16.mxu0 0
        %8469 = vmatmul.mubr.bf16.gmra.mxu0 %v8370
        %v8470 = vpop.f32.mrf.mxu0
        %v8471 = vadd.f32 %v8387, %v8470
        %v8472 = vpop.f32.mrf.mxu0
        %v8473 = vpop.f32.mrf.mxu0
        %v8474 = vpop.f32.mrf.mxu0
        %8475 = vdwg.mxu0
        %8476 = vst [vmem:[%s588] sm:$0x1] %v8471
        %s8477 = sand.u32 %s361, 1
        %s8478 = scalar_lea.sflag [#allocation4], %s8477
        %s8479 = sand.u32 %s361, 1
        %s8480 = scalar_lea.vmem [#allocation14], %s8479
        // Predicated region
        $region109: #{_lambda_.1} parent=79 // pred_check
          %p8481 = pneg %p371
        $region110: #{_lambda_.1} parent=79 // pred_check_branch
          %8483 = sbr.rel (%p8481) target = $region112
        $region111: #{_lambda_.1} parent=79 // pred_region
          %s8485 = ssub.s32 16, 16
          %8486 = vsyncadd %s8478, %s8485
          %s8487 = smul.addr %s33, 16
          %s8488 = scalar_lea.hbm %s15, %s8487
          %s8490 = sshll.u32 %s8480, 4
          %s8491 = int_to_ptr.vmem [resolvable:$true] %s8490
          %8493 = dma.vmem_to_hbm [thread:$0]  %s8491, 16, %s8488, %s8478
        $region112: #{_lambda_.1} parent=79 // pred_fallthru
          _
      $region80: #{_lambda_.1} parent=5 // pred_fallthru
        _
      %p8494 = scmp.le.s32.totalorder 2, %s28
      // Predicated region
      $region113: #{_lambda_.1} parent=5 // pred_check
        %p8495 = pneg %p8494
      $region114: #{_lambda_.1} parent=5 // pred_check_branch
        %8497 = sbr.rel (%p8495) target = $region116
      $region115: #{_lambda_.1} parent=5 // pred_region
        %s8498 = ssub.s32 %s28, 2
        // Predicated region
        $region117: #{_lambda_.1} parent=115 // pred_check
          %p8499 = pneg %p377
        $region118: #{_lambda_.1} parent=115 // pred_check_branch
          %8501 = sbr.rel (%p8499) target = $region120
        $region119: #{_lambda_.1} parent=115 // pred_region
          %s8502 = sand.u32 %s362, 1
          %s8503 = scalar_lea.sflag [#allocation4], %s8502
          %s8504 = sand.u32 %s362, 1
          %s8505 = scalar_lea.vmem [#allocation14], %s8504
          %8506 = dma.done %s8503, 16
        $region120: #{_lambda_.1} parent=115 // pred_fallthru
          _
      $region116: #{_lambda_.1} parent=5 // pred_fallthru
        _
    $region6: #{_lambda_.1} parent=1 // loop_footer
      %s32 = sadd.s32 1, %s28
    $region7: #{_lambda_.1} parent=1 // loop_footer_branch
      %27 = sbr.rel target = $region3
    $region8: #{_lambda_.1} parent=1 // loop_exit
      _
    %8507 = vsyncpa [#allocation3], 1
    %s8508 = scalar_lea.sflag [#allocation3], 1
    %8509 = vsyncpa %s8508, 1
    %8510 = vsyncpa [#allocation6], 1
    %8511 = vsyncpa [#allocation9], 1
    %8512 = vsyncpa [#allocation12], 1
    %8513 = vsyncpa [#allocation4], 1
    %s8514 = scalar_lea.sflag [#allocation4], 1
    %8515 = vsyncpa %s8514, 1

</llo_original>
